<compile_context>
chip_gen: v7x
topology: tpu7x:2x2x1
jax: 0.10.0
libtpu: 0.0.40
codegen_flags: <defaults>
</compile_context>

<pallas_src>
import functools

import jax
import jax.numpy as jnp
from jax import lax
from jax.experimental import pallas as pl
from jax.experimental.pallas import tpu as pltpu

E = 32             # text / vision hidden size (768 in the real model)
K = 16             # co-attention projection dim (512 in the real model)
NUM_CLASSES = 2
LANE = 128         # TPU lane width; classifier output padded to this
SUBLANE = 8
PATCH = 4          # patch size for the image glue


def _round_up(x, m):
    return ((x + m - 1) // m) * m


# ---------------------------------------------------------------------------
# Pallas kernel: CoAttention + classifier for ONE batch tile per grid step.
# Inputs arrive flattened to (bt*L, E); shared-weight projections are single
# big matmuls whose results are parked in VMEM scratch, and the per-example
# loop slices Refs (sublane-aligned pl.ds) instead of holding values live.
# ---------------------------------------------------------------------------
def _coattention_kernel(text_ref, img_ref,
                        wb_ref, wv_ref, wq_ref, whv_ref, whq_ref, ws_ref,
                        wc_ref, bc_ref, out_ref,
                        tb_scr, wq_scr, wv_scr, ctx_scr,
                        *, bt, lt, lv, lt_valid, lv_valid, mm_dtype):
    f32 = jnp.float32

    # MXU helpers: operands cast to mm_dtype (bf16 at real dims), f32 accum.
    def mm(a, b):                                   # a @ b
        return jnp.dot(a.astype(mm_dtype), b.astype(mm_dtype),
                       preferred_element_type=f32)

    def mm_nt(a, b):                                # a @ b.T (stored layouts)
        return lax.dot_general(a.astype(mm_dtype), b.astype(mm_dtype),
                               (((1,), (1,)), ((), ())),
                               preferred_element_type=f32)

    def mm_tn(a, b):                                # a.T @ b (contract dim 0)
        return lax.dot_general(a.astype(mm_dtype), b.astype(mm_dtype),
                               (((0,), (0,)), ((), ())),
                               preferred_element_type=f32)

    # Shared-weight projections folded across the whole batch tile.
    t2 = text_ref[...]                                        # (bt*lt, E)
    i2 = img_ref[...]                                         # (bt*lv, E)
    tb_scr[...] = mm(t2, wb_ref[...])                         # (bt*lt, E)
    wq_scr[...] = mm(t2, wq_ref[...])                         # (bt*lt, K)
    wv_scr[...] = mm(i2, wv_ref[...])                         # (bt*lv, K)

    whv = whv_ref[...]                                        # (1, K)
    whq = whq_ref[...]                                        # (1, K)

    # Static -inf masks for padded key positions (elided when no padding).
    if lv_valid < lv:
        col = lax.broadcasted_iota(jnp.int32, (1, lv), 1)
        mask_v = jnp.where(col < lv_valid, 0.0, -jnp.inf).astype(f32)
    else:
        mask_v = None
    if lt_valid < lt:
        col = lax.broadcasted_iota(jnp.int32, (1, lt), 1)
        mask_q = jnp.where(col < lt_valid, 0.0, -jnp.inf).astype(f32)
    else:
        mask_q = None

    def body(b, carry):
        to = pl.multiple_of(b * lt, SUBLANE)
        io = pl.multiple_of(b * lv, SUBLANE)
        t_b = text_ref[pl.ds(to, lt), :]                      # (lt, E)
        im_b = img_ref[pl.ds(io, lv), :]                      # (lv, E)
        tb_b = tb_scr[pl.ds(to, lt), :]                       # (lt, E)
        wq_b = wq_scr[pl.ds(to, lt), :]                       # (lt, K)
        wv_b = wv_scr[pl.ds(io, lv), :]                       # (lv, K)

        # affinity[x, y] = sum_e (t Wb)[x, e] * im[y, e]  — computed ONCE.
        aff = mm_nt(tb_b, im_b)                               # (lt, lv)
        # wvvc[x,k] = sum_y aff[x,y] wv_b[y,k]
        wvvc = mm(aff, wv_b)                                  # (lt, K)
        # wqqc[y,k] = sum_x aff[x,y] wq_b[x,k]  (TN form, no aff recompute)
        wqqc = mm_tn(aff, wq_b)                               # (lv, K)

        # Elementwise / transcendental path stays f32 (portable across gens).
        h_v = jnp.tanh(wv_b + wqqc)                           # (lv, K)
        h_q = jnp.tanh(wq_b + wvvc)                           # (lt, K)

        # Scores as lane-dense row vectors; softmax along the lane axis.
        s_v = mm_nt(whv, h_v)                                 # (1, lv)
        s_q = mm_nt(whq, h_q)                                 # (1, lt)
        if mask_v is not None:
            s_v = s_v + mask_v
        if mask_q is not None:
            s_q = s_q + mask_q

        a_v = jnp.exp(s_v - jnp.max(s_v, axis=-1, keepdims=True))
        a_v = a_v * pl.reciprocal(jnp.sum(a_v, axis=-1, keepdims=True),
                                  approx=True)                # (1, lv)
        a_q = jnp.exp(s_q - jnp.max(s_q, axis=-1, keepdims=True))
        a_q = a_q * pl.reciprocal(jnp.sum(a_q, axis=-1, keepdims=True),
                                  approx=True)                # (1, lt)

        # Context vectors as (1, L) x (L, E) MXU matmuls, written straight
        # into the (bt, E) scratch row — no list/concatenate.
        ctx_scr[pl.ds(b, 1), :] = mm(a_v, im_b) + mm(a_q, t_b)
        return carry

    lax.fori_loop(0, bt, body, 0, unroll=bool(bt <= 8))

    # Batched tail: one w_s matmul + one lane-padded classifier matmul.
    feat = jnp.tanh(mm(ctx_scr[...], ws_ref[...]))            # (bt, E)
    out_ref[...] = (mm(feat, wc_ref[...]) + bc_ref[...]).astype(out_ref.dtype)


def coattention_classifier(text_h, img_h, params, *, batch_tile=8,
                           matmul_dtype=jnp.float32):
    """Pallas call: grid over sublane-aligned batch tiles (pipelined DMA)."""
    B, Lt0, e = text_h.shape
    _, Lv0, e2 = img_h.shape
    assert e == E and e2 == E
    bt = batch_tile
    assert bt % SUBLANE == 0, "batch tile must be a multiple of 8 (sublanes)"

    # Pad seq lens to multiples of 8 (padded keys masked in-kernel) and the
    # batch to a multiple of the tile (clean (8,128) output stores; B > bt
    # yields >=2 grid steps for DMA pipelining / megacore sharding).
    Lt = _round_up(Lt0, SUBLANE)
    Lv = _round_up(Lv0, SUBLANE)
    Bp = _round_up(B, bt)
    text_h = jnp.pad(text_h, ((0, Bp - B), (0, Lt - Lt0), (0, 0)))
    img_h = jnp.pad(img_h, ((0, Bp - B), (0, Lv - Lv0), (0, 0)))
    nb = Bp // bt

    # Flatten batch into the row (sublane) axis outside the kernel.
    text_flat = text_h.reshape(Bp * Lt, E)
    img_flat = img_h.reshape(Bp * Lv, E)

    # Lane-dense classifier: pad (E, 2) weight / (1, 2) bias to 128 lanes.
    wc_pad = jnp.zeros((E, LANE), jnp.float32).at[:, :NUM_CLASSES].set(
        params["cls_w"])
    bc_pad = jnp.zeros((1, LANE), jnp.float32).at[:, :NUM_CLASSES].set(
        params["cls_b"])
    w_hv_row = params["w_hv"].T                                   # (1, K)
    w_hq_row = params["w_hq"].T                                   # (1, K)

    # TODO(synk): at real dims (E=768, K=512) single-buffer these constant
    # weight blocks (pipeline_mode=pl.Buffered(1), or one-time DMA under
    # pl.when(program_id==0)) to halve their VMEM footprint on v7x (64 MiB).
    const = lambda shape: pl.BlockSpec(shape, lambda b: (0,) * len(shape))

    kernel = functools.partial(_coattention_kernel, bt=bt, lt=Lt, lv=Lv,
                               lt_valid=Lt0, lv_valid=Lv0,
                               mm_dtype=matmul_dtype)

    out = pl.pallas_call(
        kernel,
        out_shape=jax.ShapeDtypeStruct((Bp, LANE), jnp.float32),
        grid_spec=pltpu.PrefetchScalarGridSpec(
            num_scalar_prefetch=0,
            grid=(nb,),
            in_specs=[
                pl.BlockSpec((bt * Lt, E), lambda b: (b, 0)),   # text (flat)
                pl.BlockSpec((bt * Lv, E), lambda b: (b, 0)),   # image (flat)
                const((E, E)),                                  # w_b
                const((E, K)),                                  # w_v
                const((E, K)),                                  # w_q
                const((1, K)),                                  # w_hv (row)
                const((1, K)),                                  # w_hq (row)
                const((E, E)),                                  # w_s
                const((E, LANE)),                               # classifier W
                const((1, LANE)),                               # classifier b
            ],
            out_specs=pl.BlockSpec((bt, LANE), lambda b: (b, 0)),
            scratch_shapes=[
                pltpu.VMEM((bt * Lt, E), jnp.float32),          # t @ w_b
                pltpu.VMEM((bt * Lt, K), jnp.float32),          # t @ w_q
                pltpu.VMEM((bt * Lv, K), jnp.float32),          # im @ w_v
                pltpu.VMEM((bt, E), jnp.float32),               # contexts
            ],
        ),
        compiler_params=pltpu.CompilerParams(
            dimension_semantics=("parallel",),
            vmem_limit_bytes=48 * 1024 * 1024),                 # fits v7x 64MiB
    )(text_flat, img_flat,
      params["w_b"], params["w_v"], params["w_q"],
      w_hv_row, w_hq_row, params["w_s"], wc_pad, bc_pad)

    return out[:B, :NUM_CLASSES]


# ---------------------------------------------------------------------------
# Pure-JAX reference (for a correctness check against the kernel).
# ---------------------------------------------------------------------------
def _coattention_ref(text_h, img_h, p):
    aff = jnp.einsum('bxe,bye->bxy', text_h @ p["w_b"], img_h)
    wv_v = img_h @ p["w_v"]
    wq_q = text_h @ p["w_q"]
    wqqc = jnp.einsum('bxk,bxy->byk', wq_q, aff)
    wvvc = jnp.einsum('byk,bxy->bxk', wv_v, aff)
    h_v = jnp.tanh(wv_v + wqqc)
    h_q = jnp.tanh(wq_q + wvvc)
    a_v = jax.nn.softmax((h_v @ p["w_hv"])[..., 0], axis=-1)
    a_q = jax.nn.softmax((h_q @ p["w_hq"])[..., 0], axis=-1)
    ctx_v = jnp.einsum('bx,bxd->bd', a_v, img_h)
    ctx_q = jnp.einsum('by,byd->bd', a_q, text_h)
    feat = jnp.tanh((ctx_v + ctx_q) @ p["w_s"])
    return feat @ p["cls_w"] + p["cls_b"]


# ---------------------------------------------------------------------------
# VitBERT forward: glue encoders (plain JAX) + Pallas co-attention/classifier.
# ---------------------------------------------------------------------------
def _glue_encoders(params, input_ids, vision_features):
    # TODO(synk): pretrained BertModel encoder not reproducible in-script;
    # sequence_output is approximated by a deterministic token embedding.
    text_h = params["tok_emb"][input_ids]                              # (B,Lt,E)
    # TODO(synk): pretrained VisionTransformer encoder not reproducible
    # in-script; img_features approximated by a deterministic patch projection.
    B, C, H, W = vision_features.shape                                 # NCHW
    ph = pw = PATCH
    patches = vision_features.reshape(B, C, H // ph, ph, W // pw, pw)
    patches = patches.transpose(0, 2, 4, 1, 3, 5).reshape(
        B, (H // ph) * (W // pw), C * ph * pw)
    img_h = patches @ params["patch_proj"]                             # (B,Lv,E)
    return text_h, img_h


def vit_bert_forward(params, input_ids, vision_features, input_mask,
                     added_attention_mask, hashtag_input_ids,
                     hashtag_input_mask, labels=None, *,
                     batch_tile=8, matmul_dtype=jnp.float32):
    text_h, img_h = _glue_encoders(params, input_ids, vision_features)
    logits = coattention_classifier(text_h, img_h, params,
                                    batch_tile=batch_tile,
                                    matmul_dtype=matmul_dtype)          # (B, 2)
    if labels is not None:
        logp = jax.nn.log_softmax(logits, axis=-1)
        return -jnp.mean(jnp.take_along_axis(logp, labels[:, None], axis=-1))
    return logits, text_h, img_h


def init_params(key, vocab_size=50, patch_dim=3 * PATCH * PATCH):
    ks = jax.random.split(key, 10)
    s = 0.05
    return {
        "tok_emb":    jax.random.normal(ks[0], (vocab_size, E), jnp.float32) * s,
        "patch_proj": jax.random.normal(ks[1], (patch_dim, E), jnp.float32) * s,
        "w_b":  jax.random.normal(ks[2], (E, E), jnp.float32) * s,
        "w_v":  jax.random.normal(ks[3], (E, K), jnp.float32) * s,
        "w_q":  jax.random.normal(ks[4], (E, K), jnp.float32) * s,
        "w_hv": jax.random.normal(ks[5], (K, 1), jnp.float32) * s,
        "w_hq": jax.random.normal(ks[6], (K, 1), jnp.float32) * s,
        "w_s":  jax.random.normal(ks[7], (E, E), jnp.float32) * s,
        "cls_w": jax.random.normal(ks[8], (E, NUM_CLASSES), jnp.float32) * s,
        "cls_b": jax.random.normal(ks[9], (1, NUM_CLASSES), jnp.float32) * s,
    }


if __name__ == "__main__":
    key = jax.random.PRNGKey(0)
    k_param, k_ids, k_img, k_lbl, k_ids2, k_img2 = jax.random.split(key, 6)

    params = init_params(k_param)

    # --- primary small run: B=2, Lt=8, 16x16 image -> Lv=16 ------------------
    B, Lt = 2, 8
    input_ids = jax.random.randint(k_ids, (B, Lt), 0, 50)
    vision_features = jax.random.normal(k_img, (B, 3, 16, 16), jnp.float32)
    input_mask = jnp.ones((B, Lt), jnp.int32)
    added_attention_mask = jnp.ones((B, Lt), jnp.int32)
    hashtag_input_ids = jax.random.randint(k_ids, (B, Lt), 0, 50)
    hashtag_input_mask = jnp.ones((B, Lt), jnp.int32)
    labels = jax.random.randint(k_lbl, (B,), 0, NUM_CLASSES)

    logits, text_h, img_h = vit_bert_forward(
        params, input_ids, vision_features, input_mask,
        added_attention_mask, hashtag_input_ids, hashtag_input_mask)
    logits = jax.block_until_ready(logits)

    # Verify the kernel against the pure-JAX CoAttention + classifier
    # (tolerance accounts for the approx-reciprocal softmax normalization).
    ref = _coattention_ref(text_h, img_h, params)
    assert jnp.allclose(logits, ref, rtol=5e-3, atol=5e-4), (logits, ref)

    # Loss path (labels provided).
    loss = vit_bert_forward(
        params, input_ids, vision_features, input_mask,
        added_attention_mask, hashtag_input_ids, hashtag_input_mask,
        labels=labels)
    loss = jax.block_until_ready(loss)
    assert bool(jnp.isfinite(loss))

    # --- multi-tile run: B=12 pads to 16 (grid of 2 tiles -> pipelined DMA,
    # megacore-shardable) and Lt=12 pads to 16 (exercises key masking). -------
    B2, Lt2 = 12, 12
    ids2 = jax.random.randint(k_ids2, (B2, Lt2), 0, 50)
    img2 = jax.random.normal(k_img2, (B2, 3, 16, 16), jnp.float32)
    text_h2, img_h2 = _glue_encoders(params, ids2, img2)
    logits2 = jax.block_until_ready(
        coattention_classifier(text_h2, img_h2, params, batch_tile=8))
    ref2 = _coattention_ref(text_h2, img_h2, params)
    assert jnp.allclose(logits2, ref2, rtol=5e-3, atol=1e-3), (logits2, ref2)

    # --- bf16 MXU datapath (the real-dims configuration); loose tolerance. ---
    logits_bf16 = jax.block_until_ready(
        coattention_classifier(text_h, img_h, params,
                               matmul_dtype=jnp.bfloat16))
    assert jnp.allclose(logits_bf16, ref, rtol=1e-1, atol=5e-3)

    print("KERNEL_OK")
</pallas_src>

<mosaic_0001>
module attributes {stable_mosaic.version = 11 : i64} {
  func.func @_coattention_kernel(%arg0: i32, %arg1: memref<64x32xf32, #tpu.memory_space<vmem>>, %arg2: memref<128x32xf32, #tpu.memory_space<vmem>>, %arg3: memref<32x32xf32, #tpu.memory_space<vmem>>, %arg4: memref<32x16xf32, #tpu.memory_space<vmem>>, %arg5: memref<32x16xf32, #tpu.memory_space<vmem>>, %arg6: memref<1x16xf32, #tpu.memory_space<vmem>>, %arg7: memref<1x16xf32, #tpu.memory_space<vmem>>, %arg8: memref<32x32xf32, #tpu.memory_space<vmem>>, %arg9: memref<32x128xf32, #tpu.memory_space<vmem>>, %arg10: memref<1x128xf32, #tpu.memory_space<vmem>>, %arg11: memref<8x128xf32, #tpu.memory_space<vmem>>, %arg12: memref<64x32xf32, #tpu.memory_space<vmem>>, %arg13: memref<64x16xf32, #tpu.memory_space<vmem>>, %arg14: memref<128x16xf32, #tpu.memory_space<vmem>>, %arg15: memref<8x32xf32, #tpu.memory_space<vmem>>) attributes {dimension_semantics = [#tpu.dimension_semantics<parallel>], iteration_bounds = array<i64: 1>, scalar_prefetch = 0 : i64, scratch_operands = 4 : i64, tpu.core_type = #tpu.core_type<tc>, window_params = [{transform_indices = @transform_0, window_bounds = array<i64: 64, 32>}, {transform_indices = @transform_1, window_bounds = array<i64: 128, 32>}, {pipeline_mode = #tpu.pipeline_mode<synchronous>, transform_indices = @transform_2, window_bounds = array<i64: 32, 32>}, {pipeline_mode = #tpu.pipeline_mode<synchronous>, transform_indices = @transform_3, window_bounds = array<i64: 32, 16>}, {pipeline_mode = #tpu.pipeline_mode<synchronous>, transform_indices = @transform_4, window_bounds = array<i64: 32, 16>}, {pipeline_mode = #tpu.pipeline_mode<synchronous>, transform_indices = @transform_5, window_bounds = array<i64: 1, 16>}, {pipeline_mode = #tpu.pipeline_mode<synchronous>, transform_indices = @transform_6, window_bounds = array<i64: 1, 16>}, {pipeline_mode = #tpu.pipeline_mode<synchronous>, transform_indices = @transform_7, window_bounds = array<i64: 32, 32>}, {pipeline_mode = #tpu.pipeline_mode<synchronous>, transform_indices = @transform_8, window_bounds = array<i64: 32, 128>}, {pipeline_mode = #tpu.pipeline_mode<synchronous>, transform_indices = @transform_9, window_bounds = array<i64: 1, 128>}, {transform_indices = @transform_10, window_bounds = array<i64: 8, 128>}]} {
    %c0 = arith.constant 0 : index
    %c0_0 = arith.constant 0 : index
    %0 = vector.load %arg1[%c0, %c0_0] : memref<64x32xf32, #tpu.memory_space<vmem>>, vector<64x32xf32>
    %c0_1 = arith.constant 0 : index
    %c0_2 = arith.constant 0 : index
    %1 = vector.load %arg2[%c0_1, %c0_2] : memref<128x32xf32, #tpu.memory_space<vmem>>, vector<128x32xf32>
    %c0_3 = arith.constant 0 : index
    %c0_4 = arith.constant 0 : index
    %2 = vector.load %arg3[%c0_3, %c0_4] : memref<32x32xf32, #tpu.memory_space<vmem>>, vector<32x32xf32>
    %cst = arith.constant dense<0.000000e+00> : vector<64x32xf32>
    %3 = tpu.matmul %0, %2, %cst {dimension_numbers = #tpu.dot_dimension_numbers<[1], [0], [0], [1], [0, 0, 1, 1], [], []>} : vector<64x32xf32>, vector<32x32xf32>, vector<64x32xf32> -> vector<64x32xf32>
    %c0_5 = arith.constant 0 : index
    %c0_6 = arith.constant 0 : index
    %4 = vector.load %arg12[%c0_5, %c0_6] : memref<64x32xf32, #tpu.memory_space<vmem>>, vector<64x32xf32>
    tpu.vector_store %arg12[%c0_5, %c0_6], %3 {strides = array<i32>} : memref<64x32xf32, #tpu.memory_space<vmem>>, vector<64x32xf32>,
    %c0_7 = arith.constant 0 : index
    %c0_8 = arith.constant 0 : index
    %5 = vector.load %arg5[%c0_7, %c0_8] : memref<32x16xf32, #tpu.memory_space<vmem>>, vector<32x16xf32>
    %cst_9 = arith.constant dense<0.000000e+00> : vector<64x16xf32>
    %6 = tpu.matmul %0, %5, %cst_9 {dimension_numbers = #tpu.dot_dimension_numbers<[1], [0], [0], [1], [0, 0, 1, 1], [], []>} : vector<64x32xf32>, vector<32x16xf32>, vector<64x16xf32> -> vector<64x16xf32>
    %c0_10 = arith.constant 0 : index
    %c0_11 = arith.constant 0 : index
    %7 = vector.load %arg13[%c0_10, %c0_11] : memref<64x16xf32, #tpu.memory_space<vmem>>, vector<64x16xf32>
    tpu.vector_store %arg13[%c0_10, %c0_11], %6 {strides = array<i32>} : memref<64x16xf32, #tpu.memory_space<vmem>>, vector<64x16xf32>,
    %c0_12 = arith.constant 0 : index
    %c0_13 = arith.constant 0 : index
    %8 = vector.load %arg4[%c0_12, %c0_13] : memref<32x16xf32, #tpu.memory_space<vmem>>, vector<32x16xf32>
    %cst_14 = arith.constant dense<0.000000e+00> : vector<128x16xf32>
    %9 = tpu.matmul %1, %8, %cst_14 {dimension_numbers = #tpu.dot_dimension_numbers<[1], [0], [0], [1], [0, 0, 1, 1], [], []>} : vector<128x32xf32>, vector<32x16xf32>, vector<128x16xf32> -> vector<128x16xf32>
    %c0_15 = arith.constant 0 : index
    %c0_16 = arith.constant 0 : index
    %10 = vector.load %arg14[%c0_15, %c0_16] : memref<128x16xf32, #tpu.memory_space<vmem>>, vector<128x16xf32>
    tpu.vector_store %arg14[%c0_15, %c0_16], %9 {strides = array<i32>} : memref<128x16xf32, #tpu.memory_space<vmem>>, vector<128x16xf32>,
    %c0_17 = arith.constant 0 : index
    %c0_18 = arith.constant 0 : index
    %11 = vector.load %arg6[%c0_17, %c0_18] : memref<1x16xf32, #tpu.memory_space<vmem>>, vector<1x16xf32>
    %c0_19 = arith.constant 0 : index
    %c0_20 = arith.constant 0 : index
    %12 = vector.load %arg7[%c0_19, %c0_20] : memref<1x16xf32, #tpu.memory_space<vmem>>, vector<1x16xf32>
    %c0_i32 = arith.constant 0 : i32
    %c8_i32 = arith.constant 8 : i32
    %13 = arith.muli %c0_i32, %c8_i32 : i32
    %14 = tpu.assume_multiple %13, 8 : i32
    %c16_i32 = arith.constant 16 : i32
    %15 = arith.muli %c0_i32, %c16_i32 : i32
    %16 = tpu.assume_multiple %15, 8 : i32
    %17 = arith.index_cast %14 : i32 to index
    %c0_21 = arith.constant 0 : index
    %18 = vector.load %arg1[%17, %c0_21] : memref<64x32xf32, #tpu.memory_space<vmem>>, vector<8x32xf32>
    %19 = arith.index_cast %16 : i32 to index
    %c0_22 = arith.constant 0 : index
    %20 = vector.load %arg2[%19, %c0_22] : memref<128x32xf32, #tpu.memory_space<vmem>>, vector<16x32xf32>
    %21 = arith.index_cast %14 : i32 to index
    %c0_23 = arith.constant 0 : index
    %22 = vector.load %arg12[%21, %c0_23] : memref<64x32xf32, #tpu.memory_space<vmem>>, vector<8x32xf32>
    %23 = arith.index_cast %14 : i32 to index
    %c0_24 = arith.constant 0 : index
    %24 = vector.load %arg13[%23, %c0_24] : memref<64x16xf32, #tpu.memory_space<vmem>>, vector<8x16xf32>
    %25 = arith.index_cast %16 : i32 to index
    %c0_25 = arith.constant 0 : index
    %26 = vector.load %arg14[%25, %c0_25] : memref<128x16xf32, #tpu.memory_space<vmem>>, vector<16x16xf32>
    %cst_26 = arith.constant dense<0.000000e+00> : vector<8x16xf32>
    %27 = tpu.matmul %22, %20, %cst_26 {dimension_numbers = #tpu.dot_dimension_numbers<[1], [1], [0], [0], [0, 0, 1, 0], [], []>} : vector<8x32xf32>, vector<16x32xf32>, vector<8x16xf32> -> vector<8x16xf32>
    %cst_27 = arith.constant dense<0.000000e+00> : vector<8x16xf32>
    %28 = tpu.matmul %27, %26, %cst_27 {dimension_numbers = #tpu.dot_dimension_numbers<[1], [0], [0], [1], [0, 0, 1, 1], [], []>} : vector<8x16xf32>, vector<16x16xf32>, vector<8x16xf32> -> vector<8x16xf32>
    %cst_28 = arith.constant dense<0.000000e+00> : vector<16x16xf32>
    %29 = tpu.matmul %27, %24, %cst_28 {dimension_numbers = #tpu.dot_dimension_numbers<[0], [0], [1], [1], [0, 1, 1, 1], [], []>} : vector<8x16xf32>, vector<8x16xf32>, vector<16x16xf32> -> vector<16x16xf32>
    %30 = arith.addf %26, %29 : vector<16x16xf32>
    %31 = math.tanh %30 : vector<16x16xf32>
    %32 = arith.addf %24, %28 : vector<8x16xf32>
    %33 = math.tanh %32 : vector<8x16xf32>
    %cst_29 = arith.constant dense<0.000000e+00> : vector<1x16xf32>
    %34 = tpu.matmul %11, %31, %cst_29 {dimension_numbers = #tpu.dot_dimension_numbers<[1], [1], [0], [0], [0, 0, 1, 0], [], []>} : vector<1x16xf32>, vector<16x16xf32>, vector<1x16xf32> -> vector<1x16xf32>
    %cst_30 = arith.constant dense<0.000000e+00> : vector<1x8xf32>
    %35 = tpu.matmul %12, %33, %cst_30 {dimension_numbers = #tpu.dot_dimension_numbers<[1], [1], [0], [0], [0, 0, 1, 0], [], []>} : vector<1x16xf32>, vector<8x16xf32>, vector<1x8xf32> -> vector<1x8xf32>
    %cst_31 = arith.constant dense<0xFF800000> : vector<1xf32>
    %36 = vector.multi_reduction <maximumf>, %34, %cst_31 [1] : vector<1x16xf32> to vector<1xf32>
    %37 = vector.shape_cast %36 : vector<1xf32> to vector<1x1xf32>
    %38 = vector.broadcast %37 : vector<1x1xf32> to vector<1x16xf32>
    %39 = arith.subf %34, %38 : vector<1x16xf32>
    %40 = math.exp %39 : vector<1x16xf32>
    %cst_32 = arith.constant dense<0.000000e+00> : vector<1xf32>
    %41 = vector.multi_reduction <add>, %40, %cst_32 [1] : vector<1x16xf32> to vector<1xf32>
    %42 = vector.shape_cast %41 : vector<1xf32> to vector<1x1xf32>
    %43 = tpu.reciprocal %42 {approx = true} : vector<1x1xf32> -> vector<1x1xf32>
    %44 = vector.broadcast %43 : vector<1x1xf32> to vector<1x16xf32>
    %45 = arith.mulf %40, %44 : vector<1x16xf32>
    %cst_33 = arith.constant dense<0xFF800000> : vector<1xf32>
    %46 = vector.multi_reduction <maximumf>, %35, %cst_33 [1] : vector<1x8xf32> to vector<1xf32>
    %47 = vector.shape_cast %46 : vector<1xf32> to vector<1x1xf32>
    %48 = vector.broadcast %47 : vector<1x1xf32> to vector<1x8xf32>
    %49 = arith.subf %35, %48 : vector<1x8xf32>
    %50 = math.exp %49 : vector<1x8xf32>
    %cst_34 = arith.constant dense<0.000000e+00> : vector<1xf32>
    %51 = vector.multi_reduction <add>, %50, %cst_34 [1] : vector<1x8xf32> to vector<1xf32>
    %52 = vector.shape_cast %51 : vector<1xf32> to vector<1x1xf32>
    %53 = tpu.reciprocal %52 {approx = true} : vector<1x1xf32> -> vector<1x1xf32>
    %54 = vector.broadcast %53 : vector<1x1xf32> to vector<1x8xf32>
    %55 = arith.mulf %50, %54 : vector<1x8xf32>
    %cst_35 = arith.constant dense<0.000000e+00> : vector<1x32xf32>
    %56 = tpu.matmul %45, %20, %cst_35 {dimension_numbers = #tpu.dot_dimension_numbers<[1], [0], [0], [1], [0, 0, 1, 1], [], []>} : vector<1x16xf32>, vector<16x32xf32>, vector<1x32xf32> -> vector<1x32xf32>
    %cst_36 = arith.constant dense<0.000000e+00> : vector<1x32xf32>
    %57 = tpu.matmul %55, %18, %cst_36 {dimension_numbers = #tpu.dot_dimension_numbers<[1], [0], [0], [1], [0, 0, 1, 1], [], []>} : vector<1x8xf32>, vector<8x32xf32>, vector<1x32xf32> -> vector<1x32xf32>
    %58 = arith.addf %56, %57 : vector<1x32xf32>
    %59 = arith.index_cast %c0_i32 : i32 to index
    %c0_37 = arith.constant 0 : index
    %60 = vector.load %arg15[%59, %c0_37] : memref<8x32xf32, #tpu.memory_space<vmem>>, vector<1x32xf32>
    tpu.vector_store %arg15[%59, %c0_37], %58 {strides = array<i32>} : memref<8x32xf32, #tpu.memory_space<vmem>>, vector<1x32xf32>,
    %c1_i32 = arith.constant 1 : i32
    %c8_i32_38 = arith.constant 8 : i32
    %61 = arith.muli %c1_i32, %c8_i32_38 : i32
    %62 = tpu.assume_multiple %61, 8 : i32
    %c16_i32_39 = arith.constant 16 : i32
    %63 = arith.muli %c1_i32, %c16_i32_39 : i32
    %64 = tpu.assume_multiple %63, 8 : i32
    %65 = arith.index_cast %62 : i32 to index
    %c0_40 = arith.constant 0 : index
    %66 = vector.load %arg1[%65, %c0_40] : memref<64x32xf32, #tpu.memory_space<vmem>>, vector<8x32xf32>
    %67 = arith.index_cast %64 : i32 to index
    %c0_41 = arith.constant 0 : index
    %68 = vector.load %arg2[%67, %c0_41] : memref<128x32xf32, #tpu.memory_space<vmem>>, vector<16x32xf32>
    %69 = arith.index_cast %62 : i32 to index
    %c0_42 = arith.constant 0 : index
    %70 = vector.load %arg12[%69, %c0_42] : memref<64x32xf32, #tpu.memory_space<vmem>>, vector<8x32xf32>
    %71 = arith.index_cast %62 : i32 to index
    %c0_43 = arith.constant 0 : index
    %72 = vector.load %arg13[%71, %c0_43] : memref<64x16xf32, #tpu.memory_space<vmem>>, vector<8x16xf32>
    %73 = arith.index_cast %64 : i32 to index
    %c0_44 = arith.constant 0 : index
    %74 = vector.load %arg14[%73, %c0_44] : memref<128x16xf32, #tpu.memory_space<vmem>>, vector<16x16xf32>
    %cst_45 = arith.constant dense<0.000000e+00> : vector<8x16xf32>
    %75 = tpu.matmul %70, %68, %cst_45 {dimension_numbers = #tpu.dot_dimension_numbers<[1], [1], [0], [0], [0, 0, 1, 0], [], []>} : vector<8x32xf32>, vector<16x32xf32>, vector<8x16xf32> -> vector<8x16xf32>
    %cst_46 = arith.constant dense<0.000000e+00> : vector<8x16xf32>
    %76 = tpu.matmul %75, %74, %cst_46 {dimension_numbers = #tpu.dot_dimension_numbers<[1], [0], [0], [1], [0, 0, 1, 1], [], []>} : vector<8x16xf32>, vector<16x16xf32>, vector<8x16xf32> -> vector<8x16xf32>
    %cst_47 = arith.constant dense<0.000000e+00> : vector<16x16xf32>
    %77 = tpu.matmul %75, %72, %cst_47 {dimension_numbers = #tpu.dot_dimension_numbers<[0], [0], [1], [1], [0, 1, 1, 1], [], []>} : vector<8x16xf32>, vector<8x16xf32>, vector<16x16xf32> -> vector<16x16xf32>
    %78 = arith.addf %74, %77 : vector<16x16xf32>
    %79 = math.tanh %78 : vector<16x16xf32>
    %80 = arith.addf %72, %76 : vector<8x16xf32>
    %81 = math.tanh %80 : vector<8x16xf32>
    %cst_48 = arith.constant dense<0.000000e+00> : vector<1x16xf32>
    %82 = tpu.matmul %11, %79, %cst_48 {dimension_numbers = #tpu.dot_dimension_numbers<[1], [1], [0], [0], [0, 0, 1, 0], [], []>} : vector<1x16xf32>, vector<16x16xf32>, vector<1x16xf32> -> vector<1x16xf32>
    %cst_49 = arith.constant dense<0.000000e+00> : vector<1x8xf32>
    %83 = tpu.matmul %12, %81, %cst_49 {dimension_numbers = #tpu.dot_dimension_numbers<[1], [1], [0], [0], [0, 0, 1, 0], [], []>} : vector<1x16xf32>, vector<8x16xf32>, vector<1x8xf32> -> vector<1x8xf32>
    %cst_50 = arith.constant dense<0xFF800000> : vector<1xf32>
    %84 = vector.multi_reduction <maximumf>, %82, %cst_50 [1] : vector<1x16xf32> to vector<1xf32>
    %85 = vector.shape_cast %84 : vector<1xf32> to vector<1x1xf32>
    %86 = vector.broadcast %85 : vector<1x1xf32> to vector<1x16xf32>
    %87 = arith.subf %82, %86 : vector<1x16xf32>
    %88 = math.exp %87 : vector<1x16xf32>
    %cst_51 = arith.constant dense<0.000000e+00> : vector<1xf32>
    %89 = vector.multi_reduction <add>, %88, %cst_51 [1] : vector<1x16xf32> to vector<1xf32>
    %90 = vector.shape_cast %89 : vector<1xf32> to vector<1x1xf32>
    %91 = tpu.reciprocal %90 {approx = true} : vector<1x1xf32> -> vector<1x1xf32>
    %92 = vector.broadcast %91 : vector<1x1xf32> to vector<1x16xf32>
    %93 = arith.mulf %88, %92 : vector<1x16xf32>
    %cst_52 = arith.constant dense<0xFF800000> : vector<1xf32>
    %94 = vector.multi_reduction <maximumf>, %83, %cst_52 [1] : vector<1x8xf32> to vector<1xf32>
    %95 = vector.shape_cast %94 : vector<1xf32> to vector<1x1xf32>
    %96 = vector.broadcast %95 : vector<1x1xf32> to vector<1x8xf32>
    %97 = arith.subf %83, %96 : vector<1x8xf32>
    %98 = math.exp %97 : vector<1x8xf32>
    %cst_53 = arith.constant dense<0.000000e+00> : vector<1xf32>
    %99 = vector.multi_reduction <add>, %98, %cst_53 [1] : vector<1x8xf32> to vector<1xf32>
    %100 = vector.shape_cast %99 : vector<1xf32> to vector<1x1xf32>
    %101 = tpu.reciprocal %100 {approx = true} : vector<1x1xf32> -> vector<1x1xf32>
    %102 = vector.broadcast %101 : vector<1x1xf32> to vector<1x8xf32>
    %103 = arith.mulf %98, %102 : vector<1x8xf32>
    %cst_54 = arith.constant dense<0.000000e+00> : vector<1x32xf32>
    %104 = tpu.matmul %93, %68, %cst_54 {dimension_numbers = #tpu.dot_dimension_numbers<[1], [0], [0], [1], [0, 0, 1, 1], [], []>} : vector<1x16xf32>, vector<16x32xf32>, vector<1x32xf32> -> vector<1x32xf32>
    %cst_55 = arith.constant dense<0.000000e+00> : vector<1x32xf32>
    %105 = tpu.matmul %103, %66, %cst_55 {dimension_numbers = #tpu.dot_dimension_numbers<[1], [0], [0], [1], [0, 0, 1, 1], [], []>} : vector<1x8xf32>, vector<8x32xf32>, vector<1x32xf32> -> vector<1x32xf32>
    %106 = arith.addf %104, %105 : vector<1x32xf32>
    %107 = arith.index_cast %c1_i32 : i32 to index
    %c0_56 = arith.constant 0 : index
    %108 = vector.load %arg15[%107, %c0_56] : memref<8x32xf32, #tpu.memory_space<vmem>>, vector<1x32xf32>
    tpu.vector_store %arg15[%107, %c0_56], %106 {strides = array<i32>} : memref<8x32xf32, #tpu.memory_space<vmem>>, vector<1x32xf32>,
    %c2_i32 = arith.constant 2 : i32
    %c8_i32_57 = arith.constant 8 : i32
    %109 = arith.muli %c2_i32, %c8_i32_57 : i32
    %110 = tpu.assume_multiple %109, 8 : i32
    %c16_i32_58 = arith.constant 16 : i32
    %111 = arith.muli %c2_i32, %c16_i32_58 : i32
    %112 = tpu.assume_multiple %111, 8 : i32
    %113 = arith.index_cast %110 : i32 to index
    %c0_59 = arith.constant 0 : index
    %114 = vector.load %arg1[%113, %c0_59] : memref<64x32xf32, #tpu.memory_space<vmem>>, vector<8x32xf32>
    %115 = arith.index_cast %112 : i32 to index
    %c0_60 = arith.constant 0 : index
    %116 = vector.load %arg2[%115, %c0_60] : memref<128x32xf32, #tpu.memory_space<vmem>>, vector<16x32xf32>
    %117 = arith.index_cast %110 : i32 to index
    %c0_61 = arith.constant 0 : index
    %118 = vector.load %arg12[%117, %c0_61] : memref<64x32xf32, #tpu.memory_space<vmem>>, vector<8x32xf32>
    %119 = arith.index_cast %110 : i32 to index
    %c0_62 = arith.constant 0 : index
    %120 = vector.load %arg13[%119, %c0_62] : memref<64x16xf32, #tpu.memory_space<vmem>>, vector<8x16xf32>
    %121 = arith.index_cast %112 : i32 to index
    %c0_63 = arith.constant 0 : index
    %122 = vector.load %arg14[%121, %c0_63] : memref<128x16xf32, #tpu.memory_space<vmem>>, vector<16x16xf32>
    %cst_64 = arith.constant dense<0.000000e+00> : vector<8x16xf32>
    %123 = tpu.matmul %118, %116, %cst_64 {dimension_numbers = #tpu.dot_dimension_numbers<[1], [1], [0], [0], [0, 0, 1, 0], [], []>} : vector<8x32xf32>, vector<16x32xf32>, vector<8x16xf32> -> vector<8x16xf32>
    %cst_65 = arith.constant dense<0.000000e+00> : vector<8x16xf32>
    %124 = tpu.matmul %123, %122, %cst_65 {dimension_numbers = #tpu.dot_dimension_numbers<[1], [0], [0], [1], [0, 0, 1, 1], [], []>} : vector<8x16xf32>, vector<16x16xf32>, vector<8x16xf32> -> vector<8x16xf32>
    %cst_66 = arith.constant dense<0.000000e+00> : vector<16x16xf32>
    %125 = tpu.matmul %123, %120, %cst_66 {dimension_numbers = #tpu.dot_dimension_numbers<[0], [0], [1], [1], [0, 1, 1, 1], [], []>} : vector<8x16xf32>, vector<8x16xf32>, vector<16x16xf32> -> vector<16x16xf32>
    %126 = arith.addf %122, %125 : vector<16x16xf32>
    %127 = math.tanh %126 : vector<16x16xf32>
    %128 = arith.addf %120, %124 : vector<8x16xf32>
    %129 = math.tanh %128 : vector<8x16xf32>
    %cst_67 = arith.constant dense<0.000000e+00> : vector<1x16xf32>
    %130 = tpu.matmul %11, %127, %cst_67 {dimension_numbers = #tpu.dot_dimension_numbers<[1], [1], [0], [0], [0, 0, 1, 0], [], []>} : vector<1x16xf32>, vector<16x16xf32>, vector<1x16xf32> -> vector<1x16xf32>
    %cst_68 = arith.constant dense<0.000000e+00> : vector<1x8xf32>
    %131 = tpu.matmul %12, %129, %cst_68 {dimension_numbers = #tpu.dot_dimension_numbers<[1], [1], [0], [0], [0, 0, 1, 0], [], []>} : vector<1x16xf32>, vector<8x16xf32>, vector<1x8xf32> -> vector<1x8xf32>
    %cst_69 = arith.constant dense<0xFF800000> : vector<1xf32>
    %132 = vector.multi_reduction <maximumf>, %130, %cst_69 [1] : vector<1x16xf32> to vector<1xf32>
    %133 = vector.shape_cast %132 : vector<1xf32> to vector<1x1xf32>
    %134 = vector.broadcast %133 : vector<1x1xf32> to vector<1x16xf32>
    %135 = arith.subf %130, %134 : vector<1x16xf32>
    %136 = math.exp %135 : vector<1x16xf32>
    %cst_70 = arith.constant dense<0.000000e+00> : vector<1xf32>
    %137 = vector.multi_reduction <add>, %136, %cst_70 [1] : vector<1x16xf32> to vector<1xf32>
    %138 = vector.shape_cast %137 : vector<1xf32> to vector<1x1xf32>
    %139 = tpu.reciprocal %138 {approx = true} : vector<1x1xf32> -> vector<1x1xf32>
    %140 = vector.broadcast %139 : vector<1x1xf32> to vector<1x16xf32>
    %141 = arith.mulf %136, %140 : vector<1x16xf32>
    %cst_71 = arith.constant dense<0xFF800000> : vector<1xf32>
    %142 = vector.multi_reduction <maximumf>, %131, %cst_71 [1] : vector<1x8xf32> to vector<1xf32>
    %143 = vector.shape_cast %142 : vector<1xf32> to vector<1x1xf32>
    %144 = vector.broadcast %143 : vector<1x1xf32> to vector<1x8xf32>
    %145 = arith.subf %131, %144 : vector<1x8xf32>
    %146 = math.exp %145 : vector<1x8xf32>
    %cst_72 = arith.constant dense<0.000000e+00> : vector<1xf32>
    %147 = vector.multi_reduction <add>, %146, %cst_72 [1] : vector<1x8xf32> to vector<1xf32>
    %148 = vector.shape_cast %147 : vector<1xf32> to vector<1x1xf32>
    %149 = tpu.reciprocal %148 {approx = true} : vector<1x1xf32> -> vector<1x1xf32>
    %150 = vector.broadcast %149 : vector<1x1xf32> to vector<1x8xf32>
    %151 = arith.mulf %146, %150 : vector<1x8xf32>
    %cst_73 = arith.constant dense<0.000000e+00> : vector<1x32xf32>
    %152 = tpu.matmul %141, %116, %cst_73 {dimension_numbers = #tpu.dot_dimension_numbers<[1], [0], [0], [1], [0, 0, 1, 1], [], []>} : vector<1x16xf32>, vector<16x32xf32>, vector<1x32xf32> -> vector<1x32xf32>
    %cst_74 = arith.constant dense<0.000000e+00> : vector<1x32xf32>
    %153 = tpu.matmul %151, %114, %cst_74 {dimension_numbers = #tpu.dot_dimension_numbers<[1], [0], [0], [1], [0, 0, 1, 1], [], []>} : vector<1x8xf32>, vector<8x32xf32>, vector<1x32xf32> -> vector<1x32xf32>
    %154 = arith.addf %152, %153 : vector<1x32xf32>
    %155 = arith.index_cast %c2_i32 : i32 to index
    %c0_75 = arith.constant 0 : index
    %156 = vector.load %arg15[%155, %c0_75] : memref<8x32xf32, #tpu.memory_space<vmem>>, vector<1x32xf32>
    tpu.vector_store %arg15[%155, %c0_75], %154 {strides = array<i32>} : memref<8x32xf32, #tpu.memory_space<vmem>>, vector<1x32xf32>,
    %c3_i32 = arith.constant 3 : i32
    %c8_i32_76 = arith.constant 8 : i32
    %157 = arith.muli %c3_i32, %c8_i32_76 : i32
    %158 = tpu.assume_multiple %157, 8 : i32
    %c16_i32_77 = arith.constant 16 : i32
    %159 = arith.muli %c3_i32, %c16_i32_77 : i32
    %160 = tpu.assume_multiple %159, 8 : i32
    %161 = arith.index_cast %158 : i32 to index
    %c0_78 = arith.constant 0 : index
    %162 = vector.load %arg1[%161, %c0_78] : memref<64x32xf32, #tpu.memory_space<vmem>>, vector<8x32xf32>
    %163 = arith.index_cast %160 : i32 to index
    %c0_79 = arith.constant 0 : index
    %164 = vector.load %arg2[%163, %c0_79] : memref<128x32xf32, #tpu.memory_space<vmem>>, vector<16x32xf32>
    %165 = arith.index_cast %158 : i32 to index
    %c0_80 = arith.constant 0 : index
    %166 = vector.load %arg12[%165, %c0_80] : memref<64x32xf32, #tpu.memory_space<vmem>>, vector<8x32xf32>
    %167 = arith.index_cast %158 : i32 to index
    %c0_81 = arith.constant 0 : index
    %168 = vector.load %arg13[%167, %c0_81] : memref<64x16xf32, #tpu.memory_space<vmem>>, vector<8x16xf32>
    %169 = arith.index_cast %160 : i32 to index
    %c0_82 = arith.constant 0 : index
    %170 = vector.load %arg14[%169, %c0_82] : memref<128x16xf32, #tpu.memory_space<vmem>>, vector<16x16xf32>
    %cst_83 = arith.constant dense<0.000000e+00> : vector<8x16xf32>
    %171 = tpu.matmul %166, %164, %cst_83 {dimension_numbers = #tpu.dot_dimension_numbers<[1], [1], [0], [0], [0, 0, 1, 0], [], []>} : vector<8x32xf32>, vector<16x32xf32>, vector<8x16xf32> -> vector<8x16xf32>
    %cst_84 = arith.constant dense<0.000000e+00> : vector<8x16xf32>
    %172 = tpu.matmul %171, %170, %cst_84 {dimension_numbers = #tpu.dot_dimension_numbers<[1], [0], [0], [1], [0, 0, 1, 1], [], []>} : vector<8x16xf32>, vector<16x16xf32>, vector<8x16xf32> -> vector<8x16xf32>
    %cst_85 = arith.constant dense<0.000000e+00> : vector<16x16xf32>
    %173 = tpu.matmul %171, %168, %cst_85 {dimension_numbers = #tpu.dot_dimension_numbers<[0], [0], [1], [1], [0, 1, 1, 1], [], []>} : vector<8x16xf32>, vector<8x16xf32>, vector<16x16xf32> -> vector<16x16xf32>
    %174 = arith.addf %170, %173 : vector<16x16xf32>
    %175 = math.tanh %174 : vector<16x16xf32>
    %176 = arith.addf %168, %172 : vector<8x16xf32>
    %177 = math.tanh %176 : vector<8x16xf32>
    %cst_86 = arith.constant dense<0.000000e+00> : vector<1x16xf32>
    %178 = tpu.matmul %11, %175, %cst_86 {dimension_numbers = #tpu.dot_dimension_numbers<[1], [1], [0], [0], [0, 0, 1, 0], [], []>} : vector<1x16xf32>, vector<16x16xf32>, vector<1x16xf32> -> vector<1x16xf32>
    %cst_87 = arith.constant dense<0.000000e+00> : vector<1x8xf32>
    %179 = tpu.matmul %12, %177, %cst_87 {dimension_numbers = #tpu.dot_dimension_numbers<[1], [1], [0], [0], [0, 0, 1, 0], [], []>} : vector<1x16xf32>, vector<8x16xf32>, vector<1x8xf32> -> vector<1x8xf32>
    %cst_88 = arith.constant dense<0xFF800000> : vector<1xf32>
    %180 = vector.multi_reduction <maximumf>, %178, %cst_88 [1] : vector<1x16xf32> to vector<1xf32>
    %181 = vector.shape_cast %180 : vector<1xf32> to vector<1x1xf32>
    %182 = vector.broadcast %181 : vector<1x1xf32> to vector<1x16xf32>
    %183 = arith.subf %178, %182 : vector<1x16xf32>
    %184 = math.exp %183 : vector<1x16xf32>
    %cst_89 = arith.constant dense<0.000000e+00> : vector<1xf32>
    %185 = vector.multi_reduction <add>, %184, %cst_89 [1] : vector<1x16xf32> to vector<1xf32>
    %186 = vector.shape_cast %185 : vector<1xf32> to vector<1x1xf32>
    %187 = tpu.reciprocal %186 {approx = true} : vector<1x1xf32> -> vector<1x1xf32>
    %188 = vector.broadcast %187 : vector<1x1xf32> to vector<1x16xf32>
    %189 = arith.mulf %184, %188 : vector<1x16xf32>
    %cst_90 = arith.constant dense<0xFF800000> : vector<1xf32>
    %190 = vector.multi_reduction <maximumf>, %179, %cst_90 [1] : vector<1x8xf32> to vector<1xf32>
    %191 = vector.shape_cast %190 : vector<1xf32> to vector<1x1xf32>
    %192 = vector.broadcast %191 : vector<1x1xf32> to vector<1x8xf32>
    %193 = arith.subf %179, %192 : vector<1x8xf32>
    %194 = math.exp %193 : vector<1x8xf32>
    %cst_91 = arith.constant dense<0.000000e+00> : vector<1xf32>
    %195 = vector.multi_reduction <add>, %194, %cst_91 [1] : vector<1x8xf32> to vector<1xf32>
    %196 = vector.shape_cast %195 : vector<1xf32> to vector<1x1xf32>
    %197 = tpu.reciprocal %196 {approx = true} : vector<1x1xf32> -> vector<1x1xf32>
    %198 = vector.broadcast %197 : vector<1x1xf32> to vector<1x8xf32>
    %199 = arith.mulf %194, %198 : vector<1x8xf32>
    %cst_92 = arith.constant dense<0.000000e+00> : vector<1x32xf32>
    %200 = tpu.matmul %189, %164, %cst_92 {dimension_numbers = #tpu.dot_dimension_numbers<[1], [0], [0], [1], [0, 0, 1, 1], [], []>} : vector<1x16xf32>, vector<16x32xf32>, vector<1x32xf32> -> vector<1x32xf32>
    %cst_93 = arith.constant dense<0.000000e+00> : vector<1x32xf32>
    %201 = tpu.matmul %199, %162, %cst_93 {dimension_numbers = #tpu.dot_dimension_numbers<[1], [0], [0], [1], [0, 0, 1, 1], [], []>} : vector<1x8xf32>, vector<8x32xf32>, vector<1x32xf32> -> vector<1x32xf32>
    %202 = arith.addf %200, %201 : vector<1x32xf32>
    %203 = arith.index_cast %c3_i32 : i32 to index
    %c0_94 = arith.constant 0 : index
    %204 = vector.load %arg15[%203, %c0_94] : memref<8x32xf32, #tpu.memory_space<vmem>>, vector<1x32xf32>
    tpu.vector_store %arg15[%203, %c0_94], %202 {strides = array<i32>} : memref<8x32xf32, #tpu.memory_space<vmem>>, vector<1x32xf32>,
    %c4_i32 = arith.constant 4 : i32
    %c8_i32_95 = arith.constant 8 : i32
    %205 = arith.muli %c4_i32, %c8_i32_95 : i32
    %206 = tpu.assume_multiple %205, 8 : i32
    %c16_i32_96 = arith.constant 16 : i32
    %207 = arith.muli %c4_i32, %c16_i32_96 : i32
    %208 = tpu.assume_multiple %207, 8 : i32
    %209 = arith.index_cast %206 : i32 to index
    %c0_97 = arith.constant 0 : index
    %210 = vector.load %arg1[%209, %c0_97] : memref<64x32xf32, #tpu.memory_space<vmem>>, vector<8x32xf32>
    %211 = arith.index_cast %208 : i32 to index
    %c0_98 = arith.constant 0 : index
    %212 = vector.load %arg2[%211, %c0_98] : memref<128x32xf32, #tpu.memory_space<vmem>>, vector<16x32xf32>
    %213 = arith.index_cast %206 : i32 to index
    %c0_99 = arith.constant 0 : index
    %214 = vector.load %arg12[%213, %c0_99] : memref<64x32xf32, #tpu.memory_space<vmem>>, vector<8x32xf32>
    %215 = arith.index_cast %206 : i32 to index
    %c0_100 = arith.constant 0 : index
    %216 = vector.load %arg13[%215, %c0_100] : memref<64x16xf32, #tpu.memory_space<vmem>>, vector<8x16xf32>
    %217 = arith.index_cast %208 : i32 to index
    %c0_101 = arith.constant 0 : index
    %218 = vector.load %arg14[%217, %c0_101] : memref<128x16xf32, #tpu.memory_space<vmem>>, vector<16x16xf32>
    %cst_102 = arith.constant dense<0.000000e+00> : vector<8x16xf32>
    %219 = tpu.matmul %214, %212, %cst_102 {dimension_numbers = #tpu.dot_dimension_numbers<[1], [1], [0], [0], [0, 0, 1, 0], [], []>} : vector<8x32xf32>, vector<16x32xf32>, vector<8x16xf32> -> vector<8x16xf32>
    %cst_103 = arith.constant dense<0.000000e+00> : vector<8x16xf32>
    %220 = tpu.matmul %219, %218, %cst_103 {dimension_numbers = #tpu.dot_dimension_numbers<[1], [0], [0], [1], [0, 0, 1, 1], [], []>} : vector<8x16xf32>, vector<16x16xf32>, vector<8x16xf32> -> vector<8x16xf32>
    %cst_104 = arith.constant dense<0.000000e+00> : vector<16x16xf32>
    %221 = tpu.matmul %219, %216, %cst_104 {dimension_numbers = #tpu.dot_dimension_numbers<[0], [0], [1], [1], [0, 1, 1, 1], [], []>} : vector<8x16xf32>, vector<8x16xf32>, vector<16x16xf32> -> vector<16x16xf32>
    %222 = arith.addf %218, %221 : vector<16x16xf32>
    %223 = math.tanh %222 : vector<16x16xf32>
    %224 = arith.addf %216, %220 : vector<8x16xf32>
    %225 = math.tanh %224 : vector<8x16xf32>
    %cst_105 = arith.constant dense<0.000000e+00> : vector<1x16xf32>
    %226 = tpu.matmul %11, %223, %cst_105 {dimension_numbers = #tpu.dot_dimension_numbers<[1], [1], [0], [0], [0, 0, 1, 0], [], []>} : vector<1x16xf32>, vector<16x16xf32>, vector<1x16xf32> -> vector<1x16xf32>
    %cst_106 = arith.constant dense<0.000000e+00> : vector<1x8xf32>
    %227 = tpu.matmul %12, %225, %cst_106 {dimension_numbers = #tpu.dot_dimension_numbers<[1], [1], [0], [0], [0, 0, 1, 0], [], []>} : vector<1x16xf32>, vector<8x16xf32>, vector<1x8xf32> -> vector<1x8xf32>
    %cst_107 = arith.constant dense<0xFF800000> : vector<1xf32>
    %228 = vector.multi_reduction <maximumf>, %226, %cst_107 [1] : vector<1x16xf32> to vector<1xf32>
    %229 = vector.shape_cast %228 : vector<1xf32> to vector<1x1xf32>
    %230 = vector.broadcast %229 : vector<1x1xf32> to vector<1x16xf32>
    %231 = arith.subf %226, %230 : vector<1x16xf32>
    %232 = math.exp %231 : vector<1x16xf32>
    %cst_108 = arith.constant dense<0.000000e+00> : vector<1xf32>
    %233 = vector.multi_reduction <add>, %232, %cst_108 [1] : vector<1x16xf32> to vector<1xf32>
    %234 = vector.shape_cast %233 : vector<1xf32> to vector<1x1xf32>
    %235 = tpu.reciprocal %234 {approx = true} : vector<1x1xf32> -> vector<1x1xf32>
    %236 = vector.broadcast %235 : vector<1x1xf32> to vector<1x16xf32>
    %237 = arith.mulf %232, %236 : vector<1x16xf32>
    %cst_109 = arith.constant dense<0xFF800000> : vector<1xf32>
    %238 = vector.multi_reduction <maximumf>, %227, %cst_109 [1] : vector<1x8xf32> to vector<1xf32>
    %239 = vector.shape_cast %238 : vector<1xf32> to vector<1x1xf32>
    %240 = vector.broadcast %239 : vector<1x1xf32> to vector<1x8xf32>
    %241 = arith.subf %227, %240 : vector<1x8xf32>
    %242 = math.exp %241 : vector<1x8xf32>
    %cst_110 = arith.constant dense<0.000000e+00> : vector<1xf32>
    %243 = vector.multi_reduction <add>, %242, %cst_110 [1] : vector<1x8xf32> to vector<1xf32>
    %244 = vector.shape_cast %243 : vector<1xf32> to vector<1x1xf32>
    %245 = tpu.reciprocal %244 {approx = true} : vector<1x1xf32> -> vector<1x1xf32>
    %246 = vector.broadcast %245 : vector<1x1xf32> to vector<1x8xf32>
    %247 = arith.mulf %242, %246 : vector<1x8xf32>
    %cst_111 = arith.constant dense<0.000000e+00> : vector<1x32xf32>
    %248 = tpu.matmul %237, %212, %cst_111 {dimension_numbers = #tpu.dot_dimension_numbers<[1], [0], [0], [1], [0, 0, 1, 1], [], []>} : vector<1x16xf32>, vector<16x32xf32>, vector<1x32xf32> -> vector<1x32xf32>
    %cst_112 = arith.constant dense<0.000000e+00> : vector<1x32xf32>
    %249 = tpu.matmul %247, %210, %cst_112 {dimension_numbers = #tpu.dot_dimension_numbers<[1], [0], [0], [1], [0, 0, 1, 1], [], []>} : vector<1x8xf32>, vector<8x32xf32>, vector<1x32xf32> -> vector<1x32xf32>
    %250 = arith.addf %248, %249 : vector<1x32xf32>
    %251 = arith.index_cast %c4_i32 : i32 to index
    %c0_113 = arith.constant 0 : index
    %252 = vector.load %arg15[%251, %c0_113] : memref<8x32xf32, #tpu.memory_space<vmem>>, vector<1x32xf32>
    tpu.vector_store %arg15[%251, %c0_113], %250 {strides = array<i32>} : memref<8x32xf32, #tpu.memory_space<vmem>>, vector<1x32xf32>,
    %c5_i32 = arith.constant 5 : i32
    %c8_i32_114 = arith.constant 8 : i32
    %253 = arith.muli %c5_i32, %c8_i32_114 : i32
    %254 = tpu.assume_multiple %253, 8 : i32
    %c16_i32_115 = arith.constant 16 : i32
    %255 = arith.muli %c5_i32, %c16_i32_115 : i32
    %256 = tpu.assume_multiple %255, 8 : i32
    %257 = arith.index_cast %254 : i32 to index
    %c0_116 = arith.constant 0 : index
    %258 = vector.load %arg1[%257, %c0_116] : memref<64x32xf32, #tpu.memory_space<vmem>>, vector<8x32xf32>
    %259 = arith.index_cast %256 : i32 to index
    %c0_117 = arith.constant 0 : index
    %260 = vector.load %arg2[%259, %c0_117] : memref<128x32xf32, #tpu.memory_space<vmem>>, vector<16x32xf32>
    %261 = arith.index_cast %254 : i32 to index
    %c0_118 = arith.constant 0 : index
    %262 = vector.load %arg12[%261, %c0_118] : memref<64x32xf32, #tpu.memory_space<vmem>>, vector<8x32xf32>
    %263 = arith.index_cast %254 : i32 to index
    %c0_119 = arith.constant 0 : index
    %264 = vector.load %arg13[%263, %c0_119] : memref<64x16xf32, #tpu.memory_space<vmem>>, vector<8x16xf32>
    %265 = arith.index_cast %256 : i32 to index
    %c0_120 = arith.constant 0 : index
    %266 = vector.load %arg14[%265, %c0_120] : memref<128x16xf32, #tpu.memory_space<vmem>>, vector<16x16xf32>
    %cst_121 = arith.constant dense<0.000000e+00> : vector<8x16xf32>
    %267 = tpu.matmul %262, %260, %cst_121 {dimension_numbers = #tpu.dot_dimension_numbers<[1], [1], [0], [0], [0, 0, 1, 0], [], []>} : vector<8x32xf32>, vector<16x32xf32>, vector<8x16xf32> -> vector<8x16xf32>
    %cst_122 = arith.constant dense<0.000000e+00> : vector<8x16xf32>
    %268 = tpu.matmul %267, %266, %cst_122 {dimension_numbers = #tpu.dot_dimension_numbers<[1], [0], [0], [1], [0, 0, 1, 1], [], []>} : vector<8x16xf32>, vector<16x16xf32>, vector<8x16xf32> -> vector<8x16xf32>
    %cst_123 = arith.constant dense<0.000000e+00> : vector<16x16xf32>
    %269 = tpu.matmul %267, %264, %cst_123 {dimension_numbers = #tpu.dot_dimension_numbers<[0], [0], [1], [1], [0, 1, 1, 1], [], []>} : vector<8x16xf32>, vector<8x16xf32>, vector<16x16xf32> -> vector<16x16xf32>
    %270 = arith.addf %266, %269 : vector<16x16xf32>
    %271 = math.tanh %270 : vector<16x16xf32>
    %272 = arith.addf %264, %268 : vector<8x16xf32>
    %273 = math.tanh %272 : vector<8x16xf32>
    %cst_124 = arith.constant dense<0.000000e+00> : vector<1x16xf32>
    %274 = tpu.matmul %11, %271, %cst_124 {dimension_numbers = #tpu.dot_dimension_numbers<[1], [1], [0], [0], [0, 0, 1, 0], [], []>} : vector<1x16xf32>, vector<16x16xf32>, vector<1x16xf32> -> vector<1x16xf32>
    %cst_125 = arith.constant dense<0.000000e+00> : vector<1x8xf32>
    %275 = tpu.matmul %12, %273, %cst_125 {dimension_numbers = #tpu.dot_dimension_numbers<[1], [1], [0], [0], [0, 0, 1, 0], [], []>} : vector<1x16xf32>, vector<8x16xf32>, vector<1x8xf32> -> vector<1x8xf32>
    %cst_126 = arith.constant dense<0xFF800000> : vector<1xf32>
    %276 = vector.multi_reduction <maximumf>, %274, %cst_126 [1] : vector<1x16xf32> to vector<1xf32>
    %277 = vector.shape_cast %276 : vector<1xf32> to vector<1x1xf32>
    %278 = vector.broadcast %277 : vector<1x1xf32> to vector<1x16xf32>
    %279 = arith.subf %274, %278 : vector<1x16xf32>
    %280 = math.exp %279 : vector<1x16xf32>
    %cst_127 = arith.constant dense<0.000000e+00> : vector<1xf32>
    %281 = vector.multi_reduction <add>, %280, %cst_127 [1] : vector<1x16xf32> to vector<1xf32>
    %282 = vector.shape_cast %281 : vector<1xf32> to vector<1x1xf32>
    %283 = tpu.reciprocal %282 {approx = true} : vector<1x1xf32> -> vector<1x1xf32>
    %284 = vector.broadcast %283 : vector<1x1xf32> to vector<1x16xf32>
    %285 = arith.mulf %280, %284 : vector<1x16xf32>
    %cst_128 = arith.constant dense<0xFF800000> : vector<1xf32>
    %286 = vector.multi_reduction <maximumf>, %275, %cst_128 [1] : vector<1x8xf32> to vector<1xf32>
    %287 = vector.shape_cast %286 : vector<1xf32> to vector<1x1xf32>
    %288 = vector.broadcast %287 : vector<1x1xf32> to vector<1x8xf32>
    %289 = arith.subf %275, %288 : vector<1x8xf32>
    %290 = math.exp %289 : vector<1x8xf32>
    %cst_129 = arith.constant dense<0.000000e+00> : vector<1xf32>
    %291 = vector.multi_reduction <add>, %290, %cst_129 [1] : vector<1x8xf32> to vector<1xf32>
    %292 = vector.shape_cast %291 : vector<1xf32> to vector<1x1xf32>
    %293 = tpu.reciprocal %292 {approx = true} : vector<1x1xf32> -> vector<1x1xf32>
    %294 = vector.broadcast %293 : vector<1x1xf32> to vector<1x8xf32>
    %295 = arith.mulf %290, %294 : vector<1x8xf32>
    %cst_130 = arith.constant dense<0.000000e+00> : vector<1x32xf32>
    %296 = tpu.matmul %285, %260, %cst_130 {dimension_numbers = #tpu.dot_dimension_numbers<[1], [0], [0], [1], [0, 0, 1, 1], [], []>} : vector<1x16xf32>, vector<16x32xf32>, vector<1x32xf32> -> vector<1x32xf32>
    %cst_131 = arith.constant dense<0.000000e+00> : vector<1x32xf32>
    %297 = tpu.matmul %295, %258, %cst_131 {dimension_numbers = #tpu.dot_dimension_numbers<[1], [0], [0], [1], [0, 0, 1, 1], [], []>} : vector<1x8xf32>, vector<8x32xf32>, vector<1x32xf32> -> vector<1x32xf32>
    %298 = arith.addf %296, %297 : vector<1x32xf32>
    %299 = arith.index_cast %c5_i32 : i32 to index
    %c0_132 = arith.constant 0 : index
    %300 = vector.load %arg15[%299, %c0_132] : memref<8x32xf32, #tpu.memory_space<vmem>>, vector<1x32xf32>
    tpu.vector_store %arg15[%299, %c0_132], %298 {strides = array<i32>} : memref<8x32xf32, #tpu.memory_space<vmem>>, vector<1x32xf32>,
    %c6_i32 = arith.constant 6 : i32
    %c8_i32_133 = arith.constant 8 : i32
    %301 = arith.muli %c6_i32, %c8_i32_133 : i32
    %302 = tpu.assume_multiple %301, 8 : i32
    %c16_i32_134 = arith.constant 16 : i32
    %303 = arith.muli %c6_i32, %c16_i32_134 : i32
    %304 = tpu.assume_multiple %303, 8 : i32
    %305 = arith.index_cast %302 : i32 to index
    %c0_135 = arith.constant 0 : index
    %306 = vector.load %arg1[%305, %c0_135] : memref<64x32xf32, #tpu.memory_space<vmem>>, vector<8x32xf32>
    %307 = arith.index_cast %304 : i32 to index
    %c0_136 = arith.constant 0 : index
    %308 = vector.load %arg2[%307, %c0_136] : memref<128x32xf32, #tpu.memory_space<vmem>>, vector<16x32xf32>
    %309 = arith.index_cast %302 : i32 to index
    %c0_137 = arith.constant 0 : index
    %310 = vector.load %arg12[%309, %c0_137] : memref<64x32xf32, #tpu.memory_space<vmem>>, vector<8x32xf32>
    %311 = arith.index_cast %302 : i32 to index
    %c0_138 = arith.constant 0 : index
    %312 = vector.load %arg13[%311, %c0_138] : memref<64x16xf32, #tpu.memory_space<vmem>>, vector<8x16xf32>
    %313 = arith.index_cast %304 : i32 to index
    %c0_139 = arith.constant 0 : index
    %314 = vector.load %arg14[%313, %c0_139] : memref<128x16xf32, #tpu.memory_space<vmem>>, vector<16x16xf32>
    %cst_140 = arith.constant dense<0.000000e+00> : vector<8x16xf32>
    %315 = tpu.matmul %310, %308, %cst_140 {dimension_numbers = #tpu.dot_dimension_numbers<[1], [1], [0], [0], [0, 0, 1, 0], [], []>} : vector<8x32xf32>, vector<16x32xf32>, vector<8x16xf32> -> vector<8x16xf32>
    %cst_141 = arith.constant dense<0.000000e+00> : vector<8x16xf32>
    %316 = tpu.matmul %315, %314, %cst_141 {dimension_numbers = #tpu.dot_dimension_numbers<[1], [0], [0], [1], [0, 0, 1, 1], [], []>} : vector<8x16xf32>, vector<16x16xf32>, vector<8x16xf32> -> vector<8x16xf32>
    %cst_142 = arith.constant dense<0.000000e+00> : vector<16x16xf32>
    %317 = tpu.matmul %315, %312, %cst_142 {dimension_numbers = #tpu.dot_dimension_numbers<[0], [0], [1], [1], [0, 1, 1, 1], [], []>} : vector<8x16xf32>, vector<8x16xf32>, vector<16x16xf32> -> vector<16x16xf32>
    %318 = arith.addf %314, %317 : vector<16x16xf32>
    %319 = math.tanh %318 : vector<16x16xf32>
    %320 = arith.addf %312, %316 : vector<8x16xf32>
    %321 = math.tanh %320 : vector<8x16xf32>
    %cst_143 = arith.constant dense<0.000000e+00> : vector<1x16xf32>
    %322 = tpu.matmul %11, %319, %cst_143 {dimension_numbers = #tpu.dot_dimension_numbers<[1], [1], [0], [0], [0, 0, 1, 0], [], []>} : vector<1x16xf32>, vector<16x16xf32>, vector<1x16xf32> -> vector<1x16xf32>
    %cst_144 = arith.constant dense<0.000000e+00> : vector<1x8xf32>
    %323 = tpu.matmul %12, %321, %cst_144 {dimension_numbers = #tpu.dot_dimension_numbers<[1], [1], [0], [0], [0, 0, 1, 0], [], []>} : vector<1x16xf32>, vector<8x16xf32>, vector<1x8xf32> -> vector<1x8xf32>
    %cst_145 = arith.constant dense<0xFF800000> : vector<1xf32>
    %324 = vector.multi_reduction <maximumf>, %322, %cst_145 [1] : vector<1x16xf32> to vector<1xf32>
    %325 = vector.shape_cast %324 : vector<1xf32> to vector<1x1xf32>
    %326 = vector.broadcast %325 : vector<1x1xf32> to vector<1x16xf32>
    %327 = arith.subf %322, %326 : vector<1x16xf32>
    %328 = math.exp %327 : vector<1x16xf32>
    %cst_146 = arith.constant dense<0.000000e+00> : vector<1xf32>
    %329 = vector.multi_reduction <add>, %328, %cst_146 [1] : vector<1x16xf32> to vector<1xf32>
    %330 = vector.shape_cast %329 : vector<1xf32> to vector<1x1xf32>
    %331 = tpu.reciprocal %330 {approx = true} : vector<1x1xf32> -> vector<1x1xf32>
    %332 = vector.broadcast %331 : vector<1x1xf32> to vector<1x16xf32>
    %333 = arith.mulf %328, %332 : vector<1x16xf32>
    %cst_147 = arith.constant dense<0xFF800000> : vector<1xf32>
    %334 = vector.multi_reduction <maximumf>, %323, %cst_147 [1] : vector<1x8xf32> to vector<1xf32>
    %335 = vector.shape_cast %334 : vector<1xf32> to vector<1x1xf32>
    %336 = vector.broadcast %335 : vector<1x1xf32> to vector<1x8xf32>
    %337 = arith.subf %323, %336 : vector<1x8xf32>
    %338 = math.exp %337 : vector<1x8xf32>
    %cst_148 = arith.constant dense<0.000000e+00> : vector<1xf32>
    %339 = vector.multi_reduction <add>, %338, %cst_148 [1] : vector<1x8xf32> to vector<1xf32>
    %340 = vector.shape_cast %339 : vector<1xf32> to vector<1x1xf32>
    %341 = tpu.reciprocal %340 {approx = true} : vector<1x1xf32> -> vector<1x1xf32>
    %342 = vector.broadcast %341 : vector<1x1xf32> to vector<1x8xf32>
    %343 = arith.mulf %338, %342 : vector<1x8xf32>
    %cst_149 = arith.constant dense<0.000000e+00> : vector<1x32xf32>
    %344 = tpu.matmul %333, %308, %cst_149 {dimension_numbers = #tpu.dot_dimension_numbers<[1], [0], [0], [1], [0, 0, 1, 1], [], []>} : vector<1x16xf32>, vector<16x32xf32>, vector<1x32xf32> -> vector<1x32xf32>
    %cst_150 = arith.constant dense<0.000000e+00> : vector<1x32xf32>
    %345 = tpu.matmul %343, %306, %cst_150 {dimension_numbers = #tpu.dot_dimension_numbers<[1], [0], [0], [1], [0, 0, 1, 1], [], []>} : vector<1x8xf32>, vector<8x32xf32>, vector<1x32xf32> -> vector<1x32xf32>
    %346 = arith.addf %344, %345 : vector<1x32xf32>
    %347 = arith.index_cast %c6_i32 : i32 to index
    %c0_151 = arith.constant 0 : index
    %348 = vector.load %arg15[%347, %c0_151] : memref<8x32xf32, #tpu.memory_space<vmem>>, vector<1x32xf32>
    tpu.vector_store %arg15[%347, %c0_151], %346 {strides = array<i32>} : memref<8x32xf32, #tpu.memory_space<vmem>>, vector<1x32xf32>,
    %c7_i32 = arith.constant 7 : i32
    %c8_i32_152 = arith.constant 8 : i32
    %349 = arith.muli %c7_i32, %c8_i32_152 : i32
    %350 = tpu.assume_multiple %349, 8 : i32
    %c16_i32_153 = arith.constant 16 : i32
    %351 = arith.muli %c7_i32, %c16_i32_153 : i32
    %352 = tpu.assume_multiple %351, 8 : i32
    %353 = arith.index_cast %350 : i32 to index
    %c0_154 = arith.constant 0 : index
    %354 = vector.load %arg1[%353, %c0_154] : memref<64x32xf32, #tpu.memory_space<vmem>>, vector<8x32xf32>
    %355 = arith.index_cast %352 : i32 to index
    %c0_155 = arith.constant 0 : index
    %356 = vector.load %arg2[%355, %c0_155] : memref<128x32xf32, #tpu.memory_space<vmem>>, vector<16x32xf32>
    %357 = arith.index_cast %350 : i32 to index
    %c0_156 = arith.constant 0 : index
    %358 = vector.load %arg12[%357, %c0_156] : memref<64x32xf32, #tpu.memory_space<vmem>>, vector<8x32xf32>
    %359 = arith.index_cast %350 : i32 to index
    %c0_157 = arith.constant 0 : index
    %360 = vector.load %arg13[%359, %c0_157] : memref<64x16xf32, #tpu.memory_space<vmem>>, vector<8x16xf32>
    %361 = arith.index_cast %352 : i32 to index
    %c0_158 = arith.constant 0 : index
    %362 = vector.load %arg14[%361, %c0_158] : memref<128x16xf32, #tpu.memory_space<vmem>>, vector<16x16xf32>
    %cst_159 = arith.constant dense<0.000000e+00> : vector<8x16xf32>
    %363 = tpu.matmul %358, %356, %cst_159 {dimension_numbers = #tpu.dot_dimension_numbers<[1], [1], [0], [0], [0, 0, 1, 0], [], []>} : vector<8x32xf32>, vector<16x32xf32>, vector<8x16xf32> -> vector<8x16xf32>
    %cst_160 = arith.constant dense<0.000000e+00> : vector<8x16xf32>
    %364 = tpu.matmul %363, %362, %cst_160 {dimension_numbers = #tpu.dot_dimension_numbers<[1], [0], [0], [1], [0, 0, 1, 1], [], []>} : vector<8x16xf32>, vector<16x16xf32>, vector<8x16xf32> -> vector<8x16xf32>
    %cst_161 = arith.constant dense<0.000000e+00> : vector<16x16xf32>
    %365 = tpu.matmul %363, %360, %cst_161 {dimension_numbers = #tpu.dot_dimension_numbers<[0], [0], [1], [1], [0, 1, 1, 1], [], []>} : vector<8x16xf32>, vector<8x16xf32>, vector<16x16xf32> -> vector<16x16xf32>
    %366 = arith.addf %362, %365 : vector<16x16xf32>
    %367 = math.tanh %366 : vector<16x16xf32>
    %368 = arith.addf %360, %364 : vector<8x16xf32>
    %369 = math.tanh %368 : vector<8x16xf32>
    %cst_162 = arith.constant dense<0.000000e+00> : vector<1x16xf32>
    %370 = tpu.matmul %11, %367, %cst_162 {dimension_numbers = #tpu.dot_dimension_numbers<[1], [1], [0], [0], [0, 0, 1, 0], [], []>} : vector<1x16xf32>, vector<16x16xf32>, vector<1x16xf32> -> vector<1x16xf32>
    %cst_163 = arith.constant dense<0.000000e+00> : vector<1x8xf32>
    %371 = tpu.matmul %12, %369, %cst_163 {dimension_numbers = #tpu.dot_dimension_numbers<[1], [1], [0], [0], [0, 0, 1, 0], [], []>} : vector<1x16xf32>, vector<8x16xf32>, vector<1x8xf32> -> vector<1x8xf32>
    %cst_164 = arith.constant dense<0xFF800000> : vector<1xf32>
    %372 = vector.multi_reduction <maximumf>, %370, %cst_164 [1] : vector<1x16xf32> to vector<1xf32>
    %373 = vector.shape_cast %372 : vector<1xf32> to vector<1x1xf32>
    %374 = vector.broadcast %373 : vector<1x1xf32> to vector<1x16xf32>
    %375 = arith.subf %370, %374 : vector<1x16xf32>
    %376 = math.exp %375 : vector<1x16xf32>
    %cst_165 = arith.constant dense<0.000000e+00> : vector<1xf32>
    %377 = vector.multi_reduction <add>, %376, %cst_165 [1] : vector<1x16xf32> to vector<1xf32>
    %378 = vector.shape_cast %377 : vector<1xf32> to vector<1x1xf32>
    %379 = tpu.reciprocal %378 {approx = true} : vector<1x1xf32> -> vector<1x1xf32>
    %380 = vector.broadcast %379 : vector<1x1xf32> to vector<1x16xf32>
    %381 = arith.mulf %376, %380 : vector<1x16xf32>
    %cst_166 = arith.constant dense<0xFF800000> : vector<1xf32>
    %382 = vector.multi_reduction <maximumf>, %371, %cst_166 [1] : vector<1x8xf32> to vector<1xf32>
    %383 = vector.shape_cast %382 : vector<1xf32> to vector<1x1xf32>
    %384 = vector.broadcast %383 : vector<1x1xf32> to vector<1x8xf32>
    %385 = arith.subf %371, %384 : vector<1x8xf32>
    %386 = math.exp %385 : vector<1x8xf32>
    %cst_167 = arith.constant dense<0.000000e+00> : vector<1xf32>
    %387 = vector.multi_reduction <add>, %386, %cst_167 [1] : vector<1x8xf32> to vector<1xf32>
    %388 = vector.shape_cast %387 : vector<1xf32> to vector<1x1xf32>
    %389 = tpu.reciprocal %388 {approx = true} : vector<1x1xf32> -> vector<1x1xf32>
    %390 = vector.broadcast %389 : vector<1x1xf32> to vector<1x8xf32>
    %391 = arith.mulf %386, %390 : vector<1x8xf32>
    %cst_168 = arith.constant dense<0.000000e+00> : vector<1x32xf32>
    %392 = tpu.matmul %381, %356, %cst_168 {dimension_numbers = #tpu.dot_dimension_numbers<[1], [0], [0], [1], [0, 0, 1, 1], [], []>} : vector<1x16xf32>, vector<16x32xf32>, vector<1x32xf32> -> vector<1x32xf32>
    %cst_169 = arith.constant dense<0.000000e+00> : vector<1x32xf32>
    %393 = tpu.matmul %391, %354, %cst_169 {dimension_numbers = #tpu.dot_dimension_numbers<[1], [0], [0], [1], [0, 0, 1, 1], [], []>} : vector<1x8xf32>, vector<8x32xf32>, vector<1x32xf32> -> vector<1x32xf32>
    %394 = arith.addf %392, %393 : vector<1x32xf32>
    %395 = arith.index_cast %c7_i32 : i32 to index
    %c0_170 = arith.constant 0 : index
    %396 = vector.load %arg15[%395, %c0_170] : memref<8x32xf32, #tpu.memory_space<vmem>>, vector<1x32xf32>
    tpu.vector_store %arg15[%395, %c0_170], %394 {strides = array<i32>} : memref<8x32xf32, #tpu.memory_space<vmem>>, vector<1x32xf32>,
    %c8_i32_171 = arith.constant 8 : i32
    %c0_172 = arith.constant 0 : index
    %c0_173 = arith.constant 0 : index
    %397 = vector.load %arg15[%c0_172, %c0_173] : memref<8x32xf32, #tpu.memory_space<vmem>>, vector<8x32xf32>
    %c0_174 = arith.constant 0 : index
    %c0_175 = arith.constant 0 : index
    %398 = vector.load %arg8[%c0_174, %c0_175] : memref<32x32xf32, #tpu.memory_space<vmem>>, vector<32x32xf32>
    %cst_176 = arith.constant dense<0.000000e+00> : vector<8x32xf32>
    %399 = tpu.matmul %397, %398, %cst_176 {dimension_numbers = #tpu.dot_dimension_numbers<[1], [0], [0], [1], [0, 0, 1, 1], [], []>} : vector<8x32xf32>, vector<32x32xf32>, vector<8x32xf32> -> vector<8x32xf32>
    %400 = math.tanh %399 : vector<8x32xf32>
    %c0_177 = arith.constant 0 : index
    %c0_178 = arith.constant 0 : index
    %401 = vector.load %arg9[%c0_177, %c0_178] : memref<32x128xf32, #tpu.memory_space<vmem>>, vector<32x128xf32>
    %cst_179 = arith.constant dense<0.000000e+00> : vector<8x128xf32>
    %402 = tpu.matmul %400, %401, %cst_179 {dimension_numbers = #tpu.dot_dimension_numbers<[1], [0], [0], [1], [0, 0, 1, 1], [], []>} : vector<8x32xf32>, vector<32x128xf32>, vector<8x128xf32> -> vector<8x128xf32>
    %c0_180 = arith.constant 0 : index
    %c0_181 = arith.constant 0 : index
    %403 = vector.load %arg10[%c0_180, %c0_181] : memref<1x128xf32, #tpu.memory_space<vmem>>, vector<1x128xf32>
    %404 = vector.broadcast %403 : vector<1x128xf32> to vector<8x128xf32>
    %405 = arith.addf %402, %404 : vector<8x128xf32>
    %c0_182 = arith.constant 0 : index
    %c0_183 = arith.constant 0 : index
    %406 = vector.load %arg11[%c0_182, %c0_183] : memref<8x128xf32, #tpu.memory_space<vmem>>, vector<8x128xf32>
    tpu.vector_store %arg11[%c0_182, %c0_183], %405 {strides = array<i32>} : memref<8x128xf32, #tpu.memory_space<vmem>>, vector<8x128xf32>,
    return
  }
  func.func @transform_0(%arg0: i32) -> (i32, i32) {
    %c0_i32 = arith.constant 0 : i32
    %c0_i32_0 = arith.constant 0 : i32
    return %arg0, %c0_i32 : i32, i32
  }
  func.func @transform_1(%arg0: i32) -> (i32, i32) {
    %c0_i32 = arith.constant 0 : i32
    %c0_i32_0 = arith.constant 0 : i32
    return %arg0, %c0_i32 : i32, i32
  }
  func.func @transform_2(%arg0: i32) -> (i32, i32) {
    %c0_i32 = arith.constant 0 : i32
    %c0_i32_0 = arith.constant 0 : i32
    %c0_i32_1 = arith.constant 0 : i32
    return %c0_i32, %c0_i32_0 : i32, i32
  }
  func.func @transform_3(%arg0: i32) -> (i32, i32) {
    %c0_i32 = arith.constant 0 : i32
    %c0_i32_0 = arith.constant 0 : i32
    %c0_i32_1 = arith.constant 0 : i32
    return %c0_i32, %c0_i32_0 : i32, i32
  }
  func.func @transform_4(%arg0: i32) -> (i32, i32) {
    %c0_i32 = arith.constant 0 : i32
    %c0_i32_0 = arith.constant 0 : i32
    %c0_i32_1 = arith.constant 0 : i32
    return %c0_i32, %c0_i32_0 : i32, i32
  }
  func.func @transform_5(%arg0: i32) -> (i32, i32) {
    %c0_i32 = arith.constant 0 : i32
    %c0_i32_0 = arith.constant 0 : i32
    %c0_i32_1 = arith.constant 0 : i32
    return %c0_i32, %c0_i32_0 : i32, i32
  }
  func.func @transform_6(%arg0: i32) -> (i32, i32) {
    %c0_i32 = arith.constant 0 : i32
    %c0_i32_0 = arith.constant 0 : i32
    %c0_i32_1 = arith.constant 0 : i32
    return %c0_i32, %c0_i32_0 : i32, i32
  }
  func.func @transform_7(%arg0: i32) -> (i32, i32) {
    %c0_i32 = arith.constant 0 : i32
    %c0_i32_0 = arith.constant 0 : i32
    %c0_i32_1 = arith.constant 0 : i32
    return %c0_i32, %c0_i32_0 : i32, i32
  }
  func.func @transform_8(%arg0: i32) -> (i32, i32) {
    %c0_i32 = arith.constant 0 : i32
    %c0_i32_0 = arith.constant 0 : i32
    %c0_i32_1 = arith.constant 0 : i32
    return %c0_i32, %c0_i32_0 : i32, i32
  }
  func.func @transform_9(%arg0: i32) -> (i32, i32) {
    %c0_i32 = arith.constant 0 : i32
    %c0_i32_0 = arith.constant 0 : i32
    %c0_i32_1 = arith.constant 0 : i32
    return %c0_i32, %c0_i32_0 : i32, i32
  }
  func.func @transform_10(%arg0: i32) -> (i32, i32) {
    %c0_i32 = arith.constant 0 : i32
    %c0_i32_0 = arith.constant 0 : i32
    return %arg0, %c0_i32 : i32, i32
  }
}

</mosaic_0001>

<llo_original>
// kernel: tpu_custom_call.1
$region0: #{tpu_custom_call.1}
  #allocation0 [shape = 'u32[]', space=smem, size = 0x4, offset = 0x4, fixed_abs, tag = 'smem constant byte address 0x4 - core index']
  #allocation1 [shape = 'u32[144,128]{1,0:T(1,128)}', space=vmem, size = 0x12000, scoped, tag = 'internal scratch']
  #allocation2 [shape = 'f32[64,32]{1,0:T(8,128)}', space=vmem, size = 0x8000, scoped, tag = 'scratch operand']
  #allocation3 [shape = 'f32[64,16]{1,0:T(8,128)}', space=vmem, size = 0x8000, scoped, tag = 'scratch operand']
  #allocation4 [shape = 'f32[128,16]{1,0:T(8,128)}', space=vmem, size = 0x10000, scoped, tag = 'scratch operand']
  #allocation5 [shape = 'f32[8,32]{1,0:T(8,128)}', space=vmem, size = 0x1000, scoped, tag = 'scratch operand']
  %s0 = inlined_call_operand.vmem [shape: f32[64,32], index: 0, kind: input, shape index: {}]
  %s1 = inlined_call_operand.vmem [shape: f32[128,32], index: 1, kind: input, shape index: {}]
  %s2 = inlined_call_operand.vmem [shape: f32[32,32], index: 2, kind: input, shape index: {}]
  %s3 = inlined_call_operand.vmem [shape: f32[32,16], index: 3, kind: input, shape index: {}]
  %s4 = inlined_call_operand.vmem [shape: f32[32,16], index: 4, kind: input, shape index: {}]
  %s5 = inlined_call_operand.vmem [shape: f32[1,16], index: 5, kind: input, shape index: {}]
  %s6 = inlined_call_operand.vmem [shape: f32[1,16], index: 6, kind: input, shape index: {}]
  %s7 = inlined_call_operand.vmem [shape: f32[32,32], index: 7, kind: input, shape index: {}]
  %s8 = inlined_call_operand.vmem [shape: f32[32,128], index: 8, kind: input, shape index: {}]
  %s9 = inlined_call_operand.vmem [shape: f32[1,128], index: 9, kind: input, shape index: {}]
  %s10 = inlined_call_operand.hbm [shape: f32[8,128], index: 10, kind: output, shape index: {}]
  %s11 = sld [smem:[#allocation0]]
  $region50: #{tpu_custom_call.1} parent=0
    _
  %s13 = ssub.s32 1, %s11
  %s14 = scalar_select 0, %s13, %s11
  $region1: #{tpu_custom_call.1} parent=0
    #allocation6 [shape = 'u8[4096]{0}', space=vmem, size = 0x1000, scoped, tag = 'output window, operand 0, single buffered']
    #allocation7 [shape = 's32[1]{0}', space=sflag, size = 0x4, scoped, tag = 'scoped memory for tpu_custom_call.1']
    %15 = vsyncpa [#allocation7], 0
    // Predicated region
    $region2: #{tpu_custom_call.1} parent=1 // pred_check
      _
    $region3: #{tpu_custom_call.1} parent=1 // pred_check_branch
      %17 = sbr.rel (0) target = $region5
    $region4: #{tpu_custom_call.1} parent=1 // pred_region
      _
    $region5: #{tpu_custom_call.1} parent=1 // pred_fallthru
      _
    // Predicated region
    $region6: #{tpu_custom_call.1} parent=1 // pred_check
      _
    $region7: #{tpu_custom_call.1} parent=1 // pred_check_branch
      %19 = sbr.rel (0) target = $region9
    $region8: #{tpu_custom_call.1} parent=1 // pred_region
      _
    $region9: #{tpu_custom_call.1} parent=1 // pred_fallthru
      _
    // Predicated region
    $region10: #{tpu_custom_call.1} parent=1 // pred_check
      _
    $region11: #{tpu_custom_call.1} parent=1 // pred_check_branch
      %21 = sbr.rel (0) target = $region13
    $region12: #{tpu_custom_call.1} parent=1 // pred_region
      _
    $region13: #{tpu_custom_call.1} parent=1 // pred_fallthru
      _
    // Predicated region
    $region14: #{tpu_custom_call.1} parent=1 // pred_check
      _
    $region15: #{tpu_custom_call.1} parent=1 // pred_check_branch
      %23 = sbr.rel (0) target = $region17
    $region16: #{tpu_custom_call.1} parent=1 // pred_region
      _
    $region17: #{tpu_custom_call.1} parent=1 // pred_fallthru
      _
    // Predicated region
    $region18: #{tpu_custom_call.1} parent=1 // pred_check
      _
    $region19: #{tpu_custom_call.1} parent=1 // pred_check_branch
      %25 = sbr.rel (0) target = $region21
    $region20: #{tpu_custom_call.1} parent=1 // pred_region
      _
    $region21: #{tpu_custom_call.1} parent=1 // pred_fallthru
      _
    // Predicated region
    $region22: #{tpu_custom_call.1} parent=1 // pred_check
      _
    $region23: #{tpu_custom_call.1} parent=1 // pred_check_branch
      %27 = sbr.rel (0) target = $region25
    $region24: #{tpu_custom_call.1} parent=1 // pred_region
      _
    $region25: #{tpu_custom_call.1} parent=1 // pred_fallthru
      _
    // Predicated region
    $region26: #{tpu_custom_call.1} parent=1 // pred_check
      _
    $region27: #{tpu_custom_call.1} parent=1 // pred_check_branch
      %29 = sbr.rel (0) target = $region29
    $region28: #{tpu_custom_call.1} parent=1 // pred_region
      _
    $region29: #{tpu_custom_call.1} parent=1 // pred_fallthru
      _
    // Predicated region
    $region30: #{tpu_custom_call.1} parent=1 // pred_check
      _
    $region31: #{tpu_custom_call.1} parent=1 // pred_check_branch
      %31 = sbr.rel (0) target = $region33
    $region32: #{tpu_custom_call.1} parent=1 // pred_region
      _
    $region33: #{tpu_custom_call.1} parent=1 // pred_fallthru
      _
    // Predicated region
    $region34: #{tpu_custom_call.1} parent=1 // pred_check
      _
    $region35: #{tpu_custom_call.1} parent=1 // pred_check_branch
      %33 = sbr.rel (0) target = $region37
    $region36: #{tpu_custom_call.1} parent=1 // pred_region
      _
    $region37: #{tpu_custom_call.1} parent=1 // pred_fallthru
      _
    // Predicated region
    $region38: #{tpu_custom_call.1} parent=1 // pred_check
      _
    $region39: #{tpu_custom_call.1} parent=1 // pred_check_branch
      %35 = sbr.rel (0) target = $region41
    $region40: #{tpu_custom_call.1} parent=1 // pred_region
      _
    $region41: #{tpu_custom_call.1} parent=1 // pred_fallthru
      _
    %v36 = vld [vmem:[%s0] sm:$0xff]
    %v37 = vld [vmem:[%s0 + $0x8] sm:$0xff]
    %v38 = vld [vmem:[%s0 + $0x10] sm:$0xff]
    %v39 = vld [vmem:[%s0 + $0x18] sm:$0xff]
    %v40 = vld [vmem:[%s0 + $0x20] sm:$0xff]
    %v41 = vld [vmem:[%s0 + $0x28] sm:$0xff]
    %v42 = vld [vmem:[%s0 + $0x30] sm:$0xff]
    %v43 = vld [vmem:[%s0 + $0x38] sm:$0xff]
    %v44 = vld [vmem:[%s1] sm:$0xff]
    %v45 = vld [vmem:[%s1 + $0x8] sm:$0xff]
    %v46 = vld [vmem:[%s1 + $0x10] sm:$0xff]
    %v47 = vld [vmem:[%s1 + $0x18] sm:$0xff]
    %v48 = vld [vmem:[%s1 + $0x20] sm:$0xff]
    %v49 = vld [vmem:[%s1 + $0x28] sm:$0xff]
    %v50 = vld [vmem:[%s1 + $0x30] sm:$0xff]
    %v51 = vld [vmem:[%s1 + $0x38] sm:$0xff]
    %v52 = vld [vmem:[%s1 + $0x40] sm:$0xff]
    %v53 = vld [vmem:[%s1 + $0x48] sm:$0xff]
    %v54 = vld [vmem:[%s1 + $0x50] sm:$0xff]
    %v55 = vld [vmem:[%s1 + $0x58] sm:$0xff]
    %v56 = vld [vmem:[%s1 + $0x60] sm:$0xff]
    %v57 = vld [vmem:[%s1 + $0x68] sm:$0xff]
    %v58 = vld [vmem:[%s1 + $0x70] sm:$0xff]
    %v59 = vld [vmem:[%s1 + $0x78] sm:$0xff]
    %v60 = vld [vmem:[%s2] sm:$0xff]
    %v61 = vld [vmem:[%s2 + $0x8] sm:$0xff]
    %v62 = vld [vmem:[%s2 + $0x10] sm:$0xff]
    %v63 = vld [vmem:[%s2 + $0x18] sm:$0xff]
    %vm64 = vcmask 261120
    %v66 = vsel %vm64, %v36, 0
    %v69 = vsel %vm64, %v37, 0
    %v72 = vsel %vm64, %v38, 0
    %v75 = vsel %vm64, %v39, 0
    %v78 = vsel %vm64, %v40, 0
    %v81 = vsel %vm64, %v41, 0
    %v84 = vsel %vm64, %v42, 0
    %v87 = vsel %vm64, %v43, 0
    %89 = vmatprep.subr.mxu0 0.0
    %90 = vmatpush1.msra.mxu0 %v60
    %91 = vmatprep.subr.mxu0 0.0
    %92 = vmatpush1.msra.mxu0 %v61
    %93 = vmatprep.subr.mxu0 0.0
    %94 = vmatpush1.msra.mxu0 %v62
    %95 = vmatprep.subr.mxu0 0.0
    %96 = vmatpush1.msra.mxu0 %v63
    %97 = vmatprep.subr.mxu0 0.0
    %98 = vmatpush1.msra.mxu0 0.0
    %99 = vmatprep.subr.mxu0 0.0
    %100 = vmatpush1.msra.mxu0 0.0
    %101 = vmatprep.subr.mxu0 0.0
    %102 = vmatpush1.msra.mxu0 0.0
    %103 = vmatprep.subr.mxu0 0.0
    %104 = vmatpush1.msra.mxu0 0.0
    %105 = vmatprep.subr.mxu0 0.0
    %106 = vmatpush1.msra.mxu0 0.0
    %107 = vmatprep.subr.mxu0 0.0
    %108 = vmatpush1.msra.mxu0 0.0
    %109 = vmatprep.subr.mxu0 0.0
    %110 = vmatpush1.msra.mxu0 0.0
    %111 = vmatprep.subr.mxu0 0.0
    %112 = vmatpush1.msra.mxu0 0.0
    %113 = vmatprep.subr.mxu0 0.0
    %114 = vmatpush1.msra.mxu0 0.0
    %115 = vmatprep.subr.mxu0 0.0
    %116 = vmatpush1.msra.mxu0 0.0
    %117 = vmatprep.subr.mxu0 0.0
    %118 = vmatpush1.msra.mxu0 0.0
    %119 = vmatprep.subr.mxu0 0.0
    %120 = vmatpush1.msra.mxu0 0.0
    %121 = vmatprep.subr.mxu0 0.0
    %122 = vmatpush1.msra.mxu0 0.0
    %123 = vmatprep.subr.mxu0 0.0
    %124 = vmatpush1.msra.mxu0 0.0
    %125 = vmatprep.subr.mxu0 0.0
    %126 = vmatpush1.msra.mxu0 0.0
    %127 = vmatprep.subr.mxu0 0.0
    %128 = vmatpush1.msra.mxu0 0.0
    %129 = vmatprep.subr.mxu0 0.0
    %130 = vmatpush1.msra.mxu0 0.0
    %131 = vmatprep.subr.mxu0 0.0
    %132 = vmatpush1.msra.mxu0 0.0
    %133 = vmatprep.subr.mxu0 0.0
    %134 = vmatpush1.msra.mxu0 0.0
    %135 = vmatprep.subr.mxu0 0.0
    %136 = vmatpush1.msra.mxu0 0.0
    %137 = vmatprep.subr.mxu0 0.0
    %138 = vmatpush1.msra.mxu0 0.0
    %139 = vmatprep.subr.mxu0 0.0
    %140 = vmatpush1.msra.mxu0 0.0
    %141 = vmatprep.subr.mxu0 0.0
    %142 = vmatpush1.msra.mxu0 0.0
    %143 = vmatprep.subr.mxu0 0.0
    %144 = vmatpush1.msra.mxu0 0.0
    %145 = vmatprep.subr.mxu0 0.0
    %146 = vmatpush1.msra.mxu0 0.0
    %147 = vmatprep.subr.mxu0 0.0
    %148 = vmatpush1.msra.mxu0 0.0
    %149 = vmatprep.subr.mxu0 0.0
    %150 = vmatpush1.msra.mxu0 0.0
    %151 = vmatprep.subr.mxu0 0.0
    %152 = vmatpush1.msra.mxu0 0.0
    %153 = vmatprep.mubr.f32.mxu0 0.0
    %154 = vmatmul.mubr.f32.gmra.mrb[0].mxu0 %v66
    %v155 = vpop.f32.mrb[0].mxu0
    %v156 = vadd.f32 0.0, %v155
    %v157 = vpop.f32.mrb[0].mxu0
    %158 = vmatprep.mubr.f32.mxu0 0.0
    %159 = vmatmul.mubr.f32.gmra.mrb[0].mxu0 %v69
    %v160 = vpop.f32.mrb[0].mxu0
    %v161 = vadd.f32 0.0, %v160
    %v162 = vpop.f32.mrb[0].mxu0
    %163 = vmatprep.mubr.f32.mxu0 0.0
    %164 = vmatmul.mubr.f32.gmra.mrb[0].mxu0 %v72
    %v165 = vpop.f32.mrb[0].mxu0
    %v166 = vadd.f32 0.0, %v165
    %v167 = vpop.f32.mrb[0].mxu0
    %168 = vmatprep.mubr.f32.mxu0 0.0
    %169 = vmatmul.mubr.f32.gmra.mrb[0].mxu0 %v75
    %v170 = vpop.f32.mrb[0].mxu0
    %v171 = vadd.f32 0.0, %v170
    %v172 = vpop.f32.mrb[0].mxu0
    %173 = vmatprep.mubr.f32.mxu0 0.0
    %174 = vmatmul.mubr.f32.gmra.mrb[0].mxu0 %v78
    %v175 = vpop.f32.mrb[0].mxu0
    %v176 = vadd.f32 0.0, %v175
    %v177 = vpop.f32.mrb[0].mxu0
    %178 = vmatprep.mubr.f32.mxu0 0.0
    %179 = vmatmul.mubr.f32.gmra.mrb[0].mxu0 %v81
    %v180 = vpop.f32.mrb[0].mxu0
    %v181 = vadd.f32 0.0, %v180
    %v182 = vpop.f32.mrb[0].mxu0
    %183 = vmatprep.mubr.f32.mxu0 0.0
    %184 = vmatmul.mubr.f32.gmra.mrb[0].mxu0 %v84
    %v185 = vpop.f32.mrb[0].mxu0
    %v186 = vadd.f32 0.0, %v185
    %v187 = vpop.f32.mrb[0].mxu0
    %188 = vmatprep.mubr.f32.mxu0 0.0
    %189 = vmatmul.mubr.f32.gmra.mrb[0].mxu0 %v87
    %v190 = vpop.f32.mrb[0].mxu0
    %v191 = vadd.f32 0.0, %v190
    %v192 = vpop.f32.mrb[0].mxu0
    %193 = vdwg.mxu0
    %194 = vst.msk [vmem:[#allocation2] sm:$0xff] %vm64, %v156
    %195 = vst.msk [vmem:[#allocation2 + $0x8] sm:$0xff] %vm64, %v161
    %196 = vst.msk [vmem:[#allocation2 + $0x10] sm:$0xff] %vm64, %v166
    %197 = vst.msk [vmem:[#allocation2 + $0x18] sm:$0xff] %vm64, %v171
    %198 = vst.msk [vmem:[#allocation2 + $0x20] sm:$0xff] %vm64, %v176
    %199 = vst.msk [vmem:[#allocation2 + $0x28] sm:$0xff] %vm64, %v181
    %200 = vst.msk [vmem:[#allocation2 + $0x30] sm:$0xff] %vm64, %v186
    %201 = vst.msk [vmem:[#allocation2 + $0x38] sm:$0xff] %vm64, %v191
    %v202 = vld [vmem:[%s4] sm:$0xff]
    %v203 = vld [vmem:[%s4 + $0x8] sm:$0xff]
    %v204 = vld [vmem:[%s4 + $0x10] sm:$0xff]
    %v205 = vld [vmem:[%s4 + $0x18] sm:$0xff]
    %206 = vmatprep.subr.mxu0 0.0
    %207 = vmatpush1.msra.mxu0 %v202
    %208 = vmatprep.subr.mxu0 0.0
    %209 = vmatpush1.msra.mxu0 %v203
    %210 = vmatprep.subr.mxu0 0.0
    %211 = vmatpush1.msra.mxu0 %v204
    %212 = vmatprep.subr.mxu0 0.0
    %213 = vmatpush1.msra.mxu0 %v205
    %214 = vmatprep.subr.mxu0 0.0
    %215 = vmatpush1.msra.mxu0 0.0
    %216 = vmatprep.subr.mxu0 0.0
    %217 = vmatpush1.msra.mxu0 0.0
    %218 = vmatprep.subr.mxu0 0.0
    %219 = vmatpush1.msra.mxu0 0.0
    %220 = vmatprep.subr.mxu0 0.0
    %221 = vmatpush1.msra.mxu0 0.0
    %222 = vmatprep.subr.mxu0 0.0
    %223 = vmatpush1.msra.mxu0 0.0
    %224 = vmatprep.subr.mxu0 0.0
    %225 = vmatpush1.msra.mxu0 0.0
    %226 = vmatprep.subr.mxu0 0.0
    %227 = vmatpush1.msra.mxu0 0.0
    %228 = vmatprep.subr.mxu0 0.0
    %229 = vmatpush1.msra.mxu0 0.0
    %230 = vmatprep.subr.mxu0 0.0
    %231 = vmatpush1.msra.mxu0 0.0
    %232 = vmatprep.subr.mxu0 0.0
    %233 = vmatpush1.msra.mxu0 0.0
    %234 = vmatprep.subr.mxu0 0.0
    %235 = vmatpush1.msra.mxu0 0.0
    %236 = vmatprep.subr.mxu0 0.0
    %237 = vmatpush1.msra.mxu0 0.0
    %238 = vmatprep.subr.mxu0 0.0
    %239 = vmatpush1.msra.mxu0 0.0
    %240 = vmatprep.subr.mxu0 0.0
    %241 = vmatpush1.msra.mxu0 0.0
    %242 = vmatprep.subr.mxu0 0.0
    %243 = vmatpush1.msra.mxu0 0.0
    %244 = vmatprep.subr.mxu0 0.0
    %245 = vmatpush1.msra.mxu0 0.0
    %246 = vmatprep.subr.mxu0 0.0
    %247 = vmatpush1.msra.mxu0 0.0
    %248 = vmatprep.subr.mxu0 0.0
    %249 = vmatpush1.msra.mxu0 0.0
    %250 = vmatprep.subr.mxu0 0.0
    %251 = vmatpush1.msra.mxu0 0.0
    %252 = vmatprep.subr.mxu0 0.0
    %253 = vmatpush1.msra.mxu0 0.0
    %254 = vmatprep.subr.mxu0 0.0
    %255 = vmatpush1.msra.mxu0 0.0
    %256 = vmatprep.subr.mxu0 0.0
    %257 = vmatpush1.msra.mxu0 0.0
    %258 = vmatprep.subr.mxu0 0.0
    %259 = vmatpush1.msra.mxu0 0.0
    %260 = vmatprep.subr.mxu0 0.0
    %261 = vmatpush1.msra.mxu0 0.0
    %262 = vmatprep.subr.mxu0 0.0
    %263 = vmatpush1.msra.mxu0 0.0
    %264 = vmatprep.subr.mxu0 0.0
    %265 = vmatpush1.msra.mxu0 0.0
    %266 = vmatprep.subr.mxu0 0.0
    %267 = vmatpush1.msra.mxu0 0.0
    %268 = vmatprep.subr.mxu0 0.0
    %269 = vmatpush1.msra.mxu0 0.0
    %270 = vmatprep.mubr.f32.mxu0 0.0
    %271 = vmatmul.mubr.f32.gmra.mrb[0].mxu0 %v66
    %v272 = vpop.f32.mrb[0].mxu0
    %v273 = vadd.f32 0.0, %v272
    %v274 = vpop.f32.mrb[0].mxu0
    %275 = vmatprep.mubr.f32.mxu0 0.0
    %276 = vmatmul.mubr.f32.gmra.mrb[0].mxu0 %v69
    %v277 = vpop.f32.mrb[0].mxu0
    %v278 = vadd.f32 0.0, %v277
    %v279 = vpop.f32.mrb[0].mxu0
    %280 = vmatprep.mubr.f32.mxu0 0.0
    %281 = vmatmul.mubr.f32.gmra.mrb[0].mxu0 %v72
    %v282 = vpop.f32.mrb[0].mxu0
    %v283 = vadd.f32 0.0, %v282
    %v284 = vpop.f32.mrb[0].mxu0
    %285 = vmatprep.mubr.f32.mxu0 0.0
    %286 = vmatmul.mubr.f32.gmra.mrb[0].mxu0 %v75
    %v287 = vpop.f32.mrb[0].mxu0
    %v288 = vadd.f32 0.0, %v287
    %v289 = vpop.f32.mrb[0].mxu0
    %290 = vmatprep.mubr.f32.mxu0 0.0
    %291 = vmatmul.mubr.f32.gmra.mrb[0].mxu0 %v78
    %v292 = vpop.f32.mrb[0].mxu0
    %v293 = vadd.f32 0.0, %v292
    %v294 = vpop.f32.mrb[0].mxu0
    %295 = vmatprep.mubr.f32.mxu0 0.0
    %296 = vmatmul.mubr.f32.gmra.mrb[0].mxu0 %v81
    %v297 = vpop.f32.mrb[0].mxu0
    %v298 = vadd.f32 0.0, %v297
    %v299 = vpop.f32.mrb[0].mxu0
    %300 = vmatprep.mubr.f32.mxu0 0.0
    %301 = vmatmul.mubr.f32.gmra.mrb[0].mxu0 %v84
    %v302 = vpop.f32.mrb[0].mxu0
    %v303 = vadd.f32 0.0, %v302
    %v304 = vpop.f32.mrb[0].mxu0
    %305 = vmatprep.mubr.f32.mxu0 0.0
    %306 = vmatmul.mubr.f32.gmra.mrb[0].mxu0 %v87
    %v307 = vpop.f32.mrb[0].mxu0
    %v308 = vadd.f32 0.0, %v307
    %v309 = vpop.f32.mrb[0].mxu0
    %310 = vdwg.mxu0
    %vm311 = vcmask 130048
    %312 = vst.msk [vmem:[#allocation3] sm:$0xff] %vm311, %v273
    %313 = vst.msk [vmem:[#allocation3 + $0x8] sm:$0xff] %vm311, %v278
    %314 = vst.msk [vmem:[#allocation3 + $0x10] sm:$0xff] %vm311, %v283
    %315 = vst.msk [vmem:[#allocation3 + $0x18] sm:$0xff] %vm311, %v288
    %316 = vst.msk [vmem:[#allocation3 + $0x20] sm:$0xff] %vm311, %v293
    %317 = vst.msk [vmem:[#allocation3 + $0x28] sm:$0xff] %vm311, %v298
    %318 = vst.msk [vmem:[#allocation3 + $0x30] sm:$0xff] %vm311, %v303
    %319 = vst.msk [vmem:[#allocation3 + $0x38] sm:$0xff] %vm311, %v308
    %v320 = vld [vmem:[%s3] sm:$0xff]
    %v321 = vld [vmem:[%s3 + $0x8] sm:$0xff]
    %v322 = vld [vmem:[%s3 + $0x10] sm:$0xff]
    %v323 = vld [vmem:[%s3 + $0x18] sm:$0xff]
    %v325 = vsel %vm64, %v44, 0
    %v328 = vsel %vm64, %v45, 0
    %v331 = vsel %vm64, %v46, 0
    %v334 = vsel %vm64, %v47, 0
    %v337 = vsel %vm64, %v48, 0
    %v340 = vsel %vm64, %v49, 0
    %v343 = vsel %vm64, %v50, 0
    %v346 = vsel %vm64, %v51, 0
    %v349 = vsel %vm64, %v52, 0
    %v352 = vsel %vm64, %v53, 0
    %v355 = vsel %vm64, %v54, 0
    %v358 = vsel %vm64, %v55, 0
    %v361 = vsel %vm64, %v56, 0
    %v364 = vsel %vm64, %v57, 0
    %v367 = vsel %vm64, %v58, 0
    %v370 = vsel %vm64, %v59, 0
    %372 = vmatprep.subr.mxu0 0.0
    %373 = vmatpush1.msra.mxu0 %v320
    %374 = vmatprep.subr.mxu0 0.0
    %375 = vmatpush1.msra.mxu0 %v321
    %376 = vmatprep.subr.mxu0 0.0
    %377 = vmatpush1.msra.mxu0 %v322
    %378 = vmatprep.subr.mxu0 0.0
    %379 = vmatpush1.msra.mxu0 %v323
    %380 = vmatprep.subr.mxu0 0.0
    %381 = vmatpush1.msra.mxu0 0.0
    %382 = vmatprep.subr.mxu0 0.0
    %383 = vmatpush1.msra.mxu0 0.0
    %384 = vmatprep.subr.mxu0 0.0
    %385 = vmatpush1.msra.mxu0 0.0
    %386 = vmatprep.subr.mxu0 0.0
    %387 = vmatpush1.msra.mxu0 0.0
    %388 = vmatprep.subr.mxu0 0.0
    %389 = vmatpush1.msra.mxu0 0.0
    %390 = vmatprep.subr.mxu0 0.0
    %391 = vmatpush1.msra.mxu0 0.0
    %392 = vmatprep.subr.mxu0 0.0
    %393 = vmatpush1.msra.mxu0 0.0
    %394 = vmatprep.subr.mxu0 0.0
    %395 = vmatpush1.msra.mxu0 0.0
    %396 = vmatprep.subr.mxu0 0.0
    %397 = vmatpush1.msra.mxu0 0.0
    %398 = vmatprep.subr.mxu0 0.0
    %399 = vmatpush1.msra.mxu0 0.0
    %400 = vmatprep.subr.mxu0 0.0
    %401 = vmatpush1.msra.mxu0 0.0
    %402 = vmatprep.subr.mxu0 0.0
    %403 = vmatpush1.msra.mxu0 0.0
    %404 = vmatprep.subr.mxu0 0.0
    %405 = vmatpush1.msra.mxu0 0.0
    %406 = vmatprep.subr.mxu0 0.0
    %407 = vmatpush1.msra.mxu0 0.0
    %408 = vmatprep.subr.mxu0 0.0
    %409 = vmatpush1.msra.mxu0 0.0
    %410 = vmatprep.subr.mxu0 0.0
    %411 = vmatpush1.msra.mxu0 0.0
    %412 = vmatprep.subr.mxu0 0.0
    %413 = vmatpush1.msra.mxu0 0.0
    %414 = vmatprep.subr.mxu0 0.0
    %415 = vmatpush1.msra.mxu0 0.0
    %416 = vmatprep.subr.mxu0 0.0
    %417 = vmatpush1.msra.mxu0 0.0
    %418 = vmatprep.subr.mxu0 0.0
    %419 = vmatpush1.msra.mxu0 0.0
    %420 = vmatprep.subr.mxu0 0.0
    %421 = vmatpush1.msra.mxu0 0.0
    %422 = vmatprep.subr.mxu0 0.0
    %423 = vmatpush1.msra.mxu0 0.0
    %424 = vmatprep.subr.mxu0 0.0
    %425 = vmatpush1.msra.mxu0 0.0
    %426 = vmatprep.subr.mxu0 0.0
    %427 = vmatpush1.msra.mxu0 0.0
    %428 = vmatprep.subr.mxu0 0.0
    %429 = vmatpush1.msra.mxu0 0.0
    %430 = vmatprep.subr.mxu0 0.0
    %431 = vmatpush1.msra.mxu0 0.0
    %432 = vmatprep.subr.mxu0 0.0
    %433 = vmatpush1.msra.mxu0 0.0
    %434 = vmatprep.subr.mxu0 0.0
    %435 = vmatpush1.msra.mxu0 0.0
    %436 = vmatprep.mubr.f32.mxu0 0.0
    %437 = vmatmul.mubr.f32.gmra.mrb[0].mxu0 %v325
    %v438 = vpop.f32.mrb[0].mxu0
    %v439 = vadd.f32 0.0, %v438
    %v440 = vpop.f32.mrb[0].mxu0
    %441 = vmatprep.mubr.f32.mxu0 0.0
    %442 = vmatmul.mubr.f32.gmra.mrb[0].mxu0 %v328
    %v443 = vpop.f32.mrb[0].mxu0
    %v444 = vadd.f32 0.0, %v443
    %v445 = vpop.f32.mrb[0].mxu0
    %446 = vmatprep.mubr.f32.mxu0 0.0
    %447 = vmatmul.mubr.f32.gmra.mrb[0].mxu0 %v331
    %v448 = vpop.f32.mrb[0].mxu0
    %v449 = vadd.f32 0.0, %v448
    %v450 = vpop.f32.mrb[0].mxu0
    %451 = vmatprep.mubr.f32.mxu0 0.0
    %452 = vmatmul.mubr.f32.gmra.mrb[0].mxu0 %v334
    %v453 = vpop.f32.mrb[0].mxu0
    %v454 = vadd.f32 0.0, %v453
    %v455 = vpop.f32.mrb[0].mxu0
    %456 = vmatprep.mubr.f32.mxu0 0.0
    %457 = vmatmul.mubr.f32.gmra.mrb[0].mxu0 %v337
    %v458 = vpop.f32.mrb[0].mxu0
    %v459 = vadd.f32 0.0, %v458
    %v460 = vpop.f32.mrb[0].mxu0
    %461 = vmatprep.mubr.f32.mxu0 0.0
    %462 = vmatmul.mubr.f32.gmra.mrb[0].mxu0 %v340
    %v463 = vpop.f32.mrb[0].mxu0
    %v464 = vadd.f32 0.0, %v463
    %v465 = vpop.f32.mrb[0].mxu0
    %466 = vmatprep.mubr.f32.mxu0 0.0
    %467 = vmatmul.mubr.f32.gmra.mrb[0].mxu0 %v343
    %v468 = vpop.f32.mrb[0].mxu0
    %v469 = vadd.f32 0.0, %v468
    %v470 = vpop.f32.mrb[0].mxu0
    %471 = vmatprep.mubr.f32.mxu0 0.0
    %472 = vmatmul.mubr.f32.gmra.mrb[0].mxu0 %v346
    %v473 = vpop.f32.mrb[0].mxu0
    %v474 = vadd.f32 0.0, %v473
    %v475 = vpop.f32.mrb[0].mxu0
    %476 = vmatprep.mubr.f32.mxu0 0.0
    %477 = vmatmul.mubr.f32.gmra.mrb[0].mxu0 %v349
    %v478 = vpop.f32.mrb[0].mxu0
    %v479 = vadd.f32 0.0, %v478
    %v480 = vpop.f32.mrb[0].mxu0
    %481 = vmatprep.mubr.f32.mxu0 0.0
    %482 = vmatmul.mubr.f32.gmra.mrb[0].mxu0 %v352
    %v483 = vpop.f32.mrb[0].mxu0
    %v484 = vadd.f32 0.0, %v483
    %v485 = vpop.f32.mrb[0].mxu0
    %486 = vmatprep.mubr.f32.mxu0 0.0
    %487 = vmatmul.mubr.f32.gmra.mrb[0].mxu0 %v355
    %v488 = vpop.f32.mrb[0].mxu0
    %v489 = vadd.f32 0.0, %v488
    %v490 = vpop.f32.mrb[0].mxu0
    %491 = vmatprep.mubr.f32.mxu0 0.0
    %492 = vmatmul.mubr.f32.gmra.mrb[0].mxu0 %v358
    %v493 = vpop.f32.mrb[0].mxu0
    %v494 = vadd.f32 0.0, %v493
    %v495 = vpop.f32.mrb[0].mxu0
    %496 = vmatprep.mubr.f32.mxu0 0.0
    %497 = vmatmul.mubr.f32.gmra.mrb[0].mxu0 %v361
    %v498 = vpop.f32.mrb[0].mxu0
    %v499 = vadd.f32 0.0, %v498
    %v500 = vpop.f32.mrb[0].mxu0
    %501 = vmatprep.mubr.f32.mxu0 0.0
    %502 = vmatmul.mubr.f32.gmra.mrb[0].mxu0 %v364
    %v503 = vpop.f32.mrb[0].mxu0
    %v504 = vadd.f32 0.0, %v503
    %v505 = vpop.f32.mrb[0].mxu0
    %506 = vmatprep.mubr.f32.mxu0 0.0
    %507 = vmatmul.mubr.f32.gmra.mrb[0].mxu0 %v367
    %v508 = vpop.f32.mrb[0].mxu0
    %v509 = vadd.f32 0.0, %v508
    %v510 = vpop.f32.mrb[0].mxu0
    %511 = vmatprep.mubr.f32.mxu0 0.0
    %512 = vmatmul.mubr.f32.gmra.mrb[0].mxu0 %v370
    %v513 = vpop.f32.mrb[0].mxu0
    %v514 = vadd.f32 0.0, %v513
    %v515 = vpop.f32.mrb[0].mxu0
    %516 = vdwg.mxu0
    %517 = vst.msk [vmem:[#allocation4] sm:$0xff] %vm311, %v439
    %518 = vst.msk [vmem:[#allocation4 + $0x8] sm:$0xff] %vm311, %v444
    %519 = vst.msk [vmem:[#allocation4 + $0x10] sm:$0xff] %vm311, %v449
    %520 = vst.msk [vmem:[#allocation4 + $0x18] sm:$0xff] %vm311, %v454
    %521 = vst.msk [vmem:[#allocation4 + $0x20] sm:$0xff] %vm311, %v459
    %522 = vst.msk [vmem:[#allocation4 + $0x28] sm:$0xff] %vm311, %v464
    %523 = vst.msk [vmem:[#allocation4 + $0x30] sm:$0xff] %vm311, %v469
    %524 = vst.msk [vmem:[#allocation4 + $0x38] sm:$0xff] %vm311, %v474
    %525 = vst.msk [vmem:[#allocation4 + $0x40] sm:$0xff] %vm311, %v479
    %526 = vst.msk [vmem:[#allocation4 + $0x48] sm:$0xff] %vm311, %v484
    %527 = vst.msk [vmem:[#allocation4 + $0x50] sm:$0xff] %vm311, %v489
    %528 = vst.msk [vmem:[#allocation4 + $0x58] sm:$0xff] %vm311, %v494
    %529 = vst.msk [vmem:[#allocation4 + $0x60] sm:$0xff] %vm311, %v499
    %530 = vst.msk [vmem:[#allocation4 + $0x68] sm:$0xff] %vm311, %v504
    %531 = vst.msk [vmem:[#allocation4 + $0x70] sm:$0xff] %vm311, %v509
    %532 = vst.msk [vmem:[#allocation4 + $0x78] sm:$0xff] %vm311, %v514
    %v533 = vld [vmem:[%s5] sm:$0x1]
    %v534 = vld [vmem:[%s6] sm:$0x1]
    %v535 = vld [vmem:[%s0] sm:$0xff]
    %v536 = vld [vmem:[%s1] sm:$0xff]
    %v537 = vld [vmem:[%s1 + $0x8] sm:$0xff]
    %v538 = vld [vmem:[#allocation2] sm:$0xff]
    %v539 = vld [vmem:[#allocation3] sm:$0xff]
    %v540 = vld [vmem:[#allocation4] sm:$0xff]
    %v541 = vld [vmem:[#allocation4 + $0x8] sm:$0xff]
    %v543 = vsel %vm64, %v538, 0
    %v546 = vsel %vm64, %v536, 0
    %v549 = vsel %vm64, %v537, 0
    %551 = vmatprep.subr.mxu0 0.0
    %552 = vmatpush1.xpose.msra.mxu0 %v546
    %553 = vmatprep.subr.mxu0 0.0
    %554 = vmatpush1.xpose.msra.mxu0 %v549
    %555 = vmatprep.subr.mxu0 0.0
    %556 = vmatpush1.xpose.msra.mxu0 0.0
    %557 = vmatprep.subr.mxu0 0.0
    %558 = vmatpush1.xpose.msra.mxu0 0.0
    %559 = vmatprep.subr.mxu0 0.0
    %560 = vmatpush1.xpose.msra.mxu0 0.0
    %561 = vmatprep.subr.mxu0 0.0
    %562 = vmatpush1.xpose.msra.mxu0 0.0
    %563 = vmatprep.subr.mxu0 0.0
    %564 = vmatpush1.xpose.msra.mxu0 0.0
    %565 = vmatprep.subr.mxu0 0.0
    %566 = vmatpush1.xpose.msra.mxu0 0.0
    %567 = vmatprep.subr.mxu0 0.0
    %568 = vmatpush1.xpose.msra.mxu0 0.0
    %569 = vmatprep.subr.mxu0 0.0
    %570 = vmatpush1.xpose.msra.mxu0 0.0
    %571 = vmatprep.subr.mxu0 0.0
    %572 = vmatpush1.xpose.msra.mxu0 0.0
    %573 = vmatprep.subr.mxu0 0.0
    %574 = vmatpush1.xpose.msra.mxu0 0.0
    %575 = vmatprep.subr.mxu0 0.0
    %576 = vmatpush1.xpose.msra.mxu0 0.0
    %577 = vmatprep.subr.mxu0 0.0
    %578 = vmatpush1.xpose.msra.mxu0 0.0
    %579 = vmatprep.subr.mxu0 0.0
    %580 = vmatpush1.xpose.msra.mxu0 0.0
    %581 = vmatprep.subr.mxu0 0.0
    %582 = vmatpush1.xpose.msra.mxu0 0.0
    %583 = vmatprep.subr.mxu0 0.0
    %584 = vmatpush1.xpose.msra.mxu0 0.0
    %585 = vmatprep.subr.mxu0 0.0
    %586 = vmatpush1.xpose.msra.mxu0 0.0
    %587 = vmatprep.subr.mxu0 0.0
    %588 = vmatpush1.xpose.msra.mxu0 0.0
    %589 = vmatprep.subr.mxu0 0.0
    %590 = vmatpush1.xpose.msra.mxu0 0.0
    %591 = vmatprep.subr.mxu0 0.0
    %592 = vmatpush1.xpose.msra.mxu0 0.0
    %593 = vmatprep.subr.mxu0 0.0
    %594 = vmatpush1.xpose.msra.mxu0 0.0
    %595 = vmatprep.subr.mxu0 0.0
    %596 = vmatpush1.xpose.msra.mxu0 0.0
    %597 = vmatprep.subr.mxu0 0.0
    %598 = vmatpush1.xpose.msra.mxu0 0.0
    %599 = vmatprep.subr.mxu0 0.0
    %600 = vmatpush1.xpose.msra.mxu0 0.0
    %601 = vmatprep.subr.mxu0 0.0
    %602 = vmatpush1.xpose.msra.mxu0 0.0
    %603 = vmatprep.subr.mxu0 0.0
    %604 = vmatpush1.xpose.msra.mxu0 0.0
    %605 = vmatprep.subr.mxu0 0.0
    %606 = vmatpush1.xpose.msra.mxu0 0.0
    %607 = vmatprep.subr.mxu0 0.0
    %608 = vmatpush1.xpose.msra.mxu0 0.0
    %609 = vmatprep.subr.mxu0 0.0
    %610 = vmatpush1.xpose.msra.mxu0 0.0
    %611 = vmatprep.subr.mxu0 0.0
    %612 = vmatpush1.xpose.msra.mxu0 0.0
    %613 = vmatprep.subr.mxu0 0.0
    %614 = vmatpush1.xpose.msra.mxu0 0.0
    %615 = vmatprep.mubr.f32.mxu0 0.0
    %616 = vmatmul.mubr.f32.gmra.mrb[0].mxu0 %v543
    %v617 = vpop.f32.mrb[0].mxu0
    %v618 = vadd.f32 0.0, %v617
    %v619 = vpop.f32.mrb[0].mxu0
    %620 = vdwg.mxu0
    %v622 = vsel %vm311, %v618, 0
    %624 = vmatprep.subr.mxu0 0.0
    %625 = vmatpush1.msra.mxu0 %v540
    %626 = vmatprep.subr.mxu0 0.0
    %627 = vmatpush1.msra.mxu0 %v541
    %628 = vmatprep.subr.mxu0 0.0
    %629 = vmatpush1.msra.mxu0 0.0
    %630 = vmatprep.subr.mxu0 0.0
    %631 = vmatpush1.msra.mxu0 0.0
    %632 = vmatprep.subr.mxu0 0.0
    %633 = vmatpush1.msra.mxu0 0.0
    %634 = vmatprep.subr.mxu0 0.0
    %635 = vmatpush1.msra.mxu0 0.0
    %636 = vmatprep.subr.mxu0 0.0
    %637 = vmatpush1.msra.mxu0 0.0
    %638 = vmatprep.subr.mxu0 0.0
    %639 = vmatpush1.msra.mxu0 0.0
    %640 = vmatprep.subr.mxu0 0.0
    %641 = vmatpush1.msra.mxu0 0.0
    %642 = vmatprep.subr.mxu0 0.0
    %643 = vmatpush1.msra.mxu0 0.0
    %644 = vmatprep.subr.mxu0 0.0
    %645 = vmatpush1.msra.mxu0 0.0
    %646 = vmatprep.subr.mxu0 0.0
    %647 = vmatpush1.msra.mxu0 0.0
    %648 = vmatprep.subr.mxu0 0.0
    %649 = vmatpush1.msra.mxu0 0.0
    %650 = vmatprep.subr.mxu0 0.0
    %651 = vmatpush1.msra.mxu0 0.0
    %652 = vmatprep.subr.mxu0 0.0
    %653 = vmatpush1.msra.mxu0 0.0
    %654 = vmatprep.subr.mxu0 0.0
    %655 = vmatpush1.msra.mxu0 0.0
    %656 = vmatprep.subr.mxu0 0.0
    %657 = vmatpush1.msra.mxu0 0.0
    %658 = vmatprep.subr.mxu0 0.0
    %659 = vmatpush1.msra.mxu0 0.0
    %660 = vmatprep.subr.mxu0 0.0
    %661 = vmatpush1.msra.mxu0 0.0
    %662 = vmatprep.subr.mxu0 0.0
    %663 = vmatpush1.msra.mxu0 0.0
    %664 = vmatprep.subr.mxu0 0.0
    %665 = vmatpush1.msra.mxu0 0.0
    %666 = vmatprep.subr.mxu0 0.0
    %667 = vmatpush1.msra.mxu0 0.0
    %668 = vmatprep.subr.mxu0 0.0
    %669 = vmatpush1.msra.mxu0 0.0
    %670 = vmatprep.subr.mxu0 0.0
    %671 = vmatpush1.msra.mxu0 0.0
    %672 = vmatprep.subr.mxu0 0.0
    %673 = vmatpush1.msra.mxu0 0.0
    %674 = vmatprep.subr.mxu0 0.0
    %675 = vmatpush1.msra.mxu0 0.0
    %676 = vmatprep.subr.mxu0 0.0
    %677 = vmatpush1.msra.mxu0 0.0
    %678 = vmatprep.subr.mxu0 0.0
    %679 = vmatpush1.msra.mxu0 0.0
    %680 = vmatprep.subr.mxu0 0.0
    %681 = vmatpush1.msra.mxu0 0.0
    %682 = vmatprep.subr.mxu0 0.0
    %683 = vmatpush1.msra.mxu0 0.0
    %684 = vmatprep.subr.mxu0 0.0
    %685 = vmatpush1.msra.mxu0 0.0
    %686 = vmatprep.subr.mxu0 0.0
    %687 = vmatpush1.msra.mxu0 0.0
    %688 = vmatprep.mubr.f32.mxu0 0.0
    %689 = vmatmul.mubr.f32.gmra.mrb[0].mxu0 %v622
    %v690 = vpop.f32.mrb[0].mxu0
    %v691 = vadd.f32 0.0, %v690
    %v692 = vpop.f32.mrb[0].mxu0
    %693 = vdwg.mxu0
    %694 = vxpose.xlu0.b32.start [1/16] %v618, 128
    %695 = vxpose.xlu0.b32.cont [2/16] 0.0, 128
    %696 = vxpose.xlu0.b32.cont [3/16] 0.0, 128
    %697 = vxpose.xlu0.b32.cont [4/16] 0.0, 128
    %698 = vxpose.xlu0.b32.cont [5/16] 0.0, 128
    %699 = vxpose.xlu0.b32.cont [6/16] 0.0, 128
    %700 = vxpose.xlu0.b32.cont [7/16] 0.0, 128
    %701 = vxpose.xlu0.b32.cont [8/16] 0.0, 128
    %702 = vxpose.xlu0.b32.cont [9/16] 0.0, 128
    %703 = vxpose.xlu0.b32.cont [10/16] 0.0, 128
    %704 = vxpose.xlu0.b32.cont [11/16] 0.0, 128
    %705 = vxpose.xlu0.b32.cont [12/16] 0.0, 128
    %706 = vxpose.xlu0.b32.cont [13/16] 0.0, 128
    %707 = vxpose.xlu0.b32.cont [14/16] 0.0, 128
    %708 = vxpose.xlu0.b32.cont [15/16] 0.0, 128
    %709 = vxpose.xlu0.b32.end [16/16] 0.0, 128
    %v710 = vpop.trf.xlu0
    %v711 = vpop.trf.xlu0
    %v712 = vpop.trf.xlu0
    %v713 = vpop.trf.xlu0
    %v714 = vpop.trf.xlu0
    %v715 = vpop.trf.xlu0
    %v716 = vpop.trf.xlu0
    %v717 = vpop.trf.xlu0
    %v718 = vpop.trf.xlu0
    %v719 = vpop.trf.xlu0
    %v720 = vpop.trf.xlu0
    %v721 = vpop.trf.xlu0
    %v722 = vpop.trf.xlu0
    %v723 = vpop.trf.xlu0
    %v724 = vpop.trf.xlu0
    %v725 = vpop.trf.xlu0
    %vm726 = vcmask 64512
    %v728 = vsel %vm726, %v710, 0
    %v731 = vsel %vm726, %v711, 0
    %733 = vmatprep.subr.mxu0 0.0
    %734 = vmatpush1.msra.mxu0 %v539
    %735 = vmatprep.subr.mxu0 0.0
    %736 = vmatpush1.msra.mxu0 0.0
    %737 = vmatprep.subr.mxu0 0.0
    %738 = vmatpush1.msra.mxu0 0.0
    %739 = vmatprep.subr.mxu0 0.0
    %740 = vmatpush1.msra.mxu0 0.0
    %741 = vmatprep.subr.mxu0 0.0
    %742 = vmatpush1.msra.mxu0 0.0
    %743 = vmatprep.subr.mxu0 0.0
    %744 = vmatpush1.msra.mxu0 0.0
    %745 = vmatprep.subr.mxu0 0.0
    %746 = vmatpush1.msra.mxu0 0.0
    %747 = vmatprep.subr.mxu0 0.0
    %748 = vmatpush1.msra.mxu0 0.0
    %749 = vmatprep.subr.mxu0 0.0
    %750 = vmatpush1.msra.mxu0 0.0
    %751 = vmatprep.subr.mxu0 0.0
    %752 = vmatpush1.msra.mxu0 0.0
    %753 = vmatprep.subr.mxu0 0.0
    %754 = vmatpush1.msra.mxu0 0.0
    %755 = vmatprep.subr.mxu0 0.0
    %756 = vmatpush1.msra.mxu0 0.0
    %757 = vmatprep.subr.mxu0 0.0
    %758 = vmatpush1.msra.mxu0 0.0
    %759 = vmatprep.subr.mxu0 0.0
    %760 = vmatpush1.msra.mxu0 0.0
    %761 = vmatprep.subr.mxu0 0.0
    %762 = vmatpush1.msra.mxu0 0.0
    %763 = vmatprep.subr.mxu0 0.0
    %764 = vmatpush1.msra.mxu0 0.0
    %765 = vmatprep.subr.mxu0 0.0
    %766 = vmatpush1.msra.mxu0 0.0
    %767 = vmatprep.subr.mxu0 0.0
    %768 = vmatpush1.msra.mxu0 0.0
    %769 = vmatprep.subr.mxu0 0.0
    %770 = vmatpush1.msra.mxu0 0.0
    %771 = vmatprep.subr.mxu0 0.0
    %772 = vmatpush1.msra.mxu0 0.0
    %773 = vmatprep.subr.mxu0 0.0
    %774 = vmatpush1.msra.mxu0 0.0
    %775 = vmatprep.subr.mxu0 0.0
    %776 = vmatpush1.msra.mxu0 0.0
    %777 = vmatprep.subr.mxu0 0.0
    %778 = vmatpush1.msra.mxu0 0.0
    %779 = vmatprep.subr.mxu0 0.0
    %780 = vmatpush1.msra.mxu0 0.0
    %781 = vmatprep.subr.mxu0 0.0
    %782 = vmatpush1.msra.mxu0 0.0
    %783 = vmatprep.subr.mxu0 0.0
    %784 = vmatpush1.msra.mxu0 0.0
    %785 = vmatprep.subr.mxu0 0.0
    %786 = vmatpush1.msra.mxu0 0.0
    %787 = vmatprep.subr.mxu0 0.0
    %788 = vmatpush1.msra.mxu0 0.0
    %789 = vmatprep.subr.mxu0 0.0
    %790 = vmatpush1.msra.mxu0 0.0
    %791 = vmatprep.subr.mxu0 0.0
    %792 = vmatpush1.msra.mxu0 0.0
    %793 = vmatprep.subr.mxu0 0.0
    %794 = vmatpush1.msra.mxu0 0.0
    %795 = vmatprep.subr.mxu0 0.0
    %796 = vmatpush1.msra.mxu0 0.0
    %797 = vmatprep.mubr.f32.mxu0 0.0
    %798 = vmatmul.mubr.f32.gmra.mrb[0].mxu0 %v728
    %v799 = vpop.f32.mrb[0].mxu0
    %v800 = vadd.f32 0.0, %v799
    %v801 = vpop.f32.mrb[0].mxu0
    %802 = vmatprep.mubr.f32.mxu0 0.0
    %803 = vmatmul.mubr.f32.gmra.mrb[0].mxu0 %v731
    %v804 = vpop.f32.mrb[0].mxu0
    %v805 = vadd.f32 0.0, %v804
    %v806 = vpop.f32.mrb[0].mxu0
    %807 = vdwg.mxu0
    %v808 = vadd.f32 %v540, %v800
    %v809 = vadd.f32 %v541, %v805
    %v810 = vtanh.pop %v808
    %v811 = vtanh.pop %v809
    %v812 = vadd.f32 %v539, %v691
    %v813 = vtanh.pop %v812
    %v815 = vsel %vm311, %v533, 0
    %v818 = vsel %vm311, %v810, 0
    %v821 = vsel %vm311, %v811, 0
    %823 = vmatprep.subr.mxu0 0.0
    %824 = vmatpush1.xpose.msra.mxu0 %v818
    %825 = vmatprep.subr.mxu0 0.0
    %826 = vmatpush1.xpose.msra.mxu0 %v821
    %827 = vmatprep.subr.mxu0 0.0
    %828 = vmatpush1.xpose.msra.mxu0 0.0
    %829 = vmatprep.subr.mxu0 0.0
    %830 = vmatpush1.xpose.msra.mxu0 0.0
    %831 = vmatprep.subr.mxu0 0.0
    %832 = vmatpush1.xpose.msra.mxu0 0.0
    %833 = vmatprep.subr.mxu0 0.0
    %834 = vmatpush1.xpose.msra.mxu0 0.0
    %835 = vmatprep.subr.mxu0 0.0
    %836 = vmatpush1.xpose.msra.mxu0 0.0
    %837 = vmatprep.subr.mxu0 0.0
    %838 = vmatpush1.xpose.msra.mxu0 0.0
    %839 = vmatprep.subr.mxu0 0.0
    %840 = vmatpush1.xpose.msra.mxu0 0.0
    %841 = vmatprep.subr.mxu0 0.0
    %842 = vmatpush1.xpose.msra.mxu0 0.0
    %843 = vmatprep.subr.mxu0 0.0
    %844 = vmatpush1.xpose.msra.mxu0 0.0
    %845 = vmatprep.subr.mxu0 0.0
    %846 = vmatpush1.xpose.msra.mxu0 0.0
    %847 = vmatprep.subr.mxu0 0.0
    %848 = vmatpush1.xpose.msra.mxu0 0.0
    %849 = vmatprep.subr.mxu0 0.0
    %850 = vmatpush1.xpose.msra.mxu0 0.0
    %851 = vmatprep.subr.mxu0 0.0
    %852 = vmatpush1.xpose.msra.mxu0 0.0
    %853 = vmatprep.subr.mxu0 0.0
    %854 = vmatpush1.xpose.msra.mxu0 0.0
    %855 = vmatprep.subr.mxu0 0.0
    %856 = vmatpush1.xpose.msra.mxu0 0.0
    %857 = vmatprep.subr.mxu0 0.0
    %858 = vmatpush1.xpose.msra.mxu0 0.0
    %859 = vmatprep.subr.mxu0 0.0
    %860 = vmatpush1.xpose.msra.mxu0 0.0
    %861 = vmatprep.subr.mxu0 0.0
    %862 = vmatpush1.xpose.msra.mxu0 0.0
    %863 = vmatprep.subr.mxu0 0.0
    %864 = vmatpush1.xpose.msra.mxu0 0.0
    %865 = vmatprep.subr.mxu0 0.0
    %866 = vmatpush1.xpose.msra.mxu0 0.0
    %867 = vmatprep.subr.mxu0 0.0
    %868 = vmatpush1.xpose.msra.mxu0 0.0
    %869 = vmatprep.subr.mxu0 0.0
    %870 = vmatpush1.xpose.msra.mxu0 0.0
    %871 = vmatprep.subr.mxu0 0.0
    %872 = vmatpush1.xpose.msra.mxu0 0.0
    %873 = vmatprep.subr.mxu0 0.0
    %874 = vmatpush1.xpose.msra.mxu0 0.0
    %875 = vmatprep.subr.mxu0 0.0
    %876 = vmatpush1.xpose.msra.mxu0 0.0
    %877 = vmatprep.subr.mxu0 0.0
    %878 = vmatpush1.xpose.msra.mxu0 0.0
    %879 = vmatprep.subr.mxu0 0.0
    %880 = vmatpush1.xpose.msra.mxu0 0.0
    %881 = vmatprep.subr.mxu0 0.0
    %882 = vmatpush1.xpose.msra.mxu0 0.0
    %883 = vmatprep.subr.mxu0 0.0
    %884 = vmatpush1.xpose.msra.mxu0 0.0
    %885 = vmatprep.subr.mxu0 0.0
    %886 = vmatpush1.xpose.msra.mxu0 0.0
    %887 = vmatprep.mubr.f32.mxu0 0.0
    %888 = vmatmul.mubr.f32.gmra.mrb[0].mxu0 %v815
    %v889 = vpop.f32.mrb[0].mxu0
    %v890 = vadd.f32 0.0, %v889
    %v891 = vpop.f32.mrb[0].mxu0
    %892 = vdwg.mxu0
    %v894 = vsel %vm311, %v534, 0
    %v897 = vsel %vm311, %v813, 0
    %899 = vmatprep.subr.mxu0 0.0
    %900 = vmatpush1.xpose.msra.mxu0 %v897
    %901 = vmatprep.subr.mxu0 0.0
    %902 = vmatpush1.xpose.msra.mxu0 0.0
    %903 = vmatprep.subr.mxu0 0.0
    %904 = vmatpush1.xpose.msra.mxu0 0.0
    %905 = vmatprep.subr.mxu0 0.0
    %906 = vmatpush1.xpose.msra.mxu0 0.0
    %907 = vmatprep.subr.mxu0 0.0
    %908 = vmatpush1.xpose.msra.mxu0 0.0
    %909 = vmatprep.subr.mxu0 0.0
    %910 = vmatpush1.xpose.msra.mxu0 0.0
    %911 = vmatprep.subr.mxu0 0.0
    %912 = vmatpush1.xpose.msra.mxu0 0.0
    %913 = vmatprep.subr.mxu0 0.0
    %914 = vmatpush1.xpose.msra.mxu0 0.0
    %915 = vmatprep.subr.mxu0 0.0
    %916 = vmatpush1.xpose.msra.mxu0 0.0
    %917 = vmatprep.subr.mxu0 0.0
    %918 = vmatpush1.xpose.msra.mxu0 0.0
    %919 = vmatprep.subr.mxu0 0.0
    %920 = vmatpush1.xpose.msra.mxu0 0.0
    %921 = vmatprep.subr.mxu0 0.0
    %922 = vmatpush1.xpose.msra.mxu0 0.0
    %923 = vmatprep.subr.mxu0 0.0
    %924 = vmatpush1.xpose.msra.mxu0 0.0
    %925 = vmatprep.subr.mxu0 0.0
    %926 = vmatpush1.xpose.msra.mxu0 0.0
    %927 = vmatprep.subr.mxu0 0.0
    %928 = vmatpush1.xpose.msra.mxu0 0.0
    %929 = vmatprep.subr.mxu0 0.0
    %930 = vmatpush1.xpose.msra.mxu0 0.0
    %931 = vmatprep.subr.mxu0 0.0
    %932 = vmatpush1.xpose.msra.mxu0 0.0
    %933 = vmatprep.subr.mxu0 0.0
    %934 = vmatpush1.xpose.msra.mxu0 0.0
    %935 = vmatprep.subr.mxu0 0.0
    %936 = vmatpush1.xpose.msra.mxu0 0.0
    %937 = vmatprep.subr.mxu0 0.0
    %938 = vmatpush1.xpose.msra.mxu0 0.0
    %939 = vmatprep.subr.mxu0 0.0
    %940 = vmatpush1.xpose.msra.mxu0 0.0
    %941 = vmatprep.subr.mxu0 0.0
    %942 = vmatpush1.xpose.msra.mxu0 0.0
    %943 = vmatprep.subr.mxu0 0.0
    %944 = vmatpush1.xpose.msra.mxu0 0.0
    %945 = vmatprep.subr.mxu0 0.0
    %946 = vmatpush1.xpose.msra.mxu0 0.0
    %947 = vmatprep.subr.mxu0 0.0
    %948 = vmatpush1.xpose.msra.mxu0 0.0
    %949 = vmatprep.subr.mxu0 0.0
    %950 = vmatpush1.xpose.msra.mxu0 0.0
    %951 = vmatprep.subr.mxu0 0.0
    %952 = vmatpush1.xpose.msra.mxu0 0.0
    %953 = vmatprep.subr.mxu0 0.0
    %954 = vmatpush1.xpose.msra.mxu0 0.0
    %955 = vmatprep.subr.mxu0 0.0
    %956 = vmatpush1.xpose.msra.mxu0 0.0
    %957 = vmatprep.subr.mxu0 0.0
    %958 = vmatpush1.xpose.msra.mxu0 0.0
    %959 = vmatprep.subr.mxu0 0.0
    %960 = vmatpush1.xpose.msra.mxu0 0.0
    %961 = vmatprep.subr.mxu0 0.0
    %962 = vmatpush1.xpose.msra.mxu0 0.0
    %963 = vmatprep.mubr.f32.mxu0 0.0
    %964 = vmatmul.mubr.f32.gmra.mrb[0].mxu0 %v894
    %v965 = vpop.f32.mrb[0].mxu0
    %v966 = vadd.f32 0.0, %v965
    %v967 = vpop.f32.mrb[0].mxu0
    %968 = vdwg.mxu0
    %vm969 = vcmask 122880
    %v970 = vsel %vm969, %v890, -inf
    %971 = vmax.xlane.f32.xlu0 %v970
    %v972 = vpop.xlane.xlu0 %971
    %v973 = vsub.f32 %v890, %v972
    %v974 = vmul.f32 %v973, 1.442695
    %v975 = vpow.pop %v974
    %v976 = vsel %vm969, %v975, 0.0
    %977 = vadd.xlane.f32.xlu0 %v976
    %v978 = vpop.xlane.xlu0 %977
    %v979 = vrcp.pop %v978
    %v980 = vmul.f32 %v975, %v979
    %vm981 = vcmask 57344
    %v982 = vsel %vm981, %v966, -inf
    %983 = vmax.xlane.f32.xlu0 %v982
    %v984 = vpop.xlane.xlu0 %983
    %v985 = vsub.f32 %v966, %v984
    %v986 = vmul.f32 %v985, 1.442695
    %v987 = vpow.pop %v986
    %v988 = vsel %vm981, %v987, 0.0
    %989 = vadd.xlane.f32.xlu0 %v988
    %v990 = vpop.xlane.xlu0 %989
    %v991 = vrcp.pop %v990
    %v992 = vmul.f32 %v987, %v991
    %v994 = vsel %vm726, %v992, 0
    %996 = vmatprep.subr.mxu0 0.0
    %997 = vmatpush1.msra.mxu0 %v535
    %998 = vmatprep.subr.mxu0 0.0
    %999 = vmatpush1.msra.mxu0 0.0
    %1000 = vmatprep.subr.mxu0 0.0
    %1001 = vmatpush1.msra.mxu0 0.0
    %1002 = vmatprep.subr.mxu0 0.0
    %1003 = vmatpush1.msra.mxu0 0.0
    %1004 = vmatprep.subr.mxu0 0.0
    %1005 = vmatpush1.msra.mxu0 0.0
    %1006 = vmatprep.subr.mxu0 0.0
    %1007 = vmatpush1.msra.mxu0 0.0
    %1008 = vmatprep.subr.mxu0 0.0
    %1009 = vmatpush1.msra.mxu0 0.0
    %1010 = vmatprep.subr.mxu0 0.0
    %1011 = vmatpush1.msra.mxu0 0.0
    %1012 = vmatprep.subr.mxu0 0.0
    %1013 = vmatpush1.msra.mxu0 0.0
    %1014 = vmatprep.subr.mxu0 0.0
    %1015 = vmatpush1.msra.mxu0 0.0
    %1016 = vmatprep.subr.mxu0 0.0
    %1017 = vmatpush1.msra.mxu0 0.0
    %1018 = vmatprep.subr.mxu0 0.0
    %1019 = vmatpush1.msra.mxu0 0.0
    %1020 = vmatprep.subr.mxu0 0.0
    %1021 = vmatpush1.msra.mxu0 0.0
    %1022 = vmatprep.subr.mxu0 0.0
    %1023 = vmatpush1.msra.mxu0 0.0
    %1024 = vmatprep.subr.mxu0 0.0
    %1025 = vmatpush1.msra.mxu0 0.0
    %1026 = vmatprep.subr.mxu0 0.0
    %1027 = vmatpush1.msra.mxu0 0.0
    %1028 = vmatprep.subr.mxu0 0.0
    %1029 = vmatpush1.msra.mxu0 0.0
    %1030 = vmatprep.subr.mxu0 0.0
    %1031 = vmatpush1.msra.mxu0 0.0
    %1032 = vmatprep.subr.mxu0 0.0
    %1033 = vmatpush1.msra.mxu0 0.0
    %1034 = vmatprep.subr.mxu0 0.0
    %1035 = vmatpush1.msra.mxu0 0.0
    %1036 = vmatprep.subr.mxu0 0.0
    %1037 = vmatpush1.msra.mxu0 0.0
    %1038 = vmatprep.subr.mxu0 0.0
    %1039 = vmatpush1.msra.mxu0 0.0
    %1040 = vmatprep.subr.mxu0 0.0
    %1041 = vmatpush1.msra.mxu0 0.0
    %1042 = vmatprep.subr.mxu0 0.0
    %1043 = vmatpush1.msra.mxu0 0.0
    %1044 = vmatprep.subr.mxu0 0.0
    %1045 = vmatpush1.msra.mxu0 0.0
    %1046 = vmatprep.subr.mxu0 0.0
    %1047 = vmatpush1.msra.mxu0 0.0
    %1048 = vmatprep.subr.mxu0 0.0
    %1049 = vmatpush1.msra.mxu0 0.0
    %1050 = vmatprep.subr.mxu0 0.0
    %1051 = vmatpush1.msra.mxu0 0.0
    %1052 = vmatprep.subr.mxu0 0.0
    %1053 = vmatpush1.msra.mxu0 0.0
    %1054 = vmatprep.subr.mxu0 0.0
    %1055 = vmatpush1.msra.mxu0 0.0
    %1056 = vmatprep.subr.mxu0 0.0
    %1057 = vmatpush1.msra.mxu0 0.0
    %1058 = vmatprep.subr.mxu0 0.0
    %1059 = vmatpush1.msra.mxu0 0.0
    %1060 = vmatprep.mubr.f32.mxu0 0.0
    %1061 = vmatmul.mubr.f32.gmra.mrb[0].mxu0 %v994
    %v1062 = vpop.f32.mrb[0].mxu0
    %v1063 = vadd.f32 0.0, %v1062
    %v1064 = vpop.f32.mrb[0].mxu0
    %1065 = vdwg.mxu0
    %v1067 = vsel %vm311, %v980, 0
    %1069 = vmatprep.subr.mxu0 0.0
    %1070 = vmatpush1.msra.mxu0 %v536
    %1071 = vmatprep.subr.mxu0 0.0
    %1072 = vmatpush1.msra.mxu0 %v537
    %1073 = vmatprep.subr.mxu0 0.0
    %1074 = vmatpush1.msra.mxu0 0.0
    %1075 = vmatprep.subr.mxu0 0.0
    %1076 = vmatpush1.msra.mxu0 0.0
    %1077 = vmatprep.subr.mxu0 0.0
    %1078 = vmatpush1.msra.mxu0 0.0
    %1079 = vmatprep.subr.mxu0 0.0
    %1080 = vmatpush1.msra.mxu0 0.0
    %1081 = vmatprep.subr.mxu0 0.0
    %1082 = vmatpush1.msra.mxu0 0.0
    %1083 = vmatprep.subr.mxu0 0.0
    %1084 = vmatpush1.msra.mxu0 0.0
    %1085 = vmatprep.subr.mxu0 0.0
    %1086 = vmatpush1.msra.mxu0 0.0
    %1087 = vmatprep.subr.mxu0 0.0
    %1088 = vmatpush1.msra.mxu0 0.0
    %1089 = vmatprep.subr.mxu0 0.0
    %1090 = vmatpush1.msra.mxu0 0.0
    %1091 = vmatprep.subr.mxu0 0.0
    %1092 = vmatpush1.msra.mxu0 0.0
    %1093 = vmatprep.subr.mxu0 0.0
    %1094 = vmatpush1.msra.mxu0 0.0
    %1095 = vmatprep.subr.mxu0 0.0
    %1096 = vmatpush1.msra.mxu0 0.0
    %1097 = vmatprep.subr.mxu0 0.0
    %1098 = vmatpush1.msra.mxu0 0.0
    %1099 = vmatprep.subr.mxu0 0.0
    %1100 = vmatpush1.msra.mxu0 0.0
    %1101 = vmatprep.subr.mxu0 0.0
    %1102 = vmatpush1.msra.mxu0 0.0
    %1103 = vmatprep.subr.mxu0 0.0
    %1104 = vmatpush1.msra.mxu0 0.0
    %1105 = vmatprep.subr.mxu0 0.0
    %1106 = vmatpush1.msra.mxu0 0.0
    %1107 = vmatprep.subr.mxu0 0.0
    %1108 = vmatpush1.msra.mxu0 0.0
    %1109 = vmatprep.subr.mxu0 0.0
    %1110 = vmatpush1.msra.mxu0 0.0
    %1111 = vmatprep.subr.mxu0 0.0
    %1112 = vmatpush1.msra.mxu0 0.0
    %1113 = vmatprep.subr.mxu0 0.0
    %1114 = vmatpush1.msra.mxu0 0.0
    %1115 = vmatprep.subr.mxu0 0.0
    %1116 = vmatpush1.msra.mxu0 0.0
    %1117 = vmatprep.subr.mxu0 0.0
    %1118 = vmatpush1.msra.mxu0 0.0
    %1119 = vmatprep.subr.mxu0 0.0
    %1120 = vmatpush1.msra.mxu0 0.0
    %1121 = vmatprep.subr.mxu0 0.0
    %1122 = vmatpush1.msra.mxu0 0.0
    %1123 = vmatprep.subr.mxu0 0.0
    %1124 = vmatpush1.msra.mxu0 0.0
    %1125 = vmatprep.subr.mxu0 0.0
    %1126 = vmatpush1.msra.mxu0 0.0
    %1127 = vmatprep.subr.mxu0 0.0
    %1128 = vmatpush1.msra.mxu0 0.0
    %1129 = vmatprep.subr.mxu0 0.0
    %1130 = vmatpush1.msra.mxu0 0.0
    %1131 = vmatprep.subr.mxu0 0.0
    %1132 = vmatpush1.msra.mxu0 0.0
    %1133 = vmatprep.mubr.f32.mxu0 0.0
    %1134 = vmatmul.mubr.f32.gmra.mrb[0].mxu0 %v1067
    %v1135 = vpop.f32.mrb[0].mxu0
    %v1136 = vadd.f32 %v1063, %v1135
    %v1137 = vpop.f32.mrb[0].mxu0
    %1138 = vdwg.mxu0
    %vm1139 = vcmask 253952
    %1140 = vst.msk [vmem:[#allocation5] sm:$0x1] %vm1139, %v1136
    %s1141 = scalar_lea.vmem %s0, 8
    %v1142 = vld [vmem:[%s1141] sm:$0xff]
    %s1143 = scalar_lea.vmem %s1, 16
    %v1144 = vld [vmem:[%s1143] sm:$0xff]
    %v1145 = vld [vmem:[%s1143 + $0x8] sm:$0xff]
    %s1146 = scalar_lea.vmem [#allocation2], 8
    %v1147 = vld [vmem:[%s1146] sm:$0xff]
    %s1148 = scalar_lea.vmem [#allocation3], 8
    %v1149 = vld [vmem:[%s1148] sm:$0xff]
    %s1150 = scalar_lea.vmem [#allocation4], 16
    %v1151 = vld [vmem:[%s1150] sm:$0xff]
    %v1152 = vld [vmem:[%s1150 + $0x8] sm:$0xff]
    %v1154 = vsel %vm64, %v1147, 0
    %v1157 = vsel %vm64, %v1144, 0
    %v1160 = vsel %vm64, %v1145, 0
    %1162 = vmatprep.subr.mxu0 0.0
    %1163 = vmatpush1.xpose.msra.mxu0 %v1157
    %1164 = vmatprep.subr.mxu0 0.0
    %1165 = vmatpush1.xpose.msra.mxu0 %v1160
    %1166 = vmatprep.subr.mxu0 0.0
    %1167 = vmatpush1.xpose.msra.mxu0 0.0
    %1168 = vmatprep.subr.mxu0 0.0
    %1169 = vmatpush1.xpose.msra.mxu0 0.0
    %1170 = vmatprep.subr.mxu0 0.0
    %1171 = vmatpush1.xpose.msra.mxu0 0.0
    %1172 = vmatprep.subr.mxu0 0.0
    %1173 = vmatpush1.xpose.msra.mxu0 0.0
    %1174 = vmatprep.subr.mxu0 0.0
    %1175 = vmatpush1.xpose.msra.mxu0 0.0
    %1176 = vmatprep.subr.mxu0 0.0
    %1177 = vmatpush1.xpose.msra.mxu0 0.0
    %1178 = vmatprep.subr.mxu0 0.0
    %1179 = vmatpush1.xpose.msra.mxu0 0.0
    %1180 = vmatprep.subr.mxu0 0.0
    %1181 = vmatpush1.xpose.msra.mxu0 0.0
    %1182 = vmatprep.subr.mxu0 0.0
    %1183 = vmatpush1.xpose.msra.mxu0 0.0
    %1184 = vmatprep.subr.mxu0 0.0
    %1185 = vmatpush1.xpose.msra.mxu0 0.0
    %1186 = vmatprep.subr.mxu0 0.0
    %1187 = vmatpush1.xpose.msra.mxu0 0.0
    %1188 = vmatprep.subr.mxu0 0.0
    %1189 = vmatpush1.xpose.msra.mxu0 0.0
    %1190 = vmatprep.subr.mxu0 0.0
    %1191 = vmatpush1.xpose.msra.mxu0 0.0
    %1192 = vmatprep.subr.mxu0 0.0
    %1193 = vmatpush1.xpose.msra.mxu0 0.0
    %1194 = vmatprep.subr.mxu0 0.0
    %1195 = vmatpush1.xpose.msra.mxu0 0.0
    %1196 = vmatprep.subr.mxu0 0.0
    %1197 = vmatpush1.xpose.msra.mxu0 0.0
    %1198 = vmatprep.subr.mxu0 0.0
    %1199 = vmatpush1.xpose.msra.mxu0 0.0
    %1200 = vmatprep.subr.mxu0 0.0
    %1201 = vmatpush1.xpose.msra.mxu0 0.0
    %1202 = vmatprep.subr.mxu0 0.0
    %1203 = vmatpush1.xpose.msra.mxu0 0.0
    %1204 = vmatprep.subr.mxu0 0.0
    %1205 = vmatpush1.xpose.msra.mxu0 0.0
    %1206 = vmatprep.subr.mxu0 0.0
    %1207 = vmatpush1.xpose.msra.mxu0 0.0
    %1208 = vmatprep.subr.mxu0 0.0
    %1209 = vmatpush1.xpose.msra.mxu0 0.0
    %1210 = vmatprep.subr.mxu0 0.0
    %1211 = vmatpush1.xpose.msra.mxu0 0.0
    %1212 = vmatprep.subr.mxu0 0.0
    %1213 = vmatpush1.xpose.msra.mxu0 0.0
    %1214 = vmatprep.subr.mxu0 0.0
    %1215 = vmatpush1.xpose.msra.mxu0 0.0
    %1216 = vmatprep.subr.mxu0 0.0
    %1217 = vmatpush1.xpose.msra.mxu0 0.0
    %1218 = vmatprep.subr.mxu0 0.0
    %1219 = vmatpush1.xpose.msra.mxu0 0.0
    %1220 = vmatprep.subr.mxu0 0.0
    %1221 = vmatpush1.xpose.msra.mxu0 0.0
    %1222 = vmatprep.subr.mxu0 0.0
    %1223 = vmatpush1.xpose.msra.mxu0 0.0
    %1224 = vmatprep.subr.mxu0 0.0
    %1225 = vmatpush1.xpose.msra.mxu0 0.0
    %1226 = vmatprep.mubr.f32.mxu0 0.0
    %1227 = vmatmul.mubr.f32.gmra.mrb[0].mxu0 %v1154
    %v1228 = vpop.f32.mrb[0].mxu0
    %v1229 = vadd.f32 0.0, %v1228
    %v1230 = vpop.f32.mrb[0].mxu0
    %1231 = vdwg.mxu0
    %v1233 = vsel %vm311, %v1229, 0
    %1235 = vmatprep.subr.mxu0 0.0
    %1236 = vmatpush1.msra.mxu0 %v1151
    %1237 = vmatprep.subr.mxu0 0.0
    %1238 = vmatpush1.msra.mxu0 %v1152
    %1239 = vmatprep.subr.mxu0 0.0
    %1240 = vmatpush1.msra.mxu0 0.0
    %1241 = vmatprep.subr.mxu0 0.0
    %1242 = vmatpush1.msra.mxu0 0.0
    %1243 = vmatprep.subr.mxu0 0.0
    %1244 = vmatpush1.msra.mxu0 0.0
    %1245 = vmatprep.subr.mxu0 0.0
    %1246 = vmatpush1.msra.mxu0 0.0
    %1247 = vmatprep.subr.mxu0 0.0
    %1248 = vmatpush1.msra.mxu0 0.0
    %1249 = vmatprep.subr.mxu0 0.0
    %1250 = vmatpush1.msra.mxu0 0.0
    %1251 = vmatprep.subr.mxu0 0.0
    %1252 = vmatpush1.msra.mxu0 0.0
    %1253 = vmatprep.subr.mxu0 0.0
    %1254 = vmatpush1.msra.mxu0 0.0
    %1255 = vmatprep.subr.mxu0 0.0
    %1256 = vmatpush1.msra.mxu0 0.0
    %1257 = vmatprep.subr.mxu0 0.0
    %1258 = vmatpush1.msra.mxu0 0.0
    %1259 = vmatprep.subr.mxu0 0.0
    %1260 = vmatpush1.msra.mxu0 0.0
    %1261 = vmatprep.subr.mxu0 0.0
    %1262 = vmatpush1.msra.mxu0 0.0
    %1263 = vmatprep.subr.mxu0 0.0
    %1264 = vmatpush1.msra.mxu0 0.0
    %1265 = vmatprep.subr.mxu0 0.0
    %1266 = vmatpush1.msra.mxu0 0.0
    %1267 = vmatprep.subr.mxu0 0.0
    %1268 = vmatpush1.msra.mxu0 0.0
    %1269 = vmatprep.subr.mxu0 0.0
    %1270 = vmatpush1.msra.mxu0 0.0
    %1271 = vmatprep.subr.mxu0 0.0
    %1272 = vmatpush1.msra.mxu0 0.0
    %1273 = vmatprep.subr.mxu0 0.0
    %1274 = vmatpush1.msra.mxu0 0.0
    %1275 = vmatprep.subr.mxu0 0.0
    %1276 = vmatpush1.msra.mxu0 0.0
    %1277 = vmatprep.subr.mxu0 0.0
    %1278 = vmatpush1.msra.mxu0 0.0
    %1279 = vmatprep.subr.mxu0 0.0
    %1280 = vmatpush1.msra.mxu0 0.0
    %1281 = vmatprep.subr.mxu0 0.0
    %1282 = vmatpush1.msra.mxu0 0.0
    %1283 = vmatprep.subr.mxu0 0.0
    %1284 = vmatpush1.msra.mxu0 0.0
    %1285 = vmatprep.subr.mxu0 0.0
    %1286 = vmatpush1.msra.mxu0 0.0
    %1287 = vmatprep.subr.mxu0 0.0
    %1288 = vmatpush1.msra.mxu0 0.0
    %1289 = vmatprep.subr.mxu0 0.0
    %1290 = vmatpush1.msra.mxu0 0.0
    %1291 = vmatprep.subr.mxu0 0.0
    %1292 = vmatpush1.msra.mxu0 0.0
    %1293 = vmatprep.subr.mxu0 0.0
    %1294 = vmatpush1.msra.mxu0 0.0
    %1295 = vmatprep.subr.mxu0 0.0
    %1296 = vmatpush1.msra.mxu0 0.0
    %1297 = vmatprep.subr.mxu0 0.0
    %1298 = vmatpush1.msra.mxu0 0.0
    %1299 = vmatprep.mubr.f32.mxu0 0.0
    %1300 = vmatmul.mubr.f32.gmra.mrb[0].mxu0 %v1233
    %v1301 = vpop.f32.mrb[0].mxu0
    %v1302 = vadd.f32 0.0, %v1301
    %v1303 = vpop.f32.mrb[0].mxu0
    %1304 = vdwg.mxu0
    %1305 = vxpose.xlu0.b32.start [1/16] %v1229, 128
    %1306 = vxpose.xlu0.b32.cont [2/16] 0.0, 128
    %1307 = vxpose.xlu0.b32.cont [3/16] 0.0, 128
    %1308 = vxpose.xlu0.b32.cont [4/16] 0.0, 128
    %1309 = vxpose.xlu0.b32.cont [5/16] 0.0, 128
    %1310 = vxpose.xlu0.b32.cont [6/16] 0.0, 128
    %1311 = vxpose.xlu0.b32.cont [7/16] 0.0, 128
    %1312 = vxpose.xlu0.b32.cont [8/16] 0.0, 128
    %1313 = vxpose.xlu0.b32.cont [9/16] 0.0, 128
    %1314 = vxpose.xlu0.b32.cont [10/16] 0.0, 128
    %1315 = vxpose.xlu0.b32.cont [11/16] 0.0, 128
    %1316 = vxpose.xlu0.b32.cont [12/16] 0.0, 128
    %1317 = vxpose.xlu0.b32.cont [13/16] 0.0, 128
    %1318 = vxpose.xlu0.b32.cont [14/16] 0.0, 128
    %1319 = vxpose.xlu0.b32.cont [15/16] 0.0, 128
    %1320 = vxpose.xlu0.b32.end [16/16] 0.0, 128
    %v1321 = vpop.trf.xlu0
    %v1322 = vpop.trf.xlu0
    %v1323 = vpop.trf.xlu0
    %v1324 = vpop.trf.xlu0
    %v1325 = vpop.trf.xlu0
    %v1326 = vpop.trf.xlu0
    %v1327 = vpop.trf.xlu0
    %v1328 = vpop.trf.xlu0
    %v1329 = vpop.trf.xlu0
    %v1330 = vpop.trf.xlu0
    %v1331 = vpop.trf.xlu0
    %v1332 = vpop.trf.xlu0
    %v1333 = vpop.trf.xlu0
    %v1334 = vpop.trf.xlu0
    %v1335 = vpop.trf.xlu0
    %v1336 = vpop.trf.xlu0
    %v1338 = vsel %vm726, %v1321, 0
    %v1341 = vsel %vm726, %v1322, 0
    %1343 = vmatprep.subr.mxu0 0.0
    %1344 = vmatpush1.msra.mxu0 %v1149
    %1345 = vmatprep.subr.mxu0 0.0
    %1346 = vmatpush1.msra.mxu0 0.0
    %1347 = vmatprep.subr.mxu0 0.0
    %1348 = vmatpush1.msra.mxu0 0.0
    %1349 = vmatprep.subr.mxu0 0.0
    %1350 = vmatpush1.msra.mxu0 0.0
    %1351 = vmatprep.subr.mxu0 0.0
    %1352 = vmatpush1.msra.mxu0 0.0
    %1353 = vmatprep.subr.mxu0 0.0
    %1354 = vmatpush1.msra.mxu0 0.0
    %1355 = vmatprep.subr.mxu0 0.0
    %1356 = vmatpush1.msra.mxu0 0.0
    %1357 = vmatprep.subr.mxu0 0.0
    %1358 = vmatpush1.msra.mxu0 0.0
    %1359 = vmatprep.subr.mxu0 0.0
    %1360 = vmatpush1.msra.mxu0 0.0
    %1361 = vmatprep.subr.mxu0 0.0
    %1362 = vmatpush1.msra.mxu0 0.0
    %1363 = vmatprep.subr.mxu0 0.0
    %1364 = vmatpush1.msra.mxu0 0.0
    %1365 = vmatprep.subr.mxu0 0.0
    %1366 = vmatpush1.msra.mxu0 0.0
    %1367 = vmatprep.subr.mxu0 0.0
    %1368 = vmatpush1.msra.mxu0 0.0
    %1369 = vmatprep.subr.mxu0 0.0
    %1370 = vmatpush1.msra.mxu0 0.0
    %1371 = vmatprep.subr.mxu0 0.0
    %1372 = vmatpush1.msra.mxu0 0.0
    %1373 = vmatprep.subr.mxu0 0.0
    %1374 = vmatpush1.msra.mxu0 0.0
    %1375 = vmatprep.subr.mxu0 0.0
    %1376 = vmatpush1.msra.mxu0 0.0
    %1377 = vmatprep.subr.mxu0 0.0
    %1378 = vmatpush1.msra.mxu0 0.0
    %1379 = vmatprep.subr.mxu0 0.0
    %1380 = vmatpush1.msra.mxu0 0.0
    %1381 = vmatprep.subr.mxu0 0.0
    %1382 = vmatpush1.msra.mxu0 0.0
    %1383 = vmatprep.subr.mxu0 0.0
    %1384 = vmatpush1.msra.mxu0 0.0
    %1385 = vmatprep.subr.mxu0 0.0
    %1386 = vmatpush1.msra.mxu0 0.0
    %1387 = vmatprep.subr.mxu0 0.0
    %1388 = vmatpush1.msra.mxu0 0.0
    %1389 = vmatprep.subr.mxu0 0.0
    %1390 = vmatpush1.msra.mxu0 0.0
    %1391 = vmatprep.subr.mxu0 0.0
    %1392 = vmatpush1.msra.mxu0 0.0
    %1393 = vmatprep.subr.mxu0 0.0
    %1394 = vmatpush1.msra.mxu0 0.0
    %1395 = vmatprep.subr.mxu0 0.0
    %1396 = vmatpush1.msra.mxu0 0.0
    %1397 = vmatprep.subr.mxu0 0.0
    %1398 = vmatpush1.msra.mxu0 0.0
    %1399 = vmatprep.subr.mxu0 0.0
    %1400 = vmatpush1.msra.mxu0 0.0
    %1401 = vmatprep.subr.mxu0 0.0
    %1402 = vmatpush1.msra.mxu0 0.0
    %1403 = vmatprep.subr.mxu0 0.0
    %1404 = vmatpush1.msra.mxu0 0.0
    %1405 = vmatprep.subr.mxu0 0.0
    %1406 = vmatpush1.msra.mxu0 0.0
    %1407 = vmatprep.mubr.f32.mxu0 0.0
    %1408 = vmatmul.mubr.f32.gmra.mrb[0].mxu0 %v1338
    %v1409 = vpop.f32.mrb[0].mxu0
    %v1410 = vadd.f32 0.0, %v1409
    %v1411 = vpop.f32.mrb[0].mxu0
    %1412 = vmatprep.mubr.f32.mxu0 0.0
    %1413 = vmatmul.mubr.f32.gmra.mrb[0].mxu0 %v1341
    %v1414 = vpop.f32.mrb[0].mxu0
    %v1415 = vadd.f32 0.0, %v1414
    %v1416 = vpop.f32.mrb[0].mxu0
    %1417 = vdwg.mxu0
    %v1418 = vadd.f32 %v1151, %v1410
    %v1419 = vadd.f32 %v1152, %v1415
    %v1420 = vtanh.pop %v1418
    %v1421 = vtanh.pop %v1419
    %v1422 = vadd.f32 %v1149, %v1302
    %v1423 = vtanh.pop %v1422
    %v1425 = vsel %vm311, %v1420, 0
    %v1428 = vsel %vm311, %v1421, 0
    %1430 = vmatprep.subr.mxu0 0.0
    %1431 = vmatpush1.xpose.msra.mxu0 %v1425
    %1432 = vmatprep.subr.mxu0 0.0
    %1433 = vmatpush1.xpose.msra.mxu0 %v1428
    %1434 = vmatprep.subr.mxu0 0.0
    %1435 = vmatpush1.xpose.msra.mxu0 0.0
    %1436 = vmatprep.subr.mxu0 0.0
    %1437 = vmatpush1.xpose.msra.mxu0 0.0
    %1438 = vmatprep.subr.mxu0 0.0
    %1439 = vmatpush1.xpose.msra.mxu0 0.0
    %1440 = vmatprep.subr.mxu0 0.0
    %1441 = vmatpush1.xpose.msra.mxu0 0.0
    %1442 = vmatprep.subr.mxu0 0.0
    %1443 = vmatpush1.xpose.msra.mxu0 0.0
    %1444 = vmatprep.subr.mxu0 0.0
    %1445 = vmatpush1.xpose.msra.mxu0 0.0
    %1446 = vmatprep.subr.mxu0 0.0
    %1447 = vmatpush1.xpose.msra.mxu0 0.0
    %1448 = vmatprep.subr.mxu0 0.0
    %1449 = vmatpush1.xpose.msra.mxu0 0.0
    %1450 = vmatprep.subr.mxu0 0.0
    %1451 = vmatpush1.xpose.msra.mxu0 0.0
    %1452 = vmatprep.subr.mxu0 0.0
    %1453 = vmatpush1.xpose.msra.mxu0 0.0
    %1454 = vmatprep.subr.mxu0 0.0
    %1455 = vmatpush1.xpose.msra.mxu0 0.0
    %1456 = vmatprep.subr.mxu0 0.0
    %1457 = vmatpush1.xpose.msra.mxu0 0.0
    %1458 = vmatprep.subr.mxu0 0.0
    %1459 = vmatpush1.xpose.msra.mxu0 0.0
    %1460 = vmatprep.subr.mxu0 0.0
    %1461 = vmatpush1.xpose.msra.mxu0 0.0
    %1462 = vmatprep.subr.mxu0 0.0
    %1463 = vmatpush1.xpose.msra.mxu0 0.0
    %1464 = vmatprep.subr.mxu0 0.0
    %1465 = vmatpush1.xpose.msra.mxu0 0.0
    %1466 = vmatprep.subr.mxu0 0.0
    %1467 = vmatpush1.xpose.msra.mxu0 0.0
    %1468 = vmatprep.subr.mxu0 0.0
    %1469 = vmatpush1.xpose.msra.mxu0 0.0
    %1470 = vmatprep.subr.mxu0 0.0
    %1471 = vmatpush1.xpose.msra.mxu0 0.0
    %1472 = vmatprep.subr.mxu0 0.0
    %1473 = vmatpush1.xpose.msra.mxu0 0.0
    %1474 = vmatprep.subr.mxu0 0.0
    %1475 = vmatpush1.xpose.msra.mxu0 0.0
    %1476 = vmatprep.subr.mxu0 0.0
    %1477 = vmatpush1.xpose.msra.mxu0 0.0
    %1478 = vmatprep.subr.mxu0 0.0
    %1479 = vmatpush1.xpose.msra.mxu0 0.0
    %1480 = vmatprep.subr.mxu0 0.0
    %1481 = vmatpush1.xpose.msra.mxu0 0.0
    %1482 = vmatprep.subr.mxu0 0.0
    %1483 = vmatpush1.xpose.msra.mxu0 0.0
    %1484 = vmatprep.subr.mxu0 0.0
    %1485 = vmatpush1.xpose.msra.mxu0 0.0
    %1486 = vmatprep.subr.mxu0 0.0
    %1487 = vmatpush1.xpose.msra.mxu0 0.0
    %1488 = vmatprep.subr.mxu0 0.0
    %1489 = vmatpush1.xpose.msra.mxu0 0.0
    %1490 = vmatprep.subr.mxu0 0.0
    %1491 = vmatpush1.xpose.msra.mxu0 0.0
    %1492 = vmatprep.subr.mxu0 0.0
    %1493 = vmatpush1.xpose.msra.mxu0 0.0
    %1494 = vmatprep.mubr.f32.mxu0 0.0
    %1495 = vmatmul.mubr.f32.gmra.mrb[0].mxu0 %v815
    %v1496 = vpop.f32.mrb[0].mxu0
    %v1497 = vadd.f32 0.0, %v1496
    %v1498 = vpop.f32.mrb[0].mxu0
    %1499 = vdwg.mxu0
    %v1501 = vsel %vm311, %v1423, 0
    %1503 = vmatprep.subr.mxu0 0.0
    %1504 = vmatpush1.xpose.msra.mxu0 %v1501
    %1505 = vmatprep.subr.mxu0 0.0
    %1506 = vmatpush1.xpose.msra.mxu0 0.0
    %1507 = vmatprep.subr.mxu0 0.0
    %1508 = vmatpush1.xpose.msra.mxu0 0.0
    %1509 = vmatprep.subr.mxu0 0.0
    %1510 = vmatpush1.xpose.msra.mxu0 0.0
    %1511 = vmatprep.subr.mxu0 0.0
    %1512 = vmatpush1.xpose.msra.mxu0 0.0
    %1513 = vmatprep.subr.mxu0 0.0
    %1514 = vmatpush1.xpose.msra.mxu0 0.0
    %1515 = vmatprep.subr.mxu0 0.0
    %1516 = vmatpush1.xpose.msra.mxu0 0.0
    %1517 = vmatprep.subr.mxu0 0.0
    %1518 = vmatpush1.xpose.msra.mxu0 0.0
    %1519 = vmatprep.subr.mxu0 0.0
    %1520 = vmatpush1.xpose.msra.mxu0 0.0
    %1521 = vmatprep.subr.mxu0 0.0
    %1522 = vmatpush1.xpose.msra.mxu0 0.0
    %1523 = vmatprep.subr.mxu0 0.0
    %1524 = vmatpush1.xpose.msra.mxu0 0.0
    %1525 = vmatprep.subr.mxu0 0.0
    %1526 = vmatpush1.xpose.msra.mxu0 0.0
    %1527 = vmatprep.subr.mxu0 0.0
    %1528 = vmatpush1.xpose.msra.mxu0 0.0
    %1529 = vmatprep.subr.mxu0 0.0
    %1530 = vmatpush1.xpose.msra.mxu0 0.0
    %1531 = vmatprep.subr.mxu0 0.0
    %1532 = vmatpush1.xpose.msra.mxu0 0.0
    %1533 = vmatprep.subr.mxu0 0.0
    %1534 = vmatpush1.xpose.msra.mxu0 0.0
    %1535 = vmatprep.subr.mxu0 0.0
    %1536 = vmatpush1.xpose.msra.mxu0 0.0
    %1537 = vmatprep.subr.mxu0 0.0
    %1538 = vmatpush1.xpose.msra.mxu0 0.0
    %1539 = vmatprep.subr.mxu0 0.0
    %1540 = vmatpush1.xpose.msra.mxu0 0.0
    %1541 = vmatprep.subr.mxu0 0.0
    %1542 = vmatpush1.xpose.msra.mxu0 0.0
    %1543 = vmatprep.subr.mxu0 0.0
    %1544 = vmatpush1.xpose.msra.mxu0 0.0
    %1545 = vmatprep.subr.mxu0 0.0
    %1546 = vmatpush1.xpose.msra.mxu0 0.0
    %1547 = vmatprep.subr.mxu0 0.0
    %1548 = vmatpush1.xpose.msra.mxu0 0.0
    %1549 = vmatprep.subr.mxu0 0.0
    %1550 = vmatpush1.xpose.msra.mxu0 0.0
    %1551 = vmatprep.subr.mxu0 0.0
    %1552 = vmatpush1.xpose.msra.mxu0 0.0
    %1553 = vmatprep.subr.mxu0 0.0
    %1554 = vmatpush1.xpose.msra.mxu0 0.0
    %1555 = vmatprep.subr.mxu0 0.0
    %1556 = vmatpush1.xpose.msra.mxu0 0.0
    %1557 = vmatprep.subr.mxu0 0.0
    %1558 = vmatpush1.xpose.msra.mxu0 0.0
    %1559 = vmatprep.subr.mxu0 0.0
    %1560 = vmatpush1.xpose.msra.mxu0 0.0
    %1561 = vmatprep.subr.mxu0 0.0
    %1562 = vmatpush1.xpose.msra.mxu0 0.0
    %1563 = vmatprep.subr.mxu0 0.0
    %1564 = vmatpush1.xpose.msra.mxu0 0.0
    %1565 = vmatprep.subr.mxu0 0.0
    %1566 = vmatpush1.xpose.msra.mxu0 0.0
    %1567 = vmatprep.mubr.f32.mxu0 0.0
    %1568 = vmatmul.mubr.f32.gmra.mrb[0].mxu0 %v894
    %v1569 = vpop.f32.mrb[0].mxu0
    %v1570 = vadd.f32 0.0, %v1569
    %v1571 = vpop.f32.mrb[0].mxu0
    %1572 = vdwg.mxu0
    %v1573 = vsel %vm969, %v1497, -inf
    %1574 = vmax.xlane.f32.xlu0 %v1573
    %v1575 = vpop.xlane.xlu0 %1574
    %v1576 = vsub.f32 %v1497, %v1575
    %v1577 = vmul.f32 %v1576, 1.442695
    %v1578 = vpow.pop %v1577
    %v1579 = vsel %vm969, %v1578, 0.0
    %1580 = vadd.xlane.f32.xlu0 %v1579
    %v1581 = vpop.xlane.xlu0 %1580
    %v1582 = vrcp.pop %v1581
    %v1583 = vmul.f32 %v1578, %v1582
    %v1584 = vsel %vm981, %v1570, -inf
    %1585 = vmax.xlane.f32.xlu0 %v1584
    %v1586 = vpop.xlane.xlu0 %1585
    %v1587 = vsub.f32 %v1570, %v1586
    %v1588 = vmul.f32 %v1587, 1.442695
    %v1589 = vpow.pop %v1588
    %v1590 = vsel %vm981, %v1589, 0.0
    %1591 = vadd.xlane.f32.xlu0 %v1590
    %v1592 = vpop.xlane.xlu0 %1591
    %v1593 = vrcp.pop %v1592
    %v1594 = vmul.f32 %v1589, %v1593
    %v1596 = vsel %vm726, %v1594, 0
    %1598 = vmatprep.subr.mxu0 0.0
    %1599 = vmatpush1.msra.mxu0 %v1142
    %1600 = vmatprep.subr.mxu0 0.0
    %1601 = vmatpush1.msra.mxu0 0.0
    %1602 = vmatprep.subr.mxu0 0.0
    %1603 = vmatpush1.msra.mxu0 0.0
    %1604 = vmatprep.subr.mxu0 0.0
    %1605 = vmatpush1.msra.mxu0 0.0
    %1606 = vmatprep.subr.mxu0 0.0
    %1607 = vmatpush1.msra.mxu0 0.0
    %1608 = vmatprep.subr.mxu0 0.0
    %1609 = vmatpush1.msra.mxu0 0.0
    %1610 = vmatprep.subr.mxu0 0.0
    %1611 = vmatpush1.msra.mxu0 0.0
    %1612 = vmatprep.subr.mxu0 0.0
    %1613 = vmatpush1.msra.mxu0 0.0
    %1614 = vmatprep.subr.mxu0 0.0
    %1615 = vmatpush1.msra.mxu0 0.0
    %1616 = vmatprep.subr.mxu0 0.0
    %1617 = vmatpush1.msra.mxu0 0.0
    %1618 = vmatprep.subr.mxu0 0.0
    %1619 = vmatpush1.msra.mxu0 0.0
    %1620 = vmatprep.subr.mxu0 0.0
    %1621 = vmatpush1.msra.mxu0 0.0
    %1622 = vmatprep.subr.mxu0 0.0
    %1623 = vmatpush1.msra.mxu0 0.0
    %1624 = vmatprep.subr.mxu0 0.0
    %1625 = vmatpush1.msra.mxu0 0.0
    %1626 = vmatprep.subr.mxu0 0.0
    %1627 = vmatpush1.msra.mxu0 0.0
    %1628 = vmatprep.subr.mxu0 0.0
    %1629 = vmatpush1.msra.mxu0 0.0
    %1630 = vmatprep.subr.mxu0 0.0
    %1631 = vmatpush1.msra.mxu0 0.0
    %1632 = vmatprep.subr.mxu0 0.0
    %1633 = vmatpush1.msra.mxu0 0.0
    %1634 = vmatprep.subr.mxu0 0.0
    %1635 = vmatpush1.msra.mxu0 0.0
    %1636 = vmatprep.subr.mxu0 0.0
    %1637 = vmatpush1.msra.mxu0 0.0
    %1638 = vmatprep.subr.mxu0 0.0
    %1639 = vmatpush1.msra.mxu0 0.0
    %1640 = vmatprep.subr.mxu0 0.0
    %1641 = vmatpush1.msra.mxu0 0.0
    %1642 = vmatprep.subr.mxu0 0.0
    %1643 = vmatpush1.msra.mxu0 0.0
    %1644 = vmatprep.subr.mxu0 0.0
    %1645 = vmatpush1.msra.mxu0 0.0
    %1646 = vmatprep.subr.mxu0 0.0
    %1647 = vmatpush1.msra.mxu0 0.0
    %1648 = vmatprep.subr.mxu0 0.0
    %1649 = vmatpush1.msra.mxu0 0.0
    %1650 = vmatprep.subr.mxu0 0.0
    %1651 = vmatpush1.msra.mxu0 0.0
    %1652 = vmatprep.subr.mxu0 0.0
    %1653 = vmatpush1.msra.mxu0 0.0
    %1654 = vmatprep.subr.mxu0 0.0
    %1655 = vmatpush1.msra.mxu0 0.0
    %1656 = vmatprep.subr.mxu0 0.0
    %1657 = vmatpush1.msra.mxu0 0.0
    %1658 = vmatprep.subr.mxu0 0.0
    %1659 = vmatpush1.msra.mxu0 0.0
    %1660 = vmatprep.subr.mxu0 0.0
    %1661 = vmatpush1.msra.mxu0 0.0
    %1662 = vmatprep.mubr.f32.mxu0 0.0
    %1663 = vmatmul.mubr.f32.gmra.mrb[0].mxu0 %v1596
    %v1664 = vpop.f32.mrb[0].mxu0
    %v1665 = vadd.f32 0.0, %v1664
    %v1666 = vpop.f32.mrb[0].mxu0
    %1667 = vdwg.mxu0
    %v1669 = vsel %vm311, %v1583, 0
    %1671 = vmatprep.subr.mxu0 0.0
    %1672 = vmatpush1.msra.mxu0 %v1144
    %1673 = vmatprep.subr.mxu0 0.0
    %1674 = vmatpush1.msra.mxu0 %v1145
    %1675 = vmatprep.subr.mxu0 0.0
    %1676 = vmatpush1.msra.mxu0 0.0
    %1677 = vmatprep.subr.mxu0 0.0
    %1678 = vmatpush1.msra.mxu0 0.0
    %1679 = vmatprep.subr.mxu0 0.0
    %1680 = vmatpush1.msra.mxu0 0.0
    %1681 = vmatprep.subr.mxu0 0.0
    %1682 = vmatpush1.msra.mxu0 0.0
    %1683 = vmatprep.subr.mxu0 0.0
    %1684 = vmatpush1.msra.mxu0 0.0
    %1685 = vmatprep.subr.mxu0 0.0
    %1686 = vmatpush1.msra.mxu0 0.0
    %1687 = vmatprep.subr.mxu0 0.0
    %1688 = vmatpush1.msra.mxu0 0.0
    %1689 = vmatprep.subr.mxu0 0.0
    %1690 = vmatpush1.msra.mxu0 0.0
    %1691 = vmatprep.subr.mxu0 0.0
    %1692 = vmatpush1.msra.mxu0 0.0
    %1693 = vmatprep.subr.mxu0 0.0
    %1694 = vmatpush1.msra.mxu0 0.0
    %1695 = vmatprep.subr.mxu0 0.0
    %1696 = vmatpush1.msra.mxu0 0.0
    %1697 = vmatprep.subr.mxu0 0.0
    %1698 = vmatpush1.msra.mxu0 0.0
    %1699 = vmatprep.subr.mxu0 0.0
    %1700 = vmatpush1.msra.mxu0 0.0
    %1701 = vmatprep.subr.mxu0 0.0
    %1702 = vmatpush1.msra.mxu0 0.0
    %1703 = vmatprep.subr.mxu0 0.0
    %1704 = vmatpush1.msra.mxu0 0.0
    %1705 = vmatprep.subr.mxu0 0.0
    %1706 = vmatpush1.msra.mxu0 0.0
    %1707 = vmatprep.subr.mxu0 0.0
    %1708 = vmatpush1.msra.mxu0 0.0
    %1709 = vmatprep.subr.mxu0 0.0
    %1710 = vmatpush1.msra.mxu0 0.0
    %1711 = vmatprep.subr.mxu0 0.0
    %1712 = vmatpush1.msra.mxu0 0.0
    %1713 = vmatprep.subr.mxu0 0.0
    %1714 = vmatpush1.msra.mxu0 0.0
    %1715 = vmatprep.subr.mxu0 0.0
    %1716 = vmatpush1.msra.mxu0 0.0
    %1717 = vmatprep.subr.mxu0 0.0
    %1718 = vmatpush1.msra.mxu0 0.0
    %1719 = vmatprep.subr.mxu0 0.0
    %1720 = vmatpush1.msra.mxu0 0.0
    %1721 = vmatprep.subr.mxu0 0.0
    %1722 = vmatpush1.msra.mxu0 0.0
    %1723 = vmatprep.subr.mxu0 0.0
    %1724 = vmatpush1.msra.mxu0 0.0
    %1725 = vmatprep.subr.mxu0 0.0
    %1726 = vmatpush1.msra.mxu0 0.0
    %1727 = vmatprep.subr.mxu0 0.0
    %1728 = vmatpush1.msra.mxu0 0.0
    %1729 = vmatprep.subr.mxu0 0.0
    %1730 = vmatpush1.msra.mxu0 0.0
    %1731 = vmatprep.subr.mxu0 0.0
    %1732 = vmatpush1.msra.mxu0 0.0
    %1733 = vmatprep.subr.mxu0 0.0
    %1734 = vmatpush1.msra.mxu0 0.0
    %1735 = vmatprep.mubr.f32.mxu0 0.0
    %1736 = vmatmul.mubr.f32.gmra.mrb[0].mxu0 %v1669
    %v1737 = vpop.f32.mrb[0].mxu0
    %v1738 = vadd.f32 %v1665, %v1737
    %v1739 = vpop.f32.mrb[0].mxu0
    %1740 = vdwg.mxu0
    %1741 = vst.msk [vmem:[#allocation5 + $0x1] sm:$0x1] %vm1139, %v1738
    %s1742 = scalar_lea.vmem %s0, 16
    %v1743 = vld [vmem:[%s1742] sm:$0xff]
    %s1744 = scalar_lea.vmem %s1, 32
    %v1745 = vld [vmem:[%s1744] sm:$0xff]
    %v1746 = vld [vmem:[%s1744 + $0x8] sm:$0xff]
    %s1747 = scalar_lea.vmem [#allocation2], 16
    %v1748 = vld [vmem:[%s1747] sm:$0xff]
    %s1749 = scalar_lea.vmem [#allocation3], 16
    %v1750 = vld [vmem:[%s1749] sm:$0xff]
    %s1751 = scalar_lea.vmem [#allocation4], 32
    %v1752 = vld [vmem:[%s1751] sm:$0xff]
    %v1753 = vld [vmem:[%s1751 + $0x8] sm:$0xff]
    %v1755 = vsel %vm64, %v1748, 0
    %v1758 = vsel %vm64, %v1745, 0
    %v1761 = vsel %vm64, %v1746, 0
    %1763 = vmatprep.subr.mxu0 0.0
    %1764 = vmatpush1.xpose.msra.mxu0 %v1758
    %1765 = vmatprep.subr.mxu0 0.0
    %1766 = vmatpush1.xpose.msra.mxu0 %v1761
    %1767 = vmatprep.subr.mxu0 0.0
    %1768 = vmatpush1.xpose.msra.mxu0 0.0
    %1769 = vmatprep.subr.mxu0 0.0
    %1770 = vmatpush1.xpose.msra.mxu0 0.0
    %1771 = vmatprep.subr.mxu0 0.0
    %1772 = vmatpush1.xpose.msra.mxu0 0.0
    %1773 = vmatprep.subr.mxu0 0.0
    %1774 = vmatpush1.xpose.msra.mxu0 0.0
    %1775 = vmatprep.subr.mxu0 0.0
    %1776 = vmatpush1.xpose.msra.mxu0 0.0
    %1777 = vmatprep.subr.mxu0 0.0
    %1778 = vmatpush1.xpose.msra.mxu0 0.0
    %1779 = vmatprep.subr.mxu0 0.0
    %1780 = vmatpush1.xpose.msra.mxu0 0.0
    %1781 = vmatprep.subr.mxu0 0.0
    %1782 = vmatpush1.xpose.msra.mxu0 0.0
    %1783 = vmatprep.subr.mxu0 0.0
    %1784 = vmatpush1.xpose.msra.mxu0 0.0
    %1785 = vmatprep.subr.mxu0 0.0
    %1786 = vmatpush1.xpose.msra.mxu0 0.0
    %1787 = vmatprep.subr.mxu0 0.0
    %1788 = vmatpush1.xpose.msra.mxu0 0.0
    %1789 = vmatprep.subr.mxu0 0.0
    %1790 = vmatpush1.xpose.msra.mxu0 0.0
    %1791 = vmatprep.subr.mxu0 0.0
    %1792 = vmatpush1.xpose.msra.mxu0 0.0
    %1793 = vmatprep.subr.mxu0 0.0
    %1794 = vmatpush1.xpose.msra.mxu0 0.0
    %1795 = vmatprep.subr.mxu0 0.0
    %1796 = vmatpush1.xpose.msra.mxu0 0.0
    %1797 = vmatprep.subr.mxu0 0.0
    %1798 = vmatpush1.xpose.msra.mxu0 0.0
    %1799 = vmatprep.subr.mxu0 0.0
    %1800 = vmatpush1.xpose.msra.mxu0 0.0
    %1801 = vmatprep.subr.mxu0 0.0
    %1802 = vmatpush1.xpose.msra.mxu0 0.0
    %1803 = vmatprep.subr.mxu0 0.0
    %1804 = vmatpush1.xpose.msra.mxu0 0.0
    %1805 = vmatprep.subr.mxu0 0.0
    %1806 = vmatpush1.xpose.msra.mxu0 0.0
    %1807 = vmatprep.subr.mxu0 0.0
    %1808 = vmatpush1.xpose.msra.mxu0 0.0
    %1809 = vmatprep.subr.mxu0 0.0
    %1810 = vmatpush1.xpose.msra.mxu0 0.0
    %1811 = vmatprep.subr.mxu0 0.0
    %1812 = vmatpush1.xpose.msra.mxu0 0.0
    %1813 = vmatprep.subr.mxu0 0.0
    %1814 = vmatpush1.xpose.msra.mxu0 0.0
    %1815 = vmatprep.subr.mxu0 0.0
    %1816 = vmatpush1.xpose.msra.mxu0 0.0
    %1817 = vmatprep.subr.mxu0 0.0
    %1818 = vmatpush1.xpose.msra.mxu0 0.0
    %1819 = vmatprep.subr.mxu0 0.0
    %1820 = vmatpush1.xpose.msra.mxu0 0.0
    %1821 = vmatprep.subr.mxu0 0.0
    %1822 = vmatpush1.xpose.msra.mxu0 0.0
    %1823 = vmatprep.subr.mxu0 0.0
    %1824 = vmatpush1.xpose.msra.mxu0 0.0
    %1825 = vmatprep.subr.mxu0 0.0
    %1826 = vmatpush1.xpose.msra.mxu0 0.0
    %1827 = vmatprep.mubr.f32.mxu0 0.0
    %1828 = vmatmul.mubr.f32.gmra.mrb[0].mxu0 %v1755
    %v1829 = vpop.f32.mrb[0].mxu0
    %v1830 = vadd.f32 0.0, %v1829
    %v1831 = vpop.f32.mrb[0].mxu0
    %1832 = vdwg.mxu0
    %v1834 = vsel %vm311, %v1830, 0
    %1836 = vmatprep.subr.mxu0 0.0
    %1837 = vmatpush1.msra.mxu0 %v1752
    %1838 = vmatprep.subr.mxu0 0.0
    %1839 = vmatpush1.msra.mxu0 %v1753
    %1840 = vmatprep.subr.mxu0 0.0
    %1841 = vmatpush1.msra.mxu0 0.0
    %1842 = vmatprep.subr.mxu0 0.0
    %1843 = vmatpush1.msra.mxu0 0.0
    %1844 = vmatprep.subr.mxu0 0.0
    %1845 = vmatpush1.msra.mxu0 0.0
    %1846 = vmatprep.subr.mxu0 0.0
    %1847 = vmatpush1.msra.mxu0 0.0
    %1848 = vmatprep.subr.mxu0 0.0
    %1849 = vmatpush1.msra.mxu0 0.0
    %1850 = vmatprep.subr.mxu0 0.0
    %1851 = vmatpush1.msra.mxu0 0.0
    %1852 = vmatprep.subr.mxu0 0.0
    %1853 = vmatpush1.msra.mxu0 0.0
    %1854 = vmatprep.subr.mxu0 0.0
    %1855 = vmatpush1.msra.mxu0 0.0
    %1856 = vmatprep.subr.mxu0 0.0
    %1857 = vmatpush1.msra.mxu0 0.0
    %1858 = vmatprep.subr.mxu0 0.0
    %1859 = vmatpush1.msra.mxu0 0.0
    %1860 = vmatprep.subr.mxu0 0.0
    %1861 = vmatpush1.msra.mxu0 0.0
    %1862 = vmatprep.subr.mxu0 0.0
    %1863 = vmatpush1.msra.mxu0 0.0
    %1864 = vmatprep.subr.mxu0 0.0
    %1865 = vmatpush1.msra.mxu0 0.0
    %1866 = vmatprep.subr.mxu0 0.0
    %1867 = vmatpush1.msra.mxu0 0.0
    %1868 = vmatprep.subr.mxu0 0.0
    %1869 = vmatpush1.msra.mxu0 0.0
    %1870 = vmatprep.subr.mxu0 0.0
    %1871 = vmatpush1.msra.mxu0 0.0
    %1872 = vmatprep.subr.mxu0 0.0
    %1873 = vmatpush1.msra.mxu0 0.0
    %1874 = vmatprep.subr.mxu0 0.0
    %1875 = vmatpush1.msra.mxu0 0.0
    %1876 = vmatprep.subr.mxu0 0.0
    %1877 = vmatpush1.msra.mxu0 0.0
    %1878 = vmatprep.subr.mxu0 0.0
    %1879 = vmatpush1.msra.mxu0 0.0
    %1880 = vmatprep.subr.mxu0 0.0
    %1881 = vmatpush1.msra.mxu0 0.0
    %1882 = vmatprep.subr.mxu0 0.0
    %1883 = vmatpush1.msra.mxu0 0.0
    %1884 = vmatprep.subr.mxu0 0.0
    %1885 = vmatpush1.msra.mxu0 0.0
    %1886 = vmatprep.subr.mxu0 0.0
    %1887 = vmatpush1.msra.mxu0 0.0
    %1888 = vmatprep.subr.mxu0 0.0
    %1889 = vmatpush1.msra.mxu0 0.0
    %1890 = vmatprep.subr.mxu0 0.0
    %1891 = vmatpush1.msra.mxu0 0.0
    %1892 = vmatprep.subr.mxu0 0.0
    %1893 = vmatpush1.msra.mxu0 0.0
    %1894 = vmatprep.subr.mxu0 0.0
    %1895 = vmatpush1.msra.mxu0 0.0
    %1896 = vmatprep.subr.mxu0 0.0
    %1897 = vmatpush1.msra.mxu0 0.0
    %1898 = vmatprep.subr.mxu0 0.0
    %1899 = vmatpush1.msra.mxu0 0.0
    %1900 = vmatprep.mubr.f32.mxu0 0.0
    %1901 = vmatmul.mubr.f32.gmra.mrb[0].mxu0 %v1834
    %v1902 = vpop.f32.mrb[0].mxu0
    %v1903 = vadd.f32 0.0, %v1902
    %v1904 = vpop.f32.mrb[0].mxu0
    %1905 = vdwg.mxu0
    %1906 = vxpose.xlu0.b32.start [1/16] %v1830, 128
    %1907 = vxpose.xlu0.b32.cont [2/16] 0.0, 128
    %1908 = vxpose.xlu0.b32.cont [3/16] 0.0, 128
    %1909 = vxpose.xlu0.b32.cont [4/16] 0.0, 128
    %1910 = vxpose.xlu0.b32.cont [5/16] 0.0, 128
    %1911 = vxpose.xlu0.b32.cont [6/16] 0.0, 128
    %1912 = vxpose.xlu0.b32.cont [7/16] 0.0, 128
    %1913 = vxpose.xlu0.b32.cont [8/16] 0.0, 128
    %1914 = vxpose.xlu0.b32.cont [9/16] 0.0, 128
    %1915 = vxpose.xlu0.b32.cont [10/16] 0.0, 128
    %1916 = vxpose.xlu0.b32.cont [11/16] 0.0, 128
    %1917 = vxpose.xlu0.b32.cont [12/16] 0.0, 128
    %1918 = vxpose.xlu0.b32.cont [13/16] 0.0, 128
    %1919 = vxpose.xlu0.b32.cont [14/16] 0.0, 128
    %1920 = vxpose.xlu0.b32.cont [15/16] 0.0, 128
    %1921 = vxpose.xlu0.b32.end [16/16] 0.0, 128
    %v1922 = vpop.trf.xlu0
    %v1923 = vpop.trf.xlu0
    %v1924 = vpop.trf.xlu0
    %v1925 = vpop.trf.xlu0
    %v1926 = vpop.trf.xlu0
    %v1927 = vpop.trf.xlu0
    %v1928 = vpop.trf.xlu0
    %v1929 = vpop.trf.xlu0
    %v1930 = vpop.trf.xlu0
    %v1931 = vpop.trf.xlu0
    %v1932 = vpop.trf.xlu0
    %v1933 = vpop.trf.xlu0
    %v1934 = vpop.trf.xlu0
    %v1935 = vpop.trf.xlu0
    %v1936 = vpop.trf.xlu0
    %v1937 = vpop.trf.xlu0
    %v1939 = vsel %vm726, %v1922, 0
    %v1942 = vsel %vm726, %v1923, 0
    %1944 = vmatprep.subr.mxu0 0.0
    %1945 = vmatpush1.msra.mxu0 %v1750
    %1946 = vmatprep.subr.mxu0 0.0
    %1947 = vmatpush1.msra.mxu0 0.0
    %1948 = vmatprep.subr.mxu0 0.0
    %1949 = vmatpush1.msra.mxu0 0.0
    %1950 = vmatprep.subr.mxu0 0.0
    %1951 = vmatpush1.msra.mxu0 0.0
    %1952 = vmatprep.subr.mxu0 0.0
    %1953 = vmatpush1.msra.mxu0 0.0
    %1954 = vmatprep.subr.mxu0 0.0
    %1955 = vmatpush1.msra.mxu0 0.0
    %1956 = vmatprep.subr.mxu0 0.0
    %1957 = vmatpush1.msra.mxu0 0.0
    %1958 = vmatprep.subr.mxu0 0.0
    %1959 = vmatpush1.msra.mxu0 0.0
    %1960 = vmatprep.subr.mxu0 0.0
    %1961 = vmatpush1.msra.mxu0 0.0
    %1962 = vmatprep.subr.mxu0 0.0
    %1963 = vmatpush1.msra.mxu0 0.0
    %1964 = vmatprep.subr.mxu0 0.0
    %1965 = vmatpush1.msra.mxu0 0.0
    %1966 = vmatprep.subr.mxu0 0.0
    %1967 = vmatpush1.msra.mxu0 0.0
    %1968 = vmatprep.subr.mxu0 0.0
    %1969 = vmatpush1.msra.mxu0 0.0
    %1970 = vmatprep.subr.mxu0 0.0
    %1971 = vmatpush1.msra.mxu0 0.0
    %1972 = vmatprep.subr.mxu0 0.0
    %1973 = vmatpush1.msra.mxu0 0.0
    %1974 = vmatprep.subr.mxu0 0.0
    %1975 = vmatpush1.msra.mxu0 0.0
    %1976 = vmatprep.subr.mxu0 0.0
    %1977 = vmatpush1.msra.mxu0 0.0
    %1978 = vmatprep.subr.mxu0 0.0
    %1979 = vmatpush1.msra.mxu0 0.0
    %1980 = vmatprep.subr.mxu0 0.0
    %1981 = vmatpush1.msra.mxu0 0.0
    %1982 = vmatprep.subr.mxu0 0.0
    %1983 = vmatpush1.msra.mxu0 0.0
    %1984 = vmatprep.subr.mxu0 0.0
    %1985 = vmatpush1.msra.mxu0 0.0
    %1986 = vmatprep.subr.mxu0 0.0
    %1987 = vmatpush1.msra.mxu0 0.0
    %1988 = vmatprep.subr.mxu0 0.0
    %1989 = vmatpush1.msra.mxu0 0.0
    %1990 = vmatprep.subr.mxu0 0.0
    %1991 = vmatpush1.msra.mxu0 0.0
    %1992 = vmatprep.subr.mxu0 0.0
    %1993 = vmatpush1.msra.mxu0 0.0
    %1994 = vmatprep.subr.mxu0 0.0
    %1995 = vmatpush1.msra.mxu0 0.0
    %1996 = vmatprep.subr.mxu0 0.0
    %1997 = vmatpush1.msra.mxu0 0.0
    %1998 = vmatprep.subr.mxu0 0.0
    %1999 = vmatpush1.msra.mxu0 0.0
    %2000 = vmatprep.subr.mxu0 0.0
    %2001 = vmatpush1.msra.mxu0 0.0
    %2002 = vmatprep.subr.mxu0 0.0
    %2003 = vmatpush1.msra.mxu0 0.0
    %2004 = vmatprep.subr.mxu0 0.0
    %2005 = vmatpush1.msra.mxu0 0.0
    %2006 = vmatprep.subr.mxu0 0.0
    %2007 = vmatpush1.msra.mxu0 0.0
    %2008 = vmatprep.mubr.f32.mxu0 0.0
    %2009 = vmatmul.mubr.f32.gmra.mrb[0].mxu0 %v1939
    %v2010 = vpop.f32.mrb[0].mxu0
    %v2011 = vadd.f32 0.0, %v2010
    %v2012 = vpop.f32.mrb[0].mxu0
    %2013 = vmatprep.mubr.f32.mxu0 0.0
    %2014 = vmatmul.mubr.f32.gmra.mrb[0].mxu0 %v1942
    %v2015 = vpop.f32.mrb[0].mxu0
    %v2016 = vadd.f32 0.0, %v2015
    %v2017 = vpop.f32.mrb[0].mxu0
    %2018 = vdwg.mxu0
    %v2019 = vadd.f32 %v1752, %v2011
    %v2020 = vadd.f32 %v1753, %v2016
    %v2021 = vtanh.pop %v2019
    %v2022 = vtanh.pop %v2020
    %v2023 = vadd.f32 %v1750, %v1903
    %v2024 = vtanh.pop %v2023
    %v2026 = vsel %vm311, %v2021, 0
    %v2029 = vsel %vm311, %v2022, 0
    %2031 = vmatprep.subr.mxu0 0.0
    %2032 = vmatpush1.xpose.msra.mxu0 %v2026
    %2033 = vmatprep.subr.mxu0 0.0
    %2034 = vmatpush1.xpose.msra.mxu0 %v2029
    %2035 = vmatprep.subr.mxu0 0.0
    %2036 = vmatpush1.xpose.msra.mxu0 0.0
    %2037 = vmatprep.subr.mxu0 0.0
    %2038 = vmatpush1.xpose.msra.mxu0 0.0
    %2039 = vmatprep.subr.mxu0 0.0
    %2040 = vmatpush1.xpose.msra.mxu0 0.0
    %2041 = vmatprep.subr.mxu0 0.0
    %2042 = vmatpush1.xpose.msra.mxu0 0.0
    %2043 = vmatprep.subr.mxu0 0.0
    %2044 = vmatpush1.xpose.msra.mxu0 0.0
    %2045 = vmatprep.subr.mxu0 0.0
    %2046 = vmatpush1.xpose.msra.mxu0 0.0
    %2047 = vmatprep.subr.mxu0 0.0
    %2048 = vmatpush1.xpose.msra.mxu0 0.0
    %2049 = vmatprep.subr.mxu0 0.0
    %2050 = vmatpush1.xpose.msra.mxu0 0.0
    %2051 = vmatprep.subr.mxu0 0.0
    %2052 = vmatpush1.xpose.msra.mxu0 0.0
    %2053 = vmatprep.subr.mxu0 0.0
    %2054 = vmatpush1.xpose.msra.mxu0 0.0
    %2055 = vmatprep.subr.mxu0 0.0
    %2056 = vmatpush1.xpose.msra.mxu0 0.0
    %2057 = vmatprep.subr.mxu0 0.0
    %2058 = vmatpush1.xpose.msra.mxu0 0.0
    %2059 = vmatprep.subr.mxu0 0.0
    %2060 = vmatpush1.xpose.msra.mxu0 0.0
    %2061 = vmatprep.subr.mxu0 0.0
    %2062 = vmatpush1.xpose.msra.mxu0 0.0
    %2063 = vmatprep.subr.mxu0 0.0
    %2064 = vmatpush1.xpose.msra.mxu0 0.0
    %2065 = vmatprep.subr.mxu0 0.0
    %2066 = vmatpush1.xpose.msra.mxu0 0.0
    %2067 = vmatprep.subr.mxu0 0.0
    %2068 = vmatpush1.xpose.msra.mxu0 0.0
    %2069 = vmatprep.subr.mxu0 0.0
    %2070 = vmatpush1.xpose.msra.mxu0 0.0
    %2071 = vmatprep.subr.mxu0 0.0
    %2072 = vmatpush1.xpose.msra.mxu0 0.0
    %2073 = vmatprep.subr.mxu0 0.0
    %2074 = vmatpush1.xpose.msra.mxu0 0.0
    %2075 = vmatprep.subr.mxu0 0.0
    %2076 = vmatpush1.xpose.msra.mxu0 0.0
    %2077 = vmatprep.subr.mxu0 0.0
    %2078 = vmatpush1.xpose.msra.mxu0 0.0
    %2079 = vmatprep.subr.mxu0 0.0
    %2080 = vmatpush1.xpose.msra.mxu0 0.0
    %2081 = vmatprep.subr.mxu0 0.0
    %2082 = vmatpush1.xpose.msra.mxu0 0.0
    %2083 = vmatprep.subr.mxu0 0.0
    %2084 = vmatpush1.xpose.msra.mxu0 0.0
    %2085 = vmatprep.subr.mxu0 0.0
    %2086 = vmatpush1.xpose.msra.mxu0 0.0
    %2087 = vmatprep.subr.mxu0 0.0
    %2088 = vmatpush1.xpose.msra.mxu0 0.0
    %2089 = vmatprep.subr.mxu0 0.0
    %2090 = vmatpush1.xpose.msra.mxu0 0.0
    %2091 = vmatprep.subr.mxu0 0.0
    %2092 = vmatpush1.xpose.msra.mxu0 0.0
    %2093 = vmatprep.subr.mxu0 0.0
    %2094 = vmatpush1.xpose.msra.mxu0 0.0
    %2095 = vmatprep.mubr.f32.mxu0 0.0
    %2096 = vmatmul.mubr.f32.gmra.mrb[0].mxu0 %v815
    %v2097 = vpop.f32.mrb[0].mxu0
    %v2098 = vadd.f32 0.0, %v2097
    %v2099 = vpop.f32.mrb[0].mxu0
    %2100 = vdwg.mxu0
    %v2102 = vsel %vm311, %v2024, 0
    %2104 = vmatprep.subr.mxu0 0.0
    %2105 = vmatpush1.xpose.msra.mxu0 %v2102
    %2106 = vmatprep.subr.mxu0 0.0
    %2107 = vmatpush1.xpose.msra.mxu0 0.0
    %2108 = vmatprep.subr.mxu0 0.0
    %2109 = vmatpush1.xpose.msra.mxu0 0.0
    %2110 = vmatprep.subr.mxu0 0.0
    %2111 = vmatpush1.xpose.msra.mxu0 0.0
    %2112 = vmatprep.subr.mxu0 0.0
    %2113 = vmatpush1.xpose.msra.mxu0 0.0
    %2114 = vmatprep.subr.mxu0 0.0
    %2115 = vmatpush1.xpose.msra.mxu0 0.0
    %2116 = vmatprep.subr.mxu0 0.0
    %2117 = vmatpush1.xpose.msra.mxu0 0.0
    %2118 = vmatprep.subr.mxu0 0.0
    %2119 = vmatpush1.xpose.msra.mxu0 0.0
    %2120 = vmatprep.subr.mxu0 0.0
    %2121 = vmatpush1.xpose.msra.mxu0 0.0
    %2122 = vmatprep.subr.mxu0 0.0
    %2123 = vmatpush1.xpose.msra.mxu0 0.0
    %2124 = vmatprep.subr.mxu0 0.0
    %2125 = vmatpush1.xpose.msra.mxu0 0.0
    %2126 = vmatprep.subr.mxu0 0.0
    %2127 = vmatpush1.xpose.msra.mxu0 0.0
    %2128 = vmatprep.subr.mxu0 0.0
    %2129 = vmatpush1.xpose.msra.mxu0 0.0
    %2130 = vmatprep.subr.mxu0 0.0
    %2131 = vmatpush1.xpose.msra.mxu0 0.0
    %2132 = vmatprep.subr.mxu0 0.0
    %2133 = vmatpush1.xpose.msra.mxu0 0.0
    %2134 = vmatprep.subr.mxu0 0.0
    %2135 = vmatpush1.xpose.msra.mxu0 0.0
    %2136 = vmatprep.subr.mxu0 0.0
    %2137 = vmatpush1.xpose.msra.mxu0 0.0
    %2138 = vmatprep.subr.mxu0 0.0
    %2139 = vmatpush1.xpose.msra.mxu0 0.0
    %2140 = vmatprep.subr.mxu0 0.0
    %2141 = vmatpush1.xpose.msra.mxu0 0.0
    %2142 = vmatprep.subr.mxu0 0.0
    %2143 = vmatpush1.xpose.msra.mxu0 0.0
    %2144 = vmatprep.subr.mxu0 0.0
    %2145 = vmatpush1.xpose.msra.mxu0 0.0
    %2146 = vmatprep.subr.mxu0 0.0
    %2147 = vmatpush1.xpose.msra.mxu0 0.0
    %2148 = vmatprep.subr.mxu0 0.0
    %2149 = vmatpush1.xpose.msra.mxu0 0.0
    %2150 = vmatprep.subr.mxu0 0.0
    %2151 = vmatpush1.xpose.msra.mxu0 0.0
    %2152 = vmatprep.subr.mxu0 0.0
    %2153 = vmatpush1.xpose.msra.mxu0 0.0
    %2154 = vmatprep.subr.mxu0 0.0
    %2155 = vmatpush1.xpose.msra.mxu0 0.0
    %2156 = vmatprep.subr.mxu0 0.0
    %2157 = vmatpush1.xpose.msra.mxu0 0.0
    %2158 = vmatprep.subr.mxu0 0.0
    %2159 = vmatpush1.xpose.msra.mxu0 0.0
    %2160 = vmatprep.subr.mxu0 0.0
    %2161 = vmatpush1.xpose.msra.mxu0 0.0
    %2162 = vmatprep.subr.mxu0 0.0
    %2163 = vmatpush1.xpose.msra.mxu0 0.0
    %2164 = vmatprep.subr.mxu0 0.0
    %2165 = vmatpush1.xpose.msra.mxu0 0.0
    %2166 = vmatprep.subr.mxu0 0.0
    %2167 = vmatpush1.xpose.msra.mxu0 0.0
    %2168 = vmatprep.mubr.f32.mxu0 0.0
    %2169 = vmatmul.mubr.f32.gmra.mrb[0].mxu0 %v894
    %v2170 = vpop.f32.mrb[0].mxu0
    %v2171 = vadd.f32 0.0, %v2170
    %v2172 = vpop.f32.mrb[0].mxu0
    %2173 = vdwg.mxu0
    %v2174 = vsel %vm969, %v2098, -inf
    %2175 = vmax.xlane.f32.xlu0 %v2174
    %v2176 = vpop.xlane.xlu0 %2175
    %v2177 = vsub.f32 %v2098, %v2176
    %v2178 = vmul.f32 %v2177, 1.442695
    %v2179 = vpow.pop %v2178
    %v2180 = vsel %vm969, %v2179, 0.0
    %2181 = vadd.xlane.f32.xlu0 %v2180
    %v2182 = vpop.xlane.xlu0 %2181
    %v2183 = vrcp.pop %v2182
    %v2184 = vmul.f32 %v2179, %v2183
    %v2185 = vsel %vm981, %v2171, -inf
    %2186 = vmax.xlane.f32.xlu0 %v2185
    %v2187 = vpop.xlane.xlu0 %2186
    %v2188 = vsub.f32 %v2171, %v2187
    %v2189 = vmul.f32 %v2188, 1.442695
    %v2190 = vpow.pop %v2189
    %v2191 = vsel %vm981, %v2190, 0.0
    %2192 = vadd.xlane.f32.xlu0 %v2191
    %v2193 = vpop.xlane.xlu0 %2192
    %v2194 = vrcp.pop %v2193
    %v2195 = vmul.f32 %v2190, %v2194
    %v2197 = vsel %vm726, %v2195, 0
    %2199 = vmatprep.subr.mxu0 0.0
    %2200 = vmatpush1.msra.mxu0 %v1743
    %2201 = vmatprep.subr.mxu0 0.0
    %2202 = vmatpush1.msra.mxu0 0.0
    %2203 = vmatprep.subr.mxu0 0.0
    %2204 = vmatpush1.msra.mxu0 0.0
    %2205 = vmatprep.subr.mxu0 0.0
    %2206 = vmatpush1.msra.mxu0 0.0
    %2207 = vmatprep.subr.mxu0 0.0
    %2208 = vmatpush1.msra.mxu0 0.0
    %2209 = vmatprep.subr.mxu0 0.0
    %2210 = vmatpush1.msra.mxu0 0.0
    %2211 = vmatprep.subr.mxu0 0.0
    %2212 = vmatpush1.msra.mxu0 0.0
    %2213 = vmatprep.subr.mxu0 0.0
    %2214 = vmatpush1.msra.mxu0 0.0
    %2215 = vmatprep.subr.mxu0 0.0
    %2216 = vmatpush1.msra.mxu0 0.0
    %2217 = vmatprep.subr.mxu0 0.0
    %2218 = vmatpush1.msra.mxu0 0.0
    %2219 = vmatprep.subr.mxu0 0.0
    %2220 = vmatpush1.msra.mxu0 0.0
    %2221 = vmatprep.subr.mxu0 0.0
    %2222 = vmatpush1.msra.mxu0 0.0
    %2223 = vmatprep.subr.mxu0 0.0
    %2224 = vmatpush1.msra.mxu0 0.0
    %2225 = vmatprep.subr.mxu0 0.0
    %2226 = vmatpush1.msra.mxu0 0.0
    %2227 = vmatprep.subr.mxu0 0.0
    %2228 = vmatpush1.msra.mxu0 0.0
    %2229 = vmatprep.subr.mxu0 0.0
    %2230 = vmatpush1.msra.mxu0 0.0
    %2231 = vmatprep.subr.mxu0 0.0
    %2232 = vmatpush1.msra.mxu0 0.0
    %2233 = vmatprep.subr.mxu0 0.0
    %2234 = vmatpush1.msra.mxu0 0.0
    %2235 = vmatprep.subr.mxu0 0.0
    %2236 = vmatpush1.msra.mxu0 0.0
    %2237 = vmatprep.subr.mxu0 0.0
    %2238 = vmatpush1.msra.mxu0 0.0
    %2239 = vmatprep.subr.mxu0 0.0
    %2240 = vmatpush1.msra.mxu0 0.0
    %2241 = vmatprep.subr.mxu0 0.0
    %2242 = vmatpush1.msra.mxu0 0.0
    %2243 = vmatprep.subr.mxu0 0.0
    %2244 = vmatpush1.msra.mxu0 0.0
    %2245 = vmatprep.subr.mxu0 0.0
    %2246 = vmatpush1.msra.mxu0 0.0
    %2247 = vmatprep.subr.mxu0 0.0
    %2248 = vmatpush1.msra.mxu0 0.0
    %2249 = vmatprep.subr.mxu0 0.0
    %2250 = vmatpush1.msra.mxu0 0.0
    %2251 = vmatprep.subr.mxu0 0.0
    %2252 = vmatpush1.msra.mxu0 0.0
    %2253 = vmatprep.subr.mxu0 0.0
    %2254 = vmatpush1.msra.mxu0 0.0
    %2255 = vmatprep.subr.mxu0 0.0
    %2256 = vmatpush1.msra.mxu0 0.0
    %2257 = vmatprep.subr.mxu0 0.0
    %2258 = vmatpush1.msra.mxu0 0.0
    %2259 = vmatprep.subr.mxu0 0.0
    %2260 = vmatpush1.msra.mxu0 0.0
    %2261 = vmatprep.subr.mxu0 0.0
    %2262 = vmatpush1.msra.mxu0 0.0
    %2263 = vmatprep.mubr.f32.mxu0 0.0
    %2264 = vmatmul.mubr.f32.gmra.mrb[0].mxu0 %v2197
    %v2265 = vpop.f32.mrb[0].mxu0
    %v2266 = vadd.f32 0.0, %v2265
    %v2267 = vpop.f32.mrb[0].mxu0
    %2268 = vdwg.mxu0
    %v2270 = vsel %vm311, %v2184, 0
    %2272 = vmatprep.subr.mxu0 0.0
    %2273 = vmatpush1.msra.mxu0 %v1745
    %2274 = vmatprep.subr.mxu0 0.0
    %2275 = vmatpush1.msra.mxu0 %v1746
    %2276 = vmatprep.subr.mxu0 0.0
    %2277 = vmatpush1.msra.mxu0 0.0
    %2278 = vmatprep.subr.mxu0 0.0
    %2279 = vmatpush1.msra.mxu0 0.0
    %2280 = vmatprep.subr.mxu0 0.0
    %2281 = vmatpush1.msra.mxu0 0.0
    %2282 = vmatprep.subr.mxu0 0.0
    %2283 = vmatpush1.msra.mxu0 0.0
    %2284 = vmatprep.subr.mxu0 0.0
    %2285 = vmatpush1.msra.mxu0 0.0
    %2286 = vmatprep.subr.mxu0 0.0
    %2287 = vmatpush1.msra.mxu0 0.0
    %2288 = vmatprep.subr.mxu0 0.0
    %2289 = vmatpush1.msra.mxu0 0.0
    %2290 = vmatprep.subr.mxu0 0.0
    %2291 = vmatpush1.msra.mxu0 0.0
    %2292 = vmatprep.subr.mxu0 0.0
    %2293 = vmatpush1.msra.mxu0 0.0
    %2294 = vmatprep.subr.mxu0 0.0
    %2295 = vmatpush1.msra.mxu0 0.0
    %2296 = vmatprep.subr.mxu0 0.0
    %2297 = vmatpush1.msra.mxu0 0.0
    %2298 = vmatprep.subr.mxu0 0.0
    %2299 = vmatpush1.msra.mxu0 0.0
    %2300 = vmatprep.subr.mxu0 0.0
    %2301 = vmatpush1.msra.mxu0 0.0
    %2302 = vmatprep.subr.mxu0 0.0
    %2303 = vmatpush1.msra.mxu0 0.0
    %2304 = vmatprep.subr.mxu0 0.0
    %2305 = vmatpush1.msra.mxu0 0.0
    %2306 = vmatprep.subr.mxu0 0.0
    %2307 = vmatpush1.msra.mxu0 0.0
    %2308 = vmatprep.subr.mxu0 0.0
    %2309 = vmatpush1.msra.mxu0 0.0
    %2310 = vmatprep.subr.mxu0 0.0
    %2311 = vmatpush1.msra.mxu0 0.0
    %2312 = vmatprep.subr.mxu0 0.0
    %2313 = vmatpush1.msra.mxu0 0.0
    %2314 = vmatprep.subr.mxu0 0.0
    %2315 = vmatpush1.msra.mxu0 0.0
    %2316 = vmatprep.subr.mxu0 0.0
    %2317 = vmatpush1.msra.mxu0 0.0
    %2318 = vmatprep.subr.mxu0 0.0
    %2319 = vmatpush1.msra.mxu0 0.0
    %2320 = vmatprep.subr.mxu0 0.0
    %2321 = vmatpush1.msra.mxu0 0.0
    %2322 = vmatprep.subr.mxu0 0.0
    %2323 = vmatpush1.msra.mxu0 0.0
    %2324 = vmatprep.subr.mxu0 0.0
    %2325 = vmatpush1.msra.mxu0 0.0
    %2326 = vmatprep.subr.mxu0 0.0
    %2327 = vmatpush1.msra.mxu0 0.0
    %2328 = vmatprep.subr.mxu0 0.0
    %2329 = vmatpush1.msra.mxu0 0.0
    %2330 = vmatprep.subr.mxu0 0.0
    %2331 = vmatpush1.msra.mxu0 0.0
    %2332 = vmatprep.subr.mxu0 0.0
    %2333 = vmatpush1.msra.mxu0 0.0
    %2334 = vmatprep.subr.mxu0 0.0
    %2335 = vmatpush1.msra.mxu0 0.0
    %2336 = vmatprep.mubr.f32.mxu0 0.0
    %2337 = vmatmul.mubr.f32.gmra.mrb[0].mxu0 %v2270
    %v2338 = vpop.f32.mrb[0].mxu0
    %v2339 = vadd.f32 %v2266, %v2338
    %v2340 = vpop.f32.mrb[0].mxu0
    %2341 = vdwg.mxu0
    %2342 = vst.msk [vmem:[#allocation5 + $0x2] sm:$0x1] %vm1139, %v2339
    %s2343 = scalar_lea.vmem %s0, 24
    %v2344 = vld [vmem:[%s2343] sm:$0xff]
    %s2345 = scalar_lea.vmem %s1, 48
    %v2346 = vld [vmem:[%s2345] sm:$0xff]
    %v2347 = vld [vmem:[%s2345 + $0x8] sm:$0xff]
    %s2348 = scalar_lea.vmem [#allocation2], 24
    %v2349 = vld [vmem:[%s2348] sm:$0xff]
    %s2350 = scalar_lea.vmem [#allocation3], 24
    %v2351 = vld [vmem:[%s2350] sm:$0xff]
    %s2352 = scalar_lea.vmem [#allocation4], 48
    %v2353 = vld [vmem:[%s2352] sm:$0xff]
    %v2354 = vld [vmem:[%s2352 + $0x8] sm:$0xff]
    %v2356 = vsel %vm64, %v2349, 0
    %v2359 = vsel %vm64, %v2346, 0
    %v2362 = vsel %vm64, %v2347, 0
    %2364 = vmatprep.subr.mxu0 0.0
    %2365 = vmatpush1.xpose.msra.mxu0 %v2359
    %2366 = vmatprep.subr.mxu0 0.0
    %2367 = vmatpush1.xpose.msra.mxu0 %v2362
    %2368 = vmatprep.subr.mxu0 0.0
    %2369 = vmatpush1.xpose.msra.mxu0 0.0
    %2370 = vmatprep.subr.mxu0 0.0
    %2371 = vmatpush1.xpose.msra.mxu0 0.0
    %2372 = vmatprep.subr.mxu0 0.0
    %2373 = vmatpush1.xpose.msra.mxu0 0.0
    %2374 = vmatprep.subr.mxu0 0.0
    %2375 = vmatpush1.xpose.msra.mxu0 0.0
    %2376 = vmatprep.subr.mxu0 0.0
    %2377 = vmatpush1.xpose.msra.mxu0 0.0
    %2378 = vmatprep.subr.mxu0 0.0
    %2379 = vmatpush1.xpose.msra.mxu0 0.0
    %2380 = vmatprep.subr.mxu0 0.0
    %2381 = vmatpush1.xpose.msra.mxu0 0.0
    %2382 = vmatprep.subr.mxu0 0.0
    %2383 = vmatpush1.xpose.msra.mxu0 0.0
    %2384 = vmatprep.subr.mxu0 0.0
    %2385 = vmatpush1.xpose.msra.mxu0 0.0
    %2386 = vmatprep.subr.mxu0 0.0
    %2387 = vmatpush1.xpose.msra.mxu0 0.0
    %2388 = vmatprep.subr.mxu0 0.0
    %2389 = vmatpush1.xpose.msra.mxu0 0.0
    %2390 = vmatprep.subr.mxu0 0.0
    %2391 = vmatpush1.xpose.msra.mxu0 0.0
    %2392 = vmatprep.subr.mxu0 0.0
    %2393 = vmatpush1.xpose.msra.mxu0 0.0
    %2394 = vmatprep.subr.mxu0 0.0
    %2395 = vmatpush1.xpose.msra.mxu0 0.0
    %2396 = vmatprep.subr.mxu0 0.0
    %2397 = vmatpush1.xpose.msra.mxu0 0.0
    %2398 = vmatprep.subr.mxu0 0.0
    %2399 = vmatpush1.xpose.msra.mxu0 0.0
    %2400 = vmatprep.subr.mxu0 0.0
    %2401 = vmatpush1.xpose.msra.mxu0 0.0
    %2402 = vmatprep.subr.mxu0 0.0
    %2403 = vmatpush1.xpose.msra.mxu0 0.0
    %2404 = vmatprep.subr.mxu0 0.0
    %2405 = vmatpush1.xpose.msra.mxu0 0.0
    %2406 = vmatprep.subr.mxu0 0.0
    %2407 = vmatpush1.xpose.msra.mxu0 0.0
    %2408 = vmatprep.subr.mxu0 0.0
    %2409 = vmatpush1.xpose.msra.mxu0 0.0
    %2410 = vmatprep.subr.mxu0 0.0
    %2411 = vmatpush1.xpose.msra.mxu0 0.0
    %2412 = vmatprep.subr.mxu0 0.0
    %2413 = vmatpush1.xpose.msra.mxu0 0.0
    %2414 = vmatprep.subr.mxu0 0.0
    %2415 = vmatpush1.xpose.msra.mxu0 0.0
    %2416 = vmatprep.subr.mxu0 0.0
    %2417 = vmatpush1.xpose.msra.mxu0 0.0
    %2418 = vmatprep.subr.mxu0 0.0
    %2419 = vmatpush1.xpose.msra.mxu0 0.0
    %2420 = vmatprep.subr.mxu0 0.0
    %2421 = vmatpush1.xpose.msra.mxu0 0.0
    %2422 = vmatprep.subr.mxu0 0.0
    %2423 = vmatpush1.xpose.msra.mxu0 0.0
    %2424 = vmatprep.subr.mxu0 0.0
    %2425 = vmatpush1.xpose.msra.mxu0 0.0
    %2426 = vmatprep.subr.mxu0 0.0
    %2427 = vmatpush1.xpose.msra.mxu0 0.0
    %2428 = vmatprep.mubr.f32.mxu0 0.0
    %2429 = vmatmul.mubr.f32.gmra.mrb[0].mxu0 %v2356
    %v2430 = vpop.f32.mrb[0].mxu0
    %v2431 = vadd.f32 0.0, %v2430
    %v2432 = vpop.f32.mrb[0].mxu0
    %2433 = vdwg.mxu0
    %v2435 = vsel %vm311, %v2431, 0
    %2437 = vmatprep.subr.mxu0 0.0
    %2438 = vmatpush1.msra.mxu0 %v2353
    %2439 = vmatprep.subr.mxu0 0.0
    %2440 = vmatpush1.msra.mxu0 %v2354
    %2441 = vmatprep.subr.mxu0 0.0
    %2442 = vmatpush1.msra.mxu0 0.0
    %2443 = vmatprep.subr.mxu0 0.0
    %2444 = vmatpush1.msra.mxu0 0.0
    %2445 = vmatprep.subr.mxu0 0.0
    %2446 = vmatpush1.msra.mxu0 0.0
    %2447 = vmatprep.subr.mxu0 0.0
    %2448 = vmatpush1.msra.mxu0 0.0
    %2449 = vmatprep.subr.mxu0 0.0
    %2450 = vmatpush1.msra.mxu0 0.0
    %2451 = vmatprep.subr.mxu0 0.0
    %2452 = vmatpush1.msra.mxu0 0.0
    %2453 = vmatprep.subr.mxu0 0.0
    %2454 = vmatpush1.msra.mxu0 0.0
    %2455 = vmatprep.subr.mxu0 0.0
    %2456 = vmatpush1.msra.mxu0 0.0
    %2457 = vmatprep.subr.mxu0 0.0
    %2458 = vmatpush1.msra.mxu0 0.0
    %2459 = vmatprep.subr.mxu0 0.0
    %2460 = vmatpush1.msra.mxu0 0.0
    %2461 = vmatprep.subr.mxu0 0.0
    %2462 = vmatpush1.msra.mxu0 0.0
    %2463 = vmatprep.subr.mxu0 0.0
    %2464 = vmatpush1.msra.mxu0 0.0
    %2465 = vmatprep.subr.mxu0 0.0
    %2466 = vmatpush1.msra.mxu0 0.0
    %2467 = vmatprep.subr.mxu0 0.0
    %2468 = vmatpush1.msra.mxu0 0.0
    %2469 = vmatprep.subr.mxu0 0.0
    %2470 = vmatpush1.msra.mxu0 0.0
    %2471 = vmatprep.subr.mxu0 0.0
    %2472 = vmatpush1.msra.mxu0 0.0
    %2473 = vmatprep.subr.mxu0 0.0
    %2474 = vmatpush1.msra.mxu0 0.0
    %2475 = vmatprep.subr.mxu0 0.0
    %2476 = vmatpush1.msra.mxu0 0.0
    %2477 = vmatprep.subr.mxu0 0.0
    %2478 = vmatpush1.msra.mxu0 0.0
    %2479 = vmatprep.subr.mxu0 0.0
    %2480 = vmatpush1.msra.mxu0 0.0
    %2481 = vmatprep.subr.mxu0 0.0
    %2482 = vmatpush1.msra.mxu0 0.0
    %2483 = vmatprep.subr.mxu0 0.0
    %2484 = vmatpush1.msra.mxu0 0.0
    %2485 = vmatprep.subr.mxu0 0.0
    %2486 = vmatpush1.msra.mxu0 0.0
    %2487 = vmatprep.subr.mxu0 0.0
    %2488 = vmatpush1.msra.mxu0 0.0
    %2489 = vmatprep.subr.mxu0 0.0
    %2490 = vmatpush1.msra.mxu0 0.0
    %2491 = vmatprep.subr.mxu0 0.0
    %2492 = vmatpush1.msra.mxu0 0.0
    %2493 = vmatprep.subr.mxu0 0.0
    %2494 = vmatpush1.msra.mxu0 0.0
    %2495 = vmatprep.subr.mxu0 0.0
    %2496 = vmatpush1.msra.mxu0 0.0
    %2497 = vmatprep.subr.mxu0 0.0
    %2498 = vmatpush1.msra.mxu0 0.0
    %2499 = vmatprep.subr.mxu0 0.0
    %2500 = vmatpush1.msra.mxu0 0.0
    %2501 = vmatprep.mubr.f32.mxu0 0.0
    %2502 = vmatmul.mubr.f32.gmra.mrb[0].mxu0 %v2435
    %v2503 = vpop.f32.mrb[0].mxu0
    %v2504 = vadd.f32 0.0, %v2503
    %v2505 = vpop.f32.mrb[0].mxu0
    %2506 = vdwg.mxu0
    %2507 = vxpose.xlu0.b32.start [1/16] %v2431, 128
    %2508 = vxpose.xlu0.b32.cont [2/16] 0.0, 128
    %2509 = vxpose.xlu0.b32.cont [3/16] 0.0, 128
    %2510 = vxpose.xlu0.b32.cont [4/16] 0.0, 128
    %2511 = vxpose.xlu0.b32.cont [5/16] 0.0, 128
    %2512 = vxpose.xlu0.b32.cont [6/16] 0.0, 128
    %2513 = vxpose.xlu0.b32.cont [7/16] 0.0, 128
    %2514 = vxpose.xlu0.b32.cont [8/16] 0.0, 128
    %2515 = vxpose.xlu0.b32.cont [9/16] 0.0, 128
    %2516 = vxpose.xlu0.b32.cont [10/16] 0.0, 128
    %2517 = vxpose.xlu0.b32.cont [11/16] 0.0, 128
    %2518 = vxpose.xlu0.b32.cont [12/16] 0.0, 128
    %2519 = vxpose.xlu0.b32.cont [13/16] 0.0, 128
    %2520 = vxpose.xlu0.b32.cont [14/16] 0.0, 128
    %2521 = vxpose.xlu0.b32.cont [15/16] 0.0, 128
    %2522 = vxpose.xlu0.b32.end [16/16] 0.0, 128
    %v2523 = vpop.trf.xlu0
    %v2524 = vpop.trf.xlu0
    %v2525 = vpop.trf.xlu0
    %v2526 = vpop.trf.xlu0
    %v2527 = vpop.trf.xlu0
    %v2528 = vpop.trf.xlu0
    %v2529 = vpop.trf.xlu0
    %v2530 = vpop.trf.xlu0
    %v2531 = vpop.trf.xlu0
    %v2532 = vpop.trf.xlu0
    %v2533 = vpop.trf.xlu0
    %v2534 = vpop.trf.xlu0
    %v2535 = vpop.trf.xlu0
    %v2536 = vpop.trf.xlu0
    %v2537 = vpop.trf.xlu0
    %v2538 = vpop.trf.xlu0
    %v2540 = vsel %vm726, %v2523, 0
    %v2543 = vsel %vm726, %v2524, 0
    %2545 = vmatprep.subr.mxu0 0.0
    %2546 = vmatpush1.msra.mxu0 %v2351
    %2547 = vmatprep.subr.mxu0 0.0
    %2548 = vmatpush1.msra.mxu0 0.0
    %2549 = vmatprep.subr.mxu0 0.0
    %2550 = vmatpush1.msra.mxu0 0.0
    %2551 = vmatprep.subr.mxu0 0.0
    %2552 = vmatpush1.msra.mxu0 0.0
    %2553 = vmatprep.subr.mxu0 0.0
    %2554 = vmatpush1.msra.mxu0 0.0
    %2555 = vmatprep.subr.mxu0 0.0
    %2556 = vmatpush1.msra.mxu0 0.0
    %2557 = vmatprep.subr.mxu0 0.0
    %2558 = vmatpush1.msra.mxu0 0.0
    %2559 = vmatprep.subr.mxu0 0.0
    %2560 = vmatpush1.msra.mxu0 0.0
    %2561 = vmatprep.subr.mxu0 0.0
    %2562 = vmatpush1.msra.mxu0 0.0
    %2563 = vmatprep.subr.mxu0 0.0
    %2564 = vmatpush1.msra.mxu0 0.0
    %2565 = vmatprep.subr.mxu0 0.0
    %2566 = vmatpush1.msra.mxu0 0.0
    %2567 = vmatprep.subr.mxu0 0.0
    %2568 = vmatpush1.msra.mxu0 0.0
    %2569 = vmatprep.subr.mxu0 0.0
    %2570 = vmatpush1.msra.mxu0 0.0
    %2571 = vmatprep.subr.mxu0 0.0
    %2572 = vmatpush1.msra.mxu0 0.0
    %2573 = vmatprep.subr.mxu0 0.0
    %2574 = vmatpush1.msra.mxu0 0.0
    %2575 = vmatprep.subr.mxu0 0.0
    %2576 = vmatpush1.msra.mxu0 0.0
    %2577 = vmatprep.subr.mxu0 0.0
    %2578 = vmatpush1.msra.mxu0 0.0
    %2579 = vmatprep.subr.mxu0 0.0
    %2580 = vmatpush1.msra.mxu0 0.0
    %2581 = vmatprep.subr.mxu0 0.0
    %2582 = vmatpush1.msra.mxu0 0.0
    %2583 = vmatprep.subr.mxu0 0.0
    %2584 = vmatpush1.msra.mxu0 0.0
    %2585 = vmatprep.subr.mxu0 0.0
    %2586 = vmatpush1.msra.mxu0 0.0
    %2587 = vmatprep.subr.mxu0 0.0
    %2588 = vmatpush1.msra.mxu0 0.0
    %2589 = vmatprep.subr.mxu0 0.0
    %2590 = vmatpush1.msra.mxu0 0.0
    %2591 = vmatprep.subr.mxu0 0.0
    %2592 = vmatpush1.msra.mxu0 0.0
    %2593 = vmatprep.subr.mxu0 0.0
    %2594 = vmatpush1.msra.mxu0 0.0
    %2595 = vmatprep.subr.mxu0 0.0
    %2596 = vmatpush1.msra.mxu0 0.0
    %2597 = vmatprep.subr.mxu0 0.0
    %2598 = vmatpush1.msra.mxu0 0.0
    %2599 = vmatprep.subr.mxu0 0.0
    %2600 = vmatpush1.msra.mxu0 0.0
    %2601 = vmatprep.subr.mxu0 0.0
    %2602 = vmatpush1.msra.mxu0 0.0
    %2603 = vmatprep.subr.mxu0 0.0
    %2604 = vmatpush1.msra.mxu0 0.0
    %2605 = vmatprep.subr.mxu0 0.0
    %2606 = vmatpush1.msra.mxu0 0.0
    %2607 = vmatprep.subr.mxu0 0.0
    %2608 = vmatpush1.msra.mxu0 0.0
    %2609 = vmatprep.mubr.f32.mxu0 0.0
    %2610 = vmatmul.mubr.f32.gmra.mrb[0].mxu0 %v2540
    %v2611 = vpop.f32.mrb[0].mxu0
    %v2612 = vadd.f32 0.0, %v2611
    %v2613 = vpop.f32.mrb[0].mxu0
    %2614 = vmatprep.mubr.f32.mxu0 0.0
    %2615 = vmatmul.mubr.f32.gmra.mrb[0].mxu0 %v2543
    %v2616 = vpop.f32.mrb[0].mxu0
    %v2617 = vadd.f32 0.0, %v2616
    %v2618 = vpop.f32.mrb[0].mxu0
    %2619 = vdwg.mxu0
    %v2620 = vadd.f32 %v2353, %v2612
    %v2621 = vadd.f32 %v2354, %v2617
    %v2622 = vtanh.pop %v2620
    %v2623 = vtanh.pop %v2621
    %v2624 = vadd.f32 %v2351, %v2504
    %v2625 = vtanh.pop %v2624
    %v2627 = vsel %vm311, %v2622, 0
    %v2630 = vsel %vm311, %v2623, 0
    %2632 = vmatprep.subr.mxu0 0.0
    %2633 = vmatpush1.xpose.msra.mxu0 %v2627
    %2634 = vmatprep.subr.mxu0 0.0
    %2635 = vmatpush1.xpose.msra.mxu0 %v2630
    %2636 = vmatprep.subr.mxu0 0.0
    %2637 = vmatpush1.xpose.msra.mxu0 0.0
    %2638 = vmatprep.subr.mxu0 0.0
    %2639 = vmatpush1.xpose.msra.mxu0 0.0
    %2640 = vmatprep.subr.mxu0 0.0
    %2641 = vmatpush1.xpose.msra.mxu0 0.0
    %2642 = vmatprep.subr.mxu0 0.0
    %2643 = vmatpush1.xpose.msra.mxu0 0.0
    %2644 = vmatprep.subr.mxu0 0.0
    %2645 = vmatpush1.xpose.msra.mxu0 0.0
    %2646 = vmatprep.subr.mxu0 0.0
    %2647 = vmatpush1.xpose.msra.mxu0 0.0
    %2648 = vmatprep.subr.mxu0 0.0
    %2649 = vmatpush1.xpose.msra.mxu0 0.0
    %2650 = vmatprep.subr.mxu0 0.0
    %2651 = vmatpush1.xpose.msra.mxu0 0.0
    %2652 = vmatprep.subr.mxu0 0.0
    %2653 = vmatpush1.xpose.msra.mxu0 0.0
    %2654 = vmatprep.subr.mxu0 0.0
    %2655 = vmatpush1.xpose.msra.mxu0 0.0
    %2656 = vmatprep.subr.mxu0 0.0
    %2657 = vmatpush1.xpose.msra.mxu0 0.0
    %2658 = vmatprep.subr.mxu0 0.0
    %2659 = vmatpush1.xpose.msra.mxu0 0.0
    %2660 = vmatprep.subr.mxu0 0.0
    %2661 = vmatpush1.xpose.msra.mxu0 0.0
    %2662 = vmatprep.subr.mxu0 0.0
    %2663 = vmatpush1.xpose.msra.mxu0 0.0
    %2664 = vmatprep.subr.mxu0 0.0
    %2665 = vmatpush1.xpose.msra.mxu0 0.0
    %2666 = vmatprep.subr.mxu0 0.0
    %2667 = vmatpush1.xpose.msra.mxu0 0.0
    %2668 = vmatprep.subr.mxu0 0.0
    %2669 = vmatpush1.xpose.msra.mxu0 0.0
    %2670 = vmatprep.subr.mxu0 0.0
    %2671 = vmatpush1.xpose.msra.mxu0 0.0
    %2672 = vmatprep.subr.mxu0 0.0
    %2673 = vmatpush1.xpose.msra.mxu0 0.0
    %2674 = vmatprep.subr.mxu0 0.0
    %2675 = vmatpush1.xpose.msra.mxu0 0.0
    %2676 = vmatprep.subr.mxu0 0.0
    %2677 = vmatpush1.xpose.msra.mxu0 0.0
    %2678 = vmatprep.subr.mxu0 0.0
    %2679 = vmatpush1.xpose.msra.mxu0 0.0
    %2680 = vmatprep.subr.mxu0 0.0
    %2681 = vmatpush1.xpose.msra.mxu0 0.0
    %2682 = vmatprep.subr.mxu0 0.0
    %2683 = vmatpush1.xpose.msra.mxu0 0.0
    %2684 = vmatprep.subr.mxu0 0.0
    %2685 = vmatpush1.xpose.msra.mxu0 0.0
    %2686 = vmatprep.subr.mxu0 0.0
    %2687 = vmatpush1.xpose.msra.mxu0 0.0
    %2688 = vmatprep.subr.mxu0 0.0
    %2689 = vmatpush1.xpose.msra.mxu0 0.0
    %2690 = vmatprep.subr.mxu0 0.0
    %2691 = vmatpush1.xpose.msra.mxu0 0.0
    %2692 = vmatprep.subr.mxu0 0.0
    %2693 = vmatpush1.xpose.msra.mxu0 0.0
    %2694 = vmatprep.subr.mxu0 0.0
    %2695 = vmatpush1.xpose.msra.mxu0 0.0
    %2696 = vmatprep.mubr.f32.mxu0 0.0
    %2697 = vmatmul.mubr.f32.gmra.mrb[0].mxu0 %v815
    %v2698 = vpop.f32.mrb[0].mxu0
    %v2699 = vadd.f32 0.0, %v2698
    %v2700 = vpop.f32.mrb[0].mxu0
    %2701 = vdwg.mxu0
    %v2703 = vsel %vm311, %v2625, 0
    %2705 = vmatprep.subr.mxu0 0.0
    %2706 = vmatpush1.xpose.msra.mxu0 %v2703
    %2707 = vmatprep.subr.mxu0 0.0
    %2708 = vmatpush1.xpose.msra.mxu0 0.0
    %2709 = vmatprep.subr.mxu0 0.0
    %2710 = vmatpush1.xpose.msra.mxu0 0.0
    %2711 = vmatprep.subr.mxu0 0.0
    %2712 = vmatpush1.xpose.msra.mxu0 0.0
    %2713 = vmatprep.subr.mxu0 0.0
    %2714 = vmatpush1.xpose.msra.mxu0 0.0
    %2715 = vmatprep.subr.mxu0 0.0
    %2716 = vmatpush1.xpose.msra.mxu0 0.0
    %2717 = vmatprep.subr.mxu0 0.0
    %2718 = vmatpush1.xpose.msra.mxu0 0.0
    %2719 = vmatprep.subr.mxu0 0.0
    %2720 = vmatpush1.xpose.msra.mxu0 0.0
    %2721 = vmatprep.subr.mxu0 0.0
    %2722 = vmatpush1.xpose.msra.mxu0 0.0
    %2723 = vmatprep.subr.mxu0 0.0
    %2724 = vmatpush1.xpose.msra.mxu0 0.0
    %2725 = vmatprep.subr.mxu0 0.0
    %2726 = vmatpush1.xpose.msra.mxu0 0.0
    %2727 = vmatprep.subr.mxu0 0.0
    %2728 = vmatpush1.xpose.msra.mxu0 0.0
    %2729 = vmatprep.subr.mxu0 0.0
    %2730 = vmatpush1.xpose.msra.mxu0 0.0
    %2731 = vmatprep.subr.mxu0 0.0
    %2732 = vmatpush1.xpose.msra.mxu0 0.0
    %2733 = vmatprep.subr.mxu0 0.0
    %2734 = vmatpush1.xpose.msra.mxu0 0.0
    %2735 = vmatprep.subr.mxu0 0.0
    %2736 = vmatpush1.xpose.msra.mxu0 0.0
    %2737 = vmatprep.subr.mxu0 0.0
    %2738 = vmatpush1.xpose.msra.mxu0 0.0
    %2739 = vmatprep.subr.mxu0 0.0
    %2740 = vmatpush1.xpose.msra.mxu0 0.0
    %2741 = vmatprep.subr.mxu0 0.0
    %2742 = vmatpush1.xpose.msra.mxu0 0.0
    %2743 = vmatprep.subr.mxu0 0.0
    %2744 = vmatpush1.xpose.msra.mxu0 0.0
    %2745 = vmatprep.subr.mxu0 0.0
    %2746 = vmatpush1.xpose.msra.mxu0 0.0
    %2747 = vmatprep.subr.mxu0 0.0
    %2748 = vmatpush1.xpose.msra.mxu0 0.0
    %2749 = vmatprep.subr.mxu0 0.0
    %2750 = vmatpush1.xpose.msra.mxu0 0.0
    %2751 = vmatprep.subr.mxu0 0.0
    %2752 = vmatpush1.xpose.msra.mxu0 0.0
    %2753 = vmatprep.subr.mxu0 0.0
    %2754 = vmatpush1.xpose.msra.mxu0 0.0
    %2755 = vmatprep.subr.mxu0 0.0
    %2756 = vmatpush1.xpose.msra.mxu0 0.0
    %2757 = vmatprep.subr.mxu0 0.0
    %2758 = vmatpush1.xpose.msra.mxu0 0.0
    %2759 = vmatprep.subr.mxu0 0.0
    %2760 = vmatpush1.xpose.msra.mxu0 0.0
    %2761 = vmatprep.subr.mxu0 0.0
    %2762 = vmatpush1.xpose.msra.mxu0 0.0
    %2763 = vmatprep.subr.mxu0 0.0
    %2764 = vmatpush1.xpose.msra.mxu0 0.0
    %2765 = vmatprep.subr.mxu0 0.0
    %2766 = vmatpush1.xpose.msra.mxu0 0.0
    %2767 = vmatprep.subr.mxu0 0.0
    %2768 = vmatpush1.xpose.msra.mxu0 0.0
    %2769 = vmatprep.mubr.f32.mxu0 0.0
    %2770 = vmatmul.mubr.f32.gmra.mrb[0].mxu0 %v894
    %v2771 = vpop.f32.mrb[0].mxu0
    %v2772 = vadd.f32 0.0, %v2771
    %v2773 = vpop.f32.mrb[0].mxu0
    %2774 = vdwg.mxu0
    %v2775 = vsel %vm969, %v2699, -inf
    %2776 = vmax.xlane.f32.xlu0 %v2775
    %v2777 = vpop.xlane.xlu0 %2776
    %v2778 = vsub.f32 %v2699, %v2777
    %v2779 = vmul.f32 %v2778, 1.442695
    %v2780 = vpow.pop %v2779
    %v2781 = vsel %vm969, %v2780, 0.0
    %2782 = vadd.xlane.f32.xlu0 %v2781
    %v2783 = vpop.xlane.xlu0 %2782
    %v2784 = vrcp.pop %v2783
    %v2785 = vmul.f32 %v2780, %v2784
    %v2786 = vsel %vm981, %v2772, -inf
    %2787 = vmax.xlane.f32.xlu0 %v2786
    %v2788 = vpop.xlane.xlu0 %2787
    %v2789 = vsub.f32 %v2772, %v2788
    %v2790 = vmul.f32 %v2789, 1.442695
    %v2791 = vpow.pop %v2790
    %v2792 = vsel %vm981, %v2791, 0.0
    %2793 = vadd.xlane.f32.xlu0 %v2792
    %v2794 = vpop.xlane.xlu0 %2793
    %v2795 = vrcp.pop %v2794
    %v2796 = vmul.f32 %v2791, %v2795
    %v2798 = vsel %vm726, %v2796, 0
    %2800 = vmatprep.subr.mxu0 0.0
    %2801 = vmatpush1.msra.mxu0 %v2344
    %2802 = vmatprep.subr.mxu0 0.0
    %2803 = vmatpush1.msra.mxu0 0.0
    %2804 = vmatprep.subr.mxu0 0.0
    %2805 = vmatpush1.msra.mxu0 0.0
    %2806 = vmatprep.subr.mxu0 0.0
    %2807 = vmatpush1.msra.mxu0 0.0
    %2808 = vmatprep.subr.mxu0 0.0
    %2809 = vmatpush1.msra.mxu0 0.0
    %2810 = vmatprep.subr.mxu0 0.0
    %2811 = vmatpush1.msra.mxu0 0.0
    %2812 = vmatprep.subr.mxu0 0.0
    %2813 = vmatpush1.msra.mxu0 0.0
    %2814 = vmatprep.subr.mxu0 0.0
    %2815 = vmatpush1.msra.mxu0 0.0
    %2816 = vmatprep.subr.mxu0 0.0
    %2817 = vmatpush1.msra.mxu0 0.0
    %2818 = vmatprep.subr.mxu0 0.0
    %2819 = vmatpush1.msra.mxu0 0.0
    %2820 = vmatprep.subr.mxu0 0.0
    %2821 = vmatpush1.msra.mxu0 0.0
    %2822 = vmatprep.subr.mxu0 0.0
    %2823 = vmatpush1.msra.mxu0 0.0
    %2824 = vmatprep.subr.mxu0 0.0
    %2825 = vmatpush1.msra.mxu0 0.0
    %2826 = vmatprep.subr.mxu0 0.0
    %2827 = vmatpush1.msra.mxu0 0.0
    %2828 = vmatprep.subr.mxu0 0.0
    %2829 = vmatpush1.msra.mxu0 0.0
    %2830 = vmatprep.subr.mxu0 0.0
    %2831 = vmatpush1.msra.mxu0 0.0
    %2832 = vmatprep.subr.mxu0 0.0
    %2833 = vmatpush1.msra.mxu0 0.0
    %2834 = vmatprep.subr.mxu0 0.0
    %2835 = vmatpush1.msra.mxu0 0.0
    %2836 = vmatprep.subr.mxu0 0.0
    %2837 = vmatpush1.msra.mxu0 0.0
    %2838 = vmatprep.subr.mxu0 0.0
    %2839 = vmatpush1.msra.mxu0 0.0
    %2840 = vmatprep.subr.mxu0 0.0
    %2841 = vmatpush1.msra.mxu0 0.0
    %2842 = vmatprep.subr.mxu0 0.0
    %2843 = vmatpush1.msra.mxu0 0.0
    %2844 = vmatprep.subr.mxu0 0.0
    %2845 = vmatpush1.msra.mxu0 0.0
    %2846 = vmatprep.subr.mxu0 0.0
    %2847 = vmatpush1.msra.mxu0 0.0
    %2848 = vmatprep.subr.mxu0 0.0
    %2849 = vmatpush1.msra.mxu0 0.0
    %2850 = vmatprep.subr.mxu0 0.0
    %2851 = vmatpush1.msra.mxu0 0.0
    %2852 = vmatprep.subr.mxu0 0.0
    %2853 = vmatpush1.msra.mxu0 0.0
    %2854 = vmatprep.subr.mxu0 0.0
    %2855 = vmatpush1.msra.mxu0 0.0
    %2856 = vmatprep.subr.mxu0 0.0
    %2857 = vmatpush1.msra.mxu0 0.0
    %2858 = vmatprep.subr.mxu0 0.0
    %2859 = vmatpush1.msra.mxu0 0.0
    %2860 = vmatprep.subr.mxu0 0.0
    %2861 = vmatpush1.msra.mxu0 0.0
    %2862 = vmatprep.subr.mxu0 0.0
    %2863 = vmatpush1.msra.mxu0 0.0
    %2864 = vmatprep.mubr.f32.mxu0 0.0
    %2865 = vmatmul.mubr.f32.gmra.mrb[0].mxu0 %v2798
    %v2866 = vpop.f32.mrb[0].mxu0
    %v2867 = vadd.f32 0.0, %v2866
    %v2868 = vpop.f32.mrb[0].mxu0
    %2869 = vdwg.mxu0
    %v2871 = vsel %vm311, %v2785, 0
    %2873 = vmatprep.subr.mxu0 0.0
    %2874 = vmatpush1.msra.mxu0 %v2346
    %2875 = vmatprep.subr.mxu0 0.0
    %2876 = vmatpush1.msra.mxu0 %v2347
    %2877 = vmatprep.subr.mxu0 0.0
    %2878 = vmatpush1.msra.mxu0 0.0
    %2879 = vmatprep.subr.mxu0 0.0
    %2880 = vmatpush1.msra.mxu0 0.0
    %2881 = vmatprep.subr.mxu0 0.0
    %2882 = vmatpush1.msra.mxu0 0.0
    %2883 = vmatprep.subr.mxu0 0.0
    %2884 = vmatpush1.msra.mxu0 0.0
    %2885 = vmatprep.subr.mxu0 0.0
    %2886 = vmatpush1.msra.mxu0 0.0
    %2887 = vmatprep.subr.mxu0 0.0
    %2888 = vmatpush1.msra.mxu0 0.0
    %2889 = vmatprep.subr.mxu0 0.0
    %2890 = vmatpush1.msra.mxu0 0.0
    %2891 = vmatprep.subr.mxu0 0.0
    %2892 = vmatpush1.msra.mxu0 0.0
    %2893 = vmatprep.subr.mxu0 0.0
    %2894 = vmatpush1.msra.mxu0 0.0
    %2895 = vmatprep.subr.mxu0 0.0
    %2896 = vmatpush1.msra.mxu0 0.0
    %2897 = vmatprep.subr.mxu0 0.0
    %2898 = vmatpush1.msra.mxu0 0.0
    %2899 = vmatprep.subr.mxu0 0.0
    %2900 = vmatpush1.msra.mxu0 0.0
    %2901 = vmatprep.subr.mxu0 0.0
    %2902 = vmatpush1.msra.mxu0 0.0
    %2903 = vmatprep.subr.mxu0 0.0
    %2904 = vmatpush1.msra.mxu0 0.0
    %2905 = vmatprep.subr.mxu0 0.0
    %2906 = vmatpush1.msra.mxu0 0.0
    %2907 = vmatprep.subr.mxu0 0.0
    %2908 = vmatpush1.msra.mxu0 0.0
    %2909 = vmatprep.subr.mxu0 0.0
    %2910 = vmatpush1.msra.mxu0 0.0
    %2911 = vmatprep.subr.mxu0 0.0
    %2912 = vmatpush1.msra.mxu0 0.0
    %2913 = vmatprep.subr.mxu0 0.0
    %2914 = vmatpush1.msra.mxu0 0.0
    %2915 = vmatprep.subr.mxu0 0.0
    %2916 = vmatpush1.msra.mxu0 0.0
    %2917 = vmatprep.subr.mxu0 0.0
    %2918 = vmatpush1.msra.mxu0 0.0
    %2919 = vmatprep.subr.mxu0 0.0
    %2920 = vmatpush1.msra.mxu0 0.0
    %2921 = vmatprep.subr.mxu0 0.0
    %2922 = vmatpush1.msra.mxu0 0.0
    %2923 = vmatprep.subr.mxu0 0.0
    %2924 = vmatpush1.msra.mxu0 0.0
    %2925 = vmatprep.subr.mxu0 0.0
    %2926 = vmatpush1.msra.mxu0 0.0
    %2927 = vmatprep.subr.mxu0 0.0
    %2928 = vmatpush1.msra.mxu0 0.0
    %2929 = vmatprep.subr.mxu0 0.0
    %2930 = vmatpush1.msra.mxu0 0.0
    %2931 = vmatprep.subr.mxu0 0.0
    %2932 = vmatpush1.msra.mxu0 0.0
    %2933 = vmatprep.subr.mxu0 0.0
    %2934 = vmatpush1.msra.mxu0 0.0
    %2935 = vmatprep.subr.mxu0 0.0
    %2936 = vmatpush1.msra.mxu0 0.0
    %2937 = vmatprep.mubr.f32.mxu0 0.0
    %2938 = vmatmul.mubr.f32.gmra.mrb[0].mxu0 %v2871
    %v2939 = vpop.f32.mrb[0].mxu0
    %v2940 = vadd.f32 %v2867, %v2939
    %v2941 = vpop.f32.mrb[0].mxu0
    %2942 = vdwg.mxu0
    %2943 = vst.msk [vmem:[#allocation5 + $0x3] sm:$0x1] %vm1139, %v2940
    %s2944 = scalar_lea.vmem %s0, 32
    %v2945 = vld [vmem:[%s2944] sm:$0xff]
    %s2946 = scalar_lea.vmem %s1, 64
    %v2947 = vld [vmem:[%s2946] sm:$0xff]
    %v2948 = vld [vmem:[%s2946 + $0x8] sm:$0xff]
    %s2949 = scalar_lea.vmem [#allocation2], 32
    %v2950 = vld [vmem:[%s2949] sm:$0xff]
    %s2951 = scalar_lea.vmem [#allocation3], 32
    %v2952 = vld [vmem:[%s2951] sm:$0xff]
    %s2953 = scalar_lea.vmem [#allocation4], 64
    %v2954 = vld [vmem:[%s2953] sm:$0xff]
    %v2955 = vld [vmem:[%s2953 + $0x8] sm:$0xff]
    %v2957 = vsel %vm64, %v2950, 0
    %v2960 = vsel %vm64, %v2947, 0
    %v2963 = vsel %vm64, %v2948, 0
    %2965 = vmatprep.subr.mxu0 0.0
    %2966 = vmatpush1.xpose.msra.mxu0 %v2960
    %2967 = vmatprep.subr.mxu0 0.0
    %2968 = vmatpush1.xpose.msra.mxu0 %v2963
    %2969 = vmatprep.subr.mxu0 0.0
    %2970 = vmatpush1.xpose.msra.mxu0 0.0
    %2971 = vmatprep.subr.mxu0 0.0
    %2972 = vmatpush1.xpose.msra.mxu0 0.0
    %2973 = vmatprep.subr.mxu0 0.0
    %2974 = vmatpush1.xpose.msra.mxu0 0.0
    %2975 = vmatprep.subr.mxu0 0.0
    %2976 = vmatpush1.xpose.msra.mxu0 0.0
    %2977 = vmatprep.subr.mxu0 0.0
    %2978 = vmatpush1.xpose.msra.mxu0 0.0
    %2979 = vmatprep.subr.mxu0 0.0
    %2980 = vmatpush1.xpose.msra.mxu0 0.0
    %2981 = vmatprep.subr.mxu0 0.0
    %2982 = vmatpush1.xpose.msra.mxu0 0.0
    %2983 = vmatprep.subr.mxu0 0.0
    %2984 = vmatpush1.xpose.msra.mxu0 0.0
    %2985 = vmatprep.subr.mxu0 0.0
    %2986 = vmatpush1.xpose.msra.mxu0 0.0
    %2987 = vmatprep.subr.mxu0 0.0
    %2988 = vmatpush1.xpose.msra.mxu0 0.0
    %2989 = vmatprep.subr.mxu0 0.0
    %2990 = vmatpush1.xpose.msra.mxu0 0.0
    %2991 = vmatprep.subr.mxu0 0.0
    %2992 = vmatpush1.xpose.msra.mxu0 0.0
    %2993 = vmatprep.subr.mxu0 0.0
    %2994 = vmatpush1.xpose.msra.mxu0 0.0
    %2995 = vmatprep.subr.mxu0 0.0
    %2996 = vmatpush1.xpose.msra.mxu0 0.0
    %2997 = vmatprep.subr.mxu0 0.0
    %2998 = vmatpush1.xpose.msra.mxu0 0.0
    %2999 = vmatprep.subr.mxu0 0.0
    %3000 = vmatpush1.xpose.msra.mxu0 0.0
    %3001 = vmatprep.subr.mxu0 0.0
    %3002 = vmatpush1.xpose.msra.mxu0 0.0
    %3003 = vmatprep.subr.mxu0 0.0
    %3004 = vmatpush1.xpose.msra.mxu0 0.0
    %3005 = vmatprep.subr.mxu0 0.0
    %3006 = vmatpush1.xpose.msra.mxu0 0.0
    %3007 = vmatprep.subr.mxu0 0.0
    %3008 = vmatpush1.xpose.msra.mxu0 0.0
    %3009 = vmatprep.subr.mxu0 0.0
    %3010 = vmatpush1.xpose.msra.mxu0 0.0
    %3011 = vmatprep.subr.mxu0 0.0
    %3012 = vmatpush1.xpose.msra.mxu0 0.0
    %3013 = vmatprep.subr.mxu0 0.0
    %3014 = vmatpush1.xpose.msra.mxu0 0.0
    %3015 = vmatprep.subr.mxu0 0.0
    %3016 = vmatpush1.xpose.msra.mxu0 0.0
    %3017 = vmatprep.subr.mxu0 0.0
    %3018 = vmatpush1.xpose.msra.mxu0 0.0
    %3019 = vmatprep.subr.mxu0 0.0
    %3020 = vmatpush1.xpose.msra.mxu0 0.0
    %3021 = vmatprep.subr.mxu0 0.0
    %3022 = vmatpush1.xpose.msra.mxu0 0.0
    %3023 = vmatprep.subr.mxu0 0.0
    %3024 = vmatpush1.xpose.msra.mxu0 0.0
    %3025 = vmatprep.subr.mxu0 0.0
    %3026 = vmatpush1.xpose.msra.mxu0 0.0
    %3027 = vmatprep.subr.mxu0 0.0
    %3028 = vmatpush1.xpose.msra.mxu0 0.0
    %3029 = vmatprep.mubr.f32.mxu0 0.0
    %3030 = vmatmul.mubr.f32.gmra.mrb[0].mxu0 %v2957
    %v3031 = vpop.f32.mrb[0].mxu0
    %v3032 = vadd.f32 0.0, %v3031
    %v3033 = vpop.f32.mrb[0].mxu0
    %3034 = vdwg.mxu0
    %v3036 = vsel %vm311, %v3032, 0
    %3038 = vmatprep.subr.mxu0 0.0
    %3039 = vmatpush1.msra.mxu0 %v2954
    %3040 = vmatprep.subr.mxu0 0.0
    %3041 = vmatpush1.msra.mxu0 %v2955
    %3042 = vmatprep.subr.mxu0 0.0
    %3043 = vmatpush1.msra.mxu0 0.0
    %3044 = vmatprep.subr.mxu0 0.0
    %3045 = vmatpush1.msra.mxu0 0.0
    %3046 = vmatprep.subr.mxu0 0.0
    %3047 = vmatpush1.msra.mxu0 0.0
    %3048 = vmatprep.subr.mxu0 0.0
    %3049 = vmatpush1.msra.mxu0 0.0
    %3050 = vmatprep.subr.mxu0 0.0
    %3051 = vmatpush1.msra.mxu0 0.0
    %3052 = vmatprep.subr.mxu0 0.0
    %3053 = vmatpush1.msra.mxu0 0.0
    %3054 = vmatprep.subr.mxu0 0.0
    %3055 = vmatpush1.msra.mxu0 0.0
    %3056 = vmatprep.subr.mxu0 0.0
    %3057 = vmatpush1.msra.mxu0 0.0
    %3058 = vmatprep.subr.mxu0 0.0
    %3059 = vmatpush1.msra.mxu0 0.0
    %3060 = vmatprep.subr.mxu0 0.0
    %3061 = vmatpush1.msra.mxu0 0.0
    %3062 = vmatprep.subr.mxu0 0.0
    %3063 = vmatpush1.msra.mxu0 0.0
    %3064 = vmatprep.subr.mxu0 0.0
    %3065 = vmatpush1.msra.mxu0 0.0
    %3066 = vmatprep.subr.mxu0 0.0
    %3067 = vmatpush1.msra.mxu0 0.0
    %3068 = vmatprep.subr.mxu0 0.0
    %3069 = vmatpush1.msra.mxu0 0.0
    %3070 = vmatprep.subr.mxu0 0.0
    %3071 = vmatpush1.msra.mxu0 0.0
    %3072 = vmatprep.subr.mxu0 0.0
    %3073 = vmatpush1.msra.mxu0 0.0
    %3074 = vmatprep.subr.mxu0 0.0
    %3075 = vmatpush1.msra.mxu0 0.0
    %3076 = vmatprep.subr.mxu0 0.0
    %3077 = vmatpush1.msra.mxu0 0.0
    %3078 = vmatprep.subr.mxu0 0.0
    %3079 = vmatpush1.msra.mxu0 0.0
    %3080 = vmatprep.subr.mxu0 0.0
    %3081 = vmatpush1.msra.mxu0 0.0
    %3082 = vmatprep.subr.mxu0 0.0
    %3083 = vmatpush1.msra.mxu0 0.0
    %3084 = vmatprep.subr.mxu0 0.0
    %3085 = vmatpush1.msra.mxu0 0.0
    %3086 = vmatprep.subr.mxu0 0.0
    %3087 = vmatpush1.msra.mxu0 0.0
    %3088 = vmatprep.subr.mxu0 0.0
    %3089 = vmatpush1.msra.mxu0 0.0
    %3090 = vmatprep.subr.mxu0 0.0
    %3091 = vmatpush1.msra.mxu0 0.0
    %3092 = vmatprep.subr.mxu0 0.0
    %3093 = vmatpush1.msra.mxu0 0.0
    %3094 = vmatprep.subr.mxu0 0.0
    %3095 = vmatpush1.msra.mxu0 0.0
    %3096 = vmatprep.subr.mxu0 0.0
    %3097 = vmatpush1.msra.mxu0 0.0
    %3098 = vmatprep.subr.mxu0 0.0
    %3099 = vmatpush1.msra.mxu0 0.0
    %3100 = vmatprep.subr.mxu0 0.0
    %3101 = vmatpush1.msra.mxu0 0.0
    %3102 = vmatprep.mubr.f32.mxu0 0.0
    %3103 = vmatmul.mubr.f32.gmra.mrb[0].mxu0 %v3036
    %v3104 = vpop.f32.mrb[0].mxu0
    %v3105 = vadd.f32 0.0, %v3104
    %v3106 = vpop.f32.mrb[0].mxu0
    %3107 = vdwg.mxu0
    %3108 = vxpose.xlu0.b32.start [1/16] %v3032, 128
    %3109 = vxpose.xlu0.b32.cont [2/16] 0.0, 128
    %3110 = vxpose.xlu0.b32.cont [3/16] 0.0, 128
    %3111 = vxpose.xlu0.b32.cont [4/16] 0.0, 128
    %3112 = vxpose.xlu0.b32.cont [5/16] 0.0, 128
    %3113 = vxpose.xlu0.b32.cont [6/16] 0.0, 128
    %3114 = vxpose.xlu0.b32.cont [7/16] 0.0, 128
    %3115 = vxpose.xlu0.b32.cont [8/16] 0.0, 128
    %3116 = vxpose.xlu0.b32.cont [9/16] 0.0, 128
    %3117 = vxpose.xlu0.b32.cont [10/16] 0.0, 128
    %3118 = vxpose.xlu0.b32.cont [11/16] 0.0, 128
    %3119 = vxpose.xlu0.b32.cont [12/16] 0.0, 128
    %3120 = vxpose.xlu0.b32.cont [13/16] 0.0, 128
    %3121 = vxpose.xlu0.b32.cont [14/16] 0.0, 128
    %3122 = vxpose.xlu0.b32.cont [15/16] 0.0, 128
    %3123 = vxpose.xlu0.b32.end [16/16] 0.0, 128
    %v3124 = vpop.trf.xlu0
    %v3125 = vpop.trf.xlu0
    %v3126 = vpop.trf.xlu0
    %v3127 = vpop.trf.xlu0
    %v3128 = vpop.trf.xlu0
    %v3129 = vpop.trf.xlu0
    %v3130 = vpop.trf.xlu0
    %v3131 = vpop.trf.xlu0
    %v3132 = vpop.trf.xlu0
    %v3133 = vpop.trf.xlu0
    %v3134 = vpop.trf.xlu0
    %v3135 = vpop.trf.xlu0
    %v3136 = vpop.trf.xlu0
    %v3137 = vpop.trf.xlu0
    %v3138 = vpop.trf.xlu0
    %v3139 = vpop.trf.xlu0
    %v3141 = vsel %vm726, %v3124, 0
    %v3144 = vsel %vm726, %v3125, 0
    %3146 = vmatprep.subr.mxu0 0.0
    %3147 = vmatpush1.msra.mxu0 %v2952
    %3148 = vmatprep.subr.mxu0 0.0
    %3149 = vmatpush1.msra.mxu0 0.0
    %3150 = vmatprep.subr.mxu0 0.0
    %3151 = vmatpush1.msra.mxu0 0.0
    %3152 = vmatprep.subr.mxu0 0.0
    %3153 = vmatpush1.msra.mxu0 0.0
    %3154 = vmatprep.subr.mxu0 0.0
    %3155 = vmatpush1.msra.mxu0 0.0
    %3156 = vmatprep.subr.mxu0 0.0
    %3157 = vmatpush1.msra.mxu0 0.0
    %3158 = vmatprep.subr.mxu0 0.0
    %3159 = vmatpush1.msra.mxu0 0.0
    %3160 = vmatprep.subr.mxu0 0.0
    %3161 = vmatpush1.msra.mxu0 0.0
    %3162 = vmatprep.subr.mxu0 0.0
    %3163 = vmatpush1.msra.mxu0 0.0
    %3164 = vmatprep.subr.mxu0 0.0
    %3165 = vmatpush1.msra.mxu0 0.0
    %3166 = vmatprep.subr.mxu0 0.0
    %3167 = vmatpush1.msra.mxu0 0.0
    %3168 = vmatprep.subr.mxu0 0.0
    %3169 = vmatpush1.msra.mxu0 0.0
    %3170 = vmatprep.subr.mxu0 0.0
    %3171 = vmatpush1.msra.mxu0 0.0
    %3172 = vmatprep.subr.mxu0 0.0
    %3173 = vmatpush1.msra.mxu0 0.0
    %3174 = vmatprep.subr.mxu0 0.0
    %3175 = vmatpush1.msra.mxu0 0.0
    %3176 = vmatprep.subr.mxu0 0.0
    %3177 = vmatpush1.msra.mxu0 0.0
    %3178 = vmatprep.subr.mxu0 0.0
    %3179 = vmatpush1.msra.mxu0 0.0
    %3180 = vmatprep.subr.mxu0 0.0
    %3181 = vmatpush1.msra.mxu0 0.0
    %3182 = vmatprep.subr.mxu0 0.0
    %3183 = vmatpush1.msra.mxu0 0.0
    %3184 = vmatprep.subr.mxu0 0.0
    %3185 = vmatpush1.msra.mxu0 0.0
    %3186 = vmatprep.subr.mxu0 0.0
    %3187 = vmatpush1.msra.mxu0 0.0
    %3188 = vmatprep.subr.mxu0 0.0
    %3189 = vmatpush1.msra.mxu0 0.0
    %3190 = vmatprep.subr.mxu0 0.0
    %3191 = vmatpush1.msra.mxu0 0.0
    %3192 = vmatprep.subr.mxu0 0.0
    %3193 = vmatpush1.msra.mxu0 0.0
    %3194 = vmatprep.subr.mxu0 0.0
    %3195 = vmatpush1.msra.mxu0 0.0
    %3196 = vmatprep.subr.mxu0 0.0
    %3197 = vmatpush1.msra.mxu0 0.0
    %3198 = vmatprep.subr.mxu0 0.0
    %3199 = vmatpush1.msra.mxu0 0.0
    %3200 = vmatprep.subr.mxu0 0.0
    %3201 = vmatpush1.msra.mxu0 0.0
    %3202 = vmatprep.subr.mxu0 0.0
    %3203 = vmatpush1.msra.mxu0 0.0
    %3204 = vmatprep.subr.mxu0 0.0
    %3205 = vmatpush1.msra.mxu0 0.0
    %3206 = vmatprep.subr.mxu0 0.0
    %3207 = vmatpush1.msra.mxu0 0.0
    %3208 = vmatprep.subr.mxu0 0.0
    %3209 = vmatpush1.msra.mxu0 0.0
    %3210 = vmatprep.mubr.f32.mxu0 0.0
    %3211 = vmatmul.mubr.f32.gmra.mrb[0].mxu0 %v3141
    %v3212 = vpop.f32.mrb[0].mxu0
    %v3213 = vadd.f32 0.0, %v3212
    %v3214 = vpop.f32.mrb[0].mxu0
    %3215 = vmatprep.mubr.f32.mxu0 0.0
    %3216 = vmatmul.mubr.f32.gmra.mrb[0].mxu0 %v3144
    %v3217 = vpop.f32.mrb[0].mxu0
    %v3218 = vadd.f32 0.0, %v3217
    %v3219 = vpop.f32.mrb[0].mxu0
    %3220 = vdwg.mxu0
    %v3221 = vadd.f32 %v2954, %v3213
    %v3222 = vadd.f32 %v2955, %v3218
    %v3223 = vtanh.pop %v3221
    %v3224 = vtanh.pop %v3222
    %v3225 = vadd.f32 %v2952, %v3105
    %v3226 = vtanh.pop %v3225
    %v3228 = vsel %vm311, %v3223, 0
    %v3231 = vsel %vm311, %v3224, 0
    %3233 = vmatprep.subr.mxu0 0.0
    %3234 = vmatpush1.xpose.msra.mxu0 %v3228
    %3235 = vmatprep.subr.mxu0 0.0
    %3236 = vmatpush1.xpose.msra.mxu0 %v3231
    %3237 = vmatprep.subr.mxu0 0.0
    %3238 = vmatpush1.xpose.msra.mxu0 0.0
    %3239 = vmatprep.subr.mxu0 0.0
    %3240 = vmatpush1.xpose.msra.mxu0 0.0
    %3241 = vmatprep.subr.mxu0 0.0
    %3242 = vmatpush1.xpose.msra.mxu0 0.0
    %3243 = vmatprep.subr.mxu0 0.0
    %3244 = vmatpush1.xpose.msra.mxu0 0.0
    %3245 = vmatprep.subr.mxu0 0.0
    %3246 = vmatpush1.xpose.msra.mxu0 0.0
    %3247 = vmatprep.subr.mxu0 0.0
    %3248 = vmatpush1.xpose.msra.mxu0 0.0
    %3249 = vmatprep.subr.mxu0 0.0
    %3250 = vmatpush1.xpose.msra.mxu0 0.0
    %3251 = vmatprep.subr.mxu0 0.0
    %3252 = vmatpush1.xpose.msra.mxu0 0.0
    %3253 = vmatprep.subr.mxu0 0.0
    %3254 = vmatpush1.xpose.msra.mxu0 0.0
    %3255 = vmatprep.subr.mxu0 0.0
    %3256 = vmatpush1.xpose.msra.mxu0 0.0
    %3257 = vmatprep.subr.mxu0 0.0
    %3258 = vmatpush1.xpose.msra.mxu0 0.0
    %3259 = vmatprep.subr.mxu0 0.0
    %3260 = vmatpush1.xpose.msra.mxu0 0.0
    %3261 = vmatprep.subr.mxu0 0.0
    %3262 = vmatpush1.xpose.msra.mxu0 0.0
    %3263 = vmatprep.subr.mxu0 0.0
    %3264 = vmatpush1.xpose.msra.mxu0 0.0
    %3265 = vmatprep.subr.mxu0 0.0
    %3266 = vmatpush1.xpose.msra.mxu0 0.0
    %3267 = vmatprep.subr.mxu0 0.0
    %3268 = vmatpush1.xpose.msra.mxu0 0.0
    %3269 = vmatprep.subr.mxu0 0.0
    %3270 = vmatpush1.xpose.msra.mxu0 0.0
    %3271 = vmatprep.subr.mxu0 0.0
    %3272 = vmatpush1.xpose.msra.mxu0 0.0
    %3273 = vmatprep.subr.mxu0 0.0
    %3274 = vmatpush1.xpose.msra.mxu0 0.0
    %3275 = vmatprep.subr.mxu0 0.0
    %3276 = vmatpush1.xpose.msra.mxu0 0.0
    %3277 = vmatprep.subr.mxu0 0.0
    %3278 = vmatpush1.xpose.msra.mxu0 0.0
    %3279 = vmatprep.subr.mxu0 0.0
    %3280 = vmatpush1.xpose.msra.mxu0 0.0
    %3281 = vmatprep.subr.mxu0 0.0
    %3282 = vmatpush1.xpose.msra.mxu0 0.0
    %3283 = vmatprep.subr.mxu0 0.0
    %3284 = vmatpush1.xpose.msra.mxu0 0.0
    %3285 = vmatprep.subr.mxu0 0.0
    %3286 = vmatpush1.xpose.msra.mxu0 0.0
    %3287 = vmatprep.subr.mxu0 0.0
    %3288 = vmatpush1.xpose.msra.mxu0 0.0
    %3289 = vmatprep.subr.mxu0 0.0
    %3290 = vmatpush1.xpose.msra.mxu0 0.0
    %3291 = vmatprep.subr.mxu0 0.0
    %3292 = vmatpush1.xpose.msra.mxu0 0.0
    %3293 = vmatprep.subr.mxu0 0.0
    %3294 = vmatpush1.xpose.msra.mxu0 0.0
    %3295 = vmatprep.subr.mxu0 0.0
    %3296 = vmatpush1.xpose.msra.mxu0 0.0
    %3297 = vmatprep.mubr.f32.mxu0 0.0
    %3298 = vmatmul.mubr.f32.gmra.mrb[0].mxu0 %v815
    %v3299 = vpop.f32.mrb[0].mxu0
    %v3300 = vadd.f32 0.0, %v3299
    %v3301 = vpop.f32.mrb[0].mxu0
    %3302 = vdwg.mxu0
    %v3304 = vsel %vm311, %v3226, 0
    %3306 = vmatprep.subr.mxu0 0.0
    %3307 = vmatpush1.xpose.msra.mxu0 %v3304
    %3308 = vmatprep.subr.mxu0 0.0
    %3309 = vmatpush1.xpose.msra.mxu0 0.0
    %3310 = vmatprep.subr.mxu0 0.0
    %3311 = vmatpush1.xpose.msra.mxu0 0.0
    %3312 = vmatprep.subr.mxu0 0.0
    %3313 = vmatpush1.xpose.msra.mxu0 0.0
    %3314 = vmatprep.subr.mxu0 0.0
    %3315 = vmatpush1.xpose.msra.mxu0 0.0
    %3316 = vmatprep.subr.mxu0 0.0
    %3317 = vmatpush1.xpose.msra.mxu0 0.0
    %3318 = vmatprep.subr.mxu0 0.0
    %3319 = vmatpush1.xpose.msra.mxu0 0.0
    %3320 = vmatprep.subr.mxu0 0.0
    %3321 = vmatpush1.xpose.msra.mxu0 0.0
    %3322 = vmatprep.subr.mxu0 0.0
    %3323 = vmatpush1.xpose.msra.mxu0 0.0
    %3324 = vmatprep.subr.mxu0 0.0
    %3325 = vmatpush1.xpose.msra.mxu0 0.0
    %3326 = vmatprep.subr.mxu0 0.0
    %3327 = vmatpush1.xpose.msra.mxu0 0.0
    %3328 = vmatprep.subr.mxu0 0.0
    %3329 = vmatpush1.xpose.msra.mxu0 0.0
    %3330 = vmatprep.subr.mxu0 0.0
    %3331 = vmatpush1.xpose.msra.mxu0 0.0
    %3332 = vmatprep.subr.mxu0 0.0
    %3333 = vmatpush1.xpose.msra.mxu0 0.0
    %3334 = vmatprep.subr.mxu0 0.0
    %3335 = vmatpush1.xpose.msra.mxu0 0.0
    %3336 = vmatprep.subr.mxu0 0.0
    %3337 = vmatpush1.xpose.msra.mxu0 0.0
    %3338 = vmatprep.subr.mxu0 0.0
    %3339 = vmatpush1.xpose.msra.mxu0 0.0
    %3340 = vmatprep.subr.mxu0 0.0
    %3341 = vmatpush1.xpose.msra.mxu0 0.0
    %3342 = vmatprep.subr.mxu0 0.0
    %3343 = vmatpush1.xpose.msra.mxu0 0.0
    %3344 = vmatprep.subr.mxu0 0.0
    %3345 = vmatpush1.xpose.msra.mxu0 0.0
    %3346 = vmatprep.subr.mxu0 0.0
    %3347 = vmatpush1.xpose.msra.mxu0 0.0
    %3348 = vmatprep.subr.mxu0 0.0
    %3349 = vmatpush1.xpose.msra.mxu0 0.0
    %3350 = vmatprep.subr.mxu0 0.0
    %3351 = vmatpush1.xpose.msra.mxu0 0.0
    %3352 = vmatprep.subr.mxu0 0.0
    %3353 = vmatpush1.xpose.msra.mxu0 0.0
    %3354 = vmatprep.subr.mxu0 0.0
    %3355 = vmatpush1.xpose.msra.mxu0 0.0
    %3356 = vmatprep.subr.mxu0 0.0
    %3357 = vmatpush1.xpose.msra.mxu0 0.0
    %3358 = vmatprep.subr.mxu0 0.0
    %3359 = vmatpush1.xpose.msra.mxu0 0.0
    %3360 = vmatprep.subr.mxu0 0.0
    %3361 = vmatpush1.xpose.msra.mxu0 0.0
    %3362 = vmatprep.subr.mxu0 0.0
    %3363 = vmatpush1.xpose.msra.mxu0 0.0
    %3364 = vmatprep.subr.mxu0 0.0
    %3365 = vmatpush1.xpose.msra.mxu0 0.0
    %3366 = vmatprep.subr.mxu0 0.0
    %3367 = vmatpush1.xpose.msra.mxu0 0.0
    %3368 = vmatprep.subr.mxu0 0.0
    %3369 = vmatpush1.xpose.msra.mxu0 0.0
    %3370 = vmatprep.mubr.f32.mxu0 0.0
    %3371 = vmatmul.mubr.f32.gmra.mrb[0].mxu0 %v894
    %v3372 = vpop.f32.mrb[0].mxu0
    %v3373 = vadd.f32 0.0, %v3372
    %v3374 = vpop.f32.mrb[0].mxu0
    %3375 = vdwg.mxu0
    %v3376 = vsel %vm969, %v3300, -inf
    %3377 = vmax.xlane.f32.xlu0 %v3376
    %v3378 = vpop.xlane.xlu0 %3377
    %v3379 = vsub.f32 %v3300, %v3378
    %v3380 = vmul.f32 %v3379, 1.442695
    %v3381 = vpow.pop %v3380
    %v3382 = vsel %vm969, %v3381, 0.0
    %3383 = vadd.xlane.f32.xlu0 %v3382
    %v3384 = vpop.xlane.xlu0 %3383
    %v3385 = vrcp.pop %v3384
    %v3386 = vmul.f32 %v3381, %v3385
    %v3387 = vsel %vm981, %v3373, -inf
    %3388 = vmax.xlane.f32.xlu0 %v3387
    %v3389 = vpop.xlane.xlu0 %3388
    %v3390 = vsub.f32 %v3373, %v3389
    %v3391 = vmul.f32 %v3390, 1.442695
    %v3392 = vpow.pop %v3391
    %v3393 = vsel %vm981, %v3392, 0.0
    %3394 = vadd.xlane.f32.xlu0 %v3393
    %v3395 = vpop.xlane.xlu0 %3394
    %v3396 = vrcp.pop %v3395
    %v3397 = vmul.f32 %v3392, %v3396
    %v3399 = vsel %vm726, %v3397, 0
    %3401 = vmatprep.subr.mxu0 0.0
    %3402 = vmatpush1.msra.mxu0 %v2945
    %3403 = vmatprep.subr.mxu0 0.0
    %3404 = vmatpush1.msra.mxu0 0.0
    %3405 = vmatprep.subr.mxu0 0.0
    %3406 = vmatpush1.msra.mxu0 0.0
    %3407 = vmatprep.subr.mxu0 0.0
    %3408 = vmatpush1.msra.mxu0 0.0
    %3409 = vmatprep.subr.mxu0 0.0
    %3410 = vmatpush1.msra.mxu0 0.0
    %3411 = vmatprep.subr.mxu0 0.0
    %3412 = vmatpush1.msra.mxu0 0.0
    %3413 = vmatprep.subr.mxu0 0.0
    %3414 = vmatpush1.msra.mxu0 0.0
    %3415 = vmatprep.subr.mxu0 0.0
    %3416 = vmatpush1.msra.mxu0 0.0
    %3417 = vmatprep.subr.mxu0 0.0
    %3418 = vmatpush1.msra.mxu0 0.0
    %3419 = vmatprep.subr.mxu0 0.0
    %3420 = vmatpush1.msra.mxu0 0.0
    %3421 = vmatprep.subr.mxu0 0.0
    %3422 = vmatpush1.msra.mxu0 0.0
    %3423 = vmatprep.subr.mxu0 0.0
    %3424 = vmatpush1.msra.mxu0 0.0
    %3425 = vmatprep.subr.mxu0 0.0
    %3426 = vmatpush1.msra.mxu0 0.0
    %3427 = vmatprep.subr.mxu0 0.0
    %3428 = vmatpush1.msra.mxu0 0.0
    %3429 = vmatprep.subr.mxu0 0.0
    %3430 = vmatpush1.msra.mxu0 0.0
    %3431 = vmatprep.subr.mxu0 0.0
    %3432 = vmatpush1.msra.mxu0 0.0
    %3433 = vmatprep.subr.mxu0 0.0
    %3434 = vmatpush1.msra.mxu0 0.0
    %3435 = vmatprep.subr.mxu0 0.0
    %3436 = vmatpush1.msra.mxu0 0.0
    %3437 = vmatprep.subr.mxu0 0.0
    %3438 = vmatpush1.msra.mxu0 0.0
    %3439 = vmatprep.subr.mxu0 0.0
    %3440 = vmatpush1.msra.mxu0 0.0
    %3441 = vmatprep.subr.mxu0 0.0
    %3442 = vmatpush1.msra.mxu0 0.0
    %3443 = vmatprep.subr.mxu0 0.0
    %3444 = vmatpush1.msra.mxu0 0.0
    %3445 = vmatprep.subr.mxu0 0.0
    %3446 = vmatpush1.msra.mxu0 0.0
    %3447 = vmatprep.subr.mxu0 0.0
    %3448 = vmatpush1.msra.mxu0 0.0
    %3449 = vmatprep.subr.mxu0 0.0
    %3450 = vmatpush1.msra.mxu0 0.0
    %3451 = vmatprep.subr.mxu0 0.0
    %3452 = vmatpush1.msra.mxu0 0.0
    %3453 = vmatprep.subr.mxu0 0.0
    %3454 = vmatpush1.msra.mxu0 0.0
    %3455 = vmatprep.subr.mxu0 0.0
    %3456 = vmatpush1.msra.mxu0 0.0
    %3457 = vmatprep.subr.mxu0 0.0
    %3458 = vmatpush1.msra.mxu0 0.0
    %3459 = vmatprep.subr.mxu0 0.0
    %3460 = vmatpush1.msra.mxu0 0.0
    %3461 = vmatprep.subr.mxu0 0.0
    %3462 = vmatpush1.msra.mxu0 0.0
    %3463 = vmatprep.subr.mxu0 0.0
    %3464 = vmatpush1.msra.mxu0 0.0
    %3465 = vmatprep.mubr.f32.mxu0 0.0
    %3466 = vmatmul.mubr.f32.gmra.mrb[0].mxu0 %v3399
    %v3467 = vpop.f32.mrb[0].mxu0
    %v3468 = vadd.f32 0.0, %v3467
    %v3469 = vpop.f32.mrb[0].mxu0
    %3470 = vdwg.mxu0
    %v3472 = vsel %vm311, %v3386, 0
    %3474 = vmatprep.subr.mxu0 0.0
    %3475 = vmatpush1.msra.mxu0 %v2947
    %3476 = vmatprep.subr.mxu0 0.0
    %3477 = vmatpush1.msra.mxu0 %v2948
    %3478 = vmatprep.subr.mxu0 0.0
    %3479 = vmatpush1.msra.mxu0 0.0
    %3480 = vmatprep.subr.mxu0 0.0
    %3481 = vmatpush1.msra.mxu0 0.0
    %3482 = vmatprep.subr.mxu0 0.0
    %3483 = vmatpush1.msra.mxu0 0.0
    %3484 = vmatprep.subr.mxu0 0.0
    %3485 = vmatpush1.msra.mxu0 0.0
    %3486 = vmatprep.subr.mxu0 0.0
    %3487 = vmatpush1.msra.mxu0 0.0
    %3488 = vmatprep.subr.mxu0 0.0
    %3489 = vmatpush1.msra.mxu0 0.0
    %3490 = vmatprep.subr.mxu0 0.0
    %3491 = vmatpush1.msra.mxu0 0.0
    %3492 = vmatprep.subr.mxu0 0.0
    %3493 = vmatpush1.msra.mxu0 0.0
    %3494 = vmatprep.subr.mxu0 0.0
    %3495 = vmatpush1.msra.mxu0 0.0
    %3496 = vmatprep.subr.mxu0 0.0
    %3497 = vmatpush1.msra.mxu0 0.0
    %3498 = vmatprep.subr.mxu0 0.0
    %3499 = vmatpush1.msra.mxu0 0.0
    %3500 = vmatprep.subr.mxu0 0.0
    %3501 = vmatpush1.msra.mxu0 0.0
    %3502 = vmatprep.subr.mxu0 0.0
    %3503 = vmatpush1.msra.mxu0 0.0
    %3504 = vmatprep.subr.mxu0 0.0
    %3505 = vmatpush1.msra.mxu0 0.0
    %3506 = vmatprep.subr.mxu0 0.0
    %3507 = vmatpush1.msra.mxu0 0.0
    %3508 = vmatprep.subr.mxu0 0.0
    %3509 = vmatpush1.msra.mxu0 0.0
    %3510 = vmatprep.subr.mxu0 0.0
    %3511 = vmatpush1.msra.mxu0 0.0
    %3512 = vmatprep.subr.mxu0 0.0
    %3513 = vmatpush1.msra.mxu0 0.0
    %3514 = vmatprep.subr.mxu0 0.0
    %3515 = vmatpush1.msra.mxu0 0.0
    %3516 = vmatprep.subr.mxu0 0.0
    %3517 = vmatpush1.msra.mxu0 0.0
    %3518 = vmatprep.subr.mxu0 0.0
    %3519 = vmatpush1.msra.mxu0 0.0
    %3520 = vmatprep.subr.mxu0 0.0
    %3521 = vmatpush1.msra.mxu0 0.0
    %3522 = vmatprep.subr.mxu0 0.0
    %3523 = vmatpush1.msra.mxu0 0.0
    %3524 = vmatprep.subr.mxu0 0.0
    %3525 = vmatpush1.msra.mxu0 0.0
    %3526 = vmatprep.subr.mxu0 0.0
    %3527 = vmatpush1.msra.mxu0 0.0
    %3528 = vmatprep.subr.mxu0 0.0
    %3529 = vmatpush1.msra.mxu0 0.0
    %3530 = vmatprep.subr.mxu0 0.0
    %3531 = vmatpush1.msra.mxu0 0.0
    %3532 = vmatprep.subr.mxu0 0.0
    %3533 = vmatpush1.msra.mxu0 0.0
    %3534 = vmatprep.subr.mxu0 0.0
    %3535 = vmatpush1.msra.mxu0 0.0
    %3536 = vmatprep.subr.mxu0 0.0
    %3537 = vmatpush1.msra.mxu0 0.0
    %3538 = vmatprep.mubr.f32.mxu0 0.0
    %3539 = vmatmul.mubr.f32.gmra.mrb[0].mxu0 %v3472
    %v3540 = vpop.f32.mrb[0].mxu0
    %v3541 = vadd.f32 %v3468, %v3540
    %v3542 = vpop.f32.mrb[0].mxu0
    %3543 = vdwg.mxu0
    %3544 = vst.msk [vmem:[#allocation5 + $0x4] sm:$0x1] %vm1139, %v3541
    %s3545 = scalar_lea.vmem %s0, 40
    %v3546 = vld [vmem:[%s3545] sm:$0xff]
    %s3547 = scalar_lea.vmem %s1, 80
    %v3548 = vld [vmem:[%s3547] sm:$0xff]
    %v3549 = vld [vmem:[%s3547 + $0x8] sm:$0xff]
    %s3550 = scalar_lea.vmem [#allocation2], 40
    %v3551 = vld [vmem:[%s3550] sm:$0xff]
    %s3552 = scalar_lea.vmem [#allocation3], 40
    %v3553 = vld [vmem:[%s3552] sm:$0xff]
    %s3554 = scalar_lea.vmem [#allocation4], 80
    %v3555 = vld [vmem:[%s3554] sm:$0xff]
    %v3556 = vld [vmem:[%s3554 + $0x8] sm:$0xff]
    %v3558 = vsel %vm64, %v3551, 0
    %v3561 = vsel %vm64, %v3548, 0
    %v3564 = vsel %vm64, %v3549, 0
    %3566 = vmatprep.subr.mxu0 0.0
    %3567 = vmatpush1.xpose.msra.mxu0 %v3561
    %3568 = vmatprep.subr.mxu0 0.0
    %3569 = vmatpush1.xpose.msra.mxu0 %v3564
    %3570 = vmatprep.subr.mxu0 0.0
    %3571 = vmatpush1.xpose.msra.mxu0 0.0
    %3572 = vmatprep.subr.mxu0 0.0
    %3573 = vmatpush1.xpose.msra.mxu0 0.0
    %3574 = vmatprep.subr.mxu0 0.0
    %3575 = vmatpush1.xpose.msra.mxu0 0.0
    %3576 = vmatprep.subr.mxu0 0.0
    %3577 = vmatpush1.xpose.msra.mxu0 0.0
    %3578 = vmatprep.subr.mxu0 0.0
    %3579 = vmatpush1.xpose.msra.mxu0 0.0
    %3580 = vmatprep.subr.mxu0 0.0
    %3581 = vmatpush1.xpose.msra.mxu0 0.0
    %3582 = vmatprep.subr.mxu0 0.0
    %3583 = vmatpush1.xpose.msra.mxu0 0.0
    %3584 = vmatprep.subr.mxu0 0.0
    %3585 = vmatpush1.xpose.msra.mxu0 0.0
    %3586 = vmatprep.subr.mxu0 0.0
    %3587 = vmatpush1.xpose.msra.mxu0 0.0
    %3588 = vmatprep.subr.mxu0 0.0
    %3589 = vmatpush1.xpose.msra.mxu0 0.0
    %3590 = vmatprep.subr.mxu0 0.0
    %3591 = vmatpush1.xpose.msra.mxu0 0.0
    %3592 = vmatprep.subr.mxu0 0.0
    %3593 = vmatpush1.xpose.msra.mxu0 0.0
    %3594 = vmatprep.subr.mxu0 0.0
    %3595 = vmatpush1.xpose.msra.mxu0 0.0
    %3596 = vmatprep.subr.mxu0 0.0
    %3597 = vmatpush1.xpose.msra.mxu0 0.0
    %3598 = vmatprep.subr.mxu0 0.0
    %3599 = vmatpush1.xpose.msra.mxu0 0.0
    %3600 = vmatprep.subr.mxu0 0.0
    %3601 = vmatpush1.xpose.msra.mxu0 0.0
    %3602 = vmatprep.subr.mxu0 0.0
    %3603 = vmatpush1.xpose.msra.mxu0 0.0
    %3604 = vmatprep.subr.mxu0 0.0
    %3605 = vmatpush1.xpose.msra.mxu0 0.0
    %3606 = vmatprep.subr.mxu0 0.0
    %3607 = vmatpush1.xpose.msra.mxu0 0.0
    %3608 = vmatprep.subr.mxu0 0.0
    %3609 = vmatpush1.xpose.msra.mxu0 0.0
    %3610 = vmatprep.subr.mxu0 0.0
    %3611 = vmatpush1.xpose.msra.mxu0 0.0
    %3612 = vmatprep.subr.mxu0 0.0
    %3613 = vmatpush1.xpose.msra.mxu0 0.0
    %3614 = vmatprep.subr.mxu0 0.0
    %3615 = vmatpush1.xpose.msra.mxu0 0.0
    %3616 = vmatprep.subr.mxu0 0.0
    %3617 = vmatpush1.xpose.msra.mxu0 0.0
    %3618 = vmatprep.subr.mxu0 0.0
    %3619 = vmatpush1.xpose.msra.mxu0 0.0
    %3620 = vmatprep.subr.mxu0 0.0
    %3621 = vmatpush1.xpose.msra.mxu0 0.0
    %3622 = vmatprep.subr.mxu0 0.0
    %3623 = vmatpush1.xpose.msra.mxu0 0.0
    %3624 = vmatprep.subr.mxu0 0.0
    %3625 = vmatpush1.xpose.msra.mxu0 0.0
    %3626 = vmatprep.subr.mxu0 0.0
    %3627 = vmatpush1.xpose.msra.mxu0 0.0
    %3628 = vmatprep.subr.mxu0 0.0
    %3629 = vmatpush1.xpose.msra.mxu0 0.0
    %3630 = vmatprep.mubr.f32.mxu0 0.0
    %3631 = vmatmul.mubr.f32.gmra.mrb[0].mxu0 %v3558
    %v3632 = vpop.f32.mrb[0].mxu0
    %v3633 = vadd.f32 0.0, %v3632
    %v3634 = vpop.f32.mrb[0].mxu0
    %3635 = vdwg.mxu0
    %v3637 = vsel %vm311, %v3633, 0
    %3639 = vmatprep.subr.mxu0 0.0
    %3640 = vmatpush1.msra.mxu0 %v3555
    %3641 = vmatprep.subr.mxu0 0.0
    %3642 = vmatpush1.msra.mxu0 %v3556
    %3643 = vmatprep.subr.mxu0 0.0
    %3644 = vmatpush1.msra.mxu0 0.0
    %3645 = vmatprep.subr.mxu0 0.0
    %3646 = vmatpush1.msra.mxu0 0.0
    %3647 = vmatprep.subr.mxu0 0.0
    %3648 = vmatpush1.msra.mxu0 0.0
    %3649 = vmatprep.subr.mxu0 0.0
    %3650 = vmatpush1.msra.mxu0 0.0
    %3651 = vmatprep.subr.mxu0 0.0
    %3652 = vmatpush1.msra.mxu0 0.0
    %3653 = vmatprep.subr.mxu0 0.0
    %3654 = vmatpush1.msra.mxu0 0.0
    %3655 = vmatprep.subr.mxu0 0.0
    %3656 = vmatpush1.msra.mxu0 0.0
    %3657 = vmatprep.subr.mxu0 0.0
    %3658 = vmatpush1.msra.mxu0 0.0
    %3659 = vmatprep.subr.mxu0 0.0
    %3660 = vmatpush1.msra.mxu0 0.0
    %3661 = vmatprep.subr.mxu0 0.0
    %3662 = vmatpush1.msra.mxu0 0.0
    %3663 = vmatprep.subr.mxu0 0.0
    %3664 = vmatpush1.msra.mxu0 0.0
    %3665 = vmatprep.subr.mxu0 0.0
    %3666 = vmatpush1.msra.mxu0 0.0
    %3667 = vmatprep.subr.mxu0 0.0
    %3668 = vmatpush1.msra.mxu0 0.0
    %3669 = vmatprep.subr.mxu0 0.0
    %3670 = vmatpush1.msra.mxu0 0.0
    %3671 = vmatprep.subr.mxu0 0.0
    %3672 = vmatpush1.msra.mxu0 0.0
    %3673 = vmatprep.subr.mxu0 0.0
    %3674 = vmatpush1.msra.mxu0 0.0
    %3675 = vmatprep.subr.mxu0 0.0
    %3676 = vmatpush1.msra.mxu0 0.0
    %3677 = vmatprep.subr.mxu0 0.0
    %3678 = vmatpush1.msra.mxu0 0.0
    %3679 = vmatprep.subr.mxu0 0.0
    %3680 = vmatpush1.msra.mxu0 0.0
    %3681 = vmatprep.subr.mxu0 0.0
    %3682 = vmatpush1.msra.mxu0 0.0
    %3683 = vmatprep.subr.mxu0 0.0
    %3684 = vmatpush1.msra.mxu0 0.0
    %3685 = vmatprep.subr.mxu0 0.0
    %3686 = vmatpush1.msra.mxu0 0.0
    %3687 = vmatprep.subr.mxu0 0.0
    %3688 = vmatpush1.msra.mxu0 0.0
    %3689 = vmatprep.subr.mxu0 0.0
    %3690 = vmatpush1.msra.mxu0 0.0
    %3691 = vmatprep.subr.mxu0 0.0
    %3692 = vmatpush1.msra.mxu0 0.0
    %3693 = vmatprep.subr.mxu0 0.0
    %3694 = vmatpush1.msra.mxu0 0.0
    %3695 = vmatprep.subr.mxu0 0.0
    %3696 = vmatpush1.msra.mxu0 0.0
    %3697 = vmatprep.subr.mxu0 0.0
    %3698 = vmatpush1.msra.mxu0 0.0
    %3699 = vmatprep.subr.mxu0 0.0
    %3700 = vmatpush1.msra.mxu0 0.0
    %3701 = vmatprep.subr.mxu0 0.0
    %3702 = vmatpush1.msra.mxu0 0.0
    %3703 = vmatprep.mubr.f32.mxu0 0.0
    %3704 = vmatmul.mubr.f32.gmra.mrb[0].mxu0 %v3637
    %v3705 = vpop.f32.mrb[0].mxu0
    %v3706 = vadd.f32 0.0, %v3705
    %v3707 = vpop.f32.mrb[0].mxu0
    %3708 = vdwg.mxu0
    %3709 = vxpose.xlu0.b32.start [1/16] %v3633, 128
    %3710 = vxpose.xlu0.b32.cont [2/16] 0.0, 128
    %3711 = vxpose.xlu0.b32.cont [3/16] 0.0, 128
    %3712 = vxpose.xlu0.b32.cont [4/16] 0.0, 128
    %3713 = vxpose.xlu0.b32.cont [5/16] 0.0, 128
    %3714 = vxpose.xlu0.b32.cont [6/16] 0.0, 128
    %3715 = vxpose.xlu0.b32.cont [7/16] 0.0, 128
    %3716 = vxpose.xlu0.b32.cont [8/16] 0.0, 128
    %3717 = vxpose.xlu0.b32.cont [9/16] 0.0, 128
    %3718 = vxpose.xlu0.b32.cont [10/16] 0.0, 128
    %3719 = vxpose.xlu0.b32.cont [11/16] 0.0, 128
    %3720 = vxpose.xlu0.b32.cont [12/16] 0.0, 128
    %3721 = vxpose.xlu0.b32.cont [13/16] 0.0, 128
    %3722 = vxpose.xlu0.b32.cont [14/16] 0.0, 128
    %3723 = vxpose.xlu0.b32.cont [15/16] 0.0, 128
    %3724 = vxpose.xlu0.b32.end [16/16] 0.0, 128
    %v3725 = vpop.trf.xlu0
    %v3726 = vpop.trf.xlu0
    %v3727 = vpop.trf.xlu0
    %v3728 = vpop.trf.xlu0
    %v3729 = vpop.trf.xlu0
    %v3730 = vpop.trf.xlu0
    %v3731 = vpop.trf.xlu0
    %v3732 = vpop.trf.xlu0
    %v3733 = vpop.trf.xlu0
    %v3734 = vpop.trf.xlu0
    %v3735 = vpop.trf.xlu0
    %v3736 = vpop.trf.xlu0
    %v3737 = vpop.trf.xlu0
    %v3738 = vpop.trf.xlu0
    %v3739 = vpop.trf.xlu0
    %v3740 = vpop.trf.xlu0
    %v3742 = vsel %vm726, %v3725, 0
    %v3745 = vsel %vm726, %v3726, 0
    %3747 = vmatprep.subr.mxu0 0.0
    %3748 = vmatpush1.msra.mxu0 %v3553
    %3749 = vmatprep.subr.mxu0 0.0
    %3750 = vmatpush1.msra.mxu0 0.0
    %3751 = vmatprep.subr.mxu0 0.0
    %3752 = vmatpush1.msra.mxu0 0.0
    %3753 = vmatprep.subr.mxu0 0.0
    %3754 = vmatpush1.msra.mxu0 0.0
    %3755 = vmatprep.subr.mxu0 0.0
    %3756 = vmatpush1.msra.mxu0 0.0
    %3757 = vmatprep.subr.mxu0 0.0
    %3758 = vmatpush1.msra.mxu0 0.0
    %3759 = vmatprep.subr.mxu0 0.0
    %3760 = vmatpush1.msra.mxu0 0.0
    %3761 = vmatprep.subr.mxu0 0.0
    %3762 = vmatpush1.msra.mxu0 0.0
    %3763 = vmatprep.subr.mxu0 0.0
    %3764 = vmatpush1.msra.mxu0 0.0
    %3765 = vmatprep.subr.mxu0 0.0
    %3766 = vmatpush1.msra.mxu0 0.0
    %3767 = vmatprep.subr.mxu0 0.0
    %3768 = vmatpush1.msra.mxu0 0.0
    %3769 = vmatprep.subr.mxu0 0.0
    %3770 = vmatpush1.msra.mxu0 0.0
    %3771 = vmatprep.subr.mxu0 0.0
    %3772 = vmatpush1.msra.mxu0 0.0
    %3773 = vmatprep.subr.mxu0 0.0
    %3774 = vmatpush1.msra.mxu0 0.0
    %3775 = vmatprep.subr.mxu0 0.0
    %3776 = vmatpush1.msra.mxu0 0.0
    %3777 = vmatprep.subr.mxu0 0.0
    %3778 = vmatpush1.msra.mxu0 0.0
    %3779 = vmatprep.subr.mxu0 0.0
    %3780 = vmatpush1.msra.mxu0 0.0
    %3781 = vmatprep.subr.mxu0 0.0
    %3782 = vmatpush1.msra.mxu0 0.0
    %3783 = vmatprep.subr.mxu0 0.0
    %3784 = vmatpush1.msra.mxu0 0.0
    %3785 = vmatprep.subr.mxu0 0.0
    %3786 = vmatpush1.msra.mxu0 0.0
    %3787 = vmatprep.subr.mxu0 0.0
    %3788 = vmatpush1.msra.mxu0 0.0
    %3789 = vmatprep.subr.mxu0 0.0
    %3790 = vmatpush1.msra.mxu0 0.0
    %3791 = vmatprep.subr.mxu0 0.0
    %3792 = vmatpush1.msra.mxu0 0.0
    %3793 = vmatprep.subr.mxu0 0.0
    %3794 = vmatpush1.msra.mxu0 0.0
    %3795 = vmatprep.subr.mxu0 0.0
    %3796 = vmatpush1.msra.mxu0 0.0
    %3797 = vmatprep.subr.mxu0 0.0
    %3798 = vmatpush1.msra.mxu0 0.0
    %3799 = vmatprep.subr.mxu0 0.0
    %3800 = vmatpush1.msra.mxu0 0.0
    %3801 = vmatprep.subr.mxu0 0.0
    %3802 = vmatpush1.msra.mxu0 0.0
    %3803 = vmatprep.subr.mxu0 0.0
    %3804 = vmatpush1.msra.mxu0 0.0
    %3805 = vmatprep.subr.mxu0 0.0
    %3806 = vmatpush1.msra.mxu0 0.0
    %3807 = vmatprep.subr.mxu0 0.0
    %3808 = vmatpush1.msra.mxu0 0.0
    %3809 = vmatprep.subr.mxu0 0.0
    %3810 = vmatpush1.msra.mxu0 0.0
    %3811 = vmatprep.mubr.f32.mxu0 0.0
    %3812 = vmatmul.mubr.f32.gmra.mrb[0].mxu0 %v3742
    %v3813 = vpop.f32.mrb[0].mxu0
    %v3814 = vadd.f32 0.0, %v3813
    %v3815 = vpop.f32.mrb[0].mxu0
    %3816 = vmatprep.mubr.f32.mxu0 0.0
    %3817 = vmatmul.mubr.f32.gmra.mrb[0].mxu0 %v3745
    %v3818 = vpop.f32.mrb[0].mxu0
    %v3819 = vadd.f32 0.0, %v3818
    %v3820 = vpop.f32.mrb[0].mxu0
    %3821 = vdwg.mxu0
    %v3822 = vadd.f32 %v3555, %v3814
    %v3823 = vadd.f32 %v3556, %v3819
    %v3824 = vtanh.pop %v3822
    %v3825 = vtanh.pop %v3823
    %v3826 = vadd.f32 %v3553, %v3706
    %v3827 = vtanh.pop %v3826
    %v3829 = vsel %vm311, %v3824, 0
    %v3832 = vsel %vm311, %v3825, 0
    %3834 = vmatprep.subr.mxu0 0.0
    %3835 = vmatpush1.xpose.msra.mxu0 %v3829
    %3836 = vmatprep.subr.mxu0 0.0
    %3837 = vmatpush1.xpose.msra.mxu0 %v3832
    %3838 = vmatprep.subr.mxu0 0.0
    %3839 = vmatpush1.xpose.msra.mxu0 0.0
    %3840 = vmatprep.subr.mxu0 0.0
    %3841 = vmatpush1.xpose.msra.mxu0 0.0
    %3842 = vmatprep.subr.mxu0 0.0
    %3843 = vmatpush1.xpose.msra.mxu0 0.0
    %3844 = vmatprep.subr.mxu0 0.0
    %3845 = vmatpush1.xpose.msra.mxu0 0.0
    %3846 = vmatprep.subr.mxu0 0.0
    %3847 = vmatpush1.xpose.msra.mxu0 0.0
    %3848 = vmatprep.subr.mxu0 0.0
    %3849 = vmatpush1.xpose.msra.mxu0 0.0
    %3850 = vmatprep.subr.mxu0 0.0
    %3851 = vmatpush1.xpose.msra.mxu0 0.0
    %3852 = vmatprep.subr.mxu0 0.0
    %3853 = vmatpush1.xpose.msra.mxu0 0.0
    %3854 = vmatprep.subr.mxu0 0.0
    %3855 = vmatpush1.xpose.msra.mxu0 0.0
    %3856 = vmatprep.subr.mxu0 0.0
    %3857 = vmatpush1.xpose.msra.mxu0 0.0
    %3858 = vmatprep.subr.mxu0 0.0
    %3859 = vmatpush1.xpose.msra.mxu0 0.0
    %3860 = vmatprep.subr.mxu0 0.0
    %3861 = vmatpush1.xpose.msra.mxu0 0.0
    %3862 = vmatprep.subr.mxu0 0.0
    %3863 = vmatpush1.xpose.msra.mxu0 0.0
    %3864 = vmatprep.subr.mxu0 0.0
    %3865 = vmatpush1.xpose.msra.mxu0 0.0
    %3866 = vmatprep.subr.mxu0 0.0
    %3867 = vmatpush1.xpose.msra.mxu0 0.0
    %3868 = vmatprep.subr.mxu0 0.0
    %3869 = vmatpush1.xpose.msra.mxu0 0.0
    %3870 = vmatprep.subr.mxu0 0.0
    %3871 = vmatpush1.xpose.msra.mxu0 0.0
    %3872 = vmatprep.subr.mxu0 0.0
    %3873 = vmatpush1.xpose.msra.mxu0 0.0
    %3874 = vmatprep.subr.mxu0 0.0
    %3875 = vmatpush1.xpose.msra.mxu0 0.0
    %3876 = vmatprep.subr.mxu0 0.0
    %3877 = vmatpush1.xpose.msra.mxu0 0.0
    %3878 = vmatprep.subr.mxu0 0.0
    %3879 = vmatpush1.xpose.msra.mxu0 0.0
    %3880 = vmatprep.subr.mxu0 0.0
    %3881 = vmatpush1.xpose.msra.mxu0 0.0
    %3882 = vmatprep.subr.mxu0 0.0
    %3883 = vmatpush1.xpose.msra.mxu0 0.0
    %3884 = vmatprep.subr.mxu0 0.0
    %3885 = vmatpush1.xpose.msra.mxu0 0.0
    %3886 = vmatprep.subr.mxu0 0.0
    %3887 = vmatpush1.xpose.msra.mxu0 0.0
    %3888 = vmatprep.subr.mxu0 0.0
    %3889 = vmatpush1.xpose.msra.mxu0 0.0
    %3890 = vmatprep.subr.mxu0 0.0
    %3891 = vmatpush1.xpose.msra.mxu0 0.0
    %3892 = vmatprep.subr.mxu0 0.0
    %3893 = vmatpush1.xpose.msra.mxu0 0.0
    %3894 = vmatprep.subr.mxu0 0.0
    %3895 = vmatpush1.xpose.msra.mxu0 0.0
    %3896 = vmatprep.subr.mxu0 0.0
    %3897 = vmatpush1.xpose.msra.mxu0 0.0
    %3898 = vmatprep.mubr.f32.mxu0 0.0
    %3899 = vmatmul.mubr.f32.gmra.mrb[0].mxu0 %v815
    %v3900 = vpop.f32.mrb[0].mxu0
    %v3901 = vadd.f32 0.0, %v3900
    %v3902 = vpop.f32.mrb[0].mxu0
    %3903 = vdwg.mxu0
    %v3905 = vsel %vm311, %v3827, 0
    %3907 = vmatprep.subr.mxu0 0.0
    %3908 = vmatpush1.xpose.msra.mxu0 %v3905
    %3909 = vmatprep.subr.mxu0 0.0
    %3910 = vmatpush1.xpose.msra.mxu0 0.0
    %3911 = vmatprep.subr.mxu0 0.0
    %3912 = vmatpush1.xpose.msra.mxu0 0.0
    %3913 = vmatprep.subr.mxu0 0.0
    %3914 = vmatpush1.xpose.msra.mxu0 0.0
    %3915 = vmatprep.subr.mxu0 0.0
    %3916 = vmatpush1.xpose.msra.mxu0 0.0
    %3917 = vmatprep.subr.mxu0 0.0
    %3918 = vmatpush1.xpose.msra.mxu0 0.0
    %3919 = vmatprep.subr.mxu0 0.0
    %3920 = vmatpush1.xpose.msra.mxu0 0.0
    %3921 = vmatprep.subr.mxu0 0.0
    %3922 = vmatpush1.xpose.msra.mxu0 0.0
    %3923 = vmatprep.subr.mxu0 0.0
    %3924 = vmatpush1.xpose.msra.mxu0 0.0
    %3925 = vmatprep.subr.mxu0 0.0
    %3926 = vmatpush1.xpose.msra.mxu0 0.0
    %3927 = vmatprep.subr.mxu0 0.0
    %3928 = vmatpush1.xpose.msra.mxu0 0.0
    %3929 = vmatprep.subr.mxu0 0.0
    %3930 = vmatpush1.xpose.msra.mxu0 0.0
    %3931 = vmatprep.subr.mxu0 0.0
    %3932 = vmatpush1.xpose.msra.mxu0 0.0
    %3933 = vmatprep.subr.mxu0 0.0
    %3934 = vmatpush1.xpose.msra.mxu0 0.0
    %3935 = vmatprep.subr.mxu0 0.0
    %3936 = vmatpush1.xpose.msra.mxu0 0.0
    %3937 = vmatprep.subr.mxu0 0.0
    %3938 = vmatpush1.xpose.msra.mxu0 0.0
    %3939 = vmatprep.subr.mxu0 0.0
    %3940 = vmatpush1.xpose.msra.mxu0 0.0
    %3941 = vmatprep.subr.mxu0 0.0
    %3942 = vmatpush1.xpose.msra.mxu0 0.0
    %3943 = vmatprep.subr.mxu0 0.0
    %3944 = vmatpush1.xpose.msra.mxu0 0.0
    %3945 = vmatprep.subr.mxu0 0.0
    %3946 = vmatpush1.xpose.msra.mxu0 0.0
    %3947 = vmatprep.subr.mxu0 0.0
    %3948 = vmatpush1.xpose.msra.mxu0 0.0
    %3949 = vmatprep.subr.mxu0 0.0
    %3950 = vmatpush1.xpose.msra.mxu0 0.0
    %3951 = vmatprep.subr.mxu0 0.0
    %3952 = vmatpush1.xpose.msra.mxu0 0.0
    %3953 = vmatprep.subr.mxu0 0.0
    %3954 = vmatpush1.xpose.msra.mxu0 0.0
    %3955 = vmatprep.subr.mxu0 0.0
    %3956 = vmatpush1.xpose.msra.mxu0 0.0
    %3957 = vmatprep.subr.mxu0 0.0
    %3958 = vmatpush1.xpose.msra.mxu0 0.0
    %3959 = vmatprep.subr.mxu0 0.0
    %3960 = vmatpush1.xpose.msra.mxu0 0.0
    %3961 = vmatprep.subr.mxu0 0.0
    %3962 = vmatpush1.xpose.msra.mxu0 0.0
    %3963 = vmatprep.subr.mxu0 0.0
    %3964 = vmatpush1.xpose.msra.mxu0 0.0
    %3965 = vmatprep.subr.mxu0 0.0
    %3966 = vmatpush1.xpose.msra.mxu0 0.0
    %3967 = vmatprep.subr.mxu0 0.0
    %3968 = vmatpush1.xpose.msra.mxu0 0.0
    %3969 = vmatprep.subr.mxu0 0.0
    %3970 = vmatpush1.xpose.msra.mxu0 0.0
    %3971 = vmatprep.mubr.f32.mxu0 0.0
    %3972 = vmatmul.mubr.f32.gmra.mrb[0].mxu0 %v894
    %v3973 = vpop.f32.mrb[0].mxu0
    %v3974 = vadd.f32 0.0, %v3973
    %v3975 = vpop.f32.mrb[0].mxu0
    %3976 = vdwg.mxu0
    %v3977 = vsel %vm969, %v3901, -inf
    %3978 = vmax.xlane.f32.xlu0 %v3977
    %v3979 = vpop.xlane.xlu0 %3978
    %v3980 = vsub.f32 %v3901, %v3979
    %v3981 = vmul.f32 %v3980, 1.442695
    %v3982 = vpow.pop %v3981
    %v3983 = vsel %vm969, %v3982, 0.0
    %3984 = vadd.xlane.f32.xlu0 %v3983
    %v3985 = vpop.xlane.xlu0 %3984
    %v3986 = vrcp.pop %v3985
    %v3987 = vmul.f32 %v3982, %v3986
    %v3988 = vsel %vm981, %v3974, -inf
    %3989 = vmax.xlane.f32.xlu0 %v3988
    %v3990 = vpop.xlane.xlu0 %3989
    %v3991 = vsub.f32 %v3974, %v3990
    %v3992 = vmul.f32 %v3991, 1.442695
    %v3993 = vpow.pop %v3992
    %v3994 = vsel %vm981, %v3993, 0.0
    %3995 = vadd.xlane.f32.xlu0 %v3994
    %v3996 = vpop.xlane.xlu0 %3995
    %v3997 = vrcp.pop %v3996
    %v3998 = vmul.f32 %v3993, %v3997
    %v4000 = vsel %vm726, %v3998, 0
    %4002 = vmatprep.subr.mxu0 0.0
    %4003 = vmatpush1.msra.mxu0 %v3546
    %4004 = vmatprep.subr.mxu0 0.0
    %4005 = vmatpush1.msra.mxu0 0.0
    %4006 = vmatprep.subr.mxu0 0.0
    %4007 = vmatpush1.msra.mxu0 0.0
    %4008 = vmatprep.subr.mxu0 0.0
    %4009 = vmatpush1.msra.mxu0 0.0
    %4010 = vmatprep.subr.mxu0 0.0
    %4011 = vmatpush1.msra.mxu0 0.0
    %4012 = vmatprep.subr.mxu0 0.0
    %4013 = vmatpush1.msra.mxu0 0.0
    %4014 = vmatprep.subr.mxu0 0.0
    %4015 = vmatpush1.msra.mxu0 0.0
    %4016 = vmatprep.subr.mxu0 0.0
    %4017 = vmatpush1.msra.mxu0 0.0
    %4018 = vmatprep.subr.mxu0 0.0
    %4019 = vmatpush1.msra.mxu0 0.0
    %4020 = vmatprep.subr.mxu0 0.0
    %4021 = vmatpush1.msra.mxu0 0.0
    %4022 = vmatprep.subr.mxu0 0.0
    %4023 = vmatpush1.msra.mxu0 0.0
    %4024 = vmatprep.subr.mxu0 0.0
    %4025 = vmatpush1.msra.mxu0 0.0
    %4026 = vmatprep.subr.mxu0 0.0
    %4027 = vmatpush1.msra.mxu0 0.0
    %4028 = vmatprep.subr.mxu0 0.0
    %4029 = vmatpush1.msra.mxu0 0.0
    %4030 = vmatprep.subr.mxu0 0.0
    %4031 = vmatpush1.msra.mxu0 0.0
    %4032 = vmatprep.subr.mxu0 0.0
    %4033 = vmatpush1.msra.mxu0 0.0
    %4034 = vmatprep.subr.mxu0 0.0
    %4035 = vmatpush1.msra.mxu0 0.0
    %4036 = vmatprep.subr.mxu0 0.0
    %4037 = vmatpush1.msra.mxu0 0.0
    %4038 = vmatprep.subr.mxu0 0.0
    %4039 = vmatpush1.msra.mxu0 0.0
    %4040 = vmatprep.subr.mxu0 0.0
    %4041 = vmatpush1.msra.mxu0 0.0
    %4042 = vmatprep.subr.mxu0 0.0
    %4043 = vmatpush1.msra.mxu0 0.0
    %4044 = vmatprep.subr.mxu0 0.0
    %4045 = vmatpush1.msra.mxu0 0.0
    %4046 = vmatprep.subr.mxu0 0.0
    %4047 = vmatpush1.msra.mxu0 0.0
    %4048 = vmatprep.subr.mxu0 0.0
    %4049 = vmatpush1.msra.mxu0 0.0
    %4050 = vmatprep.subr.mxu0 0.0
    %4051 = vmatpush1.msra.mxu0 0.0
    %4052 = vmatprep.subr.mxu0 0.0
    %4053 = vmatpush1.msra.mxu0 0.0
    %4054 = vmatprep.subr.mxu0 0.0
    %4055 = vmatpush1.msra.mxu0 0.0
    %4056 = vmatprep.subr.mxu0 0.0
    %4057 = vmatpush1.msra.mxu0 0.0
    %4058 = vmatprep.subr.mxu0 0.0
    %4059 = vmatpush1.msra.mxu0 0.0
    %4060 = vmatprep.subr.mxu0 0.0
    %4061 = vmatpush1.msra.mxu0 0.0
    %4062 = vmatprep.subr.mxu0 0.0
    %4063 = vmatpush1.msra.mxu0 0.0
    %4064 = vmatprep.subr.mxu0 0.0
    %4065 = vmatpush1.msra.mxu0 0.0
    %4066 = vmatprep.mubr.f32.mxu0 0.0
    %4067 = vmatmul.mubr.f32.gmra.mrb[0].mxu0 %v4000
    %v4068 = vpop.f32.mrb[0].mxu0
    %v4069 = vadd.f32 0.0, %v4068
    %v4070 = vpop.f32.mrb[0].mxu0
    %4071 = vdwg.mxu0
    %v4073 = vsel %vm311, %v3987, 0
    %4075 = vmatprep.subr.mxu0 0.0
    %4076 = vmatpush1.msra.mxu0 %v3548
    %4077 = vmatprep.subr.mxu0 0.0
    %4078 = vmatpush1.msra.mxu0 %v3549
    %4079 = vmatprep.subr.mxu0 0.0
    %4080 = vmatpush1.msra.mxu0 0.0
    %4081 = vmatprep.subr.mxu0 0.0
    %4082 = vmatpush1.msra.mxu0 0.0
    %4083 = vmatprep.subr.mxu0 0.0
    %4084 = vmatpush1.msra.mxu0 0.0
    %4085 = vmatprep.subr.mxu0 0.0
    %4086 = vmatpush1.msra.mxu0 0.0
    %4087 = vmatprep.subr.mxu0 0.0
    %4088 = vmatpush1.msra.mxu0 0.0
    %4089 = vmatprep.subr.mxu0 0.0
    %4090 = vmatpush1.msra.mxu0 0.0
    %4091 = vmatprep.subr.mxu0 0.0
    %4092 = vmatpush1.msra.mxu0 0.0
    %4093 = vmatprep.subr.mxu0 0.0
    %4094 = vmatpush1.msra.mxu0 0.0
    %4095 = vmatprep.subr.mxu0 0.0
    %4096 = vmatpush1.msra.mxu0 0.0
    %4097 = vmatprep.subr.mxu0 0.0
    %4098 = vmatpush1.msra.mxu0 0.0
    %4099 = vmatprep.subr.mxu0 0.0
    %4100 = vmatpush1.msra.mxu0 0.0
    %4101 = vmatprep.subr.mxu0 0.0
    %4102 = vmatpush1.msra.mxu0 0.0
    %4103 = vmatprep.subr.mxu0 0.0
    %4104 = vmatpush1.msra.mxu0 0.0
    %4105 = vmatprep.subr.mxu0 0.0
    %4106 = vmatpush1.msra.mxu0 0.0
    %4107 = vmatprep.subr.mxu0 0.0
    %4108 = vmatpush1.msra.mxu0 0.0
    %4109 = vmatprep.subr.mxu0 0.0
    %4110 = vmatpush1.msra.mxu0 0.0
    %4111 = vmatprep.subr.mxu0 0.0
    %4112 = vmatpush1.msra.mxu0 0.0
    %4113 = vmatprep.subr.mxu0 0.0
    %4114 = vmatpush1.msra.mxu0 0.0
    %4115 = vmatprep.subr.mxu0 0.0
    %4116 = vmatpush1.msra.mxu0 0.0
    %4117 = vmatprep.subr.mxu0 0.0
    %4118 = vmatpush1.msra.mxu0 0.0
    %4119 = vmatprep.subr.mxu0 0.0
    %4120 = vmatpush1.msra.mxu0 0.0
    %4121 = vmatprep.subr.mxu0 0.0
    %4122 = vmatpush1.msra.mxu0 0.0
    %4123 = vmatprep.subr.mxu0 0.0
    %4124 = vmatpush1.msra.mxu0 0.0
    %4125 = vmatprep.subr.mxu0 0.0
    %4126 = vmatpush1.msra.mxu0 0.0
    %4127 = vmatprep.subr.mxu0 0.0
    %4128 = vmatpush1.msra.mxu0 0.0
    %4129 = vmatprep.subr.mxu0 0.0
    %4130 = vmatpush1.msra.mxu0 0.0
    %4131 = vmatprep.subr.mxu0 0.0
    %4132 = vmatpush1.msra.mxu0 0.0
    %4133 = vmatprep.subr.mxu0 0.0
    %4134 = vmatpush1.msra.mxu0 0.0
    %4135 = vmatprep.subr.mxu0 0.0
    %4136 = vmatpush1.msra.mxu0 0.0
    %4137 = vmatprep.subr.mxu0 0.0
    %4138 = vmatpush1.msra.mxu0 0.0
    %4139 = vmatprep.mubr.f32.mxu0 0.0
    %4140 = vmatmul.mubr.f32.gmra.mrb[0].mxu0 %v4073
    %v4141 = vpop.f32.mrb[0].mxu0
    %v4142 = vadd.f32 %v4069, %v4141
    %v4143 = vpop.f32.mrb[0].mxu0
    %4144 = vdwg.mxu0
    %4145 = vst.msk [vmem:[#allocation5 + $0x5] sm:$0x1] %vm1139, %v4142
    %s4146 = scalar_lea.vmem %s0, 48
    %v4147 = vld [vmem:[%s4146] sm:$0xff]
    %s4148 = scalar_lea.vmem %s1, 96
    %v4149 = vld [vmem:[%s4148] sm:$0xff]
    %v4150 = vld [vmem:[%s4148 + $0x8] sm:$0xff]
    %s4151 = scalar_lea.vmem [#allocation2], 48
    %v4152 = vld [vmem:[%s4151] sm:$0xff]
    %s4153 = scalar_lea.vmem [#allocation3], 48
    %v4154 = vld [vmem:[%s4153] sm:$0xff]
    %s4155 = scalar_lea.vmem [#allocation4], 96
    %v4156 = vld [vmem:[%s4155] sm:$0xff]
    %v4157 = vld [vmem:[%s4155 + $0x8] sm:$0xff]
    %v4159 = vsel %vm64, %v4152, 0
    %v4162 = vsel %vm64, %v4149, 0
    %v4165 = vsel %vm64, %v4150, 0
    %4167 = vmatprep.subr.mxu0 0.0
    %4168 = vmatpush1.xpose.msra.mxu0 %v4162
    %4169 = vmatprep.subr.mxu0 0.0
    %4170 = vmatpush1.xpose.msra.mxu0 %v4165
    %4171 = vmatprep.subr.mxu0 0.0
    %4172 = vmatpush1.xpose.msra.mxu0 0.0
    %4173 = vmatprep.subr.mxu0 0.0
    %4174 = vmatpush1.xpose.msra.mxu0 0.0
    %4175 = vmatprep.subr.mxu0 0.0
    %4176 = vmatpush1.xpose.msra.mxu0 0.0
    %4177 = vmatprep.subr.mxu0 0.0
    %4178 = vmatpush1.xpose.msra.mxu0 0.0
    %4179 = vmatprep.subr.mxu0 0.0
    %4180 = vmatpush1.xpose.msra.mxu0 0.0
    %4181 = vmatprep.subr.mxu0 0.0
    %4182 = vmatpush1.xpose.msra.mxu0 0.0
    %4183 = vmatprep.subr.mxu0 0.0
    %4184 = vmatpush1.xpose.msra.mxu0 0.0
    %4185 = vmatprep.subr.mxu0 0.0
    %4186 = vmatpush1.xpose.msra.mxu0 0.0
    %4187 = vmatprep.subr.mxu0 0.0
    %4188 = vmatpush1.xpose.msra.mxu0 0.0
    %4189 = vmatprep.subr.mxu0 0.0
    %4190 = vmatpush1.xpose.msra.mxu0 0.0
    %4191 = vmatprep.subr.mxu0 0.0
    %4192 = vmatpush1.xpose.msra.mxu0 0.0
    %4193 = vmatprep.subr.mxu0 0.0
    %4194 = vmatpush1.xpose.msra.mxu0 0.0
    %4195 = vmatprep.subr.mxu0 0.0
    %4196 = vmatpush1.xpose.msra.mxu0 0.0
    %4197 = vmatprep.subr.mxu0 0.0
    %4198 = vmatpush1.xpose.msra.mxu0 0.0
    %4199 = vmatprep.subr.mxu0 0.0
    %4200 = vmatpush1.xpose.msra.mxu0 0.0
    %4201 = vmatprep.subr.mxu0 0.0
    %4202 = vmatpush1.xpose.msra.mxu0 0.0
    %4203 = vmatprep.subr.mxu0 0.0
    %4204 = vmatpush1.xpose.msra.mxu0 0.0
    %4205 = vmatprep.subr.mxu0 0.0
    %4206 = vmatpush1.xpose.msra.mxu0 0.0
    %4207 = vmatprep.subr.mxu0 0.0
    %4208 = vmatpush1.xpose.msra.mxu0 0.0
    %4209 = vmatprep.subr.mxu0 0.0
    %4210 = vmatpush1.xpose.msra.mxu0 0.0
    %4211 = vmatprep.subr.mxu0 0.0
    %4212 = vmatpush1.xpose.msra.mxu0 0.0
    %4213 = vmatprep.subr.mxu0 0.0
    %4214 = vmatpush1.xpose.msra.mxu0 0.0
    %4215 = vmatprep.subr.mxu0 0.0
    %4216 = vmatpush1.xpose.msra.mxu0 0.0
    %4217 = vmatprep.subr.mxu0 0.0
    %4218 = vmatpush1.xpose.msra.mxu0 0.0
    %4219 = vmatprep.subr.mxu0 0.0
    %4220 = vmatpush1.xpose.msra.mxu0 0.0
    %4221 = vmatprep.subr.mxu0 0.0
    %4222 = vmatpush1.xpose.msra.mxu0 0.0
    %4223 = vmatprep.subr.mxu0 0.0
    %4224 = vmatpush1.xpose.msra.mxu0 0.0
    %4225 = vmatprep.subr.mxu0 0.0
    %4226 = vmatpush1.xpose.msra.mxu0 0.0
    %4227 = vmatprep.subr.mxu0 0.0
    %4228 = vmatpush1.xpose.msra.mxu0 0.0
    %4229 = vmatprep.subr.mxu0 0.0
    %4230 = vmatpush1.xpose.msra.mxu0 0.0
    %4231 = vmatprep.mubr.f32.mxu0 0.0
    %4232 = vmatmul.mubr.f32.gmra.mrb[0].mxu0 %v4159
    %v4233 = vpop.f32.mrb[0].mxu0
    %v4234 = vadd.f32 0.0, %v4233
    %v4235 = vpop.f32.mrb[0].mxu0
    %4236 = vdwg.mxu0
    %v4238 = vsel %vm311, %v4234, 0
    %4240 = vmatprep.subr.mxu0 0.0
    %4241 = vmatpush1.msra.mxu0 %v4156
    %4242 = vmatprep.subr.mxu0 0.0
    %4243 = vmatpush1.msra.mxu0 %v4157
    %4244 = vmatprep.subr.mxu0 0.0
    %4245 = vmatpush1.msra.mxu0 0.0
    %4246 = vmatprep.subr.mxu0 0.0
    %4247 = vmatpush1.msra.mxu0 0.0
    %4248 = vmatprep.subr.mxu0 0.0
    %4249 = vmatpush1.msra.mxu0 0.0
    %4250 = vmatprep.subr.mxu0 0.0
    %4251 = vmatpush1.msra.mxu0 0.0
    %4252 = vmatprep.subr.mxu0 0.0
    %4253 = vmatpush1.msra.mxu0 0.0
    %4254 = vmatprep.subr.mxu0 0.0
    %4255 = vmatpush1.msra.mxu0 0.0
    %4256 = vmatprep.subr.mxu0 0.0
    %4257 = vmatpush1.msra.mxu0 0.0
    %4258 = vmatprep.subr.mxu0 0.0
    %4259 = vmatpush1.msra.mxu0 0.0
    %4260 = vmatprep.subr.mxu0 0.0
    %4261 = vmatpush1.msra.mxu0 0.0
    %4262 = vmatprep.subr.mxu0 0.0
    %4263 = vmatpush1.msra.mxu0 0.0
    %4264 = vmatprep.subr.mxu0 0.0
    %4265 = vmatpush1.msra.mxu0 0.0
    %4266 = vmatprep.subr.mxu0 0.0
    %4267 = vmatpush1.msra.mxu0 0.0
    %4268 = vmatprep.subr.mxu0 0.0
    %4269 = vmatpush1.msra.mxu0 0.0
    %4270 = vmatprep.subr.mxu0 0.0
    %4271 = vmatpush1.msra.mxu0 0.0
    %4272 = vmatprep.subr.mxu0 0.0
    %4273 = vmatpush1.msra.mxu0 0.0
    %4274 = vmatprep.subr.mxu0 0.0
    %4275 = vmatpush1.msra.mxu0 0.0
    %4276 = vmatprep.subr.mxu0 0.0
    %4277 = vmatpush1.msra.mxu0 0.0
    %4278 = vmatprep.subr.mxu0 0.0
    %4279 = vmatpush1.msra.mxu0 0.0
    %4280 = vmatprep.subr.mxu0 0.0
    %4281 = vmatpush1.msra.mxu0 0.0
    %4282 = vmatprep.subr.mxu0 0.0
    %4283 = vmatpush1.msra.mxu0 0.0
    %4284 = vmatprep.subr.mxu0 0.0
    %4285 = vmatpush1.msra.mxu0 0.0
    %4286 = vmatprep.subr.mxu0 0.0
    %4287 = vmatpush1.msra.mxu0 0.0
    %4288 = vmatprep.subr.mxu0 0.0
    %4289 = vmatpush1.msra.mxu0 0.0
    %4290 = vmatprep.subr.mxu0 0.0
    %4291 = vmatpush1.msra.mxu0 0.0
    %4292 = vmatprep.subr.mxu0 0.0
    %4293 = vmatpush1.msra.mxu0 0.0
    %4294 = vmatprep.subr.mxu0 0.0
    %4295 = vmatpush1.msra.mxu0 0.0
    %4296 = vmatprep.subr.mxu0 0.0
    %4297 = vmatpush1.msra.mxu0 0.0
    %4298 = vmatprep.subr.mxu0 0.0
    %4299 = vmatpush1.msra.mxu0 0.0
    %4300 = vmatprep.subr.mxu0 0.0
    %4301 = vmatpush1.msra.mxu0 0.0
    %4302 = vmatprep.subr.mxu0 0.0
    %4303 = vmatpush1.msra.mxu0 0.0
    %4304 = vmatprep.mubr.f32.mxu0 0.0
    %4305 = vmatmul.mubr.f32.gmra.mrb[0].mxu0 %v4238
    %v4306 = vpop.f32.mrb[0].mxu0
    %v4307 = vadd.f32 0.0, %v4306
    %v4308 = vpop.f32.mrb[0].mxu0
    %4309 = vdwg.mxu0
    %4310 = vxpose.xlu0.b32.start [1/16] %v4234, 128
    %4311 = vxpose.xlu0.b32.cont [2/16] 0.0, 128
    %4312 = vxpose.xlu0.b32.cont [3/16] 0.0, 128
    %4313 = vxpose.xlu0.b32.cont [4/16] 0.0, 128
    %4314 = vxpose.xlu0.b32.cont [5/16] 0.0, 128
    %4315 = vxpose.xlu0.b32.cont [6/16] 0.0, 128
    %4316 = vxpose.xlu0.b32.cont [7/16] 0.0, 128
    %4317 = vxpose.xlu0.b32.cont [8/16] 0.0, 128
    %4318 = vxpose.xlu0.b32.cont [9/16] 0.0, 128
    %4319 = vxpose.xlu0.b32.cont [10/16] 0.0, 128
    %4320 = vxpose.xlu0.b32.cont [11/16] 0.0, 128
    %4321 = vxpose.xlu0.b32.cont [12/16] 0.0, 128
    %4322 = vxpose.xlu0.b32.cont [13/16] 0.0, 128
    %4323 = vxpose.xlu0.b32.cont [14/16] 0.0, 128
    %4324 = vxpose.xlu0.b32.cont [15/16] 0.0, 128
    %4325 = vxpose.xlu0.b32.end [16/16] 0.0, 128
    %v4326 = vpop.trf.xlu0
    %v4327 = vpop.trf.xlu0
    %v4328 = vpop.trf.xlu0
    %v4329 = vpop.trf.xlu0
    %v4330 = vpop.trf.xlu0
    %v4331 = vpop.trf.xlu0
    %v4332 = vpop.trf.xlu0
    %v4333 = vpop.trf.xlu0
    %v4334 = vpop.trf.xlu0
    %v4335 = vpop.trf.xlu0
    %v4336 = vpop.trf.xlu0
    %v4337 = vpop.trf.xlu0
    %v4338 = vpop.trf.xlu0
    %v4339 = vpop.trf.xlu0
    %v4340 = vpop.trf.xlu0
    %v4341 = vpop.trf.xlu0
    %v4343 = vsel %vm726, %v4326, 0
    %v4346 = vsel %vm726, %v4327, 0
    %4348 = vmatprep.subr.mxu0 0.0
    %4349 = vmatpush1.msra.mxu0 %v4154
    %4350 = vmatprep.subr.mxu0 0.0
    %4351 = vmatpush1.msra.mxu0 0.0
    %4352 = vmatprep.subr.mxu0 0.0
    %4353 = vmatpush1.msra.mxu0 0.0
    %4354 = vmatprep.subr.mxu0 0.0
    %4355 = vmatpush1.msra.mxu0 0.0
    %4356 = vmatprep.subr.mxu0 0.0
    %4357 = vmatpush1.msra.mxu0 0.0
    %4358 = vmatprep.subr.mxu0 0.0
    %4359 = vmatpush1.msra.mxu0 0.0
    %4360 = vmatprep.subr.mxu0 0.0
    %4361 = vmatpush1.msra.mxu0 0.0
    %4362 = vmatprep.subr.mxu0 0.0
    %4363 = vmatpush1.msra.mxu0 0.0
    %4364 = vmatprep.subr.mxu0 0.0
    %4365 = vmatpush1.msra.mxu0 0.0
    %4366 = vmatprep.subr.mxu0 0.0
    %4367 = vmatpush1.msra.mxu0 0.0
    %4368 = vmatprep.subr.mxu0 0.0
    %4369 = vmatpush1.msra.mxu0 0.0
    %4370 = vmatprep.subr.mxu0 0.0
    %4371 = vmatpush1.msra.mxu0 0.0
    %4372 = vmatprep.subr.mxu0 0.0
    %4373 = vmatpush1.msra.mxu0 0.0
    %4374 = vmatprep.subr.mxu0 0.0
    %4375 = vmatpush1.msra.mxu0 0.0
    %4376 = vmatprep.subr.mxu0 0.0
    %4377 = vmatpush1.msra.mxu0 0.0
    %4378 = vmatprep.subr.mxu0 0.0
    %4379 = vmatpush1.msra.mxu0 0.0
    %4380 = vmatprep.subr.mxu0 0.0
    %4381 = vmatpush1.msra.mxu0 0.0
    %4382 = vmatprep.subr.mxu0 0.0
    %4383 = vmatpush1.msra.mxu0 0.0
    %4384 = vmatprep.subr.mxu0 0.0
    %4385 = vmatpush1.msra.mxu0 0.0
    %4386 = vmatprep.subr.mxu0 0.0
    %4387 = vmatpush1.msra.mxu0 0.0
    %4388 = vmatprep.subr.mxu0 0.0
    %4389 = vmatpush1.msra.mxu0 0.0
    %4390 = vmatprep.subr.mxu0 0.0
    %4391 = vmatpush1.msra.mxu0 0.0
    %4392 = vmatprep.subr.mxu0 0.0
    %4393 = vmatpush1.msra.mxu0 0.0
    %4394 = vmatprep.subr.mxu0 0.0
    %4395 = vmatpush1.msra.mxu0 0.0
    %4396 = vmatprep.subr.mxu0 0.0
    %4397 = vmatpush1.msra.mxu0 0.0
    %4398 = vmatprep.subr.mxu0 0.0
    %4399 = vmatpush1.msra.mxu0 0.0
    %4400 = vmatprep.subr.mxu0 0.0
    %4401 = vmatpush1.msra.mxu0 0.0
    %4402 = vmatprep.subr.mxu0 0.0
    %4403 = vmatpush1.msra.mxu0 0.0
    %4404 = vmatprep.subr.mxu0 0.0
    %4405 = vmatpush1.msra.mxu0 0.0
    %4406 = vmatprep.subr.mxu0 0.0
    %4407 = vmatpush1.msra.mxu0 0.0
    %4408 = vmatprep.subr.mxu0 0.0
    %4409 = vmatpush1.msra.mxu0 0.0
    %4410 = vmatprep.subr.mxu0 0.0
    %4411 = vmatpush1.msra.mxu0 0.0
    %4412 = vmatprep.mubr.f32.mxu0 0.0
    %4413 = vmatmul.mubr.f32.gmra.mrb[0].mxu0 %v4343
    %v4414 = vpop.f32.mrb[0].mxu0
    %v4415 = vadd.f32 0.0, %v4414
    %v4416 = vpop.f32.mrb[0].mxu0
    %4417 = vmatprep.mubr.f32.mxu0 0.0
    %4418 = vmatmul.mubr.f32.gmra.mrb[0].mxu0 %v4346
    %v4419 = vpop.f32.mrb[0].mxu0
    %v4420 = vadd.f32 0.0, %v4419
    %v4421 = vpop.f32.mrb[0].mxu0
    %4422 = vdwg.mxu0
    %v4423 = vadd.f32 %v4156, %v4415
    %v4424 = vadd.f32 %v4157, %v4420
    %v4425 = vtanh.pop %v4423
    %v4426 = vtanh.pop %v4424
    %v4427 = vadd.f32 %v4154, %v4307
    %v4428 = vtanh.pop %v4427
    %v4430 = vsel %vm311, %v4425, 0
    %v4433 = vsel %vm311, %v4426, 0
    %4435 = vmatprep.subr.mxu0 0.0
    %4436 = vmatpush1.xpose.msra.mxu0 %v4430
    %4437 = vmatprep.subr.mxu0 0.0
    %4438 = vmatpush1.xpose.msra.mxu0 %v4433
    %4439 = vmatprep.subr.mxu0 0.0
    %4440 = vmatpush1.xpose.msra.mxu0 0.0
    %4441 = vmatprep.subr.mxu0 0.0
    %4442 = vmatpush1.xpose.msra.mxu0 0.0
    %4443 = vmatprep.subr.mxu0 0.0
    %4444 = vmatpush1.xpose.msra.mxu0 0.0
    %4445 = vmatprep.subr.mxu0 0.0
    %4446 = vmatpush1.xpose.msra.mxu0 0.0
    %4447 = vmatprep.subr.mxu0 0.0
    %4448 = vmatpush1.xpose.msra.mxu0 0.0
    %4449 = vmatprep.subr.mxu0 0.0
    %4450 = vmatpush1.xpose.msra.mxu0 0.0
    %4451 = vmatprep.subr.mxu0 0.0
    %4452 = vmatpush1.xpose.msra.mxu0 0.0
    %4453 = vmatprep.subr.mxu0 0.0
    %4454 = vmatpush1.xpose.msra.mxu0 0.0
    %4455 = vmatprep.subr.mxu0 0.0
    %4456 = vmatpush1.xpose.msra.mxu0 0.0
    %4457 = vmatprep.subr.mxu0 0.0
    %4458 = vmatpush1.xpose.msra.mxu0 0.0
    %4459 = vmatprep.subr.mxu0 0.0
    %4460 = vmatpush1.xpose.msra.mxu0 0.0
    %4461 = vmatprep.subr.mxu0 0.0
    %4462 = vmatpush1.xpose.msra.mxu0 0.0
    %4463 = vmatprep.subr.mxu0 0.0
    %4464 = vmatpush1.xpose.msra.mxu0 0.0
    %4465 = vmatprep.subr.mxu0 0.0
    %4466 = vmatpush1.xpose.msra.mxu0 0.0
    %4467 = vmatprep.subr.mxu0 0.0
    %4468 = vmatpush1.xpose.msra.mxu0 0.0
    %4469 = vmatprep.subr.mxu0 0.0
    %4470 = vmatpush1.xpose.msra.mxu0 0.0
    %4471 = vmatprep.subr.mxu0 0.0
    %4472 = vmatpush1.xpose.msra.mxu0 0.0
    %4473 = vmatprep.subr.mxu0 0.0
    %4474 = vmatpush1.xpose.msra.mxu0 0.0
    %4475 = vmatprep.subr.mxu0 0.0
    %4476 = vmatpush1.xpose.msra.mxu0 0.0
    %4477 = vmatprep.subr.mxu0 0.0
    %4478 = vmatpush1.xpose.msra.mxu0 0.0
    %4479 = vmatprep.subr.mxu0 0.0
    %4480 = vmatpush1.xpose.msra.mxu0 0.0
    %4481 = vmatprep.subr.mxu0 0.0
    %4482 = vmatpush1.xpose.msra.mxu0 0.0
    %4483 = vmatprep.subr.mxu0 0.0
    %4484 = vmatpush1.xpose.msra.mxu0 0.0
    %4485 = vmatprep.subr.mxu0 0.0
    %4486 = vmatpush1.xpose.msra.mxu0 0.0
    %4487 = vmatprep.subr.mxu0 0.0
    %4488 = vmatpush1.xpose.msra.mxu0 0.0
    %4489 = vmatprep.subr.mxu0 0.0
    %4490 = vmatpush1.xpose.msra.mxu0 0.0
    %4491 = vmatprep.subr.mxu0 0.0
    %4492 = vmatpush1.xpose.msra.mxu0 0.0
    %4493 = vmatprep.subr.mxu0 0.0
    %4494 = vmatpush1.xpose.msra.mxu0 0.0
    %4495 = vmatprep.subr.mxu0 0.0
    %4496 = vmatpush1.xpose.msra.mxu0 0.0
    %4497 = vmatprep.subr.mxu0 0.0
    %4498 = vmatpush1.xpose.msra.mxu0 0.0
    %4499 = vmatprep.mubr.f32.mxu0 0.0
    %4500 = vmatmul.mubr.f32.gmra.mrb[0].mxu0 %v815
    %v4501 = vpop.f32.mrb[0].mxu0
    %v4502 = vadd.f32 0.0, %v4501
    %v4503 = vpop.f32.mrb[0].mxu0
    %4504 = vdwg.mxu0
    %v4506 = vsel %vm311, %v4428, 0
    %4508 = vmatprep.subr.mxu0 0.0
    %4509 = vmatpush1.xpose.msra.mxu0 %v4506
    %4510 = vmatprep.subr.mxu0 0.0
    %4511 = vmatpush1.xpose.msra.mxu0 0.0
    %4512 = vmatprep.subr.mxu0 0.0
    %4513 = vmatpush1.xpose.msra.mxu0 0.0
    %4514 = vmatprep.subr.mxu0 0.0
    %4515 = vmatpush1.xpose.msra.mxu0 0.0
    %4516 = vmatprep.subr.mxu0 0.0
    %4517 = vmatpush1.xpose.msra.mxu0 0.0
    %4518 = vmatprep.subr.mxu0 0.0
    %4519 = vmatpush1.xpose.msra.mxu0 0.0
    %4520 = vmatprep.subr.mxu0 0.0
    %4521 = vmatpush1.xpose.msra.mxu0 0.0
    %4522 = vmatprep.subr.mxu0 0.0
    %4523 = vmatpush1.xpose.msra.mxu0 0.0
    %4524 = vmatprep.subr.mxu0 0.0
    %4525 = vmatpush1.xpose.msra.mxu0 0.0
    %4526 = vmatprep.subr.mxu0 0.0
    %4527 = vmatpush1.xpose.msra.mxu0 0.0
    %4528 = vmatprep.subr.mxu0 0.0
    %4529 = vmatpush1.xpose.msra.mxu0 0.0
    %4530 = vmatprep.subr.mxu0 0.0
    %4531 = vmatpush1.xpose.msra.mxu0 0.0
    %4532 = vmatprep.subr.mxu0 0.0
    %4533 = vmatpush1.xpose.msra.mxu0 0.0
    %4534 = vmatprep.subr.mxu0 0.0
    %4535 = vmatpush1.xpose.msra.mxu0 0.0
    %4536 = vmatprep.subr.mxu0 0.0
    %4537 = vmatpush1.xpose.msra.mxu0 0.0
    %4538 = vmatprep.subr.mxu0 0.0
    %4539 = vmatpush1.xpose.msra.mxu0 0.0
    %4540 = vmatprep.subr.mxu0 0.0
    %4541 = vmatpush1.xpose.msra.mxu0 0.0
    %4542 = vmatprep.subr.mxu0 0.0
    %4543 = vmatpush1.xpose.msra.mxu0 0.0
    %4544 = vmatprep.subr.mxu0 0.0
    %4545 = vmatpush1.xpose.msra.mxu0 0.0
    %4546 = vmatprep.subr.mxu0 0.0
    %4547 = vmatpush1.xpose.msra.mxu0 0.0
    %4548 = vmatprep.subr.mxu0 0.0
    %4549 = vmatpush1.xpose.msra.mxu0 0.0
    %4550 = vmatprep.subr.mxu0 0.0
    %4551 = vmatpush1.xpose.msra.mxu0 0.0
    %4552 = vmatprep.subr.mxu0 0.0
    %4553 = vmatpush1.xpose.msra.mxu0 0.0
    %4554 = vmatprep.subr.mxu0 0.0
    %4555 = vmatpush1.xpose.msra.mxu0 0.0
    %4556 = vmatprep.subr.mxu0 0.0
    %4557 = vmatpush1.xpose.msra.mxu0 0.0
    %4558 = vmatprep.subr.mxu0 0.0
    %4559 = vmatpush1.xpose.msra.mxu0 0.0
    %4560 = vmatprep.subr.mxu0 0.0
    %4561 = vmatpush1.xpose.msra.mxu0 0.0
    %4562 = vmatprep.subr.mxu0 0.0
    %4563 = vmatpush1.xpose.msra.mxu0 0.0
    %4564 = vmatprep.subr.mxu0 0.0
    %4565 = vmatpush1.xpose.msra.mxu0 0.0
    %4566 = vmatprep.subr.mxu0 0.0
    %4567 = vmatpush1.xpose.msra.mxu0 0.0
    %4568 = vmatprep.subr.mxu0 0.0
    %4569 = vmatpush1.xpose.msra.mxu0 0.0
    %4570 = vmatprep.subr.mxu0 0.0
    %4571 = vmatpush1.xpose.msra.mxu0 0.0
    %4572 = vmatprep.mubr.f32.mxu0 0.0
    %4573 = vmatmul.mubr.f32.gmra.mrb[0].mxu0 %v894
    %v4574 = vpop.f32.mrb[0].mxu0
    %v4575 = vadd.f32 0.0, %v4574
    %v4576 = vpop.f32.mrb[0].mxu0
    %4577 = vdwg.mxu0
    %v4578 = vsel %vm969, %v4502, -inf
    %4579 = vmax.xlane.f32.xlu0 %v4578
    %v4580 = vpop.xlane.xlu0 %4579
    %v4581 = vsub.f32 %v4502, %v4580
    %v4582 = vmul.f32 %v4581, 1.442695
    %v4583 = vpow.pop %v4582
    %v4584 = vsel %vm969, %v4583, 0.0
    %4585 = vadd.xlane.f32.xlu0 %v4584
    %v4586 = vpop.xlane.xlu0 %4585
    %v4587 = vrcp.pop %v4586
    %v4588 = vmul.f32 %v4583, %v4587
    %v4589 = vsel %vm981, %v4575, -inf
    %4590 = vmax.xlane.f32.xlu0 %v4589
    %v4591 = vpop.xlane.xlu0 %4590
    %v4592 = vsub.f32 %v4575, %v4591
    %v4593 = vmul.f32 %v4592, 1.442695
    %v4594 = vpow.pop %v4593
    %v4595 = vsel %vm981, %v4594, 0.0
    %4596 = vadd.xlane.f32.xlu0 %v4595
    %v4597 = vpop.xlane.xlu0 %4596
    %v4598 = vrcp.pop %v4597
    %v4599 = vmul.f32 %v4594, %v4598
    %v4601 = vsel %vm726, %v4599, 0
    %4603 = vmatprep.subr.mxu0 0.0
    %4604 = vmatpush1.msra.mxu0 %v4147
    %4605 = vmatprep.subr.mxu0 0.0
    %4606 = vmatpush1.msra.mxu0 0.0
    %4607 = vmatprep.subr.mxu0 0.0
    %4608 = vmatpush1.msra.mxu0 0.0
    %4609 = vmatprep.subr.mxu0 0.0
    %4610 = vmatpush1.msra.mxu0 0.0
    %4611 = vmatprep.subr.mxu0 0.0
    %4612 = vmatpush1.msra.mxu0 0.0
    %4613 = vmatprep.subr.mxu0 0.0
    %4614 = vmatpush1.msra.mxu0 0.0
    %4615 = vmatprep.subr.mxu0 0.0
    %4616 = vmatpush1.msra.mxu0 0.0
    %4617 = vmatprep.subr.mxu0 0.0
    %4618 = vmatpush1.msra.mxu0 0.0
    %4619 = vmatprep.subr.mxu0 0.0
    %4620 = vmatpush1.msra.mxu0 0.0
    %4621 = vmatprep.subr.mxu0 0.0
    %4622 = vmatpush1.msra.mxu0 0.0
    %4623 = vmatprep.subr.mxu0 0.0
    %4624 = vmatpush1.msra.mxu0 0.0
    %4625 = vmatprep.subr.mxu0 0.0
    %4626 = vmatpush1.msra.mxu0 0.0
    %4627 = vmatprep.subr.mxu0 0.0
    %4628 = vmatpush1.msra.mxu0 0.0
    %4629 = vmatprep.subr.mxu0 0.0
    %4630 = vmatpush1.msra.mxu0 0.0
    %4631 = vmatprep.subr.mxu0 0.0
    %4632 = vmatpush1.msra.mxu0 0.0
    %4633 = vmatprep.subr.mxu0 0.0
    %4634 = vmatpush1.msra.mxu0 0.0
    %4635 = vmatprep.subr.mxu0 0.0
    %4636 = vmatpush1.msra.mxu0 0.0
    %4637 = vmatprep.subr.mxu0 0.0
    %4638 = vmatpush1.msra.mxu0 0.0
    %4639 = vmatprep.subr.mxu0 0.0
    %4640 = vmatpush1.msra.mxu0 0.0
    %4641 = vmatprep.subr.mxu0 0.0
    %4642 = vmatpush1.msra.mxu0 0.0
    %4643 = vmatprep.subr.mxu0 0.0
    %4644 = vmatpush1.msra.mxu0 0.0
    %4645 = vmatprep.subr.mxu0 0.0
    %4646 = vmatpush1.msra.mxu0 0.0
    %4647 = vmatprep.subr.mxu0 0.0
    %4648 = vmatpush1.msra.mxu0 0.0
    %4649 = vmatprep.subr.mxu0 0.0
    %4650 = vmatpush1.msra.mxu0 0.0
    %4651 = vmatprep.subr.mxu0 0.0
    %4652 = vmatpush1.msra.mxu0 0.0
    %4653 = vmatprep.subr.mxu0 0.0
    %4654 = vmatpush1.msra.mxu0 0.0
    %4655 = vmatprep.subr.mxu0 0.0
    %4656 = vmatpush1.msra.mxu0 0.0
    %4657 = vmatprep.subr.mxu0 0.0
    %4658 = vmatpush1.msra.mxu0 0.0
    %4659 = vmatprep.subr.mxu0 0.0
    %4660 = vmatpush1.msra.mxu0 0.0
    %4661 = vmatprep.subr.mxu0 0.0
    %4662 = vmatpush1.msra.mxu0 0.0
    %4663 = vmatprep.subr.mxu0 0.0
    %4664 = vmatpush1.msra.mxu0 0.0
    %4665 = vmatprep.subr.mxu0 0.0
    %4666 = vmatpush1.msra.mxu0 0.0
    %4667 = vmatprep.mubr.f32.mxu0 0.0
    %4668 = vmatmul.mubr.f32.gmra.mrb[0].mxu0 %v4601
    %v4669 = vpop.f32.mrb[0].mxu0
    %v4670 = vadd.f32 0.0, %v4669
    %v4671 = vpop.f32.mrb[0].mxu0
    %4672 = vdwg.mxu0
    %v4674 = vsel %vm311, %v4588, 0
    %4676 = vmatprep.subr.mxu0 0.0
    %4677 = vmatpush1.msra.mxu0 %v4149
    %4678 = vmatprep.subr.mxu0 0.0
    %4679 = vmatpush1.msra.mxu0 %v4150
    %4680 = vmatprep.subr.mxu0 0.0
    %4681 = vmatpush1.msra.mxu0 0.0
    %4682 = vmatprep.subr.mxu0 0.0
    %4683 = vmatpush1.msra.mxu0 0.0
    %4684 = vmatprep.subr.mxu0 0.0
    %4685 = vmatpush1.msra.mxu0 0.0
    %4686 = vmatprep.subr.mxu0 0.0
    %4687 = vmatpush1.msra.mxu0 0.0
    %4688 = vmatprep.subr.mxu0 0.0
    %4689 = vmatpush1.msra.mxu0 0.0
    %4690 = vmatprep.subr.mxu0 0.0
    %4691 = vmatpush1.msra.mxu0 0.0
    %4692 = vmatprep.subr.mxu0 0.0
    %4693 = vmatpush1.msra.mxu0 0.0
    %4694 = vmatprep.subr.mxu0 0.0
    %4695 = vmatpush1.msra.mxu0 0.0
    %4696 = vmatprep.subr.mxu0 0.0
    %4697 = vmatpush1.msra.mxu0 0.0
    %4698 = vmatprep.subr.mxu0 0.0
    %4699 = vmatpush1.msra.mxu0 0.0
    %4700 = vmatprep.subr.mxu0 0.0
    %4701 = vmatpush1.msra.mxu0 0.0
    %4702 = vmatprep.subr.mxu0 0.0
    %4703 = vmatpush1.msra.mxu0 0.0
    %4704 = vmatprep.subr.mxu0 0.0
    %4705 = vmatpush1.msra.mxu0 0.0
    %4706 = vmatprep.subr.mxu0 0.0
    %4707 = vmatpush1.msra.mxu0 0.0
    %4708 = vmatprep.subr.mxu0 0.0
    %4709 = vmatpush1.msra.mxu0 0.0
    %4710 = vmatprep.subr.mxu0 0.0
    %4711 = vmatpush1.msra.mxu0 0.0
    %4712 = vmatprep.subr.mxu0 0.0
    %4713 = vmatpush1.msra.mxu0 0.0
    %4714 = vmatprep.subr.mxu0 0.0
    %4715 = vmatpush1.msra.mxu0 0.0
    %4716 = vmatprep.subr.mxu0 0.0
    %4717 = vmatpush1.msra.mxu0 0.0
    %4718 = vmatprep.subr.mxu0 0.0
    %4719 = vmatpush1.msra.mxu0 0.0
    %4720 = vmatprep.subr.mxu0 0.0
    %4721 = vmatpush1.msra.mxu0 0.0
    %4722 = vmatprep.subr.mxu0 0.0
    %4723 = vmatpush1.msra.mxu0 0.0
    %4724 = vmatprep.subr.mxu0 0.0
    %4725 = vmatpush1.msra.mxu0 0.0
    %4726 = vmatprep.subr.mxu0 0.0
    %4727 = vmatpush1.msra.mxu0 0.0
    %4728 = vmatprep.subr.mxu0 0.0
    %4729 = vmatpush1.msra.mxu0 0.0
    %4730 = vmatprep.subr.mxu0 0.0
    %4731 = vmatpush1.msra.mxu0 0.0
    %4732 = vmatprep.subr.mxu0 0.0
    %4733 = vmatpush1.msra.mxu0 0.0
    %4734 = vmatprep.subr.mxu0 0.0
    %4735 = vmatpush1.msra.mxu0 0.0
    %4736 = vmatprep.subr.mxu0 0.0
    %4737 = vmatpush1.msra.mxu0 0.0
    %4738 = vmatprep.subr.mxu0 0.0
    %4739 = vmatpush1.msra.mxu0 0.0
    %4740 = vmatprep.mubr.f32.mxu0 0.0
    %4741 = vmatmul.mubr.f32.gmra.mrb[0].mxu0 %v4674
    %v4742 = vpop.f32.mrb[0].mxu0
    %v4743 = vadd.f32 %v4670, %v4742
    %v4744 = vpop.f32.mrb[0].mxu0
    %4745 = vdwg.mxu0
    %4746 = vst.msk [vmem:[#allocation5 + $0x6] sm:$0x1] %vm1139, %v4743
    %s4747 = scalar_lea.vmem %s0, 56
    %v4748 = vld [vmem:[%s4747] sm:$0xff]
    %s4749 = scalar_lea.vmem %s1, 112
    %v4750 = vld [vmem:[%s4749] sm:$0xff]
    %v4751 = vld [vmem:[%s4749 + $0x8] sm:$0xff]
    %s4752 = scalar_lea.vmem [#allocation2], 56
    %v4753 = vld [vmem:[%s4752] sm:$0xff]
    %s4754 = scalar_lea.vmem [#allocation3], 56
    %v4755 = vld [vmem:[%s4754] sm:$0xff]
    %s4756 = scalar_lea.vmem [#allocation4], 112
    %v4757 = vld [vmem:[%s4756] sm:$0xff]
    %v4758 = vld [vmem:[%s4756 + $0x8] sm:$0xff]
    %v4760 = vsel %vm64, %v4753, 0
    %v4763 = vsel %vm64, %v4750, 0
    %v4766 = vsel %vm64, %v4751, 0
    %4768 = vmatprep.subr.mxu0 0.0
    %4769 = vmatpush1.xpose.msra.mxu0 %v4763
    %4770 = vmatprep.subr.mxu0 0.0
    %4771 = vmatpush1.xpose.msra.mxu0 %v4766
    %4772 = vmatprep.subr.mxu0 0.0
    %4773 = vmatpush1.xpose.msra.mxu0 0.0
    %4774 = vmatprep.subr.mxu0 0.0
    %4775 = vmatpush1.xpose.msra.mxu0 0.0
    %4776 = vmatprep.subr.mxu0 0.0
    %4777 = vmatpush1.xpose.msra.mxu0 0.0
    %4778 = vmatprep.subr.mxu0 0.0
    %4779 = vmatpush1.xpose.msra.mxu0 0.0
    %4780 = vmatprep.subr.mxu0 0.0
    %4781 = vmatpush1.xpose.msra.mxu0 0.0
    %4782 = vmatprep.subr.mxu0 0.0
    %4783 = vmatpush1.xpose.msra.mxu0 0.0
    %4784 = vmatprep.subr.mxu0 0.0
    %4785 = vmatpush1.xpose.msra.mxu0 0.0
    %4786 = vmatprep.subr.mxu0 0.0
    %4787 = vmatpush1.xpose.msra.mxu0 0.0
    %4788 = vmatprep.subr.mxu0 0.0
    %4789 = vmatpush1.xpose.msra.mxu0 0.0
    %4790 = vmatprep.subr.mxu0 0.0
    %4791 = vmatpush1.xpose.msra.mxu0 0.0
    %4792 = vmatprep.subr.mxu0 0.0
    %4793 = vmatpush1.xpose.msra.mxu0 0.0
    %4794 = vmatprep.subr.mxu0 0.0
    %4795 = vmatpush1.xpose.msra.mxu0 0.0
    %4796 = vmatprep.subr.mxu0 0.0
    %4797 = vmatpush1.xpose.msra.mxu0 0.0
    %4798 = vmatprep.subr.mxu0 0.0
    %4799 = vmatpush1.xpose.msra.mxu0 0.0
    %4800 = vmatprep.subr.mxu0 0.0
    %4801 = vmatpush1.xpose.msra.mxu0 0.0
    %4802 = vmatprep.subr.mxu0 0.0
    %4803 = vmatpush1.xpose.msra.mxu0 0.0
    %4804 = vmatprep.subr.mxu0 0.0
    %4805 = vmatpush1.xpose.msra.mxu0 0.0
    %4806 = vmatprep.subr.mxu0 0.0
    %4807 = vmatpush1.xpose.msra.mxu0 0.0
    %4808 = vmatprep.subr.mxu0 0.0
    %4809 = vmatpush1.xpose.msra.mxu0 0.0
    %4810 = vmatprep.subr.mxu0 0.0
    %4811 = vmatpush1.xpose.msra.mxu0 0.0
    %4812 = vmatprep.subr.mxu0 0.0
    %4813 = vmatpush1.xpose.msra.mxu0 0.0
    %4814 = vmatprep.subr.mxu0 0.0
    %4815 = vmatpush1.xpose.msra.mxu0 0.0
    %4816 = vmatprep.subr.mxu0 0.0
    %4817 = vmatpush1.xpose.msra.mxu0 0.0
    %4818 = vmatprep.subr.mxu0 0.0
    %4819 = vmatpush1.xpose.msra.mxu0 0.0
    %4820 = vmatprep.subr.mxu0 0.0
    %4821 = vmatpush1.xpose.msra.mxu0 0.0
    %4822 = vmatprep.subr.mxu0 0.0
    %4823 = vmatpush1.xpose.msra.mxu0 0.0
    %4824 = vmatprep.subr.mxu0 0.0
    %4825 = vmatpush1.xpose.msra.mxu0 0.0
    %4826 = vmatprep.subr.mxu0 0.0
    %4827 = vmatpush1.xpose.msra.mxu0 0.0
    %4828 = vmatprep.subr.mxu0 0.0
    %4829 = vmatpush1.xpose.msra.mxu0 0.0
    %4830 = vmatprep.subr.mxu0 0.0
    %4831 = vmatpush1.xpose.msra.mxu0 0.0
    %4832 = vmatprep.mubr.f32.mxu0 0.0
    %4833 = vmatmul.mubr.f32.gmra.mrb[0].mxu0 %v4760
    %v4834 = vpop.f32.mrb[0].mxu0
    %v4835 = vadd.f32 0.0, %v4834
    %v4836 = vpop.f32.mrb[0].mxu0
    %4837 = vdwg.mxu0
    %v4839 = vsel %vm311, %v4835, 0
    %4841 = vmatprep.subr.mxu0 0.0
    %4842 = vmatpush1.msra.mxu0 %v4757
    %4843 = vmatprep.subr.mxu0 0.0
    %4844 = vmatpush1.msra.mxu0 %v4758
    %4845 = vmatprep.subr.mxu0 0.0
    %4846 = vmatpush1.msra.mxu0 0.0
    %4847 = vmatprep.subr.mxu0 0.0
    %4848 = vmatpush1.msra.mxu0 0.0
    %4849 = vmatprep.subr.mxu0 0.0
    %4850 = vmatpush1.msra.mxu0 0.0
    %4851 = vmatprep.subr.mxu0 0.0
    %4852 = vmatpush1.msra.mxu0 0.0
    %4853 = vmatprep.subr.mxu0 0.0
    %4854 = vmatpush1.msra.mxu0 0.0
    %4855 = vmatprep.subr.mxu0 0.0
    %4856 = vmatpush1.msra.mxu0 0.0
    %4857 = vmatprep.subr.mxu0 0.0
    %4858 = vmatpush1.msra.mxu0 0.0
    %4859 = vmatprep.subr.mxu0 0.0
    %4860 = vmatpush1.msra.mxu0 0.0
    %4861 = vmatprep.subr.mxu0 0.0
    %4862 = vmatpush1.msra.mxu0 0.0
    %4863 = vmatprep.subr.mxu0 0.0
    %4864 = vmatpush1.msra.mxu0 0.0
    %4865 = vmatprep.subr.mxu0 0.0
    %4866 = vmatpush1.msra.mxu0 0.0
    %4867 = vmatprep.subr.mxu0 0.0
    %4868 = vmatpush1.msra.mxu0 0.0
    %4869 = vmatprep.subr.mxu0 0.0
    %4870 = vmatpush1.msra.mxu0 0.0
    %4871 = vmatprep.subr.mxu0 0.0
    %4872 = vmatpush1.msra.mxu0 0.0
    %4873 = vmatprep.subr.mxu0 0.0
    %4874 = vmatpush1.msra.mxu0 0.0
    %4875 = vmatprep.subr.mxu0 0.0
    %4876 = vmatpush1.msra.mxu0 0.0
    %4877 = vmatprep.subr.mxu0 0.0
    %4878 = vmatpush1.msra.mxu0 0.0
    %4879 = vmatprep.subr.mxu0 0.0
    %4880 = vmatpush1.msra.mxu0 0.0
    %4881 = vmatprep.subr.mxu0 0.0
    %4882 = vmatpush1.msra.mxu0 0.0
    %4883 = vmatprep.subr.mxu0 0.0
    %4884 = vmatpush1.msra.mxu0 0.0
    %4885 = vmatprep.subr.mxu0 0.0
    %4886 = vmatpush1.msra.mxu0 0.0
    %4887 = vmatprep.subr.mxu0 0.0
    %4888 = vmatpush1.msra.mxu0 0.0
    %4889 = vmatprep.subr.mxu0 0.0
    %4890 = vmatpush1.msra.mxu0 0.0
    %4891 = vmatprep.subr.mxu0 0.0
    %4892 = vmatpush1.msra.mxu0 0.0
    %4893 = vmatprep.subr.mxu0 0.0
    %4894 = vmatpush1.msra.mxu0 0.0
    %4895 = vmatprep.subr.mxu0 0.0
    %4896 = vmatpush1.msra.mxu0 0.0
    %4897 = vmatprep.subr.mxu0 0.0
    %4898 = vmatpush1.msra.mxu0 0.0
    %4899 = vmatprep.subr.mxu0 0.0
    %4900 = vmatpush1.msra.mxu0 0.0
    %4901 = vmatprep.subr.mxu0 0.0
    %4902 = vmatpush1.msra.mxu0 0.0
    %4903 = vmatprep.subr.mxu0 0.0
    %4904 = vmatpush1.msra.mxu0 0.0
    %4905 = vmatprep.mubr.f32.mxu0 0.0
    %4906 = vmatmul.mubr.f32.gmra.mrb[0].mxu0 %v4839
    %v4907 = vpop.f32.mrb[0].mxu0
    %v4908 = vadd.f32 0.0, %v4907
    %v4909 = vpop.f32.mrb[0].mxu0
    %4910 = vdwg.mxu0
    %4911 = vxpose.xlu0.b32.start [1/16] %v4835, 128
    %4912 = vxpose.xlu0.b32.cont [2/16] 0.0, 128
    %4913 = vxpose.xlu0.b32.cont [3/16] 0.0, 128
    %4914 = vxpose.xlu0.b32.cont [4/16] 0.0, 128
    %4915 = vxpose.xlu0.b32.cont [5/16] 0.0, 128
    %4916 = vxpose.xlu0.b32.cont [6/16] 0.0, 128
    %4917 = vxpose.xlu0.b32.cont [7/16] 0.0, 128
    %4918 = vxpose.xlu0.b32.cont [8/16] 0.0, 128
    %4919 = vxpose.xlu0.b32.cont [9/16] 0.0, 128
    %4920 = vxpose.xlu0.b32.cont [10/16] 0.0, 128
    %4921 = vxpose.xlu0.b32.cont [11/16] 0.0, 128
    %4922 = vxpose.xlu0.b32.cont [12/16] 0.0, 128
    %4923 = vxpose.xlu0.b32.cont [13/16] 0.0, 128
    %4924 = vxpose.xlu0.b32.cont [14/16] 0.0, 128
    %4925 = vxpose.xlu0.b32.cont [15/16] 0.0, 128
    %4926 = vxpose.xlu0.b32.end [16/16] 0.0, 128
    %v4927 = vpop.trf.xlu0
    %v4928 = vpop.trf.xlu0
    %v4929 = vpop.trf.xlu0
    %v4930 = vpop.trf.xlu0
    %v4931 = vpop.trf.xlu0
    %v4932 = vpop.trf.xlu0
    %v4933 = vpop.trf.xlu0
    %v4934 = vpop.trf.xlu0
    %v4935 = vpop.trf.xlu0
    %v4936 = vpop.trf.xlu0
    %v4937 = vpop.trf.xlu0
    %v4938 = vpop.trf.xlu0
    %v4939 = vpop.trf.xlu0
    %v4940 = vpop.trf.xlu0
    %v4941 = vpop.trf.xlu0
    %v4942 = vpop.trf.xlu0
    %v4944 = vsel %vm726, %v4927, 0
    %v4947 = vsel %vm726, %v4928, 0
    %4949 = vmatprep.subr.mxu0 0.0
    %4950 = vmatpush1.msra.mxu0 %v4755
    %4951 = vmatprep.subr.mxu0 0.0
    %4952 = vmatpush1.msra.mxu0 0.0
    %4953 = vmatprep.subr.mxu0 0.0
    %4954 = vmatpush1.msra.mxu0 0.0
    %4955 = vmatprep.subr.mxu0 0.0
    %4956 = vmatpush1.msra.mxu0 0.0
    %4957 = vmatprep.subr.mxu0 0.0
    %4958 = vmatpush1.msra.mxu0 0.0
    %4959 = vmatprep.subr.mxu0 0.0
    %4960 = vmatpush1.msra.mxu0 0.0
    %4961 = vmatprep.subr.mxu0 0.0
    %4962 = vmatpush1.msra.mxu0 0.0
    %4963 = vmatprep.subr.mxu0 0.0
    %4964 = vmatpush1.msra.mxu0 0.0
    %4965 = vmatprep.subr.mxu0 0.0
    %4966 = vmatpush1.msra.mxu0 0.0
    %4967 = vmatprep.subr.mxu0 0.0
    %4968 = vmatpush1.msra.mxu0 0.0
    %4969 = vmatprep.subr.mxu0 0.0
    %4970 = vmatpush1.msra.mxu0 0.0
    %4971 = vmatprep.subr.mxu0 0.0
    %4972 = vmatpush1.msra.mxu0 0.0
    %4973 = vmatprep.subr.mxu0 0.0
    %4974 = vmatpush1.msra.mxu0 0.0
    %4975 = vmatprep.subr.mxu0 0.0
    %4976 = vmatpush1.msra.mxu0 0.0
    %4977 = vmatprep.subr.mxu0 0.0
    %4978 = vmatpush1.msra.mxu0 0.0
    %4979 = vmatprep.subr.mxu0 0.0
    %4980 = vmatpush1.msra.mxu0 0.0
    %4981 = vmatprep.subr.mxu0 0.0
    %4982 = vmatpush1.msra.mxu0 0.0
    %4983 = vmatprep.subr.mxu0 0.0
    %4984 = vmatpush1.msra.mxu0 0.0
    %4985 = vmatprep.subr.mxu0 0.0
    %4986 = vmatpush1.msra.mxu0 0.0
    %4987 = vmatprep.subr.mxu0 0.0
    %4988 = vmatpush1.msra.mxu0 0.0
    %4989 = vmatprep.subr.mxu0 0.0
    %4990 = vmatpush1.msra.mxu0 0.0
    %4991 = vmatprep.subr.mxu0 0.0
    %4992 = vmatpush1.msra.mxu0 0.0
    %4993 = vmatprep.subr.mxu0 0.0
    %4994 = vmatpush1.msra.mxu0 0.0
    %4995 = vmatprep.subr.mxu0 0.0
    %4996 = vmatpush1.msra.mxu0 0.0
    %4997 = vmatprep.subr.mxu0 0.0
    %4998 = vmatpush1.msra.mxu0 0.0
    %4999 = vmatprep.subr.mxu0 0.0
    %5000 = vmatpush1.msra.mxu0 0.0
    %5001 = vmatprep.subr.mxu0 0.0
    %5002 = vmatpush1.msra.mxu0 0.0
    %5003 = vmatprep.subr.mxu0 0.0
    %5004 = vmatpush1.msra.mxu0 0.0
    %5005 = vmatprep.subr.mxu0 0.0
    %5006 = vmatpush1.msra.mxu0 0.0
    %5007 = vmatprep.subr.mxu0 0.0
    %5008 = vmatpush1.msra.mxu0 0.0
    %5009 = vmatprep.subr.mxu0 0.0
    %5010 = vmatpush1.msra.mxu0 0.0
    %5011 = vmatprep.subr.mxu0 0.0
    %5012 = vmatpush1.msra.mxu0 0.0
    %5013 = vmatprep.mubr.f32.mxu0 0.0
    %5014 = vmatmul.mubr.f32.gmra.mrb[0].mxu0 %v4944
    %v5015 = vpop.f32.mrb[0].mxu0
    %v5016 = vadd.f32 0.0, %v5015
    %v5017 = vpop.f32.mrb[0].mxu0
    %5018 = vmatprep.mubr.f32.mxu0 0.0
    %5019 = vmatmul.mubr.f32.gmra.mrb[0].mxu0 %v4947
    %v5020 = vpop.f32.mrb[0].mxu0
    %v5021 = vadd.f32 0.0, %v5020
    %v5022 = vpop.f32.mrb[0].mxu0
    %5023 = vdwg.mxu0
    %v5024 = vadd.f32 %v4757, %v5016
    %v5025 = vadd.f32 %v4758, %v5021
    %v5026 = vtanh.pop %v5024
    %v5027 = vtanh.pop %v5025
    %v5028 = vadd.f32 %v4755, %v4908
    %v5029 = vtanh.pop %v5028
    %v5031 = vsel %vm311, %v5026, 0
    %v5034 = vsel %vm311, %v5027, 0
    %5036 = vmatprep.subr.mxu0 0.0
    %5037 = vmatpush1.xpose.msra.mxu0 %v5031
    %5038 = vmatprep.subr.mxu0 0.0
    %5039 = vmatpush1.xpose.msra.mxu0 %v5034
    %5040 = vmatprep.subr.mxu0 0.0
    %5041 = vmatpush1.xpose.msra.mxu0 0.0
    %5042 = vmatprep.subr.mxu0 0.0
    %5043 = vmatpush1.xpose.msra.mxu0 0.0
    %5044 = vmatprep.subr.mxu0 0.0
    %5045 = vmatpush1.xpose.msra.mxu0 0.0
    %5046 = vmatprep.subr.mxu0 0.0
    %5047 = vmatpush1.xpose.msra.mxu0 0.0
    %5048 = vmatprep.subr.mxu0 0.0
    %5049 = vmatpush1.xpose.msra.mxu0 0.0
    %5050 = vmatprep.subr.mxu0 0.0
    %5051 = vmatpush1.xpose.msra.mxu0 0.0
    %5052 = vmatprep.subr.mxu0 0.0
    %5053 = vmatpush1.xpose.msra.mxu0 0.0
    %5054 = vmatprep.subr.mxu0 0.0
    %5055 = vmatpush1.xpose.msra.mxu0 0.0
    %5056 = vmatprep.subr.mxu0 0.0
    %5057 = vmatpush1.xpose.msra.mxu0 0.0
    %5058 = vmatprep.subr.mxu0 0.0
    %5059 = vmatpush1.xpose.msra.mxu0 0.0
    %5060 = vmatprep.subr.mxu0 0.0
    %5061 = vmatpush1.xpose.msra.mxu0 0.0
    %5062 = vmatprep.subr.mxu0 0.0
    %5063 = vmatpush1.xpose.msra.mxu0 0.0
    %5064 = vmatprep.subr.mxu0 0.0
    %5065 = vmatpush1.xpose.msra.mxu0 0.0
    %5066 = vmatprep.subr.mxu0 0.0
    %5067 = vmatpush1.xpose.msra.mxu0 0.0
    %5068 = vmatprep.subr.mxu0 0.0
    %5069 = vmatpush1.xpose.msra.mxu0 0.0
    %5070 = vmatprep.subr.mxu0 0.0
    %5071 = vmatpush1.xpose.msra.mxu0 0.0
    %5072 = vmatprep.subr.mxu0 0.0
    %5073 = vmatpush1.xpose.msra.mxu0 0.0
    %5074 = vmatprep.subr.mxu0 0.0
    %5075 = vmatpush1.xpose.msra.mxu0 0.0
    %5076 = vmatprep.subr.mxu0 0.0
    %5077 = vmatpush1.xpose.msra.mxu0 0.0
    %5078 = vmatprep.subr.mxu0 0.0
    %5079 = vmatpush1.xpose.msra.mxu0 0.0
    %5080 = vmatprep.subr.mxu0 0.0
    %5081 = vmatpush1.xpose.msra.mxu0 0.0
    %5082 = vmatprep.subr.mxu0 0.0
    %5083 = vmatpush1.xpose.msra.mxu0 0.0
    %5084 = vmatprep.subr.mxu0 0.0
    %5085 = vmatpush1.xpose.msra.mxu0 0.0
    %5086 = vmatprep.subr.mxu0 0.0
    %5087 = vmatpush1.xpose.msra.mxu0 0.0
    %5088 = vmatprep.subr.mxu0 0.0
    %5089 = vmatpush1.xpose.msra.mxu0 0.0
    %5090 = vmatprep.subr.mxu0 0.0
    %5091 = vmatpush1.xpose.msra.mxu0 0.0
    %5092 = vmatprep.subr.mxu0 0.0
    %5093 = vmatpush1.xpose.msra.mxu0 0.0
    %5094 = vmatprep.subr.mxu0 0.0
    %5095 = vmatpush1.xpose.msra.mxu0 0.0
    %5096 = vmatprep.subr.mxu0 0.0
    %5097 = vmatpush1.xpose.msra.mxu0 0.0
    %5098 = vmatprep.subr.mxu0 0.0
    %5099 = vmatpush1.xpose.msra.mxu0 0.0
    %5100 = vmatprep.mubr.f32.mxu0 0.0
    %5101 = vmatmul.mubr.f32.gmra.mrb[0].mxu0 %v815
    %v5102 = vpop.f32.mrb[0].mxu0
    %v5103 = vadd.f32 0.0, %v5102
    %v5104 = vpop.f32.mrb[0].mxu0
    %5105 = vdwg.mxu0
    %v5107 = vsel %vm311, %v5029, 0
    %5109 = vmatprep.subr.mxu0 0.0
    %5110 = vmatpush1.xpose.msra.mxu0 %v5107
    %5111 = vmatprep.subr.mxu0 0.0
    %5112 = vmatpush1.xpose.msra.mxu0 0.0
    %5113 = vmatprep.subr.mxu0 0.0
    %5114 = vmatpush1.xpose.msra.mxu0 0.0
    %5115 = vmatprep.subr.mxu0 0.0
    %5116 = vmatpush1.xpose.msra.mxu0 0.0
    %5117 = vmatprep.subr.mxu0 0.0
    %5118 = vmatpush1.xpose.msra.mxu0 0.0
    %5119 = vmatprep.subr.mxu0 0.0
    %5120 = vmatpush1.xpose.msra.mxu0 0.0
    %5121 = vmatprep.subr.mxu0 0.0
    %5122 = vmatpush1.xpose.msra.mxu0 0.0
    %5123 = vmatprep.subr.mxu0 0.0
    %5124 = vmatpush1.xpose.msra.mxu0 0.0
    %5125 = vmatprep.subr.mxu0 0.0
    %5126 = vmatpush1.xpose.msra.mxu0 0.0
    %5127 = vmatprep.subr.mxu0 0.0
    %5128 = vmatpush1.xpose.msra.mxu0 0.0
    %5129 = vmatprep.subr.mxu0 0.0
    %5130 = vmatpush1.xpose.msra.mxu0 0.0
    %5131 = vmatprep.subr.mxu0 0.0
    %5132 = vmatpush1.xpose.msra.mxu0 0.0
    %5133 = vmatprep.subr.mxu0 0.0
    %5134 = vmatpush1.xpose.msra.mxu0 0.0
    %5135 = vmatprep.subr.mxu0 0.0
    %5136 = vmatpush1.xpose.msra.mxu0 0.0
    %5137 = vmatprep.subr.mxu0 0.0
    %5138 = vmatpush1.xpose.msra.mxu0 0.0
    %5139 = vmatprep.subr.mxu0 0.0
    %5140 = vmatpush1.xpose.msra.mxu0 0.0
    %5141 = vmatprep.subr.mxu0 0.0
    %5142 = vmatpush1.xpose.msra.mxu0 0.0
    %5143 = vmatprep.subr.mxu0 0.0
    %5144 = vmatpush1.xpose.msra.mxu0 0.0
    %5145 = vmatprep.subr.mxu0 0.0
    %5146 = vmatpush1.xpose.msra.mxu0 0.0
    %5147 = vmatprep.subr.mxu0 0.0
    %5148 = vmatpush1.xpose.msra.mxu0 0.0
    %5149 = vmatprep.subr.mxu0 0.0
    %5150 = vmatpush1.xpose.msra.mxu0 0.0
    %5151 = vmatprep.subr.mxu0 0.0
    %5152 = vmatpush1.xpose.msra.mxu0 0.0
    %5153 = vmatprep.subr.mxu0 0.0
    %5154 = vmatpush1.xpose.msra.mxu0 0.0
    %5155 = vmatprep.subr.mxu0 0.0
    %5156 = vmatpush1.xpose.msra.mxu0 0.0
    %5157 = vmatprep.subr.mxu0 0.0
    %5158 = vmatpush1.xpose.msra.mxu0 0.0
    %5159 = vmatprep.subr.mxu0 0.0
    %5160 = vmatpush1.xpose.msra.mxu0 0.0
    %5161 = vmatprep.subr.mxu0 0.0
    %5162 = vmatpush1.xpose.msra.mxu0 0.0
    %5163 = vmatprep.subr.mxu0 0.0
    %5164 = vmatpush1.xpose.msra.mxu0 0.0
    %5165 = vmatprep.subr.mxu0 0.0
    %5166 = vmatpush1.xpose.msra.mxu0 0.0
    %5167 = vmatprep.subr.mxu0 0.0
    %5168 = vmatpush1.xpose.msra.mxu0 0.0
    %5169 = vmatprep.subr.mxu0 0.0
    %5170 = vmatpush1.xpose.msra.mxu0 0.0
    %5171 = vmatprep.subr.mxu0 0.0
    %5172 = vmatpush1.xpose.msra.mxu0 0.0
    %5173 = vmatprep.mubr.f32.mxu0 0.0
    %5174 = vmatmul.mubr.f32.gmra.mrb[0].mxu0 %v894
    %v5175 = vpop.f32.mrb[0].mxu0
    %v5176 = vadd.f32 0.0, %v5175
    %v5177 = vpop.f32.mrb[0].mxu0
    %5178 = vdwg.mxu0
    %v5179 = vsel %vm969, %v5103, -inf
    %5180 = vmax.xlane.f32.xlu0 %v5179
    %v5181 = vpop.xlane.xlu0 %5180
    %v5182 = vsub.f32 %v5103, %v5181
    %v5183 = vmul.f32 %v5182, 1.442695
    %v5184 = vpow.pop %v5183
    %v5185 = vsel %vm969, %v5184, 0.0
    %5186 = vadd.xlane.f32.xlu0 %v5185
    %v5187 = vpop.xlane.xlu0 %5186
    %v5188 = vrcp.pop %v5187
    %v5189 = vmul.f32 %v5184, %v5188
    %v5190 = vsel %vm981, %v5176, -inf
    %5191 = vmax.xlane.f32.xlu0 %v5190
    %v5192 = vpop.xlane.xlu0 %5191
    %v5193 = vsub.f32 %v5176, %v5192
    %v5194 = vmul.f32 %v5193, 1.442695
    %v5195 = vpow.pop %v5194
    %v5196 = vsel %vm981, %v5195, 0.0
    %5197 = vadd.xlane.f32.xlu0 %v5196
    %v5198 = vpop.xlane.xlu0 %5197
    %v5199 = vrcp.pop %v5198
    %v5200 = vmul.f32 %v5195, %v5199
    %v5202 = vsel %vm726, %v5200, 0
    %5204 = vmatprep.subr.mxu0 0.0
    %5205 = vmatpush1.msra.mxu0 %v4748
    %5206 = vmatprep.subr.mxu0 0.0
    %5207 = vmatpush1.msra.mxu0 0.0
    %5208 = vmatprep.subr.mxu0 0.0
    %5209 = vmatpush1.msra.mxu0 0.0
    %5210 = vmatprep.subr.mxu0 0.0
    %5211 = vmatpush1.msra.mxu0 0.0
    %5212 = vmatprep.subr.mxu0 0.0
    %5213 = vmatpush1.msra.mxu0 0.0
    %5214 = vmatprep.subr.mxu0 0.0
    %5215 = vmatpush1.msra.mxu0 0.0
    %5216 = vmatprep.subr.mxu0 0.0
    %5217 = vmatpush1.msra.mxu0 0.0
    %5218 = vmatprep.subr.mxu0 0.0
    %5219 = vmatpush1.msra.mxu0 0.0
    %5220 = vmatprep.subr.mxu0 0.0
    %5221 = vmatpush1.msra.mxu0 0.0
    %5222 = vmatprep.subr.mxu0 0.0
    %5223 = vmatpush1.msra.mxu0 0.0
    %5224 = vmatprep.subr.mxu0 0.0
    %5225 = vmatpush1.msra.mxu0 0.0
    %5226 = vmatprep.subr.mxu0 0.0
    %5227 = vmatpush1.msra.mxu0 0.0
    %5228 = vmatprep.subr.mxu0 0.0
    %5229 = vmatpush1.msra.mxu0 0.0
    %5230 = vmatprep.subr.mxu0 0.0
    %5231 = vmatpush1.msra.mxu0 0.0
    %5232 = vmatprep.subr.mxu0 0.0
    %5233 = vmatpush1.msra.mxu0 0.0
    %5234 = vmatprep.subr.mxu0 0.0
    %5235 = vmatpush1.msra.mxu0 0.0
    %5236 = vmatprep.subr.mxu0 0.0
    %5237 = vmatpush1.msra.mxu0 0.0
    %5238 = vmatprep.subr.mxu0 0.0
    %5239 = vmatpush1.msra.mxu0 0.0
    %5240 = vmatprep.subr.mxu0 0.0
    %5241 = vmatpush1.msra.mxu0 0.0
    %5242 = vmatprep.subr.mxu0 0.0
    %5243 = vmatpush1.msra.mxu0 0.0
    %5244 = vmatprep.subr.mxu0 0.0
    %5245 = vmatpush1.msra.mxu0 0.0
    %5246 = vmatprep.subr.mxu0 0.0
    %5247 = vmatpush1.msra.mxu0 0.0
    %5248 = vmatprep.subr.mxu0 0.0
    %5249 = vmatpush1.msra.mxu0 0.0
    %5250 = vmatprep.subr.mxu0 0.0
    %5251 = vmatpush1.msra.mxu0 0.0
    %5252 = vmatprep.subr.mxu0 0.0
    %5253 = vmatpush1.msra.mxu0 0.0
    %5254 = vmatprep.subr.mxu0 0.0
    %5255 = vmatpush1.msra.mxu0 0.0
    %5256 = vmatprep.subr.mxu0 0.0
    %5257 = vmatpush1.msra.mxu0 0.0
    %5258 = vmatprep.subr.mxu0 0.0
    %5259 = vmatpush1.msra.mxu0 0.0
    %5260 = vmatprep.subr.mxu0 0.0
    %5261 = vmatpush1.msra.mxu0 0.0
    %5262 = vmatprep.subr.mxu0 0.0
    %5263 = vmatpush1.msra.mxu0 0.0
    %5264 = vmatprep.subr.mxu0 0.0
    %5265 = vmatpush1.msra.mxu0 0.0
    %5266 = vmatprep.subr.mxu0 0.0
    %5267 = vmatpush1.msra.mxu0 0.0
    %5268 = vmatprep.mubr.f32.mxu0 0.0
    %5269 = vmatmul.mubr.f32.gmra.mrb[0].mxu0 %v5202
    %v5270 = vpop.f32.mrb[0].mxu0
    %v5271 = vadd.f32 0.0, %v5270
    %v5272 = vpop.f32.mrb[0].mxu0
    %5273 = vdwg.mxu0
    %v5275 = vsel %vm311, %v5189, 0
    %5277 = vmatprep.subr.mxu0 0.0
    %5278 = vmatpush1.msra.mxu0 %v4750
    %5279 = vmatprep.subr.mxu0 0.0
    %5280 = vmatpush1.msra.mxu0 %v4751
    %5281 = vmatprep.subr.mxu0 0.0
    %5282 = vmatpush1.msra.mxu0 0.0
    %5283 = vmatprep.subr.mxu0 0.0
    %5284 = vmatpush1.msra.mxu0 0.0
    %5285 = vmatprep.subr.mxu0 0.0
    %5286 = vmatpush1.msra.mxu0 0.0
    %5287 = vmatprep.subr.mxu0 0.0
    %5288 = vmatpush1.msra.mxu0 0.0
    %5289 = vmatprep.subr.mxu0 0.0
    %5290 = vmatpush1.msra.mxu0 0.0
    %5291 = vmatprep.subr.mxu0 0.0
    %5292 = vmatpush1.msra.mxu0 0.0
    %5293 = vmatprep.subr.mxu0 0.0
    %5294 = vmatpush1.msra.mxu0 0.0
    %5295 = vmatprep.subr.mxu0 0.0
    %5296 = vmatpush1.msra.mxu0 0.0
    %5297 = vmatprep.subr.mxu0 0.0
    %5298 = vmatpush1.msra.mxu0 0.0
    %5299 = vmatprep.subr.mxu0 0.0
    %5300 = vmatpush1.msra.mxu0 0.0
    %5301 = vmatprep.subr.mxu0 0.0
    %5302 = vmatpush1.msra.mxu0 0.0
    %5303 = vmatprep.subr.mxu0 0.0
    %5304 = vmatpush1.msra.mxu0 0.0
    %5305 = vmatprep.subr.mxu0 0.0
    %5306 = vmatpush1.msra.mxu0 0.0
    %5307 = vmatprep.subr.mxu0 0.0
    %5308 = vmatpush1.msra.mxu0 0.0
    %5309 = vmatprep.subr.mxu0 0.0
    %5310 = vmatpush1.msra.mxu0 0.0
    %5311 = vmatprep.subr.mxu0 0.0
    %5312 = vmatpush1.msra.mxu0 0.0
    %5313 = vmatprep.subr.mxu0 0.0
    %5314 = vmatpush1.msra.mxu0 0.0
    %5315 = vmatprep.subr.mxu0 0.0
    %5316 = vmatpush1.msra.mxu0 0.0
    %5317 = vmatprep.subr.mxu0 0.0
    %5318 = vmatpush1.msra.mxu0 0.0
    %5319 = vmatprep.subr.mxu0 0.0
    %5320 = vmatpush1.msra.mxu0 0.0
    %5321 = vmatprep.subr.mxu0 0.0
    %5322 = vmatpush1.msra.mxu0 0.0
    %5323 = vmatprep.subr.mxu0 0.0
    %5324 = vmatpush1.msra.mxu0 0.0
    %5325 = vmatprep.subr.mxu0 0.0
    %5326 = vmatpush1.msra.mxu0 0.0
    %5327 = vmatprep.subr.mxu0 0.0
    %5328 = vmatpush1.msra.mxu0 0.0
    %5329 = vmatprep.subr.mxu0 0.0
    %5330 = vmatpush1.msra.mxu0 0.0
    %5331 = vmatprep.subr.mxu0 0.0
    %5332 = vmatpush1.msra.mxu0 0.0
    %5333 = vmatprep.subr.mxu0 0.0
    %5334 = vmatpush1.msra.mxu0 0.0
    %5335 = vmatprep.subr.mxu0 0.0
    %5336 = vmatpush1.msra.mxu0 0.0
    %5337 = vmatprep.subr.mxu0 0.0
    %5338 = vmatpush1.msra.mxu0 0.0
    %5339 = vmatprep.subr.mxu0 0.0
    %5340 = vmatpush1.msra.mxu0 0.0
    %5341 = vmatprep.mubr.f32.mxu0 0.0
    %5342 = vmatmul.mubr.f32.gmra.mrb[0].mxu0 %v5275
    %v5343 = vpop.f32.mrb[0].mxu0
    %v5344 = vadd.f32 %v5271, %v5343
    %v5345 = vpop.f32.mrb[0].mxu0
    %5346 = vdwg.mxu0
    %5347 = vst.msk [vmem:[#allocation5 + $0x7] sm:$0x1] %vm1139, %v5344
    %v5348 = vld [vmem:[#allocation5] sm:$0xff]
    %v5349 = vld [vmem:[%s7] sm:$0xff]
    %v5350 = vld [vmem:[%s7 + $0x8] sm:$0xff]
    %v5351 = vld [vmem:[%s7 + $0x10] sm:$0xff]
    %v5352 = vld [vmem:[%s7 + $0x18] sm:$0xff]
    %v5354 = vsel %vm64, %v5348, 0
    %5356 = vmatprep.subr.mxu0 0.0
    %5357 = vmatpush1.msra.mxu0 %v5349
    %5358 = vmatprep.subr.mxu0 0.0
    %5359 = vmatpush1.msra.mxu0 %v5350
    %5360 = vmatprep.subr.mxu0 0.0
    %5361 = vmatpush1.msra.mxu0 %v5351
    %5362 = vmatprep.subr.mxu0 0.0
    %5363 = vmatpush1.msra.mxu0 %v5352
    %5364 = vmatprep.subr.mxu0 0.0
    %5365 = vmatpush1.msra.mxu0 0.0
    %5366 = vmatprep.subr.mxu0 0.0
    %5367 = vmatpush1.msra.mxu0 0.0
    %5368 = vmatprep.subr.mxu0 0.0
    %5369 = vmatpush1.msra.mxu0 0.0
    %5370 = vmatprep.subr.mxu0 0.0
    %5371 = vmatpush1.msra.mxu0 0.0
    %5372 = vmatprep.subr.mxu0 0.0
    %5373 = vmatpush1.msra.mxu0 0.0
    %5374 = vmatprep.subr.mxu0 0.0
    %5375 = vmatpush1.msra.mxu0 0.0
    %5376 = vmatprep.subr.mxu0 0.0
    %5377 = vmatpush1.msra.mxu0 0.0
    %5378 = vmatprep.subr.mxu0 0.0
    %5379 = vmatpush1.msra.mxu0 0.0
    %5380 = vmatprep.subr.mxu0 0.0
    %5381 = vmatpush1.msra.mxu0 0.0
    %5382 = vmatprep.subr.mxu0 0.0
    %5383 = vmatpush1.msra.mxu0 0.0
    %5384 = vmatprep.subr.mxu0 0.0
    %5385 = vmatpush1.msra.mxu0 0.0
    %5386 = vmatprep.subr.mxu0 0.0
    %5387 = vmatpush1.msra.mxu0 0.0
    %5388 = vmatprep.subr.mxu0 0.0
    %5389 = vmatpush1.msra.mxu0 0.0
    %5390 = vmatprep.subr.mxu0 0.0
    %5391 = vmatpush1.msra.mxu0 0.0
    %5392 = vmatprep.subr.mxu0 0.0
    %5393 = vmatpush1.msra.mxu0 0.0
    %5394 = vmatprep.subr.mxu0 0.0
    %5395 = vmatpush1.msra.mxu0 0.0
    %5396 = vmatprep.subr.mxu0 0.0
    %5397 = vmatpush1.msra.mxu0 0.0
    %5398 = vmatprep.subr.mxu0 0.0
    %5399 = vmatpush1.msra.mxu0 0.0
    %5400 = vmatprep.subr.mxu0 0.0
    %5401 = vmatpush1.msra.mxu0 0.0
    %5402 = vmatprep.subr.mxu0 0.0
    %5403 = vmatpush1.msra.mxu0 0.0
    %5404 = vmatprep.subr.mxu0 0.0
    %5405 = vmatpush1.msra.mxu0 0.0
    %5406 = vmatprep.subr.mxu0 0.0
    %5407 = vmatpush1.msra.mxu0 0.0
    %5408 = vmatprep.subr.mxu0 0.0
    %5409 = vmatpush1.msra.mxu0 0.0
    %5410 = vmatprep.subr.mxu0 0.0
    %5411 = vmatpush1.msra.mxu0 0.0
    %5412 = vmatprep.subr.mxu0 0.0
    %5413 = vmatpush1.msra.mxu0 0.0
    %5414 = vmatprep.subr.mxu0 0.0
    %5415 = vmatpush1.msra.mxu0 0.0
    %5416 = vmatprep.subr.mxu0 0.0
    %5417 = vmatpush1.msra.mxu0 0.0
    %5418 = vmatprep.subr.mxu0 0.0
    %5419 = vmatpush1.msra.mxu0 0.0
    %5420 = vmatprep.mubr.f32.mxu0 0.0
    %5421 = vmatmul.mubr.f32.gmra.mrb[0].mxu0 %v5354
    %v5422 = vpop.f32.mrb[0].mxu0
    %v5423 = vadd.f32 0.0, %v5422
    %v5424 = vpop.f32.mrb[0].mxu0
    %5425 = vdwg.mxu0
    %v5426 = vtanh.pop %v5423
    %v5427 = vld [vmem:[%s8] sm:$0xff]
    %v5428 = vld [vmem:[%s8 + $0x8] sm:$0xff]
    %v5429 = vld [vmem:[%s8 + $0x10] sm:$0xff]
    %v5430 = vld [vmem:[%s8 + $0x18] sm:$0xff]
    %v5431 = vld [vmem:[%s9] sm:$0x1]
    %v5433 = vlaneseq
    %v5434 = vshrl.u32 %v5433, 7
    %v5435 = vsub.s32 0, %v5434
    %v5436 = vrot.slane %v5431, %v5435
    %v5439 = vsel %vm64, %v5426, 0
    %5441 = vmatprep.subr.mxu0 0.0
    %5442 = vmatpush1.msra.mxu0 %v5427
    %5443 = vmatprep.subr.mxu0 0.0
    %5444 = vmatpush1.msra.mxu0 %v5428
    %5445 = vmatprep.subr.mxu0 0.0
    %5446 = vmatpush1.msra.mxu0 %v5429
    %5447 = vmatprep.subr.mxu0 0.0
    %5448 = vmatpush1.msra.mxu0 %v5430
    %5449 = vmatprep.subr.mxu0 0.0
    %5450 = vmatpush1.msra.mxu0 0.0
    %5451 = vmatprep.subr.mxu0 0.0
    %5452 = vmatpush1.msra.mxu0 0.0
    %5453 = vmatprep.subr.mxu0 0.0
    %5454 = vmatpush1.msra.mxu0 0.0
    %5455 = vmatprep.subr.mxu0 0.0
    %5456 = vmatpush1.msra.mxu0 0.0
    %5457 = vmatprep.subr.mxu0 0.0
    %5458 = vmatpush1.msra.mxu0 0.0
    %5459 = vmatprep.subr.mxu0 0.0
    %5460 = vmatpush1.msra.mxu0 0.0
    %5461 = vmatprep.subr.mxu0 0.0
    %5462 = vmatpush1.msra.mxu0 0.0
    %5463 = vmatprep.subr.mxu0 0.0
    %5464 = vmatpush1.msra.mxu0 0.0
    %5465 = vmatprep.subr.mxu0 0.0
    %5466 = vmatpush1.msra.mxu0 0.0
    %5467 = vmatprep.subr.mxu0 0.0
    %5468 = vmatpush1.msra.mxu0 0.0
    %5469 = vmatprep.subr.mxu0 0.0
    %5470 = vmatpush1.msra.mxu0 0.0
    %5471 = vmatprep.subr.mxu0 0.0
    %5472 = vmatpush1.msra.mxu0 0.0
    %5473 = vmatprep.subr.mxu0 0.0
    %5474 = vmatpush1.msra.mxu0 0.0
    %5475 = vmatprep.subr.mxu0 0.0
    %5476 = vmatpush1.msra.mxu0 0.0
    %5477 = vmatprep.subr.mxu0 0.0
    %5478 = vmatpush1.msra.mxu0 0.0
    %5479 = vmatprep.subr.mxu0 0.0
    %5480 = vmatpush1.msra.mxu0 0.0
    %5481 = vmatprep.subr.mxu0 0.0
    %5482 = vmatpush1.msra.mxu0 0.0
    %5483 = vmatprep.subr.mxu0 0.0
    %5484 = vmatpush1.msra.mxu0 0.0
    %5485 = vmatprep.subr.mxu0 0.0
    %5486 = vmatpush1.msra.mxu0 0.0
    %5487 = vmatprep.subr.mxu0 0.0
    %5488 = vmatpush1.msra.mxu0 0.0
    %5489 = vmatprep.subr.mxu0 0.0
    %5490 = vmatpush1.msra.mxu0 0.0
    %5491 = vmatprep.subr.mxu0 0.0
    %5492 = vmatpush1.msra.mxu0 0.0
    %5493 = vmatprep.subr.mxu0 0.0
    %5494 = vmatpush1.msra.mxu0 0.0
    %5495 = vmatprep.subr.mxu0 0.0
    %5496 = vmatpush1.msra.mxu0 0.0
    %5497 = vmatprep.subr.mxu0 0.0
    %5498 = vmatpush1.msra.mxu0 0.0
    %5499 = vmatprep.subr.mxu0 0.0
    %5500 = vmatpush1.msra.mxu0 0.0
    %5501 = vmatprep.subr.mxu0 0.0
    %5502 = vmatpush1.msra.mxu0 0.0
    %5503 = vmatprep.subr.mxu0 0.0
    %5504 = vmatpush1.msra.mxu0 0.0
    %5505 = vmatprep.mubr.f32.mxu0 0.0
    %5506 = vmatmul.mubr.f32.gmra.mrb[0].mxu0 %v5439
    %v5507 = vpop.f32.mrb[0].mxu0
    %v5508 = vadd.f32 %v5436, %v5507
    %v5509 = vpop.f32.mrb[0].mxu0
    %5510 = vdwg.mxu0
    %5511 = vst [vmem:[#allocation6] sm:$0xff] %v5508
    // Predicated region
    $region42: #{tpu_custom_call.1} parent=1 // pred_check
      _
    $region43: #{tpu_custom_call.1} parent=1 // pred_check_branch
      %5513 = sbr.rel (0) target = $region45
    $region44: #{tpu_custom_call.1} parent=1 // pred_region
      %s5515 = ssub.s32 128, 128
      %5516 = vsyncadd [#allocation7], %s5515
      %s5518 = sshll.u32 [#allocation6], 4
      %s5519 = int_to_ptr.vmem [resolvable:$true] %s5518
      %5521 = dma.vmem_to_hbm [thread:$0]  %s5519, 128, %s10, [#allocation7]
    $region45: #{tpu_custom_call.1} parent=1 // pred_fallthru
      _
    // Predicated region
    $region46: #{tpu_custom_call.1} parent=1 // pred_check
      _
    $region47: #{tpu_custom_call.1} parent=1 // pred_check_branch
      %5523 = sbr.rel (0) target = $region49
    $region48: #{tpu_custom_call.1} parent=1 // pred_region
      %5524 = dma.done [#allocation7], 128
    $region49: #{tpu_custom_call.1} parent=1 // pred_fallthru
      _
    %5525 = vsyncpa [#allocation7], 1

</llo_original>
